<compile_context>
chip_gen: v7x
topology: tpu7x:2x2x1
jax: 0.10.0
libtpu: 0.0.40
codegen_flags: <defaults>
</compile_context>

<pallas_src>
import functools
import math

import jax
import jax.numpy as jnp
from jax.experimental import pallas as pl
from jax.experimental.pallas import tpu as pltpu


_VMEM_BUDGET = 10 * 1024 * 1024          # conservative tile-picking budget


def _round_up(x, m):
    return ((x + m - 1) // m) * m


def _pad_rows(x, mp):
    m = x.shape[0]
    return x if m == mp else jnp.pad(x, ((0, mp - m), (0, 0)))


@functools.lru_cache(maxsize=None)
def _num_tensorcores():
    """Best-effort TensorCore count (v7x has 2); default 1 (no grid split)."""
    try:
        info = pltpu.get_tpu_info()
        for name in ("num_cores", "tensorcores_per_chip", "num_tensorcores",
                     "cores_per_chip"):
            n = getattr(info, name, None)
            if n:
                return max(1, int(n))
    except Exception:
        pass
    try:
        n = getattr(jax.devices()[0], "num_cores", None)
        if n:
            return max(1, int(n))
    except Exception:
        pass
    return 1


@functools.lru_cache(maxsize=None)
def _vmem_limit_bytes():
    """Per-generation scoped-VMEM request (v7x: 64 MiB physical; v5e/v6e: 128)."""
    try:
        cap = int(getattr(pltpu.get_tpu_info(), "vmem_capacity_bytes", 0))
    except Exception:
        cap = 0
    if cap <= 0:
        cap = 64 * 1024 * 1024                       # conservative fallback
    return int(min(48 * 1024 * 1024, max(16 * 1024 * 1024, cap // 2)))


# ----------------------------- Pallas kernels ------------------------------ #

def _fused_matmul_kernel(aff_ref, x_ref, w_ref, o_ref, *, apply_relu):
    # Fused: previous layer's BN affine (+ReLU) + bf16 cast + MXU matmul.
    aff = aff_ref[...]                                     # (2, K): [scale; shift]
    x = x_ref[...] * aff[0:1, :] + aff[1:2, :]
    if apply_relu:
        x = jnp.maximum(x, 0.0)
    o_ref[...] = jnp.dot(x.astype(jnp.bfloat16), w_ref[...],
                         preferred_element_type=jnp.float32)


def _bn_stats_kernel(x_ref, o_ref):
    # Lane-dense per-column [sum; sum_sq] over M tiles; output stays VMEM-resident.
    x = x_ref[...]
    upd = jnp.concatenate(
        [jnp.sum(x, axis=0, keepdims=True),
         jnp.sum(x * x, axis=0, keepdims=True)], axis=0)   # (2, Cw)

    @pl.when(pl.program_id(0) == 0)
    def _():
        o_ref[...] = upd

    @pl.when(pl.program_id(0) > 0)
    def _():
        o_ref[...] = o_ref[...] + upd


def _affine_act_kernel(aff_ref, x_ref, o_ref, *, act):
    aff = aff_ref[...]                                     # (2, Cw): [scale; shift]
    y = x_ref[...] * aff[0:1, :] + aff[1:2, :]
    if act == "relu":
        y = jnp.maximum(y, 0.0)
    elif act == "tanh":
        y = jnp.tanh(y)
    o_ref[...] = y


# ------------------------------ tile picking -------------------------------- #

def _pick_tm_matmul(M, K, N):
    """One grid step when it fits the VMEM budget; 2 steps on multi-TC chips."""
    per_row = 2 * (K * 4 + N * 4)                 # f32 x + f32 out, double-buffered
    fixed = 2 * K * N * 2 + 2 * K * 4             # bf16 weights (x2) + affine
    avail = max(_VMEM_BUDGET - fixed, 1 << 20)
    mp = _round_up(max(M, 16), 16)
    tm = max(16, min(mp, (avail // per_row) // 16 * 16))
    if _num_tensorcores() >= 2 and mp >= 256:     # give both TensorCores work (v7x)
        tm = min(tm, max(16, _round_up(mp // 2, 16)))
    return tm


def _pick_tm_elem(M, C):
    per_row = 2 * 2 * C * 4                        # f32 in + f32 out, double-buffered
    mp = _round_up(max(M, 8), 8)
    tm = max(8, min(mp, (_VMEM_BUDGET // per_row) // 8 * 8))
    if _num_tensorcores() >= 2 and mp >= 256:
        tm = min(tm, max(8, _round_up(mp // 2, 8)))
    return tm


# ------------------------------ Pallas wrappers ----------------------------- #

def fused_matmul(x, aff, w_bf16, *, apply_relu):
    """relu(x*scale + shift) (optional) cast to bf16, then @ w on the MXU.

    x: (M, K) f32, aff: (2, K) f32 [scale; shift], w: (K, Np) bf16 -> (M, Np) f32."""
    M, K = x.shape
    Np = w_bf16.shape[1]
    tm = _pick_tm_matmul(M, K, Np)
    Mp = _round_up(M, tm)
    xp = _pad_rows(x.astype(jnp.float32), Mp)      # pad rows are garbage, sliced off
    out = pl.pallas_call(
        functools.partial(_fused_matmul_kernel, apply_relu=apply_relu),
        out_shape=jax.ShapeDtypeStruct((Mp, Np), jnp.float32),
        grid=(Mp // tm,),
        in_specs=[
            pl.BlockSpec((2, K), lambda i: (0, 0)),
            pl.BlockSpec((tm, K), lambda i: (i, 0)),
            pl.BlockSpec((K, Np), lambda i: (0, 0)),
        ],
        out_specs=pl.BlockSpec((tm, Np), lambda i: (i, 0)),
        compiler_params=pltpu.CompilerParams(
            dimension_semantics=("parallel",),
            vmem_limit_bytes=_vmem_limit_bytes()),
    )(aff.astype(jnp.float32), xp, w_bf16)
    return out[:M] if Mp != M else out


def bn_stats(x2d):
    """x2d: (M, Cw) f32, lane-dense -> (2, Cw) f32 with [sum; sum_sq] over rows."""
    M, Cw = x2d.shape
    tm = _pick_tm_elem(M, Cw)
    Mp = _round_up(M, tm)
    xp = _pad_rows(x2d, Mp)                        # zero pad rows add 0 -> exact
    return pl.pallas_call(
        _bn_stats_kernel,
        out_shape=jax.ShapeDtypeStruct((2, Cw), jnp.float32),
        grid=(Mp // tm,),
        in_specs=[pl.BlockSpec((tm, Cw), lambda i: (i, 0))],
        out_specs=pl.BlockSpec((2, Cw), lambda i: (0, 0)),
        compiler_params=pltpu.CompilerParams(
            dimension_semantics=("arbitrary",),    # reduction axis
            vmem_limit_bytes=_vmem_limit_bytes()),
    )(xp)


def affine_act(x2d, aff, *, act):
    """y = act(x * scale + shift) tiled over rows; aff: (2, Cw) [scale; shift]."""
    M, Cw = x2d.shape
    tm = _pick_tm_elem(M, Cw)
    Mp = _round_up(M, tm)
    xp = _pad_rows(x2d, Mp)
    out = pl.pallas_call(
        functools.partial(_affine_act_kernel, act=act),
        out_shape=jax.ShapeDtypeStruct((Mp, Cw), jnp.float32),
        grid=(Mp // tm,),
        in_specs=[
            pl.BlockSpec((2, Cw), lambda i: (0, 0)),
            pl.BlockSpec((tm, Cw), lambda i: (i, 0)),
        ],
        out_specs=pl.BlockSpec((tm, Cw), lambda i: (i, 0)),
        compiler_params=pltpu.CompilerParams(
            dimension_semantics=("parallel",),
            vmem_limit_bytes=_vmem_limit_bytes()),
    )(aff.astype(jnp.float32), xp)
    return out[:M] if Mp != M else out


# ------------------------------ JAX glue ----------------------------------- #

def conv_transpose2d_fused(x_nhwc, aff, w, stride, pad, *, apply_relu):
    """ConvTranspose2d with the previous BN affine(+ReLU) fused into its matmul.

    x: (N, Hin, Win, Cin) f32; aff: (2, Cin) [scale; shift];
    w: (Cin, Cout, k, k) PyTorch ConvTranspose2d layout.
    Returns (N, Ho, Wo, Cout) f32 (no bias, no activation)."""
    N, Hin, Win, Cin = x_nhwc.shape
    _, Cout, k, _ = w.shape

    ncols = Cout * k * k
    ncols_p = _round_up(ncols, 128)                          # lane-dense matmul output
    wmat = w.reshape(Cin, ncols).astype(jnp.bfloat16)
    if ncols_p != ncols:
        wmat = jnp.pad(wmat, ((0, 0), (0, ncols_p - ncols)))
    xmat = x_nhwc.reshape(N * Hin * Win, Cin)
    v = fused_matmul(xmat, aff, wmat, apply_relu=apply_relu)  # (M, ncols_p) f32
    v = v[:, :ncols].reshape(N, Hin, Win, Cout, k, k)

    if stride == 1 and Hin == 1 and Win == 1 and pad == 0:
        # 1x1 input, stride 1: no overlap, output is exactly the kernel taps.
        return v.reshape(N, Cout, k, k).transpose(0, 2, 3, 1)

    if not (stride == 2 and k == 4):
        raise NotImplementedError("parity col2im written for stride=2, k=4")

    # Parity-grouped 4-tap col2im: output phase (py, px) only receives taps with
    # ky%2==py, kx%2==px, and the 4 phases write disjoint outputs.
    Hp, Wp = Hin + 1, Win + 1

    def phase(py, px):
        a = jnp.pad(v[..., py, px],         ((0, 0), (0, 1), (0, 1), (0, 0)))
        b = jnp.pad(v[..., py + 2, px],     ((0, 0), (1, 0), (0, 1), (0, 0)))
        c = jnp.pad(v[..., py, px + 2],     ((0, 0), (0, 1), (1, 0), (0, 0)))
        d = jnp.pad(v[..., py + 2, px + 2], ((0, 0), (1, 0), (1, 0), (0, 0)))
        return a + b + c + d                                  # (N, Hp, Wp, Cout)

    row = lambda py: jnp.stack([phase(py, 0), phase(py, 1)], axis=3)  # (N,Hp,Wp,2,C)
    Y = jnp.stack([row(0), row(1)], axis=2)                   # (N, Hp, 2, Wp, 2, C)
    yf = Y.reshape(N, 2 * Hp, 2 * Wp, Cout)                   # depth-to-space
    return yf[:, pad:2 * Hp - pad, pad:2 * Wp - pad, :]


def bn_scale_shift(x_nhwc, gamma, beta, eps=1e-5):
    """Train-mode BatchNorm2d batch stats -> fused (2, C) affine [scale; shift]."""
    N, H, W, C = x_nhwc.shape
    M = N * H * W
    stats = bn_stats(x_nhwc.reshape(N * H, W * C))            # lane-dense (2, W*C)
    stats = stats.reshape(2, W, C).sum(axis=1)                # tiny fold -> (2, C)
    mean = stats[0] / M
    var = jnp.maximum(stats[1] / M - mean * mean, 0.0)
    scale = gamma.reshape(-1) * jax.lax.rsqrt(var + eps)
    shift = beta.reshape(-1) - mean * scale
    return jnp.stack([scale, shift], axis=0)                  # (2, C)


def bias_tanh_lane_dense(y_nhwc, bias):
    """Lane-dense bias + tanh epilogue for C=3 output (rows of lcm(C,128) lanes)."""
    N, H, W, C = y_nhwc.shape
    total = N * H * W * C
    lane = (C * 128) // math.gcd(C, 128)                      # 384 for C=3
    flat = y_nhwc.reshape(-1)
    total_p = _round_up(total, lane)
    if total_p != total:
        flat = jnp.pad(flat, (0, total_p - total))
    x2d = flat.reshape(total_p // lane, lane)
    bias_row = jnp.tile(bias.reshape(-1).astype(jnp.float32), lane // C)
    aff = jnp.stack([jnp.ones((lane,), jnp.float32), bias_row], axis=0)
    out = affine_act(x2d, aff, act="tanh")
    return out.reshape(-1)[:total].reshape(N, H, W, C)


# (stride, padding) for the 5 ConvTranspose2d layers, fixed by the architecture.
_STRIDE_PAD = [(1, 0), (2, 1), (2, 1), (2, 1), (2, 1)]


def generator_forward(z, params):
    """z: (N, z_dim, 1, 1) NCHW.  Returns (N, img_channels, 64, 64) NCHW."""
    N, z_dim = z.shape[0], z.shape[1]
    blocks = params["blocks"]

    # Block 1: no preceding BN -> identity pre-affine, no pre-ReLU.
    aff = jnp.stack([jnp.ones((z_dim,), jnp.float32),
                     jnp.zeros((z_dim,), jnp.float32)], axis=0)
    x = z.reshape(N, 1, 1, z_dim).astype(jnp.float32)          # NHWC (1x1 spatial)
    s, p = _STRIDE_PAD[0]
    x = conv_transpose2d_fused(x, aff, blocks[0]["w"], s, p, apply_relu=False)
    aff = bn_scale_shift(x, blocks[0]["gamma"], blocks[0]["beta"])

    # Blocks 2-4: previous BN affine + ReLU fused into this block's matmul.
    for blk, (s, p) in zip(blocks[1:], _STRIDE_PAD[1:4]):
        x = conv_transpose2d_fused(x, aff, blk["w"], s, p, apply_relu=True)
        aff = bn_scale_shift(x, blk["gamma"], blk["beta"])

    # Final ConvTranspose2d (block 4's BN+ReLU fused in) + lane-dense bias+tanh.
    s, p = _STRIDE_PAD[4]
    y = conv_transpose2d_fused(x, aff, params["final_w"], s, p, apply_relu=True)
    y = bias_tanh_lane_dense(y, params["final_b"])
    return jnp.transpose(y, (0, 3, 1, 2))                      # NHWC -> NCHW once


def init_generator_params(key, z_dim, img_channels, features_g):
    specs = [(z_dim, features_g * 16),
             (features_g * 16, features_g * 8),
             (features_g * 8, features_g * 4),
             (features_g * 4, features_g * 2)]
    keys = jax.random.split(key, len(specs) * 3 + 2)
    blocks, ki = [], 0
    for (cin, cout) in specs:
        w = 0.05 * jax.random.normal(keys[ki], (cin, cout, 4, 4), jnp.float32); ki += 1
        gamma = 1.0 + 0.1 * jax.random.normal(keys[ki], (1, cout), jnp.float32); ki += 1
        beta = 0.1 * jax.random.normal(keys[ki], (1, cout), jnp.float32); ki += 1
        blocks.append(dict(w=w, gamma=gamma, beta=beta))
    final_w = 0.05 * jax.random.normal(
        keys[ki], (features_g * 2, img_channels, 4, 4), jnp.float32); ki += 1
    final_b = 0.05 * jax.random.normal(keys[ki], (img_channels,), jnp.float32)
    return dict(blocks=blocks, final_w=final_w, final_b=final_b)


# --------------------------------- main ------------------------------------ #

if __name__ == "__main__":
    z_dim, img_channels, features_g, batch = 16, 3, 8, 2
    key = jax.random.PRNGKey(0)
    kz, kp = jax.random.split(key)
    params = init_generator_params(kp, z_dim, img_channels, features_g)
    z = jax.random.normal(kz, (batch, z_dim, 1, 1), jnp.float32)

    fwd = jax.jit(generator_forward)
    out = fwd(z, params)
    out = jax.block_until_ready(out)

    assert out.shape == (batch, img_channels, 64, 64), out.shape
    assert bool(jnp.all(jnp.isfinite(out)))
    assert bool(jnp.max(jnp.abs(out)) <= 1.0 + 1e-5)   # tanh-bounded
    print("KERNEL_OK")
</pallas_src>

<mosaic_0001>
module attributes {stable_mosaic.version = 11 : i64} {
  func.func @_fused_matmul_kernel(%arg0: i32, %arg1: memref<2x16xf32, #tpu.memory_space<vmem>>, %arg2: memref<16x16xf32, #tpu.memory_space<vmem>>, %arg3: memref<16x2048xbf16, #tpu.memory_space<vmem>>, %arg4: memref<16x2048xf32, #tpu.memory_space<vmem>>) attributes {dimension_semantics = [#tpu.dimension_semantics<parallel>], iteration_bounds = array<i64: 1>, scalar_prefetch = 0 : i64, scratch_operands = 0 : i64, tpu.core_type = #tpu.core_type<tc>, window_params = [{pipeline_mode = #tpu.pipeline_mode<synchronous>, transform_indices = @transform_0, window_bounds = array<i64: 2, 16>}, {transform_indices = @transform_1, window_bounds = array<i64: 16, 16>}, {pipeline_mode = #tpu.pipeline_mode<synchronous>, transform_indices = @transform_2, window_bounds = array<i64: 16, 2048>}, {transform_indices = @transform_3, window_bounds = array<i64: 16, 2048>}]} {
    %c0 = arith.constant 0 : index
    %c0_0 = arith.constant 0 : index
    %0 = vector.load %arg1[%c0, %c0_0] : memref<2x16xf32, #tpu.memory_space<vmem>>, vector<2x16xf32>
    %c0_1 = arith.constant 0 : index
    %c0_2 = arith.constant 0 : index
    %1 = vector.load %arg2[%c0_1, %c0_2] : memref<16x16xf32, #tpu.memory_space<vmem>>, vector<16x16xf32>
    %2 = vector.extract_strided_slice %0 {offsets = [0, 0], sizes = [1, 16], strides = [1, 1]} : vector<2x16xf32> to vector<1x16xf32>
    %3 = vector.broadcast %2 : vector<1x16xf32> to vector<16x16xf32>
    %4 = arith.mulf %1, %3 : vector<16x16xf32>
    %5 = vector.extract_strided_slice %0 {offsets = [1, 0], sizes = [1, 16], strides = [1, 1]} : vector<2x16xf32> to vector<1x16xf32>
    %6 = vector.broadcast %5 : vector<1x16xf32> to vector<16x16xf32>
    %7 = arith.addf %4, %6 : vector<16x16xf32>
    %8 = arith.truncf %7 : vector<16x16xf32> to vector<16x16xbf16>
    %c0_3 = arith.constant 0 : index
    %c0_4 = arith.constant 0 : index
    %9 = vector.load %arg3[%c0_3, %c0_4] : memref<16x2048xbf16, #tpu.memory_space<vmem>>, vector<16x2048xbf16>
    %cst = arith.constant dense<0.000000e+00> : vector<16x2048xf32>
    %10 = tpu.matmul %8, %9, %cst {dimension_numbers = #tpu.dot_dimension_numbers<[1], [0], [0], [1], [0, 0, 1, 1], [], []>} : vector<16x16xbf16>, vector<16x2048xbf16>, vector<16x2048xf32> -> vector<16x2048xf32>
    %c0_5 = arith.constant 0 : index
    %c0_6 = arith.constant 0 : index
    %11 = vector.load %arg4[%c0_5, %c0_6] : memref<16x2048xf32, #tpu.memory_space<vmem>>, vector<16x2048xf32>
    tpu.vector_store %arg4[%c0_5, %c0_6], %10 {strides = array<i32>} : memref<16x2048xf32, #tpu.memory_space<vmem>>, vector<16x2048xf32>,
    return
  }
  func.func @transform_0(%arg0: i32) -> (i32, i32) {
    %c0_i32 = arith.constant 0 : i32
    %c0_i32_0 = arith.constant 0 : i32
    %c0_i32_1 = arith.constant 0 : i32
    return %c0_i32, %c0_i32_0 : i32, i32
  }
  func.func @transform_1(%arg0: i32) -> (i32, i32) {
    %c0_i32 = arith.constant 0 : i32
    %c0_i32_0 = arith.constant 0 : i32
    return %arg0, %c0_i32 : i32, i32
  }
  func.func @transform_2(%arg0: i32) -> (i32, i32) {
    %c0_i32 = arith.constant 0 : i32
    %c0_i32_0 = arith.constant 0 : i32
    %c0_i32_1 = arith.constant 0 : i32
    return %c0_i32, %c0_i32_0 : i32, i32
  }
  func.func @transform_3(%arg0: i32) -> (i32, i32) {
    %c0_i32 = arith.constant 0 : i32
    %c0_i32_0 = arith.constant 0 : i32
    return %arg0, %c0_i32 : i32, i32
  }
}

module attributes {stable_mosaic.version = 11 : i64} {
  func.func @_bn_stats_kernel(%arg0: i32, %arg1: memref<8x512xf32, #tpu.memory_space<vmem>>, %arg2: memref<2x512xf32, #tpu.memory_space<vmem>>) attributes {dimension_semantics = [#tpu.dimension_semantics<arbitrary>], iteration_bounds = array<i64: 1>, scalar_prefetch = 0 : i64, scratch_operands = 0 : i64, tpu.core_type = #tpu.core_type<tc>, window_params = [{transform_indices = @transform_0, window_bounds = array<i64: 8, 512>}, {pipeline_mode = #tpu.pipeline_mode<synchronous>, transform_indices = @transform_1, window_bounds = array<i64: 2, 512>}]} {
    %c0 = arith.constant 0 : index
    %c0_0 = arith.constant 0 : index
    %0 = vector.load %arg1[%c0, %c0_0] : memref<8x512xf32, #tpu.memory_space<vmem>>, vector<8x512xf32>
    %cst = arith.constant dense<0.000000e+00> : vector<512xf32>
    %1 = vector.multi_reduction <add>, %0, %cst [0] : vector<8x512xf32> to vector<512xf32>
    %2 = vector.shape_cast %1 : vector<512xf32> to vector<1x512xf32>
    %3 = arith.mulf %0, %0 : vector<8x512xf32>
    %cst_1 = arith.constant dense<0.000000e+00> : vector<512xf32>
    %4 = vector.multi_reduction <add>, %3, %cst_1 [0] : vector<8x512xf32> to vector<512xf32>
    %5 = vector.shape_cast %4 : vector<512xf32> to vector<1x512xf32>
    %6 = tpu.concatenate %2, %5 in 0 : vector<1x512xf32>, vector<1x512xf32> -> vector<2x512xf32>
    %c0_i32 = arith.constant 0 : i32
    %7 = arith.cmpi eq, %arg0, %c0_i32 : i32
    %8 = arith.extui %7 : i1 to i32
    %c0_i32_2 = arith.constant 0 : i32
    %9 = arith.cmpi ne, %8, %c0_i32_2 : i32
    scf.if %9 {
      %c0_5 = arith.constant 0 : index
      %c0_6 = arith.constant 0 : index
      %13 = vector.load %arg2[%c0_5, %c0_6] : memref<2x512xf32, #tpu.memory_space<vmem>>, vector<2x512xf32>
      tpu.vector_store %arg2[%c0_5, %c0_6], %6 {strides = array<i32>} : memref<2x512xf32, #tpu.memory_space<vmem>>, vector<2x512xf32>,
    } else {
    }
    %c0_i32_3 = arith.constant 0 : i32
    %10 = arith.cmpi sgt, %arg0, %c0_i32_3 : i32
    %11 = arith.extui %10 : i1 to i32
    %c0_i32_4 = arith.constant 0 : i32
    %12 = arith.cmpi ne, %11, %c0_i32_4 : i32
    scf.if %12 {
      %c0_5 = arith.constant 0 : index
      %c0_6 = arith.constant 0 : index
      %13 = vector.load %arg2[%c0_5, %c0_6] : memref<2x512xf32, #tpu.memory_space<vmem>>, vector<2x512xf32>
      %14 = arith.addf %13, %6 : vector<2x512xf32>
      %c0_7 = arith.constant 0 : index
      %c0_8 = arith.constant 0 : index
      %15 = vector.load %arg2[%c0_7, %c0_8] : memref<2x512xf32, #tpu.memory_space<vmem>>, vector<2x512xf32>
      tpu.vector_store %arg2[%c0_7, %c0_8], %14 {strides = array<i32>} : memref<2x512xf32, #tpu.memory_space<vmem>>, vector<2x512xf32>,
    } else {
    }
    return
  }
  func.func @transform_0(%arg0: i32) -> (i32, i32) {
    %c0_i32 = arith.constant 0 : i32
    %c0_i32_0 = arith.constant 0 : i32
    return %arg0, %c0_i32 : i32, i32
  }
  func.func @transform_1(%arg0: i32) -> (i32, i32) {
    %c0_i32 = arith.constant 0 : i32
    %c0_i32_0 = arith.constant 0 : i32
    %c0_i32_1 = arith.constant 0 : i32
    return %c0_i32, %c0_i32_0 : i32, i32
  }
}

module attributes {stable_mosaic.version = 11 : i64} {
  func.func @_fused_matmul_kernel(%arg0: i32, %arg1: memref<2x128xf32, #tpu.memory_space<vmem>>, %arg2: memref<32x128xf32, #tpu.memory_space<vmem>>, %arg3: memref<128x1024xbf16, #tpu.memory_space<vmem>>, %arg4: memref<32x1024xf32, #tpu.memory_space<vmem>>) attributes {dimension_semantics = [#tpu.dimension_semantics<parallel>], iteration_bounds = array<i64: 1>, scalar_prefetch = 0 : i64, scratch_operands = 0 : i64, tpu.core_type = #tpu.core_type<tc>, window_params = [{pipeline_mode = #tpu.pipeline_mode<synchronous>, transform_indices = @transform_0, window_bounds = array<i64: 2, 128>}, {transform_indices = @transform_1, window_bounds = array<i64: 32, 128>}, {pipeline_mode = #tpu.pipeline_mode<synchronous>, transform_indices = @transform_2, window_bounds = array<i64: 128, 1024>}, {transform_indices = @transform_3, window_bounds = array<i64: 32, 1024>}]} {
    %c0 = arith.constant 0 : index
    %c0_0 = arith.constant 0 : index
    %0 = vector.load %arg1[%c0, %c0_0] : memref<2x128xf32, #tpu.memory_space<vmem>>, vector<2x128xf32>
    %c0_1 = arith.constant 0 : index
    %c0_2 = arith.constant 0 : index
    %1 = vector.load %arg2[%c0_1, %c0_2] : memref<32x128xf32, #tpu.memory_space<vmem>>, vector<32x128xf32>
    %2 = vector.extract_strided_slice %0 {offsets = [0, 0], sizes = [1, 128], strides = [1, 1]} : vector<2x128xf32> to vector<1x128xf32>
    %3 = vector.broadcast %2 : vector<1x128xf32> to vector<32x128xf32>
    %4 = arith.mulf %1, %3 : vector<32x128xf32>
    %5 = vector.extract_strided_slice %0 {offsets = [1, 0], sizes = [1, 128], strides = [1, 1]} : vector<2x128xf32> to vector<1x128xf32>
    %6 = vector.broadcast %5 : vector<1x128xf32> to vector<32x128xf32>
    %7 = arith.addf %4, %6 : vector<32x128xf32>
    %cst = arith.constant 0.000000e+00 : f32
    %8 = vector.broadcast %cst : f32 to vector<32x128xf32>
    %9 = arith.maximumf %7, %8 : vector<32x128xf32>
    %10 = arith.truncf %9 : vector<32x128xf32> to vector<32x128xbf16>
    %c0_3 = arith.constant 0 : index
    %c0_4 = arith.constant 0 : index
    %11 = vector.load %arg3[%c0_3, %c0_4] : memref<128x1024xbf16, #tpu.memory_space<vmem>>, vector<128x1024xbf16>
    %cst_5 = arith.constant dense<0.000000e+00> : vector<32x1024xf32>
    %12 = tpu.matmul %10, %11, %cst_5 {dimension_numbers = #tpu.dot_dimension_numbers<[1], [0], [0], [1], [0, 0, 1, 1], [], []>} : vector<32x128xbf16>, vector<128x1024xbf16>, vector<32x1024xf32> -> vector<32x1024xf32>
    %c0_6 = arith.constant 0 : index
    %c0_7 = arith.constant 0 : index
    %13 = vector.load %arg4[%c0_6, %c0_7] : memref<32x1024xf32, #tpu.memory_space<vmem>>, vector<32x1024xf32>
    tpu.vector_store %arg4[%c0_6, %c0_7], %12 {strides = array<i32>} : memref<32x1024xf32, #tpu.memory_space<vmem>>, vector<32x1024xf32>,
    return
  }
  func.func @transform_0(%arg0: i32) -> (i32, i32) {
    %c0_i32 = arith.constant 0 : i32
    %c0_i32_0 = arith.constant 0 : i32
    %c0_i32_1 = arith.constant 0 : i32
    return %c0_i32, %c0_i32_0 : i32, i32
  }
  func.func @transform_1(%arg0: i32) -> (i32, i32) {
    %c0_i32 = arith.constant 0 : i32
    %c0_i32_0 = arith.constant 0 : i32
    return %arg0, %c0_i32 : i32, i32
  }
  func.func @transform_2(%arg0: i32) -> (i32, i32) {
    %c0_i32 = arith.constant 0 : i32
    %c0_i32_0 = arith.constant 0 : i32
    %c0_i32_1 = arith.constant 0 : i32
    return %c0_i32, %c0_i32_0 : i32, i32
  }
  func.func @transform_3(%arg0: i32) -> (i32, i32) {
    %c0_i32 = arith.constant 0 : i32
    %c0_i32_0 = arith.constant 0 : i32
    return %arg0, %c0_i32 : i32, i32
  }
}

module attributes {stable_mosaic.version = 11 : i64} {
  func.func @_bn_stats_kernel(%arg0: i32, %arg1: memref<16x512xf32, #tpu.memory_space<vmem>>, %arg2: memref<2x512xf32, #tpu.memory_space<vmem>>) attributes {dimension_semantics = [#tpu.dimension_semantics<arbitrary>], iteration_bounds = array<i64: 1>, scalar_prefetch = 0 : i64, scratch_operands = 0 : i64, tpu.core_type = #tpu.core_type<tc>, window_params = [{transform_indices = @transform_0, window_bounds = array<i64: 16, 512>}, {pipeline_mode = #tpu.pipeline_mode<synchronous>, transform_indices = @transform_1, window_bounds = array<i64: 2, 512>}]} {
    %c0 = arith.constant 0 : index
    %c0_0 = arith.constant 0 : index
    %0 = vector.load %arg1[%c0, %c0_0] : memref<16x512xf32, #tpu.memory_space<vmem>>, vector<16x512xf32>
    %cst = arith.constant dense<0.000000e+00> : vector<512xf32>
    %1 = vector.multi_reduction <add>, %0, %cst [0] : vector<16x512xf32> to vector<512xf32>
    %2 = vector.shape_cast %1 : vector<512xf32> to vector<1x512xf32>
    %3 = arith.mulf %0, %0 : vector<16x512xf32>
    %cst_1 = arith.constant dense<0.000000e+00> : vector<512xf32>
    %4 = vector.multi_reduction <add>, %3, %cst_1 [0] : vector<16x512xf32> to vector<512xf32>
    %5 = vector.shape_cast %4 : vector<512xf32> to vector<1x512xf32>
    %6 = tpu.concatenate %2, %5 in 0 : vector<1x512xf32>, vector<1x512xf32> -> vector<2x512xf32>
    %c0_i32 = arith.constant 0 : i32
    %7 = arith.cmpi eq, %arg0, %c0_i32 : i32
    %8 = arith.extui %7 : i1 to i32
    %c0_i32_2 = arith.constant 0 : i32
    %9 = arith.cmpi ne, %8, %c0_i32_2 : i32
    scf.if %9 {
      %c0_5 = arith.constant 0 : index
      %c0_6 = arith.constant 0 : index
      %13 = vector.load %arg2[%c0_5, %c0_6] : memref<2x512xf32, #tpu.memory_space<vmem>>, vector<2x512xf32>
      tpu.vector_store %arg2[%c0_5, %c0_6], %6 {strides = array<i32>} : memref<2x512xf32, #tpu.memory_space<vmem>>, vector<2x512xf32>,
    } else {
    }
    %c0_i32_3 = arith.constant 0 : i32
    %10 = arith.cmpi sgt, %arg0, %c0_i32_3 : i32
    %11 = arith.extui %10 : i1 to i32
    %c0_i32_4 = arith.constant 0 : i32
    %12 = arith.cmpi ne, %11, %c0_i32_4 : i32
    scf.if %12 {
      %c0_5 = arith.constant 0 : index
      %c0_6 = arith.constant 0 : index
      %13 = vector.load %arg2[%c0_5, %c0_6] : memref<2x512xf32, #tpu.memory_space<vmem>>, vector<2x512xf32>
      %14 = arith.addf %13, %6 : vector<2x512xf32>
      %c0_7 = arith.constant 0 : index
      %c0_8 = arith.constant 0 : index
      %15 = vector.load %arg2[%c0_7, %c0_8] : memref<2x512xf32, #tpu.memory_space<vmem>>, vector<2x512xf32>
      tpu.vector_store %arg2[%c0_7, %c0_8], %14 {strides = array<i32>} : memref<2x512xf32, #tpu.memory_space<vmem>>, vector<2x512xf32>,
    } else {
    }
    return
  }
  func.func @transform_0(%arg0: i32) -> (i32, i32) {
    %c0_i32 = arith.constant 0 : i32
    %c0_i32_0 = arith.constant 0 : i32
    return %arg0, %c0_i32 : i32, i32
  }
  func.func @transform_1(%arg0: i32) -> (i32, i32) {
    %c0_i32 = arith.constant 0 : i32
    %c0_i32_0 = arith.constant 0 : i32
    %c0_i32_1 = arith.constant 0 : i32
    return %c0_i32, %c0_i32_0 : i32, i32
  }
}

module attributes {stable_mosaic.version = 11 : i64} {
  func.func @_fused_matmul_kernel(%arg0: i32, %arg1: memref<2x64xf32, #tpu.memory_space<vmem>>, %arg2: memref<128x64xf32, #tpu.memory_space<vmem>>, %arg3: memref<64x512xbf16, #tpu.memory_space<vmem>>, %arg4: memref<128x512xf32, #tpu.memory_space<vmem>>) attributes {dimension_semantics = [#tpu.dimension_semantics<parallel>], iteration_bounds = array<i64: 1>, scalar_prefetch = 0 : i64, scratch_operands = 0 : i64, tpu.core_type = #tpu.core_type<tc>, window_params = [{pipeline_mode = #tpu.pipeline_mode<synchronous>, transform_indices = @transform_0, window_bounds = array<i64: 2, 64>}, {transform_indices = @transform_1, window_bounds = array<i64: 128, 64>}, {pipeline_mode = #tpu.pipeline_mode<synchronous>, transform_indices = @transform_2, window_bounds = array<i64: 64, 512>}, {transform_indices = @transform_3, window_bounds = array<i64: 128, 512>}]} {
    %c0 = arith.constant 0 : index
    %c0_0 = arith.constant 0 : index
    %0 = vector.load %arg1[%c0, %c0_0] : memref<2x64xf32, #tpu.memory_space<vmem>>, vector<2x64xf32>
    %c0_1 = arith.constant 0 : index
    %c0_2 = arith.constant 0 : index
    %1 = vector.load %arg2[%c0_1, %c0_2] : memref<128x64xf32, #tpu.memory_space<vmem>>, vector<128x64xf32>
    %2 = vector.extract_strided_slice %0 {offsets = [0, 0], sizes = [1, 64], strides = [1, 1]} : vector<2x64xf32> to vector<1x64xf32>
    %3 = vector.broadcast %2 : vector<1x64xf32> to vector<128x64xf32>
    %4 = arith.mulf %1, %3 : vector<128x64xf32>
    %5 = vector.extract_strided_slice %0 {offsets = [1, 0], sizes = [1, 64], strides = [1, 1]} : vector<2x64xf32> to vector<1x64xf32>
    %6 = vector.broadcast %5 : vector<1x64xf32> to vector<128x64xf32>
    %7 = arith.addf %4, %6 : vector<128x64xf32>
    %cst = arith.constant 0.000000e+00 : f32
    %8 = vector.broadcast %cst : f32 to vector<128x64xf32>
    %9 = arith.maximumf %7, %8 : vector<128x64xf32>
    %10 = arith.truncf %9 : vector<128x64xf32> to vector<128x64xbf16>
    %c0_3 = arith.constant 0 : index
    %c0_4 = arith.constant 0 : index
    %11 = vector.load %arg3[%c0_3, %c0_4] : memref<64x512xbf16, #tpu.memory_space<vmem>>, vector<64x512xbf16>
    %cst_5 = arith.constant dense<0.000000e+00> : vector<128x512xf32>
    %12 = tpu.matmul %10, %11, %cst_5 {dimension_numbers = #tpu.dot_dimension_numbers<[1], [0], [0], [1], [0, 0, 1, 1], [], []>} : vector<128x64xbf16>, vector<64x512xbf16>, vector<128x512xf32> -> vector<128x512xf32>
    %c0_6 = arith.constant 0 : index
    %c0_7 = arith.constant 0 : index
    %13 = vector.load %arg4[%c0_6, %c0_7] : memref<128x512xf32, #tpu.memory_space<vmem>>, vector<128x512xf32>
    tpu.vector_store %arg4[%c0_6, %c0_7], %12 {strides = array<i32>} : memref<128x512xf32, #tpu.memory_space<vmem>>, vector<128x512xf32>,
    return
  }
  func.func @transform_0(%arg0: i32) -> (i32, i32) {
    %c0_i32 = arith.constant 0 : i32
    %c0_i32_0 = arith.constant 0 : i32
    %c0_i32_1 = arith.constant 0 : i32
    return %c0_i32, %c0_i32_0 : i32, i32
  }
  func.func @transform_1(%arg0: i32) -> (i32, i32) {
    %c0_i32 = arith.constant 0 : i32
    %c0_i32_0 = arith.constant 0 : i32
    return %arg0, %c0_i32 : i32, i32
  }
  func.func @transform_2(%arg0: i32) -> (i32, i32) {
    %c0_i32 = arith.constant 0 : i32
    %c0_i32_0 = arith.constant 0 : i32
    %c0_i32_1 = arith.constant 0 : i32
    return %c0_i32, %c0_i32_0 : i32, i32
  }
  func.func @transform_3(%arg0: i32) -> (i32, i32) {
    %c0_i32 = arith.constant 0 : i32
    %c0_i32_0 = arith.constant 0 : i32
    return %arg0, %c0_i32 : i32, i32
  }
}

module attributes {stable_mosaic.version = 11 : i64} {
  func.func @_bn_stats_kernel(%arg0: i32, %arg1: memref<32x512xf32, #tpu.memory_space<vmem>>, %arg2: memref<2x512xf32, #tpu.memory_space<vmem>>) attributes {dimension_semantics = [#tpu.dimension_semantics<arbitrary>], iteration_bounds = array<i64: 1>, scalar_prefetch = 0 : i64, scratch_operands = 0 : i64, tpu.core_type = #tpu.core_type<tc>, window_params = [{transform_indices = @transform_0, window_bounds = array<i64: 32, 512>}, {pipeline_mode = #tpu.pipeline_mode<synchronous>, transform_indices = @transform_1, window_bounds = array<i64: 2, 512>}]} {
    %c0 = arith.constant 0 : index
    %c0_0 = arith.constant 0 : index
    %0 = vector.load %arg1[%c0, %c0_0] : memref<32x512xf32, #tpu.memory_space<vmem>>, vector<32x512xf32>
    %cst = arith.constant dense<0.000000e+00> : vector<512xf32>
    %1 = vector.multi_reduction <add>, %0, %cst [0] : vector<32x512xf32> to vector<512xf32>
    %2 = vector.shape_cast %1 : vector<512xf32> to vector<1x512xf32>
    %3 = arith.mulf %0, %0 : vector<32x512xf32>
    %cst_1 = arith.constant dense<0.000000e+00> : vector<512xf32>
    %4 = vector.multi_reduction <add>, %3, %cst_1 [0] : vector<32x512xf32> to vector<512xf32>
    %5 = vector.shape_cast %4 : vector<512xf32> to vector<1x512xf32>
    %6 = tpu.concatenate %2, %5 in 0 : vector<1x512xf32>, vector<1x512xf32> -> vector<2x512xf32>
    %c0_i32 = arith.constant 0 : i32
    %7 = arith.cmpi eq, %arg0, %c0_i32 : i32
    %8 = arith.extui %7 : i1 to i32
    %c0_i32_2 = arith.constant 0 : i32
    %9 = arith.cmpi ne, %8, %c0_i32_2 : i32
    scf.if %9 {
      %c0_5 = arith.constant 0 : index
      %c0_6 = arith.constant 0 : index
      %13 = vector.load %arg2[%c0_5, %c0_6] : memref<2x512xf32, #tpu.memory_space<vmem>>, vector<2x512xf32>
      tpu.vector_store %arg2[%c0_5, %c0_6], %6 {strides = array<i32>} : memref<2x512xf32, #tpu.memory_space<vmem>>, vector<2x512xf32>,
    } else {
    }
    %c0_i32_3 = arith.constant 0 : i32
    %10 = arith.cmpi sgt, %arg0, %c0_i32_3 : i32
    %11 = arith.extui %10 : i1 to i32
    %c0_i32_4 = arith.constant 0 : i32
    %12 = arith.cmpi ne, %11, %c0_i32_4 : i32
    scf.if %12 {
      %c0_5 = arith.constant 0 : index
      %c0_6 = arith.constant 0 : index
      %13 = vector.load %arg2[%c0_5, %c0_6] : memref<2x512xf32, #tpu.memory_space<vmem>>, vector<2x512xf32>
      %14 = arith.addf %13, %6 : vector<2x512xf32>
      %c0_7 = arith.constant 0 : index
      %c0_8 = arith.constant 0 : index
      %15 = vector.load %arg2[%c0_7, %c0_8] : memref<2x512xf32, #tpu.memory_space<vmem>>, vector<2x512xf32>
      tpu.vector_store %arg2[%c0_7, %c0_8], %14 {strides = array<i32>} : memref<2x512xf32, #tpu.memory_space<vmem>>, vector<2x512xf32>,
    } else {
    }
    return
  }
  func.func @transform_0(%arg0: i32) -> (i32, i32) {
    %c0_i32 = arith.constant 0 : i32
    %c0_i32_0 = arith.constant 0 : i32
    return %arg0, %c0_i32 : i32, i32
  }
  func.func @transform_1(%arg0: i32) -> (i32, i32) {
    %c0_i32 = arith.constant 0 : i32
    %c0_i32_0 = arith.constant 0 : i32
    %c0_i32_1 = arith.constant 0 : i32
    return %c0_i32, %c0_i32_0 : i32, i32
  }
}

module attributes {stable_mosaic.version = 11 : i64} {
  func.func @_fused_matmul_kernel(%arg0: i32, %arg1: memref<2x32xf32, #tpu.memory_space<vmem>>, %arg2: memref<512x32xf32, #tpu.memory_space<vmem>>, %arg3: memref<32x256xbf16, #tpu.memory_space<vmem>>, %arg4: memref<512x256xf32, #tpu.memory_space<vmem>>) attributes {dimension_semantics = [#tpu.dimension_semantics<parallel>], iteration_bounds = array<i64: 1>, scalar_prefetch = 0 : i64, scratch_operands = 0 : i64, tpu.core_type = #tpu.core_type<tc>, window_params = [{pipeline_mode = #tpu.pipeline_mode<synchronous>, transform_indices = @transform_0, window_bounds = array<i64: 2, 32>}, {transform_indices = @transform_1, window_bounds = array<i64: 512, 32>}, {pipeline_mode = #tpu.pipeline_mode<synchronous>, transform_indices = @transform_2, window_bounds = array<i64: 32, 256>}, {transform_indices = @transform_3, window_bounds = array<i64: 512, 256>}]} {
    %c0 = arith.constant 0 : index
    %c0_0 = arith.constant 0 : index
    %0 = vector.load %arg1[%c0, %c0_0] : memref<2x32xf32, #tpu.memory_space<vmem>>, vector<2x32xf32>
    %c0_1 = arith.constant 0 : index
    %c0_2 = arith.constant 0 : index
    %1 = vector.load %arg2[%c0_1, %c0_2] : memref<512x32xf32, #tpu.memory_space<vmem>>, vector<512x32xf32>
    %2 = vector.extract_strided_slice %0 {offsets = [0, 0], sizes = [1, 32], strides = [1, 1]} : vector<2x32xf32> to vector<1x32xf32>
    %3 = vector.broadcast %2 : vector<1x32xf32> to vector<512x32xf32>
    %4 = arith.mulf %1, %3 : vector<512x32xf32>
    %5 = vector.extract_strided_slice %0 {offsets = [1, 0], sizes = [1, 32], strides = [1, 1]} : vector<2x32xf32> to vector<1x32xf32>
    %6 = vector.broadcast %5 : vector<1x32xf32> to vector<512x32xf32>
    %7 = arith.addf %4, %6 : vector<512x32xf32>
    %cst = arith.constant 0.000000e+00 : f32
    %8 = vector.broadcast %cst : f32 to vector<512x32xf32>
    %9 = arith.maximumf %7, %8 : vector<512x32xf32>
    %10 = arith.truncf %9 : vector<512x32xf32> to vector<512x32xbf16>
    %c0_3 = arith.constant 0 : index
    %c0_4 = arith.constant 0 : index
    %11 = vector.load %arg3[%c0_3, %c0_4] : memref<32x256xbf16, #tpu.memory_space<vmem>>, vector<32x256xbf16>
    %cst_5 = arith.constant dense<0.000000e+00> : vector<512x256xf32>
    %12 = tpu.matmul %10, %11, %cst_5 {dimension_numbers = #tpu.dot_dimension_numbers<[1], [0], [0], [1], [0, 0, 1, 1], [], []>} : vector<512x32xbf16>, vector<32x256xbf16>, vector<512x256xf32> -> vector<512x256xf32>
    %c0_6 = arith.constant 0 : index
    %c0_7 = arith.constant 0 : index
    %13 = vector.load %arg4[%c0_6, %c0_7] : memref<512x256xf32, #tpu.memory_space<vmem>>, vector<512x256xf32>
    tpu.vector_store %arg4[%c0_6, %c0_7], %12 {strides = array<i32>} : memref<512x256xf32, #tpu.memory_space<vmem>>, vector<512x256xf32>,
    return
  }
  func.func @transform_0(%arg0: i32) -> (i32, i32) {
    %c0_i32 = arith.constant 0 : i32
    %c0_i32_0 = arith.constant 0 : i32
    %c0_i32_1 = arith.constant 0 : i32
    return %c0_i32, %c0_i32_0 : i32, i32
  }
  func.func @transform_1(%arg0: i32) -> (i32, i32) {
    %c0_i32 = arith.constant 0 : i32
    %c0_i32_0 = arith.constant 0 : i32
    return %arg0, %c0_i32 : i32, i32
  }
  func.func @transform_2(%arg0: i32) -> (i32, i32) {
    %c0_i32 = arith.constant 0 : i32
    %c0_i32_0 = arith.constant 0 : i32
    %c0_i32_1 = arith.constant 0 : i32
    return %c0_i32, %c0_i32_0 : i32, i32
  }
  func.func @transform_3(%arg0: i32) -> (i32, i32) {
    %c0_i32 = arith.constant 0 : i32
    %c0_i32_0 = arith.constant 0 : i32
    return %arg0, %c0_i32 : i32, i32
  }
}

module attributes {stable_mosaic.version = 11 : i64} {
  func.func @_bn_stats_kernel(%arg0: i32, %arg1: memref<64x512xf32, #tpu.memory_space<vmem>>, %arg2: memref<2x512xf32, #tpu.memory_space<vmem>>) attributes {dimension_semantics = [#tpu.dimension_semantics<arbitrary>], iteration_bounds = array<i64: 1>, scalar_prefetch = 0 : i64, scratch_operands = 0 : i64, tpu.core_type = #tpu.core_type<tc>, window_params = [{transform_indices = @transform_0, window_bounds = array<i64: 64, 512>}, {pipeline_mode = #tpu.pipeline_mode<synchronous>, transform_indices = @transform_1, window_bounds = array<i64: 2, 512>}]} {
    %c0 = arith.constant 0 : index
    %c0_0 = arith.constant 0 : index
    %0 = vector.load %arg1[%c0, %c0_0] : memref<64x512xf32, #tpu.memory_space<vmem>>, vector<64x512xf32>
    %cst = arith.constant dense<0.000000e+00> : vector<512xf32>
    %1 = vector.multi_reduction <add>, %0, %cst [0] : vector<64x512xf32> to vector<512xf32>
    %2 = vector.shape_cast %1 : vector<512xf32> to vector<1x512xf32>
    %3 = arith.mulf %0, %0 : vector<64x512xf32>
    %cst_1 = arith.constant dense<0.000000e+00> : vector<512xf32>
    %4 = vector.multi_reduction <add>, %3, %cst_1 [0] : vector<64x512xf32> to vector<512xf32>
    %5 = vector.shape_cast %4 : vector<512xf32> to vector<1x512xf32>
    %6 = tpu.concatenate %2, %5 in 0 : vector<1x512xf32>, vector<1x512xf32> -> vector<2x512xf32>
    %c0_i32 = arith.constant 0 : i32
    %7 = arith.cmpi eq, %arg0, %c0_i32 : i32
    %8 = arith.extui %7 : i1 to i32
    %c0_i32_2 = arith.constant 0 : i32
    %9 = arith.cmpi ne, %8, %c0_i32_2 : i32
    scf.if %9 {
      %c0_5 = arith.constant 0 : index
      %c0_6 = arith.constant 0 : index
      %13 = vector.load %arg2[%c0_5, %c0_6] : memref<2x512xf32, #tpu.memory_space<vmem>>, vector<2x512xf32>
      tpu.vector_store %arg2[%c0_5, %c0_6], %6 {strides = array<i32>} : memref<2x512xf32, #tpu.memory_space<vmem>>, vector<2x512xf32>,
    } else {
    }
    %c0_i32_3 = arith.constant 0 : i32
    %10 = arith.cmpi sgt, %arg0, %c0_i32_3 : i32
    %11 = arith.extui %10 : i1 to i32
    %c0_i32_4 = arith.constant 0 : i32
    %12 = arith.cmpi ne, %11, %c0_i32_4 : i32
    scf.if %12 {
      %c0_5 = arith.constant 0 : index
      %c0_6 = arith.constant 0 : index
      %13 = vector.load %arg2[%c0_5, %c0_6] : memref<2x512xf32, #tpu.memory_space<vmem>>, vector<2x512xf32>
      %14 = arith.addf %13, %6 : vector<2x512xf32>
      %c0_7 = arith.constant 0 : index
      %c0_8 = arith.constant 0 : index
      %15 = vector.load %arg2[%c0_7, %c0_8] : memref<2x512xf32, #tpu.memory_space<vmem>>, vector<2x512xf32>
      tpu.vector_store %arg2[%c0_7, %c0_8], %14 {strides = array<i32>} : memref<2x512xf32, #tpu.memory_space<vmem>>, vector<2x512xf32>,
    } else {
    }
    return
  }
  func.func @transform_0(%arg0: i32) -> (i32, i32) {
    %c0_i32 = arith.constant 0 : i32
    %c0_i32_0 = arith.constant 0 : i32
    return %arg0, %c0_i32 : i32, i32
  }
  func.func @transform_1(%arg0: i32) -> (i32, i32) {
    %c0_i32 = arith.constant 0 : i32
    %c0_i32_0 = arith.constant 0 : i32
    %c0_i32_1 = arith.constant 0 : i32
    return %c0_i32, %c0_i32_0 : i32, i32
  }
}

module attributes {stable_mosaic.version = 11 : i64} {
  func.func @_fused_matmul_kernel(%arg0: i32, %arg1: memref<2x16xf32, #tpu.memory_space<vmem>>, %arg2: memref<2048x16xf32, #tpu.memory_space<vmem>>, %arg3: memref<16x128xbf16, #tpu.memory_space<vmem>>, %arg4: memref<2048x128xf32, #tpu.memory_space<vmem>>) attributes {dimension_semantics = [#tpu.dimension_semantics<parallel>], iteration_bounds = array<i64: 1>, scalar_prefetch = 0 : i64, scratch_operands = 0 : i64, tpu.core_type = #tpu.core_type<tc>, window_params = [{pipeline_mode = #tpu.pipeline_mode<synchronous>, transform_indices = @transform_0, window_bounds = array<i64: 2, 16>}, {transform_indices = @transform_1, window_bounds = array<i64: 2048, 16>}, {pipeline_mode = #tpu.pipeline_mode<synchronous>, transform_indices = @transform_2, window_bounds = array<i64: 16, 128>}, {transform_indices = @transform_3, window_bounds = array<i64: 2048, 128>}]} {
    %c0 = arith.constant 0 : index
    %c0_0 = arith.constant 0 : index
    %0 = vector.load %arg1[%c0, %c0_0] : memref<2x16xf32, #tpu.memory_space<vmem>>, vector<2x16xf32>
    %c0_1 = arith.constant 0 : index
    %c0_2 = arith.constant 0 : index
    %1 = vector.load %arg2[%c0_1, %c0_2] : memref<2048x16xf32, #tpu.memory_space<vmem>>, vector<2048x16xf32>
    %2 = vector.extract_strided_slice %0 {offsets = [0, 0], sizes = [1, 16], strides = [1, 1]} : vector<2x16xf32> to vector<1x16xf32>
    %3 = vector.broadcast %2 : vector<1x16xf32> to vector<2048x16xf32>
    %4 = arith.mulf %1, %3 : vector<2048x16xf32>
    %5 = vector.extract_strided_slice %0 {offsets = [1, 0], sizes = [1, 16], strides = [1, 1]} : vector<2x16xf32> to vector<1x16xf32>
    %6 = vector.broadcast %5 : vector<1x16xf32> to vector<2048x16xf32>
    %7 = arith.addf %4, %6 : vector<2048x16xf32>
    %cst = arith.constant 0.000000e+00 : f32
    %8 = vector.broadcast %cst : f32 to vector<2048x16xf32>
    %9 = arith.maximumf %7, %8 : vector<2048x16xf32>
    %10 = arith.truncf %9 : vector<2048x16xf32> to vector<2048x16xbf16>
    %c0_3 = arith.constant 0 : index
    %c0_4 = arith.constant 0 : index
    %11 = vector.load %arg3[%c0_3, %c0_4] : memref<16x128xbf16, #tpu.memory_space<vmem>>, vector<16x128xbf16>
    %cst_5 = arith.constant dense<0.000000e+00> : vector<2048x128xf32>
    %12 = tpu.matmul %10, %11, %cst_5 {dimension_numbers = #tpu.dot_dimension_numbers<[1], [0], [0], [1], [0, 0, 1, 1], [], []>} : vector<2048x16xbf16>, vector<16x128xbf16>, vector<2048x128xf32> -> vector<2048x128xf32>
    %c0_6 = arith.constant 0 : index
    %c0_7 = arith.constant 0 : index
    %13 = vector.load %arg4[%c0_6, %c0_7] : memref<2048x128xf32, #tpu.memory_space<vmem>>, vector<2048x128xf32>
    tpu.vector_store %arg4[%c0_6, %c0_7], %12 {strides = array<i32>} : memref<2048x128xf32, #tpu.memory_space<vmem>>, vector<2048x128xf32>,
    return
  }
  func.func @transform_0(%arg0: i32) -> (i32, i32) {
    %c0_i32 = arith.constant 0 : i32
    %c0_i32_0 = arith.constant 0 : i32
    %c0_i32_1 = arith.constant 0 : i32
    return %c0_i32, %c0_i32_0 : i32, i32
  }
  func.func @transform_1(%arg0: i32) -> (i32, i32) {
    %c0_i32 = arith.constant 0 : i32
    %c0_i32_0 = arith.constant 0 : i32
    return %arg0, %c0_i32 : i32, i32
  }
  func.func @transform_2(%arg0: i32) -> (i32, i32) {
    %c0_i32 = arith.constant 0 : i32
    %c0_i32_0 = arith.constant 0 : i32
    %c0_i32_1 = arith.constant 0 : i32
    return %c0_i32, %c0_i32_0 : i32, i32
  }
  func.func @transform_3(%arg0: i32) -> (i32, i32) {
    %c0_i32 = arith.constant 0 : i32
    %c0_i32_0 = arith.constant 0 : i32
    return %arg0, %c0_i32 : i32, i32
  }
}

module attributes {stable_mosaic.version = 11 : i64} {
  func.func @_affine_act_kernel(%arg0: i32, %arg1: memref<2x384xf32, #tpu.memory_space<vmem>>, %arg2: memref<64x384xf32, #tpu.memory_space<vmem>>, %arg3: memref<64x384xf32, #tpu.memory_space<vmem>>) attributes {dimension_semantics = [#tpu.dimension_semantics<parallel>], iteration_bounds = array<i64: 1>, scalar_prefetch = 0 : i64, scratch_operands = 0 : i64, tpu.core_type = #tpu.core_type<tc>, window_params = [{pipeline_mode = #tpu.pipeline_mode<synchronous>, transform_indices = @transform_0, window_bounds = array<i64: 2, 384>}, {transform_indices = @transform_1, window_bounds = array<i64: 64, 384>}, {transform_indices = @transform_2, window_bounds = array<i64: 64, 384>}]} {
    %c0 = arith.constant 0 : index
    %c0_0 = arith.constant 0 : index
    %0 = vector.load %arg1[%c0, %c0_0] : memref<2x384xf32, #tpu.memory_space<vmem>>, vector<2x384xf32>
    %c0_1 = arith.constant 0 : index
    %c0_2 = arith.constant 0 : index
    %1 = vector.load %arg2[%c0_1, %c0_2] : memref<64x384xf32, #tpu.memory_space<vmem>>, vector<64x384xf32>
    %2 = vector.extract_strided_slice %0 {offsets = [0, 0], sizes = [1, 384], strides = [1, 1]} : vector<2x384xf32> to vector<1x384xf32>
    %3 = vector.broadcast %2 : vector<1x384xf32> to vector<64x384xf32>
    %4 = arith.mulf %1, %3 : vector<64x384xf32>
    %5 = vector.extract_strided_slice %0 {offsets = [1, 0], sizes = [1, 384], strides = [1, 1]} : vector<2x384xf32> to vector<1x384xf32>
    %6 = vector.broadcast %5 : vector<1x384xf32> to vector<64x384xf32>
    %7 = arith.addf %4, %6 : vector<64x384xf32>
    %8 = math.tanh %7 : vector<64x384xf32>
    %c0_3 = arith.constant 0 : index
    %c0_4 = arith.constant 0 : index
    %9 = vector.load %arg3[%c0_3, %c0_4] : memref<64x384xf32, #tpu.memory_space<vmem>>, vector<64x384xf32>
    tpu.vector_store %arg3[%c0_3, %c0_4], %8 {strides = array<i32>} : memref<64x384xf32, #tpu.memory_space<vmem>>, vector<64x384xf32>,
    return
  }
  func.func @transform_0(%arg0: i32) -> (i32, i32) {
    %c0_i32 = arith.constant 0 : i32
    %c0_i32_0 = arith.constant 0 : i32
    %c0_i32_1 = arith.constant 0 : i32
    return %c0_i32, %c0_i32_0 : i32, i32
  }
  func.func @transform_1(%arg0: i32) -> (i32, i32) {
    %c0_i32 = arith.constant 0 : i32
    %c0_i32_0 = arith.constant 0 : i32
    return %arg0, %c0_i32 : i32, i32
  }
  func.func @transform_2(%arg0: i32) -> (i32, i32) {
    %c0_i32 = arith.constant 0 : i32
    %c0_i32_0 = arith.constant 0 : i32
    return %arg0, %c0_i32 : i32, i32
  }
}

</mosaic_0001>

<llo_original>
// kernel: generator_forward.10
$region0: #{generator_forward.10}
  #allocation0 [shape = 'u32[]', space=smem, size = 0x4, offset = 0x4, fixed_abs, tag = 'smem constant byte address 0x4 - core index']
  #allocation1 [shape = 'u32[144,128]{1,0:T(1,128)}', space=vmem, size = 0x12000, scoped, tag = 'internal scratch']
  %s0 = inlined_call_operand.hbm [shape: f32[2,16], index: 0, kind: input, shape index: {}]
  %s1 = inlined_call_operand.vmem [shape: f32[16,16], index: 1, kind: input, shape index: {}]
  %s2 = inlined_call_operand.vmem [shape: bf16[16,2048], index: 2, kind: input, shape index: {}]
  %s3 = inlined_call_operand.vmem [shape: f32[16,2048], index: 3, kind: output, shape index: {}]
  %s4 = sld [smem:[#allocation0]]
  $region26: #{generator_forward.10} parent=0
    _
  %s6 = ssub.s32 1, %s4
  %s7 = scalar_select 0, %s6, %s4
  $region1: #{generator_forward.10} parent=0
    #allocation2 [shape = 'u8[1024]{0}', space=vmem, size = 0x400, scoped, tag = 'input window, operand 0, single buffered']
    #allocation3 [shape = 's32[1]{0}', space=sflag, size = 0x4, scoped, tag = 'scoped memory for generator_forward.10']
    %8 = vsyncpa [#allocation3], 0
    // Predicated region
    $region2: #{generator_forward.10} parent=1 // pred_check
      _
    $region3: #{generator_forward.10} parent=1 // pred_check_branch
      %10 = sbr.rel (0) target = $region5
    $region4: #{generator_forward.10} parent=1 // pred_region
      %s12 = ssub.s32 32, 32
      %13 = vsyncadd [#allocation3], %s12
      %s15 = sshll.u32 [#allocation2], 4
      %s16 = int_to_ptr.vmem [resolvable:$true] %s15
      %18 = dma.hbm_to_vmem [thread:$0]  %s0, 32, %s16, [#allocation3]
    $region5: #{generator_forward.10} parent=1 // pred_fallthru
      _
    // Predicated region
    $region6: #{generator_forward.10} parent=1 // pred_check
      _
    $region7: #{generator_forward.10} parent=1 // pred_check_branch
      %20 = sbr.rel (0) target = $region9
    $region8: #{generator_forward.10} parent=1 // pred_region
      _
    $region9: #{generator_forward.10} parent=1 // pred_fallthru
      _
    // Predicated region
    $region10: #{generator_forward.10} parent=1 // pred_check
      _
    $region11: #{generator_forward.10} parent=1 // pred_check_branch
      %22 = sbr.rel (0) target = $region13
    $region12: #{generator_forward.10} parent=1 // pred_region
      _
    $region13: #{generator_forward.10} parent=1 // pred_fallthru
      _
    // Predicated region
    $region14: #{generator_forward.10} parent=1 // pred_check
      _
    $region15: #{generator_forward.10} parent=1 // pred_check_branch
      %24 = sbr.rel (0) target = $region17
    $region16: #{generator_forward.10} parent=1 // pred_region
      %25 = dma.done [#allocation3], 32
    $region17: #{generator_forward.10} parent=1 // pred_fallthru
      _
    %v27 = vld [vmem:[#allocation2] sm:$0x3]
    %v28 = vld [vmem:[%s1] sm:$0xff]
    %v29 = vld [vmem:[%s1 + $0x8] sm:$0xff]
    %v30 = vlaneseq
    %v31 = vshrl.u32 %v30, 7
    %v32 = vsub.s32 0, %v31
    %v33 = vrot.slane %v27, %v32
    %v34 = vmul.f32 %v28, %v33
    %v35 = vmul.f32 %v29, %v33
    %v36 = vlaneseq
    %v37 = vshrl.u32 %v36, 7
    %v38 = vsub.s32 1, %v37
    %v39 = vrot.slane %v27, %v38
    %v40 = vadd.f32 %v34, %v39
    %v41 = vadd.f32 %v35, %v39
    %v42 = vpack.c.bf16 %v41, %v40
    %v43 = vld [vmem:[%s2] sm:$0xff]
    %v44 = vld [vmem:[%s2 + $0x8] sm:$0xff]
    %v45 = vld [vmem:[%s2 + $0x10] sm:$0xff]
    %v46 = vld [vmem:[%s2 + $0x18] sm:$0xff]
    %v47 = vld [vmem:[%s2 + $0x20] sm:$0xff]
    %v48 = vld [vmem:[%s2 + $0x28] sm:$0xff]
    %v49 = vld [vmem:[%s2 + $0x30] sm:$0xff]
    %v50 = vld [vmem:[%s2 + $0x38] sm:$0xff]
    %v51 = vld [vmem:[%s2 + $0x40] sm:$0xff]
    %v52 = vld [vmem:[%s2 + $0x48] sm:$0xff]
    %v53 = vld [vmem:[%s2 + $0x50] sm:$0xff]
    %v54 = vld [vmem:[%s2 + $0x58] sm:$0xff]
    %v55 = vld [vmem:[%s2 + $0x60] sm:$0xff]
    %v56 = vld [vmem:[%s2 + $0x68] sm:$0xff]
    %v57 = vld [vmem:[%s2 + $0x70] sm:$0xff]
    %v58 = vld [vmem:[%s2 + $0x78] sm:$0xff]
    %v75 = vunpack.c.l.b16 %v43
    %v76 = vunpack.c.h.b16 %v43
    %v77 = vunpack.c.l.b16 %v44
    %v78 = vunpack.c.h.b16 %v44
    %v79 = vunpack.c.l.b16 %v45
    %v80 = vunpack.c.h.b16 %v45
    %v81 = vunpack.c.l.b16 %v46
    %v82 = vunpack.c.h.b16 %v46
    %v83 = vunpack.c.l.b16 %v47
    %v84 = vunpack.c.h.b16 %v47
    %v85 = vunpack.c.l.b16 %v48
    %v86 = vunpack.c.h.b16 %v48
    %v87 = vunpack.c.l.b16 %v49
    %v88 = vunpack.c.h.b16 %v49
    %v89 = vunpack.c.l.b16 %v50
    %v90 = vunpack.c.h.b16 %v50
    %v91 = vunpack.c.l.b16 %v51
    %v92 = vunpack.c.h.b16 %v51
    %v93 = vunpack.c.l.b16 %v52
    %v94 = vunpack.c.h.b16 %v52
    %v95 = vunpack.c.l.b16 %v53
    %v96 = vunpack.c.h.b16 %v53
    %v97 = vunpack.c.l.b16 %v54
    %v98 = vunpack.c.h.b16 %v54
    %v99 = vunpack.c.l.b16 %v55
    %v100 = vunpack.c.h.b16 %v55
    %v101 = vunpack.c.l.b16 %v56
    %v102 = vunpack.c.h.b16 %v56
    %v103 = vunpack.c.l.b16 %v57
    %v104 = vunpack.c.h.b16 %v57
    %v105 = vunpack.c.l.b16 %v58
    %v106 = vunpack.c.h.b16 %v58
    %v107 = vpack.c.b16 %v91, %v75
    %v108 = vpack.c.b16 %v92, %v76
    %v109 = vpack.c.b16 %v93, %v77
    %v110 = vpack.c.b16 %v94, %v78
    %v111 = vpack.c.b16 %v95, %v79
    %v112 = vpack.c.b16 %v96, %v80
    %v113 = vpack.c.b16 %v97, %v81
    %v114 = vpack.c.b16 %v98, %v82
    %v115 = vpack.c.b16 %v99, %v83
    %v116 = vpack.c.b16 %v100, %v84
    %v117 = vpack.c.b16 %v101, %v85
    %v118 = vpack.c.b16 %v102, %v86
    %v119 = vpack.c.b16 %v103, %v87
    %v120 = vpack.c.b16 %v104, %v88
    %v121 = vpack.c.b16 %v105, %v89
    %v122 = vpack.c.b16 %v106, %v90
    %vm139 = vcmask 130048
    %v141 = vsel %vm139, %v42, 0
    %143 = vmatprep.subr.bf16.mxu0 %v108
    %144 = vmatpush1.bf16.msra.mxu0 %v107
    %145 = vmatprep.subr.bf16.mxu0 0
    %146 = vmatpush1.bf16.msra.mxu0 0
    %147 = vmatprep.subr.bf16.mxu0 0
    %148 = vmatpush1.bf16.msra.mxu0 0
    %149 = vmatprep.subr.bf16.mxu0 0
    %150 = vmatpush1.bf16.msra.mxu0 0
    %151 = vmatprep.subr.bf16.mxu0 0
    %152 = vmatpush1.bf16.msra.mxu0 0
    %153 = vmatprep.subr.bf16.mxu0 0
    %154 = vmatpush1.bf16.msra.mxu0 0
    %155 = vmatprep.subr.bf16.mxu0 0
    %156 = vmatpush1.bf16.msra.mxu0 0
    %157 = vmatprep.subr.bf16.mxu0 0
    %158 = vmatpush1.bf16.msra.mxu0 0
    %159 = vmatprep.subr.bf16.mxu0 0
    %160 = vmatpush1.bf16.msra.mxu0 0
    %161 = vmatprep.subr.bf16.mxu0 0
    %162 = vmatpush1.bf16.msra.mxu0 0
    %163 = vmatprep.subr.bf16.mxu0 0
    %164 = vmatpush1.bf16.msra.mxu0 0
    %165 = vmatprep.subr.bf16.mxu0 0
    %166 = vmatpush1.bf16.msra.mxu0 0
    %167 = vmatprep.subr.bf16.mxu0 0
    %168 = vmatpush1.bf16.msra.mxu0 0
    %169 = vmatprep.subr.bf16.mxu0 0
    %170 = vmatpush1.bf16.msra.mxu0 0
    %171 = vmatprep.subr.bf16.mxu0 0
    %172 = vmatpush1.bf16.msra.mxu0 0
    %173 = vmatprep.subr.bf16.mxu0 0
    %174 = vmatpush1.bf16.msra.mxu0 0
    %175 = vmatprep.mubr.bf16.mxu0 0
    %176 = vmatmul.mubr.bf16.gmra.mrb[0].mxu0 %v141
    %v177 = vpop.f32.mrb[0].mxu0
    %v178 = vadd.f32 0.0, %v177
    %v179 = vpop.f32.mrb[0].mxu0
    %v180 = vadd.f32 0.0, %v179
    %v181 = vpop.f32.mrb[0].mxu0
    %v182 = vadd.f32 0.0, %v181
    %v183 = vpop.f32.mrb[0].mxu0
    %v184 = vadd.f32 0.0, %v183
    %185 = vdwg.mxu0
    %186 = vmatprep.subr.bf16.mxu0 %v110
    %187 = vmatpush1.bf16.msra.mxu0 %v109
    %188 = vmatprep.subr.bf16.mxu0 0
    %189 = vmatpush1.bf16.msra.mxu0 0
    %190 = vmatprep.subr.bf16.mxu0 0
    %191 = vmatpush1.bf16.msra.mxu0 0
    %192 = vmatprep.subr.bf16.mxu0 0
    %193 = vmatpush1.bf16.msra.mxu0 0
    %194 = vmatprep.subr.bf16.mxu0 0
    %195 = vmatpush1.bf16.msra.mxu0 0
    %196 = vmatprep.subr.bf16.mxu0 0
    %197 = vmatpush1.bf16.msra.mxu0 0
    %198 = vmatprep.subr.bf16.mxu0 0
    %199 = vmatpush1.bf16.msra.mxu0 0
    %200 = vmatprep.subr.bf16.mxu0 0
    %201 = vmatpush1.bf16.msra.mxu0 0
    %202 = vmatprep.subr.bf16.mxu0 0
    %203 = vmatpush1.bf16.msra.mxu0 0
    %204 = vmatprep.subr.bf16.mxu0 0
    %205 = vmatpush1.bf16.msra.mxu0 0
    %206 = vmatprep.subr.bf16.mxu0 0
    %207 = vmatpush1.bf16.msra.mxu0 0
    %208 = vmatprep.subr.bf16.mxu0 0
    %209 = vmatpush1.bf16.msra.mxu0 0
    %210 = vmatprep.subr.bf16.mxu0 0
    %211 = vmatpush1.bf16.msra.mxu0 0
    %212 = vmatprep.subr.bf16.mxu0 0
    %213 = vmatpush1.bf16.msra.mxu0 0
    %214 = vmatprep.subr.bf16.mxu0 0
    %215 = vmatpush1.bf16.msra.mxu0 0
    %216 = vmatprep.subr.bf16.mxu0 0
    %217 = vmatpush1.bf16.msra.mxu0 0
    %218 = vmatprep.mubr.bf16.mxu0 0
    %219 = vmatmul.mubr.bf16.gmra.mrb[0].mxu0 %v141
    %v220 = vpop.f32.mrb[0].mxu0
    %v221 = vadd.f32 0.0, %v220
    %v222 = vpop.f32.mrb[0].mxu0
    %v223 = vadd.f32 0.0, %v222
    %v224 = vpop.f32.mrb[0].mxu0
    %v225 = vadd.f32 0.0, %v224
    %v226 = vpop.f32.mrb[0].mxu0
    %v227 = vadd.f32 0.0, %v226
    %228 = vdwg.mxu0
    %229 = vmatprep.subr.bf16.mxu0 %v112
    %230 = vmatpush1.bf16.msra.mxu0 %v111
    %231 = vmatprep.subr.bf16.mxu0 0
    %232 = vmatpush1.bf16.msra.mxu0 0
    %233 = vmatprep.subr.bf16.mxu0 0
    %234 = vmatpush1.bf16.msra.mxu0 0
    %235 = vmatprep.subr.bf16.mxu0 0
    %236 = vmatpush1.bf16.msra.mxu0 0
    %237 = vmatprep.subr.bf16.mxu0 0
    %238 = vmatpush1.bf16.msra.mxu0 0
    %239 = vmatprep.subr.bf16.mxu0 0
    %240 = vmatpush1.bf16.msra.mxu0 0
    %241 = vmatprep.subr.bf16.mxu0 0
    %242 = vmatpush1.bf16.msra.mxu0 0
    %243 = vmatprep.subr.bf16.mxu0 0
    %244 = vmatpush1.bf16.msra.mxu0 0
    %245 = vmatprep.subr.bf16.mxu0 0
    %246 = vmatpush1.bf16.msra.mxu0 0
    %247 = vmatprep.subr.bf16.mxu0 0
    %248 = vmatpush1.bf16.msra.mxu0 0
    %249 = vmatprep.subr.bf16.mxu0 0
    %250 = vmatpush1.bf16.msra.mxu0 0
    %251 = vmatprep.subr.bf16.mxu0 0
    %252 = vmatpush1.bf16.msra.mxu0 0
    %253 = vmatprep.subr.bf16.mxu0 0
    %254 = vmatpush1.bf16.msra.mxu0 0
    %255 = vmatprep.subr.bf16.mxu0 0
    %256 = vmatpush1.bf16.msra.mxu0 0
    %257 = vmatprep.subr.bf16.mxu0 0
    %258 = vmatpush1.bf16.msra.mxu0 0
    %259 = vmatprep.subr.bf16.mxu0 0
    %260 = vmatpush1.bf16.msra.mxu0 0
    %261 = vmatprep.mubr.bf16.mxu0 0
    %262 = vmatmul.mubr.bf16.gmra.mrb[0].mxu0 %v141
    %v263 = vpop.f32.mrb[0].mxu0
    %v264 = vadd.f32 0.0, %v263
    %v265 = vpop.f32.mrb[0].mxu0
    %v266 = vadd.f32 0.0, %v265
    %v267 = vpop.f32.mrb[0].mxu0
    %v268 = vadd.f32 0.0, %v267
    %v269 = vpop.f32.mrb[0].mxu0
    %v270 = vadd.f32 0.0, %v269
    %271 = vdwg.mxu0
    %272 = vmatprep.subr.bf16.mxu0 %v114
    %273 = vmatpush1.bf16.msra.mxu0 %v113
    %274 = vmatprep.subr.bf16.mxu0 0
    %275 = vmatpush1.bf16.msra.mxu0 0
    %276 = vmatprep.subr.bf16.mxu0 0
    %277 = vmatpush1.bf16.msra.mxu0 0
    %278 = vmatprep.subr.bf16.mxu0 0
    %279 = vmatpush1.bf16.msra.mxu0 0
    %280 = vmatprep.subr.bf16.mxu0 0
    %281 = vmatpush1.bf16.msra.mxu0 0
    %282 = vmatprep.subr.bf16.mxu0 0
    %283 = vmatpush1.bf16.msra.mxu0 0
    %284 = vmatprep.subr.bf16.mxu0 0
    %285 = vmatpush1.bf16.msra.mxu0 0
    %286 = vmatprep.subr.bf16.mxu0 0
    %287 = vmatpush1.bf16.msra.mxu0 0
    %288 = vmatprep.subr.bf16.mxu0 0
    %289 = vmatpush1.bf16.msra.mxu0 0
    %290 = vmatprep.subr.bf16.mxu0 0
    %291 = vmatpush1.bf16.msra.mxu0 0
    %292 = vmatprep.subr.bf16.mxu0 0
    %293 = vmatpush1.bf16.msra.mxu0 0
    %294 = vmatprep.subr.bf16.mxu0 0
    %295 = vmatpush1.bf16.msra.mxu0 0
    %296 = vmatprep.subr.bf16.mxu0 0
    %297 = vmatpush1.bf16.msra.mxu0 0
    %298 = vmatprep.subr.bf16.mxu0 0
    %299 = vmatpush1.bf16.msra.mxu0 0
    %300 = vmatprep.subr.bf16.mxu0 0
    %301 = vmatpush1.bf16.msra.mxu0 0
    %302 = vmatprep.subr.bf16.mxu0 0
    %303 = vmatpush1.bf16.msra.mxu0 0
    %304 = vmatprep.mubr.bf16.mxu0 0
    %305 = vmatmul.mubr.bf16.gmra.mrb[0].mxu0 %v141
    %v306 = vpop.f32.mrb[0].mxu0
    %v307 = vadd.f32 0.0, %v306
    %v308 = vpop.f32.mrb[0].mxu0
    %v309 = vadd.f32 0.0, %v308
    %v310 = vpop.f32.mrb[0].mxu0
    %v311 = vadd.f32 0.0, %v310
    %v312 = vpop.f32.mrb[0].mxu0
    %v313 = vadd.f32 0.0, %v312
    %314 = vdwg.mxu0
    %315 = vmatprep.subr.bf16.mxu0 %v116
    %316 = vmatpush1.bf16.msra.mxu0 %v115
    %317 = vmatprep.subr.bf16.mxu0 0
    %318 = vmatpush1.bf16.msra.mxu0 0
    %319 = vmatprep.subr.bf16.mxu0 0
    %320 = vmatpush1.bf16.msra.mxu0 0
    %321 = vmatprep.subr.bf16.mxu0 0
    %322 = vmatpush1.bf16.msra.mxu0 0
    %323 = vmatprep.subr.bf16.mxu0 0
    %324 = vmatpush1.bf16.msra.mxu0 0
    %325 = vmatprep.subr.bf16.mxu0 0
    %326 = vmatpush1.bf16.msra.mxu0 0
    %327 = vmatprep.subr.bf16.mxu0 0
    %328 = vmatpush1.bf16.msra.mxu0 0
    %329 = vmatprep.subr.bf16.mxu0 0
    %330 = vmatpush1.bf16.msra.mxu0 0
    %331 = vmatprep.subr.bf16.mxu0 0
    %332 = vmatpush1.bf16.msra.mxu0 0
    %333 = vmatprep.subr.bf16.mxu0 0
    %334 = vmatpush1.bf16.msra.mxu0 0
    %335 = vmatprep.subr.bf16.mxu0 0
    %336 = vmatpush1.bf16.msra.mxu0 0
    %337 = vmatprep.subr.bf16.mxu0 0
    %338 = vmatpush1.bf16.msra.mxu0 0
    %339 = vmatprep.subr.bf16.mxu0 0
    %340 = vmatpush1.bf16.msra.mxu0 0
    %341 = vmatprep.subr.bf16.mxu0 0
    %342 = vmatpush1.bf16.msra.mxu0 0
    %343 = vmatprep.subr.bf16.mxu0 0
    %344 = vmatpush1.bf16.msra.mxu0 0
    %345 = vmatprep.subr.bf16.mxu0 0
    %346 = vmatpush1.bf16.msra.mxu0 0
    %347 = vmatprep.mubr.bf16.mxu0 0
    %348 = vmatmul.mubr.bf16.gmra.mrb[0].mxu0 %v141
    %v349 = vpop.f32.mrb[0].mxu0
    %v350 = vadd.f32 0.0, %v349
    %v351 = vpop.f32.mrb[0].mxu0
    %v352 = vadd.f32 0.0, %v351
    %v353 = vpop.f32.mrb[0].mxu0
    %v354 = vadd.f32 0.0, %v353
    %v355 = vpop.f32.mrb[0].mxu0
    %v356 = vadd.f32 0.0, %v355
    %357 = vdwg.mxu0
    %358 = vmatprep.subr.bf16.mxu0 %v118
    %359 = vmatpush1.bf16.msra.mxu0 %v117
    %360 = vmatprep.subr.bf16.mxu0 0
    %361 = vmatpush1.bf16.msra.mxu0 0
    %362 = vmatprep.subr.bf16.mxu0 0
    %363 = vmatpush1.bf16.msra.mxu0 0
    %364 = vmatprep.subr.bf16.mxu0 0
    %365 = vmatpush1.bf16.msra.mxu0 0
    %366 = vmatprep.subr.bf16.mxu0 0
    %367 = vmatpush1.bf16.msra.mxu0 0
    %368 = vmatprep.subr.bf16.mxu0 0
    %369 = vmatpush1.bf16.msra.mxu0 0
    %370 = vmatprep.subr.bf16.mxu0 0
    %371 = vmatpush1.bf16.msra.mxu0 0
    %372 = vmatprep.subr.bf16.mxu0 0
    %373 = vmatpush1.bf16.msra.mxu0 0
    %374 = vmatprep.subr.bf16.mxu0 0
    %375 = vmatpush1.bf16.msra.mxu0 0
    %376 = vmatprep.subr.bf16.mxu0 0
    %377 = vmatpush1.bf16.msra.mxu0 0
    %378 = vmatprep.subr.bf16.mxu0 0
    %379 = vmatpush1.bf16.msra.mxu0 0
    %380 = vmatprep.subr.bf16.mxu0 0
    %381 = vmatpush1.bf16.msra.mxu0 0
    %382 = vmatprep.subr.bf16.mxu0 0
    %383 = vmatpush1.bf16.msra.mxu0 0
    %384 = vmatprep.subr.bf16.mxu0 0
    %385 = vmatpush1.bf16.msra.mxu0 0
    %386 = vmatprep.subr.bf16.mxu0 0
    %387 = vmatpush1.bf16.msra.mxu0 0
    %388 = vmatprep.subr.bf16.mxu0 0
    %389 = vmatpush1.bf16.msra.mxu0 0
    %390 = vmatprep.mubr.bf16.mxu0 0
    %391 = vmatmul.mubr.bf16.gmra.mrb[0].mxu0 %v141
    %v392 = vpop.f32.mrb[0].mxu0
    %v393 = vadd.f32 0.0, %v392
    %v394 = vpop.f32.mrb[0].mxu0
    %v395 = vadd.f32 0.0, %v394
    %v396 = vpop.f32.mrb[0].mxu0
    %v397 = vadd.f32 0.0, %v396
    %v398 = vpop.f32.mrb[0].mxu0
    %v399 = vadd.f32 0.0, %v398
    %400 = vdwg.mxu0
    %401 = vmatprep.subr.bf16.mxu0 %v120
    %402 = vmatpush1.bf16.msra.mxu0 %v119
    %403 = vmatprep.subr.bf16.mxu0 0
    %404 = vmatpush1.bf16.msra.mxu0 0
    %405 = vmatprep.subr.bf16.mxu0 0
    %406 = vmatpush1.bf16.msra.mxu0 0
    %407 = vmatprep.subr.bf16.mxu0 0
    %408 = vmatpush1.bf16.msra.mxu0 0
    %409 = vmatprep.subr.bf16.mxu0 0
    %410 = vmatpush1.bf16.msra.mxu0 0
    %411 = vmatprep.subr.bf16.mxu0 0
    %412 = vmatpush1.bf16.msra.mxu0 0
    %413 = vmatprep.subr.bf16.mxu0 0
    %414 = vmatpush1.bf16.msra.mxu0 0
    %415 = vmatprep.subr.bf16.mxu0 0
    %416 = vmatpush1.bf16.msra.mxu0 0
    %417 = vmatprep.subr.bf16.mxu0 0
    %418 = vmatpush1.bf16.msra.mxu0 0
    %419 = vmatprep.subr.bf16.mxu0 0
    %420 = vmatpush1.bf16.msra.mxu0 0
    %421 = vmatprep.subr.bf16.mxu0 0
    %422 = vmatpush1.bf16.msra.mxu0 0
    %423 = vmatprep.subr.bf16.mxu0 0
    %424 = vmatpush1.bf16.msra.mxu0 0
    %425 = vmatprep.subr.bf16.mxu0 0
    %426 = vmatpush1.bf16.msra.mxu0 0
    %427 = vmatprep.subr.bf16.mxu0 0
    %428 = vmatpush1.bf16.msra.mxu0 0
    %429 = vmatprep.subr.bf16.mxu0 0
    %430 = vmatpush1.bf16.msra.mxu0 0
    %431 = vmatprep.subr.bf16.mxu0 0
    %432 = vmatpush1.bf16.msra.mxu0 0
    %433 = vmatprep.mubr.bf16.mxu0 0
    %434 = vmatmul.mubr.bf16.gmra.mrb[0].mxu0 %v141
    %v435 = vpop.f32.mrb[0].mxu0
    %v436 = vadd.f32 0.0, %v435
    %v437 = vpop.f32.mrb[0].mxu0
    %v438 = vadd.f32 0.0, %v437
    %v439 = vpop.f32.mrb[0].mxu0
    %v440 = vadd.f32 0.0, %v439
    %v441 = vpop.f32.mrb[0].mxu0
    %v442 = vadd.f32 0.0, %v441
    %443 = vdwg.mxu0
    %444 = vmatprep.subr.bf16.mxu0 %v122
    %445 = vmatpush1.bf16.msra.mxu0 %v121
    %446 = vmatprep.subr.bf16.mxu0 0
    %447 = vmatpush1.bf16.msra.mxu0 0
    %448 = vmatprep.subr.bf16.mxu0 0
    %449 = vmatpush1.bf16.msra.mxu0 0
    %450 = vmatprep.subr.bf16.mxu0 0
    %451 = vmatpush1.bf16.msra.mxu0 0
    %452 = vmatprep.subr.bf16.mxu0 0
    %453 = vmatpush1.bf16.msra.mxu0 0
    %454 = vmatprep.subr.bf16.mxu0 0
    %455 = vmatpush1.bf16.msra.mxu0 0
    %456 = vmatprep.subr.bf16.mxu0 0
    %457 = vmatpush1.bf16.msra.mxu0 0
    %458 = vmatprep.subr.bf16.mxu0 0
    %459 = vmatpush1.bf16.msra.mxu0 0
    %460 = vmatprep.subr.bf16.mxu0 0
    %461 = vmatpush1.bf16.msra.mxu0 0
    %462 = vmatprep.subr.bf16.mxu0 0
    %463 = vmatpush1.bf16.msra.mxu0 0
    %464 = vmatprep.subr.bf16.mxu0 0
    %465 = vmatpush1.bf16.msra.mxu0 0
    %466 = vmatprep.subr.bf16.mxu0 0
    %467 = vmatpush1.bf16.msra.mxu0 0
    %468 = vmatprep.subr.bf16.mxu0 0
    %469 = vmatpush1.bf16.msra.mxu0 0
    %470 = vmatprep.subr.bf16.mxu0 0
    %471 = vmatpush1.bf16.msra.mxu0 0
    %472 = vmatprep.subr.bf16.mxu0 0
    %473 = vmatpush1.bf16.msra.mxu0 0
    %474 = vmatprep.subr.bf16.mxu0 0
    %475 = vmatpush1.bf16.msra.mxu0 0
    %476 = vmatprep.mubr.bf16.mxu0 0
    %477 = vmatmul.mubr.bf16.gmra.mrb[0].mxu0 %v141
    %v478 = vpop.f32.mrb[0].mxu0
    %v479 = vadd.f32 0.0, %v478
    %v480 = vpop.f32.mrb[0].mxu0
    %v481 = vadd.f32 0.0, %v480
    %v482 = vpop.f32.mrb[0].mxu0
    %v483 = vadd.f32 0.0, %v482
    %v484 = vpop.f32.mrb[0].mxu0
    %v485 = vadd.f32 0.0, %v484
    %486 = vdwg.mxu0
    %487 = vst [vmem:[%s3] sm:$0xff] %v178
    %488 = vst [vmem:[%s3 + $0x8] sm:$0xff] %v180
    %489 = vst [vmem:[%s3 + $0x10] sm:$0xff] %v221
    %490 = vst [vmem:[%s3 + $0x18] sm:$0xff] %v223
    %491 = vst [vmem:[%s3 + $0x20] sm:$0xff] %v264
    %492 = vst [vmem:[%s3 + $0x28] sm:$0xff] %v266
    %493 = vst [vmem:[%s3 + $0x30] sm:$0xff] %v307
    %494 = vst [vmem:[%s3 + $0x38] sm:$0xff] %v309
    %495 = vst [vmem:[%s3 + $0x40] sm:$0xff] %v350
    %496 = vst [vmem:[%s3 + $0x48] sm:$0xff] %v352
    %497 = vst [vmem:[%s3 + $0x50] sm:$0xff] %v393
    %498 = vst [vmem:[%s3 + $0x58] sm:$0xff] %v395
    %499 = vst [vmem:[%s3 + $0x60] sm:$0xff] %v436
    %500 = vst [vmem:[%s3 + $0x68] sm:$0xff] %v438
    %501 = vst [vmem:[%s3 + $0x70] sm:$0xff] %v479
    %502 = vst [vmem:[%s3 + $0x78] sm:$0xff] %v481
    %503 = vst [vmem:[%s3 + $0x80] sm:$0xff] %v182
    %504 = vst [vmem:[%s3 + $0x88] sm:$0xff] %v184
    %505 = vst [vmem:[%s3 + $0x90] sm:$0xff] %v225
    %506 = vst [vmem:[%s3 + $0x98] sm:$0xff] %v227
    %507 = vst [vmem:[%s3 + $0xa0] sm:$0xff] %v268
    %508 = vst [vmem:[%s3 + $0xa8] sm:$0xff] %v270
    %509 = vst [vmem:[%s3 + $0xb0] sm:$0xff] %v311
    %510 = vst [vmem:[%s3 + $0xb8] sm:$0xff] %v313
    %511 = vst [vmem:[%s3 + $0xc0] sm:$0xff] %v354
    %512 = vst [vmem:[%s3 + $0xc8] sm:$0xff] %v356
    %513 = vst [vmem:[%s3 + $0xd0] sm:$0xff] %v397
    %514 = vst [vmem:[%s3 + $0xd8] sm:$0xff] %v399
    %515 = vst [vmem:[%s3 + $0xe0] sm:$0xff] %v440
    %516 = vst [vmem:[%s3 + $0xe8] sm:$0xff] %v442
    %517 = vst [vmem:[%s3 + $0xf0] sm:$0xff] %v483
    %518 = vst [vmem:[%s3 + $0xf8] sm:$0xff] %v485
    // Predicated region
    $region18: #{generator_forward.10} parent=1 // pred_check
      _
    $region19: #{generator_forward.10} parent=1 // pred_check_branch
      %520 = sbr.rel (0) target = $region21
    $region20: #{generator_forward.10} parent=1 // pred_region
      _
    $region21: #{generator_forward.10} parent=1 // pred_fallthru
      _
    // Predicated region
    $region22: #{generator_forward.10} parent=1 // pred_check
      _
    $region23: #{generator_forward.10} parent=1 // pred_check_branch
      %522 = sbr.rel (0) target = $region25
    $region24: #{generator_forward.10} parent=1 // pred_region
      _
    $region25: #{generator_forward.10} parent=1 // pred_fallthru
      _
    %523 = vsyncpa [#allocation3], 1

// kernel: generator_forward.11
$region0: #{generator_forward.11}
  #allocation0 [shape = 'u32[]', space=smem, size = 0x4, offset = 0x4, fixed_abs, tag = 'smem constant byte address 0x4 - core index']
  #allocation1 [shape = 'u32[144,128]{1,0:T(1,128)}', space=vmem, size = 0x12000, scoped, tag = 'internal scratch']
  %s0 = inlined_call_operand.vmem [shape: f32[8,512], index: 0, kind: input, shape index: {}]
  %s1 = inlined_call_operand.vmem [shape: f32[2,512], index: 1, kind: output, shape index: {}]
  %s2 = sld [smem:[#allocation0]]
  $region22: #{generator_forward.11} parent=0
    _
  %s4 = ssub.s32 1, %s2
  %s5 = scalar_select 0, %s4, %s2
  // Predicated region
  $region2: #{generator_forward.11} parent=0 // pred_check
    _
  $region3: #{generator_forward.11} parent=0 // pred_check_branch
    %7 = sbr.rel (0) target = $region5
  $region4: #{generator_forward.11} parent=0 // pred_region
    _
  $region5: #{generator_forward.11} parent=0 // pred_fallthru
    _
  %v8 = vld [vmem:[%s0] sm:$0xff]
  %v9 = vld [vmem:[%s0 + $0x8] sm:$0xff]
  %v10 = vld [vmem:[%s0 + $0x10] sm:$0xff]
  %v11 = vld [vmem:[%s0 + $0x18] sm:$0xff]
  %v12 = vrot.slane %v8, 4
  %v13 = vadd.f32 %v8, %v12
  %v14 = vrot.slane %v13, 2
  %v15 = vadd.f32 %v13, %v14
  %v16 = vrot.slane %v15, 1
  %v17 = vadd.f32 %v15, %v16
  %v18 = vrot.slane %v9, 4
  %v19 = vadd.f32 %v9, %v18
  %v20 = vrot.slane %v19, 2
  %v21 = vadd.f32 %v19, %v20
  %v22 = vrot.slane %v21, 1
  %v23 = vadd.f32 %v21, %v22
  %v24 = vrot.slane %v10, 4
  %v25 = vadd.f32 %v10, %v24
  %v26 = vrot.slane %v25, 2
  %v27 = vadd.f32 %v25, %v26
  %v28 = vrot.slane %v27, 1
  %v29 = vadd.f32 %v27, %v28
  %v30 = vrot.slane %v11, 4
  %v31 = vadd.f32 %v11, %v30
  %v32 = vrot.slane %v31, 2
  %v33 = vadd.f32 %v31, %v32
  %v34 = vrot.slane %v33, 1
  %v35 = vadd.f32 %v33, %v34
  %v36 = vmul.f32 %v8, %v8
  %v37 = vmul.f32 %v9, %v9
  %v38 = vmul.f32 %v10, %v10
  %v39 = vmul.f32 %v11, %v11
  %v40 = vrot.slane %v36, 4
  %v41 = vadd.f32 %v36, %v40
  %v42 = vrot.slane %v41, 2
  %v43 = vadd.f32 %v41, %v42
  %v44 = vrot.slane %v43, 1
  %v45 = vadd.f32 %v43, %v44
  %v46 = vrot.slane %v37, 4
  %v47 = vadd.f32 %v37, %v46
  %v48 = vrot.slane %v47, 2
  %v49 = vadd.f32 %v47, %v48
  %v50 = vrot.slane %v49, 1
  %v51 = vadd.f32 %v49, %v50
  %v52 = vrot.slane %v38, 4
  %v53 = vadd.f32 %v38, %v52
  %v54 = vrot.slane %v53, 2
  %v55 = vadd.f32 %v53, %v54
  %v56 = vrot.slane %v55, 1
  %v57 = vadd.f32 %v55, %v56
  %v58 = vrot.slane %v39, 4
  %v59 = vadd.f32 %v39, %v58
  %v60 = vrot.slane %v59, 2
  %v61 = vadd.f32 %v59, %v60
  %v62 = vrot.slane %v61, 1
  %v63 = vadd.f32 %v61, %v62
  %vm64 = vcmask 1040384
  %v65 = vsel %vm64, %v17, %v45
  %v66 = vsel %vm64, %v23, %v51
  %v67 = vsel %vm64, %v29, %v57
  %v68 = vsel %vm64, %v35, %v63
  %p69 = scmp.eq.s32.totalorder 0, 0
  // Predicated region
  $region6: #{generator_forward.11} parent=0 // pred_check
    %p70 = pneg %p69
  $region7: #{generator_forward.11} parent=0 // pred_check_branch
    %72 = sbr.rel (%p70) target = $region9
  $region8: #{generator_forward.11} parent=0 // pred_region
    %v77 = vcombine.low %v65, %v66
    %v78 = vcombine.low %v67, %v68
    %v80 = vunpack.c.l.s4 1983009808
    %v81 = vunpack.c.0.s8 %v80
    %v82 = vlaneseq
    %v83 = vshrl.u32 %v82, 7
    %v84 = vsub.s32 %v81, %v83
    %v85 = vrot.slane %v77, %v84
    %v87 = vunpack.c.l.s4 1983009808
    %v88 = vunpack.c.0.s8 %v87
    %v89 = vlaneseq
    %v90 = vshrl.u32 %v89, 7
    %v91 = vsub.s32 %v88, %v90
    %v92 = vrot.slane %v78, %v91
    %v93 = vcombine.low %v85, %v92
    %95 = vst [vmem:[%s1] sm:$0xff] %v93
  $region9: #{generator_forward.11} parent=0 // pred_fallthru
    _
  %p96 = scmp.gt.s32.totalorder 0, 0
  // Predicated region
  $region10: #{generator_forward.11} parent=0 // pred_check
    %p97 = pneg %p96
  $region11: #{generator_forward.11} parent=0 // pred_check_branch
    %99 = sbr.rel (%p97) target = $region13
  $region12: #{generator_forward.11} parent=0 // pred_region
    %v100 = vld [vmem:[%s1] sm:$0xff]
    %v105 = vcombine.low %v65, %v66
    %v106 = vcombine.low %v67, %v68
    %v108 = vunpack.c.l.s4 1983009808
    %v109 = vunpack.c.0.s8 %v108
    %v110 = vlaneseq
    %v111 = vshrl.u32 %v110, 7
    %v112 = vsub.s32 %v109, %v111
    %v113 = vrot.slane %v105, %v112
    %v115 = vunpack.c.l.s4 1983009808
    %v116 = vunpack.c.0.s8 %v115
    %v117 = vlaneseq
    %v118 = vshrl.u32 %v117, 7
    %v119 = vsub.s32 %v116, %v118
    %v120 = vrot.slane %v106, %v119
    %v121 = vcombine.low %v113, %v120
    %v123 = vadd.f32 %v100, %v121
    %124 = vst [vmem:[%s1] sm:$0xff] %v123
  $region13: #{generator_forward.11} parent=0 // pred_fallthru
    _
  // Predicated region
  $region14: #{generator_forward.11} parent=0 // pred_check
    _
  $region15: #{generator_forward.11} parent=0 // pred_check_branch
    %126 = sbr.rel (0) target = $region17
  $region16: #{generator_forward.11} parent=0 // pred_region
    _
  $region17: #{generator_forward.11} parent=0 // pred_fallthru
    _
  // Predicated region
  $region18: #{generator_forward.11} parent=0 // pred_check
    _
  $region19: #{generator_forward.11} parent=0 // pred_check_branch
    %128 = sbr.rel (0) target = $region21
  $region20: #{generator_forward.11} parent=0 // pred_region
    _
  $region21: #{generator_forward.11} parent=0 // pred_fallthru
    _

// kernel: generator_forward.12
$region0: #{generator_forward.12}
  #allocation0 [shape = 'u32[]', space=smem, size = 0x4, offset = 0x4, fixed_abs, tag = 'smem constant byte address 0x4 - core index']
  #allocation1 [shape = 'u32[144,128]{1,0:T(1,128)}', space=vmem, size = 0x12000, scoped, tag = 'internal scratch']
  %s0 = inlined_call_operand.vmem [shape: f32[2,128], index: 0, kind: input, shape index: {}]
  %s1 = inlined_call_operand.vmem [shape: f32[32,128], index: 1, kind: input, shape index: {}]
  %s2 = inlined_call_operand.vmem [shape: bf16[128,1024], index: 2, kind: input, shape index: {}]
  %s3 = inlined_call_operand.vmem [shape: f32[32,1024], index: 3, kind: output, shape index: {}]
  %s4 = sld [smem:[#allocation0]]
  $region22: #{generator_forward.12} parent=0
    _
  %s6 = ssub.s32 1, %s4
  %s7 = scalar_select 0, %s6, %s4
  // Predicated region
  $region2: #{generator_forward.12} parent=0 // pred_check
    _
  $region3: #{generator_forward.12} parent=0 // pred_check_branch
    %9 = sbr.rel (0) target = $region5
  $region4: #{generator_forward.12} parent=0 // pred_region
    _
  $region5: #{generator_forward.12} parent=0 // pred_fallthru
    _
  // Predicated region
  $region6: #{generator_forward.12} parent=0 // pred_check
    _
  $region7: #{generator_forward.12} parent=0 // pred_check_branch
    %11 = sbr.rel (0) target = $region9
  $region8: #{generator_forward.12} parent=0 // pred_region
    _
  $region9: #{generator_forward.12} parent=0 // pred_fallthru
    _
  // Predicated region
  $region10: #{generator_forward.12} parent=0 // pred_check
    _
  $region11: #{generator_forward.12} parent=0 // pred_check_branch
    %13 = sbr.rel (0) target = $region13
  $region12: #{generator_forward.12} parent=0 // pred_region
    _
  $region13: #{generator_forward.12} parent=0 // pred_fallthru
    _
  %v15 = vld [vmem:[%s0] sm:$0x3]
  %v16 = vld [vmem:[%s1] sm:$0xff]
  %v17 = vld [vmem:[%s1 + $0x8] sm:$0xff]
  %v18 = vld [vmem:[%s1 + $0x10] sm:$0xff]
  %v19 = vld [vmem:[%s1 + $0x18] sm:$0xff]
  %v20 = vlaneseq
  %v21 = vshrl.u32 %v20, 7
  %v22 = vsub.s32 0, %v21
  %v23 = vrot.slane %v15, %v22
  %v24 = vmul.f32 %v16, %v23
  %v25 = vmul.f32 %v17, %v23
  %v26 = vmul.f32 %v18, %v23
  %v27 = vmul.f32 %v19, %v23
  %v28 = vlaneseq
  %v29 = vshrl.u32 %v28, 7
  %v30 = vsub.s32 1, %v29
  %v31 = vrot.slane %v15, %v30
  %v32 = vadd.f32 %v24, %v31
  %v33 = vadd.f32 %v25, %v31
  %v34 = vadd.f32 %v26, %v31
  %v35 = vadd.f32 %v27, %v31
  %v36 = vmax.f32 %v32, 0.0
  %v37 = vmax.f32 %v33, 0.0
  %v38 = vmax.f32 %v34, 0.0
  %v39 = vmax.f32 %v35, 0.0
  %v40 = vpack.c.bf16 %v37, %v36
  %v41 = vpack.c.bf16 %v39, %v38
  %v42 = vld [vmem:[%s2] sm:$0xff]
  %v43 = vld [vmem:[%s2 + $0x8] sm:$0xff]
  %v44 = vld [vmem:[%s2 + $0x10] sm:$0xff]
  %v45 = vld [vmem:[%s2 + $0x18] sm:$0xff]
  %v46 = vld [vmem:[%s2 + $0x20] sm:$0xff]
  %v47 = vld [vmem:[%s2 + $0x28] sm:$0xff]
  %v48 = vld [vmem:[%s2 + $0x30] sm:$0xff]
  %v49 = vld [vmem:[%s2 + $0x38] sm:$0xff]
  %v50 = vld [vmem:[%s2 + $0x40] sm:$0xff]
  %v51 = vld [vmem:[%s2 + $0x48] sm:$0xff]
  %v52 = vld [vmem:[%s2 + $0x50] sm:$0xff]
  %v53 = vld [vmem:[%s2 + $0x58] sm:$0xff]
  %v54 = vld [vmem:[%s2 + $0x60] sm:$0xff]
  %v55 = vld [vmem:[%s2 + $0x68] sm:$0xff]
  %v56 = vld [vmem:[%s2 + $0x70] sm:$0xff]
  %v57 = vld [vmem:[%s2 + $0x78] sm:$0xff]
  %v58 = vld [vmem:[%s2 + $0x80] sm:$0xff]
  %v59 = vld [vmem:[%s2 + $0x88] sm:$0xff]
  %v60 = vld [vmem:[%s2 + $0x90] sm:$0xff]
  %v61 = vld [vmem:[%s2 + $0x98] sm:$0xff]
  %v62 = vld [vmem:[%s2 + $0xa0] sm:$0xff]
  %v63 = vld [vmem:[%s2 + $0xa8] sm:$0xff]
  %v64 = vld [vmem:[%s2 + $0xb0] sm:$0xff]
  %v65 = vld [vmem:[%s2 + $0xb8] sm:$0xff]
  %v66 = vld [vmem:[%s2 + $0xc0] sm:$0xff]
  %v67 = vld [vmem:[%s2 + $0xc8] sm:$0xff]
  %v68 = vld [vmem:[%s2 + $0xd0] sm:$0xff]
  %v69 = vld [vmem:[%s2 + $0xd8] sm:$0xff]
  %v70 = vld [vmem:[%s2 + $0xe0] sm:$0xff]
  %v71 = vld [vmem:[%s2 + $0xe8] sm:$0xff]
  %v72 = vld [vmem:[%s2 + $0xf0] sm:$0xff]
  %v73 = vld [vmem:[%s2 + $0xf8] sm:$0xff]
  %v74 = vld [vmem:[%s2 + $0x100] sm:$0xff]
  %v75 = vld [vmem:[%s2 + $0x108] sm:$0xff]
  %v76 = vld [vmem:[%s2 + $0x110] sm:$0xff]
  %v77 = vld [vmem:[%s2 + $0x118] sm:$0xff]
  %v78 = vld [vmem:[%s2 + $0x120] sm:$0xff]
  %v79 = vld [vmem:[%s2 + $0x128] sm:$0xff]
  %v80 = vld [vmem:[%s2 + $0x130] sm:$0xff]
  %v81 = vld [vmem:[%s2 + $0x138] sm:$0xff]
  %v82 = vld [vmem:[%s2 + $0x140] sm:$0xff]
  %v83 = vld [vmem:[%s2 + $0x148] sm:$0xff]
  %v84 = vld [vmem:[%s2 + $0x150] sm:$0xff]
  %v85 = vld [vmem:[%s2 + $0x158] sm:$0xff]
  %v86 = vld [vmem:[%s2 + $0x160] sm:$0xff]
  %v87 = vld [vmem:[%s2 + $0x168] sm:$0xff]
  %v88 = vld [vmem:[%s2 + $0x170] sm:$0xff]
  %v89 = vld [vmem:[%s2 + $0x178] sm:$0xff]
  %v90 = vld [vmem:[%s2 + $0x180] sm:$0xff]
  %v91 = vld [vmem:[%s2 + $0x188] sm:$0xff]
  %v92 = vld [vmem:[%s2 + $0x190] sm:$0xff]
  %v93 = vld [vmem:[%s2 + $0x198] sm:$0xff]
  %v94 = vld [vmem:[%s2 + $0x1a0] sm:$0xff]
  %v95 = vld [vmem:[%s2 + $0x1a8] sm:$0xff]
  %v96 = vld [vmem:[%s2 + $0x1b0] sm:$0xff]
  %v97 = vld [vmem:[%s2 + $0x1b8] sm:$0xff]
  %v98 = vld [vmem:[%s2 + $0x1c0] sm:$0xff]
  %v99 = vld [vmem:[%s2 + $0x1c8] sm:$0xff]
  %v100 = vld [vmem:[%s2 + $0x1d0] sm:$0xff]
  %v101 = vld [vmem:[%s2 + $0x1d8] sm:$0xff]
  %v102 = vld [vmem:[%s2 + $0x1e0] sm:$0xff]
  %v103 = vld [vmem:[%s2 + $0x1e8] sm:$0xff]
  %v104 = vld [vmem:[%s2 + $0x1f0] sm:$0xff]
  %v105 = vld [vmem:[%s2 + $0x1f8] sm:$0xff]
  %v170 = vunpack.c.l.b16 %v42
  %v171 = vunpack.c.h.b16 %v42
  %v172 = vunpack.c.l.b16 %v43
  %v173 = vunpack.c.h.b16 %v43
  %v174 = vunpack.c.l.b16 %v44
  %v175 = vunpack.c.h.b16 %v44
  %v176 = vunpack.c.l.b16 %v45
  %v177 = vunpack.c.h.b16 %v45
  %v178 = vunpack.c.l.b16 %v46
  %v179 = vunpack.c.h.b16 %v46
  %v180 = vunpack.c.l.b16 %v47
  %v181 = vunpack.c.h.b16 %v47
  %v182 = vunpack.c.l.b16 %v48
  %v183 = vunpack.c.h.b16 %v48
  %v184 = vunpack.c.l.b16 %v49
  %v185 = vunpack.c.h.b16 %v49
  %v186 = vunpack.c.l.b16 %v50
  %v187 = vunpack.c.h.b16 %v50
  %v188 = vunpack.c.l.b16 %v51
  %v189 = vunpack.c.h.b16 %v51
  %v190 = vunpack.c.l.b16 %v52
  %v191 = vunpack.c.h.b16 %v52
  %v192 = vunpack.c.l.b16 %v53
  %v193 = vunpack.c.h.b16 %v53
  %v194 = vunpack.c.l.b16 %v54
  %v195 = vunpack.c.h.b16 %v54
  %v196 = vunpack.c.l.b16 %v55
  %v197 = vunpack.c.h.b16 %v55
  %v198 = vunpack.c.l.b16 %v56
  %v199 = vunpack.c.h.b16 %v56
  %v200 = vunpack.c.l.b16 %v57
  %v201 = vunpack.c.h.b16 %v57
  %v202 = vunpack.c.l.b16 %v58
  %v203 = vunpack.c.h.b16 %v58
  %v204 = vunpack.c.l.b16 %v59
  %v205 = vunpack.c.h.b16 %v59
  %v206 = vunpack.c.l.b16 %v60
  %v207 = vunpack.c.h.b16 %v60
  %v208 = vunpack.c.l.b16 %v61
  %v209 = vunpack.c.h.b16 %v61
  %v210 = vunpack.c.l.b16 %v62
  %v211 = vunpack.c.h.b16 %v62
  %v212 = vunpack.c.l.b16 %v63
  %v213 = vunpack.c.h.b16 %v63
  %v214 = vunpack.c.l.b16 %v64
  %v215 = vunpack.c.h.b16 %v64
  %v216 = vunpack.c.l.b16 %v65
  %v217 = vunpack.c.h.b16 %v65
  %v218 = vunpack.c.l.b16 %v66
  %v219 = vunpack.c.h.b16 %v66
  %v220 = vunpack.c.l.b16 %v67
  %v221 = vunpack.c.h.b16 %v67
  %v222 = vunpack.c.l.b16 %v68
  %v223 = vunpack.c.h.b16 %v68
  %v224 = vunpack.c.l.b16 %v69
  %v225 = vunpack.c.h.b16 %v69
  %v226 = vunpack.c.l.b16 %v70
  %v227 = vunpack.c.h.b16 %v70
  %v228 = vunpack.c.l.b16 %v71
  %v229 = vunpack.c.h.b16 %v71
  %v230 = vunpack.c.l.b16 %v72
  %v231 = vunpack.c.h.b16 %v72
  %v232 = vunpack.c.l.b16 %v73
  %v233 = vunpack.c.h.b16 %v73
  %v234 = vunpack.c.l.b16 %v74
  %v235 = vunpack.c.h.b16 %v74
  %v236 = vunpack.c.l.b16 %v75
  %v237 = vunpack.c.h.b16 %v75
  %v238 = vunpack.c.l.b16 %v76
  %v239 = vunpack.c.h.b16 %v76
  %v240 = vunpack.c.l.b16 %v77
  %v241 = vunpack.c.h.b16 %v77
  %v242 = vunpack.c.l.b16 %v78
  %v243 = vunpack.c.h.b16 %v78
  %v244 = vunpack.c.l.b16 %v79
  %v245 = vunpack.c.h.b16 %v79
  %v246 = vunpack.c.l.b16 %v80
  %v247 = vunpack.c.h.b16 %v80
  %v248 = vunpack.c.l.b16 %v81
  %v249 = vunpack.c.h.b16 %v81
  %v250 = vunpack.c.l.b16 %v82
  %v251 = vunpack.c.h.b16 %v82
  %v252 = vunpack.c.l.b16 %v83
  %v253 = vunpack.c.h.b16 %v83
  %v254 = vunpack.c.l.b16 %v84
  %v255 = vunpack.c.h.b16 %v84
  %v256 = vunpack.c.l.b16 %v85
  %v257 = vunpack.c.h.b16 %v85
  %v258 = vunpack.c.l.b16 %v86
  %v259 = vunpack.c.h.b16 %v86
  %v260 = vunpack.c.l.b16 %v87
  %v261 = vunpack.c.h.b16 %v87
  %v262 = vunpack.c.l.b16 %v88
  %v263 = vunpack.c.h.b16 %v88
  %v264 = vunpack.c.l.b16 %v89
  %v265 = vunpack.c.h.b16 %v89
  %v266 = vunpack.c.l.b16 %v90
  %v267 = vunpack.c.h.b16 %v90
  %v268 = vunpack.c.l.b16 %v91
  %v269 = vunpack.c.h.b16 %v91
  %v270 = vunpack.c.l.b16 %v92
  %v271 = vunpack.c.h.b16 %v92
  %v272 = vunpack.c.l.b16 %v93
  %v273 = vunpack.c.h.b16 %v93
  %v274 = vunpack.c.l.b16 %v94
  %v275 = vunpack.c.h.b16 %v94
  %v276 = vunpack.c.l.b16 %v95
  %v277 = vunpack.c.h.b16 %v95
  %v278 = vunpack.c.l.b16 %v96
  %v279 = vunpack.c.h.b16 %v96
  %v280 = vunpack.c.l.b16 %v97
  %v281 = vunpack.c.h.b16 %v97
  %v282 = vunpack.c.l.b16 %v98
  %v283 = vunpack.c.h.b16 %v98
  %v284 = vunpack.c.l.b16 %v99
  %v285 = vunpack.c.h.b16 %v99
  %v286 = vunpack.c.l.b16 %v100
  %v287 = vunpack.c.h.b16 %v100
  %v288 = vunpack.c.l.b16 %v101
  %v289 = vunpack.c.h.b16 %v101
  %v290 = vunpack.c.l.b16 %v102
  %v291 = vunpack.c.h.b16 %v102
  %v292 = vunpack.c.l.b16 %v103
  %v293 = vunpack.c.h.b16 %v103
  %v294 = vunpack.c.l.b16 %v104
  %v295 = vunpack.c.h.b16 %v104
  %v296 = vunpack.c.l.b16 %v105
  %v297 = vunpack.c.h.b16 %v105
  %v298 = vpack.c.b16 %v178, %v170
  %v299 = vpack.c.b16 %v179, %v171
  %v300 = vpack.c.b16 %v180, %v172
  %v301 = vpack.c.b16 %v181, %v173
  %v302 = vpack.c.b16 %v182, %v174
  %v303 = vpack.c.b16 %v183, %v175
  %v304 = vpack.c.b16 %v184, %v176
  %v305 = vpack.c.b16 %v185, %v177
  %v306 = vpack.c.b16 %v194, %v186
  %v307 = vpack.c.b16 %v195, %v187
  %v308 = vpack.c.b16 %v196, %v188
  %v309 = vpack.c.b16 %v197, %v189
  %v310 = vpack.c.b16 %v198, %v190
  %v311 = vpack.c.b16 %v199, %v191
  %v312 = vpack.c.b16 %v200, %v192
  %v313 = vpack.c.b16 %v201, %v193
  %v314 = vpack.c.b16 %v210, %v202
  %v315 = vpack.c.b16 %v211, %v203
  %v316 = vpack.c.b16 %v212, %v204
  %v317 = vpack.c.b16 %v213, %v205
  %v318 = vpack.c.b16 %v214, %v206
  %v319 = vpack.c.b16 %v215, %v207
  %v320 = vpack.c.b16 %v216, %v208
  %v321 = vpack.c.b16 %v217, %v209
  %v322 = vpack.c.b16 %v226, %v218
  %v323 = vpack.c.b16 %v227, %v219
  %v324 = vpack.c.b16 %v228, %v220
  %v325 = vpack.c.b16 %v229, %v221
  %v326 = vpack.c.b16 %v230, %v222
  %v327 = vpack.c.b16 %v231, %v223
  %v328 = vpack.c.b16 %v232, %v224
  %v329 = vpack.c.b16 %v233, %v225
  %v330 = vpack.c.b16 %v242, %v234
  %v331 = vpack.c.b16 %v243, %v235
  %v332 = vpack.c.b16 %v244, %v236
  %v333 = vpack.c.b16 %v245, %v237
  %v334 = vpack.c.b16 %v246, %v238
  %v335 = vpack.c.b16 %v247, %v239
  %v336 = vpack.c.b16 %v248, %v240
  %v337 = vpack.c.b16 %v249, %v241
  %v338 = vpack.c.b16 %v258, %v250
  %v339 = vpack.c.b16 %v259, %v251
  %v340 = vpack.c.b16 %v260, %v252
  %v341 = vpack.c.b16 %v261, %v253
  %v342 = vpack.c.b16 %v262, %v254
  %v343 = vpack.c.b16 %v263, %v255
  %v344 = vpack.c.b16 %v264, %v256
  %v345 = vpack.c.b16 %v265, %v257
  %v346 = vpack.c.b16 %v274, %v266
  %v347 = vpack.c.b16 %v275, %v267
  %v348 = vpack.c.b16 %v276, %v268
  %v349 = vpack.c.b16 %v277, %v269
  %v350 = vpack.c.b16 %v278, %v270
  %v351 = vpack.c.b16 %v279, %v271
  %v352 = vpack.c.b16 %v280, %v272
  %v353 = vpack.c.b16 %v281, %v273
  %v354 = vpack.c.b16 %v290, %v282
  %v355 = vpack.c.b16 %v291, %v283
  %v356 = vpack.c.b16 %v292, %v284
  %v357 = vpack.c.b16 %v293, %v285
  %v358 = vpack.c.b16 %v294, %v286
  %v359 = vpack.c.b16 %v295, %v287
  %v360 = vpack.c.b16 %v296, %v288
  %v361 = vpack.c.b16 %v297, %v289
  %426 = vmatprep.subr.bf16.mxu0 %v299
  %427 = vmatpush1.bf16.msra.mxu0 %v298
  %428 = vmatprep.subr.bf16.mxu0 %v307
  %429 = vmatpush1.bf16.msra.mxu0 %v306
  %430 = vmatprep.subr.bf16.mxu0 %v315
  %431 = vmatpush1.bf16.msra.mxu0 %v314
  %432 = vmatprep.subr.bf16.mxu0 %v323
  %433 = vmatpush1.bf16.msra.mxu0 %v322
  %434 = vmatprep.subr.bf16.mxu0 %v331
  %435 = vmatpush1.bf16.msra.mxu0 %v330
  %436 = vmatprep.subr.bf16.mxu0 %v339
  %437 = vmatpush1.bf16.msra.mxu0 %v338
  %438 = vmatprep.subr.bf16.mxu0 %v347
  %439 = vmatpush1.bf16.msra.mxu0 %v346
  %440 = vmatprep.subr.bf16.mxu0 %v355
  %441 = vmatpush1.bf16.msra.mxu0 %v354
  %442 = vmatprep.subr.bf16.mxu0 0
  %443 = vmatpush1.bf16.msra.mxu0 0
  %444 = vmatprep.subr.bf16.mxu0 0
  %445 = vmatpush1.bf16.msra.mxu0 0
  %446 = vmatprep.subr.bf16.mxu0 0
  %447 = vmatpush1.bf16.msra.mxu0 0
  %448 = vmatprep.subr.bf16.mxu0 0
  %449 = vmatpush1.bf16.msra.mxu0 0
  %450 = vmatprep.subr.bf16.mxu0 0
  %451 = vmatpush1.bf16.msra.mxu0 0
  %452 = vmatprep.subr.bf16.mxu0 0
  %453 = vmatpush1.bf16.msra.mxu0 0
  %454 = vmatprep.subr.bf16.mxu0 0
  %455 = vmatpush1.bf16.msra.mxu0 0
  %456 = vmatprep.subr.bf16.mxu0 0
  %457 = vmatpush1.bf16.msra.mxu0 0
  %458 = vmatprep.mubr.bf16.mxu0 0
  %459 = vmatmul.mubr.bf16.gmra.mrb[0].mxu0 %v40
  %v460 = vpop.f32.mrb[0].mxu0
  %v461 = vadd.f32 0.0, %v460
  %v462 = vpop.f32.mrb[0].mxu0
  %v463 = vadd.f32 0.0, %v462
  %v464 = vpop.f32.mrb[0].mxu0
  %v465 = vadd.f32 0.0, %v464
  %v466 = vpop.f32.mrb[0].mxu0
  %v467 = vadd.f32 0.0, %v466
  %468 = vmatprep.mubr.bf16.mxu0 0
  %469 = vmatmul.mubr.bf16.gmra.mrb[0].mxu0 %v41
  %v470 = vpop.f32.mrb[0].mxu0
  %v471 = vadd.f32 0.0, %v470
  %v472 = vpop.f32.mrb[0].mxu0
  %v473 = vadd.f32 0.0, %v472
  %v474 = vpop.f32.mrb[0].mxu0
  %v475 = vadd.f32 0.0, %v474
  %v476 = vpop.f32.mrb[0].mxu0
  %v477 = vadd.f32 0.0, %v476
  %478 = vdwg.mxu0
  %479 = vmatprep.subr.bf16.mxu0 %v301
  %480 = vmatpush1.bf16.msra.mxu0 %v300
  %481 = vmatprep.subr.bf16.mxu0 %v309
  %482 = vmatpush1.bf16.msra.mxu0 %v308
  %483 = vmatprep.subr.bf16.mxu0 %v317
  %484 = vmatpush1.bf16.msra.mxu0 %v316
  %485 = vmatprep.subr.bf16.mxu0 %v325
  %486 = vmatpush1.bf16.msra.mxu0 %v324
  %487 = vmatprep.subr.bf16.mxu0 %v333
  %488 = vmatpush1.bf16.msra.mxu0 %v332
  %489 = vmatprep.subr.bf16.mxu0 %v341
  %490 = vmatpush1.bf16.msra.mxu0 %v340
  %491 = vmatprep.subr.bf16.mxu0 %v349
  %492 = vmatpush1.bf16.msra.mxu0 %v348
  %493 = vmatprep.subr.bf16.mxu0 %v357
  %494 = vmatpush1.bf16.msra.mxu0 %v356
  %495 = vmatprep.subr.bf16.mxu0 0
  %496 = vmatpush1.bf16.msra.mxu0 0
  %497 = vmatprep.subr.bf16.mxu0 0
  %498 = vmatpush1.bf16.msra.mxu0 0
  %499 = vmatprep.subr.bf16.mxu0 0
  %500 = vmatpush1.bf16.msra.mxu0 0
  %501 = vmatprep.subr.bf16.mxu0 0
  %502 = vmatpush1.bf16.msra.mxu0 0
  %503 = vmatprep.subr.bf16.mxu0 0
  %504 = vmatpush1.bf16.msra.mxu0 0
  %505 = vmatprep.subr.bf16.mxu0 0
  %506 = vmatpush1.bf16.msra.mxu0 0
  %507 = vmatprep.subr.bf16.mxu0 0
  %508 = vmatpush1.bf16.msra.mxu0 0
  %509 = vmatprep.subr.bf16.mxu0 0
  %510 = vmatpush1.bf16.msra.mxu0 0
  %511 = vmatprep.mubr.bf16.mxu0 0
  %512 = vmatmul.mubr.bf16.gmra.mrb[0].mxu0 %v40
  %v513 = vpop.f32.mrb[0].mxu0
  %v514 = vadd.f32 0.0, %v513
  %v515 = vpop.f32.mrb[0].mxu0
  %v516 = vadd.f32 0.0, %v515
  %v517 = vpop.f32.mrb[0].mxu0
  %v518 = vadd.f32 0.0, %v517
  %v519 = vpop.f32.mrb[0].mxu0
  %v520 = vadd.f32 0.0, %v519
  %521 = vmatprep.mubr.bf16.mxu0 0
  %522 = vmatmul.mubr.bf16.gmra.mrb[0].mxu0 %v41
  %v523 = vpop.f32.mrb[0].mxu0
  %v524 = vadd.f32 0.0, %v523
  %v525 = vpop.f32.mrb[0].mxu0
  %v526 = vadd.f32 0.0, %v525
  %v527 = vpop.f32.mrb[0].mxu0
  %v528 = vadd.f32 0.0, %v527
  %v529 = vpop.f32.mrb[0].mxu0
  %v530 = vadd.f32 0.0, %v529
  %531 = vdwg.mxu0
  %532 = vmatprep.subr.bf16.mxu0 %v303
  %533 = vmatpush1.bf16.msra.mxu0 %v302
  %534 = vmatprep.subr.bf16.mxu0 %v311
  %535 = vmatpush1.bf16.msra.mxu0 %v310
  %536 = vmatprep.subr.bf16.mxu0 %v319
  %537 = vmatpush1.bf16.msra.mxu0 %v318
  %538 = vmatprep.subr.bf16.mxu0 %v327
  %539 = vmatpush1.bf16.msra.mxu0 %v326
  %540 = vmatprep.subr.bf16.mxu0 %v335
  %541 = vmatpush1.bf16.msra.mxu0 %v334
  %542 = vmatprep.subr.bf16.mxu0 %v343
  %543 = vmatpush1.bf16.msra.mxu0 %v342
  %544 = vmatprep.subr.bf16.mxu0 %v351
  %545 = vmatpush1.bf16.msra.mxu0 %v350
  %546 = vmatprep.subr.bf16.mxu0 %v359
  %547 = vmatpush1.bf16.msra.mxu0 %v358
  %548 = vmatprep.subr.bf16.mxu0 0
  %549 = vmatpush1.bf16.msra.mxu0 0
  %550 = vmatprep.subr.bf16.mxu0 0
  %551 = vmatpush1.bf16.msra.mxu0 0
  %552 = vmatprep.subr.bf16.mxu0 0
  %553 = vmatpush1.bf16.msra.mxu0 0
  %554 = vmatprep.subr.bf16.mxu0 0
  %555 = vmatpush1.bf16.msra.mxu0 0
  %556 = vmatprep.subr.bf16.mxu0 0
  %557 = vmatpush1.bf16.msra.mxu0 0
  %558 = vmatprep.subr.bf16.mxu0 0
  %559 = vmatpush1.bf16.msra.mxu0 0
  %560 = vmatprep.subr.bf16.mxu0 0
  %561 = vmatpush1.bf16.msra.mxu0 0
  %562 = vmatprep.subr.bf16.mxu0 0
  %563 = vmatpush1.bf16.msra.mxu0 0
  %564 = vmatprep.mubr.bf16.mxu0 0
  %565 = vmatmul.mubr.bf16.gmra.mrb[0].mxu0 %v40
  %v566 = vpop.f32.mrb[0].mxu0
  %v567 = vadd.f32 0.0, %v566
  %v568 = vpop.f32.mrb[0].mxu0
  %v569 = vadd.f32 0.0, %v568
  %v570 = vpop.f32.mrb[0].mxu0
  %v571 = vadd.f32 0.0, %v570
  %v572 = vpop.f32.mrb[0].mxu0
  %v573 = vadd.f32 0.0, %v572
  %574 = vmatprep.mubr.bf16.mxu0 0
  %575 = vmatmul.mubr.bf16.gmra.mrb[0].mxu0 %v41
  %v576 = vpop.f32.mrb[0].mxu0
  %v577 = vadd.f32 0.0, %v576
  %v578 = vpop.f32.mrb[0].mxu0
  %v579 = vadd.f32 0.0, %v578
  %v580 = vpop.f32.mrb[0].mxu0
  %v581 = vadd.f32 0.0, %v580
  %v582 = vpop.f32.mrb[0].mxu0
  %v583 = vadd.f32 0.0, %v582
  %584 = vdwg.mxu0
  %585 = vmatprep.subr.bf16.mxu0 %v305
  %586 = vmatpush1.bf16.msra.mxu0 %v304
  %587 = vmatprep.subr.bf16.mxu0 %v313
  %588 = vmatpush1.bf16.msra.mxu0 %v312
  %589 = vmatprep.subr.bf16.mxu0 %v321
  %590 = vmatpush1.bf16.msra.mxu0 %v320
  %591 = vmatprep.subr.bf16.mxu0 %v329
  %592 = vmatpush1.bf16.msra.mxu0 %v328
  %593 = vmatprep.subr.bf16.mxu0 %v337
  %594 = vmatpush1.bf16.msra.mxu0 %v336
  %595 = vmatprep.subr.bf16.mxu0 %v345
  %596 = vmatpush1.bf16.msra.mxu0 %v344
  %597 = vmatprep.subr.bf16.mxu0 %v353
  %598 = vmatpush1.bf16.msra.mxu0 %v352
  %599 = vmatprep.subr.bf16.mxu0 %v361
  %600 = vmatpush1.bf16.msra.mxu0 %v360
  %601 = vmatprep.subr.bf16.mxu0 0
  %602 = vmatpush1.bf16.msra.mxu0 0
  %603 = vmatprep.subr.bf16.mxu0 0
  %604 = vmatpush1.bf16.msra.mxu0 0
  %605 = vmatprep.subr.bf16.mxu0 0
  %606 = vmatpush1.bf16.msra.mxu0 0
  %607 = vmatprep.subr.bf16.mxu0 0
  %608 = vmatpush1.bf16.msra.mxu0 0
  %609 = vmatprep.subr.bf16.mxu0 0
  %610 = vmatpush1.bf16.msra.mxu0 0
  %611 = vmatprep.subr.bf16.mxu0 0
  %612 = vmatpush1.bf16.msra.mxu0 0
  %613 = vmatprep.subr.bf16.mxu0 0
  %614 = vmatpush1.bf16.msra.mxu0 0
  %615 = vmatprep.subr.bf16.mxu0 0
  %616 = vmatpush1.bf16.msra.mxu0 0
  %617 = vmatprep.mubr.bf16.mxu0 0
  %618 = vmatmul.mubr.bf16.gmra.mrb[0].mxu0 %v40
  %v619 = vpop.f32.mrb[0].mxu0
  %v620 = vadd.f32 0.0, %v619
  %v621 = vpop.f32.mrb[0].mxu0
  %v622 = vadd.f32 0.0, %v621
  %v623 = vpop.f32.mrb[0].mxu0
  %v624 = vadd.f32 0.0, %v623
  %v625 = vpop.f32.mrb[0].mxu0
  %v626 = vadd.f32 0.0, %v625
  %627 = vmatprep.mubr.bf16.mxu0 0
  %628 = vmatmul.mubr.bf16.gmra.mrb[0].mxu0 %v41
  %v629 = vpop.f32.mrb[0].mxu0
  %v630 = vadd.f32 0.0, %v629
  %v631 = vpop.f32.mrb[0].mxu0
  %v632 = vadd.f32 0.0, %v631
  %v633 = vpop.f32.mrb[0].mxu0
  %v634 = vadd.f32 0.0, %v633
  %v635 = vpop.f32.mrb[0].mxu0
  %v636 = vadd.f32 0.0, %v635
  %637 = vdwg.mxu0
  %638 = vst [vmem:[%s3] sm:$0xff] %v461
  %639 = vst [vmem:[%s3 + $0x8] sm:$0xff] %v463
  %640 = vst [vmem:[%s3 + $0x10] sm:$0xff] %v514
  %641 = vst [vmem:[%s3 + $0x18] sm:$0xff] %v516
  %642 = vst [vmem:[%s3 + $0x20] sm:$0xff] %v567
  %643 = vst [vmem:[%s3 + $0x28] sm:$0xff] %v569
  %644 = vst [vmem:[%s3 + $0x30] sm:$0xff] %v620
  %645 = vst [vmem:[%s3 + $0x38] sm:$0xff] %v622
  %646 = vst [vmem:[%s3 + $0x40] sm:$0xff] %v465
  %647 = vst [vmem:[%s3 + $0x48] sm:$0xff] %v467
  %648 = vst [vmem:[%s3 + $0x50] sm:$0xff] %v518
  %649 = vst [vmem:[%s3 + $0x58] sm:$0xff] %v520
  %650 = vst [vmem:[%s3 + $0x60] sm:$0xff] %v571
  %651 = vst [vmem:[%s3 + $0x68] sm:$0xff] %v573
  %652 = vst [vmem:[%s3 + $0x70] sm:$0xff] %v624
  %653 = vst [vmem:[%s3 + $0x78] sm:$0xff] %v626
  %654 = vst [vmem:[%s3 + $0x80] sm:$0xff] %v471
  %655 = vst [vmem:[%s3 + $0x88] sm:$0xff] %v473
  %656 = vst [vmem:[%s3 + $0x90] sm:$0xff] %v524
  %657 = vst [vmem:[%s3 + $0x98] sm:$0xff] %v526
  %658 = vst [vmem:[%s3 + $0xa0] sm:$0xff] %v577
  %659 = vst [vmem:[%s3 + $0xa8] sm:$0xff] %v579
  %660 = vst [vmem:[%s3 + $0xb0] sm:$0xff] %v630
  %661 = vst [vmem:[%s3 + $0xb8] sm:$0xff] %v632
  %662 = vst [vmem:[%s3 + $0xc0] sm:$0xff] %v475
  %663 = vst [vmem:[%s3 + $0xc8] sm:$0xff] %v477
  %664 = vst [vmem:[%s3 + $0xd0] sm:$0xff] %v528
  %665 = vst [vmem:[%s3 + $0xd8] sm:$0xff] %v530
  %666 = vst [vmem:[%s3 + $0xe0] sm:$0xff] %v581
  %667 = vst [vmem:[%s3 + $0xe8] sm:$0xff] %v583
  %668 = vst [vmem:[%s3 + $0xf0] sm:$0xff] %v634
  %669 = vst [vmem:[%s3 + $0xf8] sm:$0xff] %v636
  // Predicated region
  $region14: #{generator_forward.12} parent=0 // pred_check
    _
  $region15: #{generator_forward.12} parent=0 // pred_check_branch
    %671 = sbr.rel (0) target = $region17
  $region16: #{generator_forward.12} parent=0 // pred_region
    _
  $region17: #{generator_forward.12} parent=0 // pred_fallthru
    _
  // Predicated region
  $region18: #{generator_forward.12} parent=0 // pred_check
    _
  $region19: #{generator_forward.12} parent=0 // pred_check_branch
    %673 = sbr.rel (0) target = $region21
  $region20: #{generator_forward.12} parent=0 // pred_region
    _
  $region21: #{generator_forward.12} parent=0 // pred_fallthru
    _

// kernel: generator_forward.13
$region0: #{generator_forward.13}
  #allocation0 [shape = 'u32[]', space=smem, size = 0x4, offset = 0x4, fixed_abs, tag = 'smem constant byte address 0x4 - core index']
  #allocation1 [shape = 'u32[144,128]{1,0:T(1,128)}', space=vmem, size = 0x12000, scoped, tag = 'internal scratch']
  %s0 = inlined_call_operand.vmem [shape: f32[16,512], index: 0, kind: input, shape index: {}]
  %s1 = inlined_call_operand.vmem [shape: f32[2,512], index: 1, kind: output, shape index: {}]
  %s2 = sld [smem:[#allocation0]]
  $region22: #{generator_forward.13} parent=0
    _
  %s4 = ssub.s32 1, %s2
  %s5 = scalar_select 0, %s4, %s2
  // Predicated region
  $region2: #{generator_forward.13} parent=0 // pred_check
    _
  $region3: #{generator_forward.13} parent=0 // pred_check_branch
    %7 = sbr.rel (0) target = $region5
  $region4: #{generator_forward.13} parent=0 // pred_region
    _
  $region5: #{generator_forward.13} parent=0 // pred_fallthru
    _
  %v8 = vld [vmem:[%s0] sm:$0xff]
  %v9 = vld [vmem:[%s0 + $0x8] sm:$0xff]
  %v10 = vld [vmem:[%s0 + $0x10] sm:$0xff]
  %v11 = vld [vmem:[%s0 + $0x18] sm:$0xff]
  %v12 = vld [vmem:[%s0 + $0x20] sm:$0xff]
  %v13 = vld [vmem:[%s0 + $0x28] sm:$0xff]
  %v14 = vld [vmem:[%s0 + $0x30] sm:$0xff]
  %v15 = vld [vmem:[%s0 + $0x38] sm:$0xff]
  %v16 = vadd.f32 %v8, %v12
  %v17 = vrot.slane %v16, 4
  %v18 = vadd.f32 %v16, %v17
  %v19 = vrot.slane %v18, 2
  %v20 = vadd.f32 %v18, %v19
  %v21 = vrot.slane %v20, 1
  %v22 = vadd.f32 %v20, %v21
  %v23 = vadd.f32 %v9, %v13
  %v24 = vrot.slane %v23, 4
  %v25 = vadd.f32 %v23, %v24
  %v26 = vrot.slane %v25, 2
  %v27 = vadd.f32 %v25, %v26
  %v28 = vrot.slane %v27, 1
  %v29 = vadd.f32 %v27, %v28
  %v30 = vadd.f32 %v10, %v14
  %v31 = vrot.slane %v30, 4
  %v32 = vadd.f32 %v30, %v31
  %v33 = vrot.slane %v32, 2
  %v34 = vadd.f32 %v32, %v33
  %v35 = vrot.slane %v34, 1
  %v36 = vadd.f32 %v34, %v35
  %v37 = vadd.f32 %v11, %v15
  %v38 = vrot.slane %v37, 4
  %v39 = vadd.f32 %v37, %v38
  %v40 = vrot.slane %v39, 2
  %v41 = vadd.f32 %v39, %v40
  %v42 = vrot.slane %v41, 1
  %v43 = vadd.f32 %v41, %v42
  %v44 = vmul.f32 %v8, %v8
  %v45 = vmul.f32 %v9, %v9
  %v46 = vmul.f32 %v10, %v10
  %v47 = vmul.f32 %v11, %v11
  %v48 = vmul.f32 %v12, %v12
  %v49 = vmul.f32 %v13, %v13
  %v50 = vmul.f32 %v14, %v14
  %v51 = vmul.f32 %v15, %v15
  %v52 = vadd.f32 %v44, %v48
  %v53 = vrot.slane %v52, 4
  %v54 = vadd.f32 %v52, %v53
  %v55 = vrot.slane %v54, 2
  %v56 = vadd.f32 %v54, %v55
  %v57 = vrot.slane %v56, 1
  %v58 = vadd.f32 %v56, %v57
  %v59 = vadd.f32 %v45, %v49
  %v60 = vrot.slane %v59, 4
  %v61 = vadd.f32 %v59, %v60
  %v62 = vrot.slane %v61, 2
  %v63 = vadd.f32 %v61, %v62
  %v64 = vrot.slane %v63, 1
  %v65 = vadd.f32 %v63, %v64
  %v66 = vadd.f32 %v46, %v50
  %v67 = vrot.slane %v66, 4
  %v68 = vadd.f32 %v66, %v67
  %v69 = vrot.slane %v68, 2
  %v70 = vadd.f32 %v68, %v69
  %v71 = vrot.slane %v70, 1
  %v72 = vadd.f32 %v70, %v71
  %v73 = vadd.f32 %v47, %v51
  %v74 = vrot.slane %v73, 4
  %v75 = vadd.f32 %v73, %v74
  %v76 = vrot.slane %v75, 2
  %v77 = vadd.f32 %v75, %v76
  %v78 = vrot.slane %v77, 1
  %v79 = vadd.f32 %v77, %v78
  %vm80 = vcmask 1040384
  %v81 = vsel %vm80, %v22, %v58
  %v82 = vsel %vm80, %v29, %v65
  %v83 = vsel %vm80, %v36, %v72
  %v84 = vsel %vm80, %v43, %v79
  %p85 = scmp.eq.s32.totalorder 0, 0
  // Predicated region
  $region6: #{generator_forward.13} parent=0 // pred_check
    %p86 = pneg %p85
  $region7: #{generator_forward.13} parent=0 // pred_check_branch
    %88 = sbr.rel (%p86) target = $region9
  $region8: #{generator_forward.13} parent=0 // pred_region
    %v93 = vcombine.low %v81, %v82
    %v94 = vcombine.low %v83, %v84
    %v96 = vunpack.c.l.s4 1983009808
    %v97 = vunpack.c.0.s8 %v96
    %v98 = vlaneseq
    %v99 = vshrl.u32 %v98, 7
    %v100 = vsub.s32 %v97, %v99
    %v101 = vrot.slane %v93, %v100
    %v103 = vunpack.c.l.s4 1983009808
    %v104 = vunpack.c.0.s8 %v103
    %v105 = vlaneseq
    %v106 = vshrl.u32 %v105, 7
    %v107 = vsub.s32 %v104, %v106
    %v108 = vrot.slane %v94, %v107
    %v109 = vcombine.low %v101, %v108
    %111 = vst [vmem:[%s1] sm:$0xff] %v109
  $region9: #{generator_forward.13} parent=0 // pred_fallthru
    _
  %p112 = scmp.gt.s32.totalorder 0, 0
  // Predicated region
  $region10: #{generator_forward.13} parent=0 // pred_check
    %p113 = pneg %p112
  $region11: #{generator_forward.13} parent=0 // pred_check_branch
    %115 = sbr.rel (%p113) target = $region13
  $region12: #{generator_forward.13} parent=0 // pred_region
    %v116 = vld [vmem:[%s1] sm:$0xff]
    %v121 = vcombine.low %v81, %v82
    %v122 = vcombine.low %v83, %v84
    %v124 = vunpack.c.l.s4 1983009808
    %v125 = vunpack.c.0.s8 %v124
    %v126 = vlaneseq
    %v127 = vshrl.u32 %v126, 7
    %v128 = vsub.s32 %v125, %v127
    %v129 = vrot.slane %v121, %v128
    %v131 = vunpack.c.l.s4 1983009808
    %v132 = vunpack.c.0.s8 %v131
    %v133 = vlaneseq
    %v134 = vshrl.u32 %v133, 7
    %v135 = vsub.s32 %v132, %v134
    %v136 = vrot.slane %v122, %v135
    %v137 = vcombine.low %v129, %v136
    %v139 = vadd.f32 %v116, %v137
    %140 = vst [vmem:[%s1] sm:$0xff] %v139
  $region13: #{generator_forward.13} parent=0 // pred_fallthru
    _
  // Predicated region
  $region14: #{generator_forward.13} parent=0 // pred_check
    _
  $region15: #{generator_forward.13} parent=0 // pred_check_branch
    %142 = sbr.rel (0) target = $region17
  $region16: #{generator_forward.13} parent=0 // pred_region
    _
  $region17: #{generator_forward.13} parent=0 // pred_fallthru
    _
  // Predicated region
  $region18: #{generator_forward.13} parent=0 // pred_check
    _
  $region19: #{generator_forward.13} parent=0 // pred_check_branch
    %144 = sbr.rel (0) target = $region21
  $region20: #{generator_forward.13} parent=0 // pred_region
    _
  $region21: #{generator_forward.13} parent=0 // pred_fallthru
    _

// kernel: generator_forward.14
$region0: #{generator_forward.14}
  #allocation0 [shape = 'u32[]', space=smem, size = 0x4, offset = 0x4, fixed_abs, tag = 'smem constant byte address 0x4 - core index']
  #allocation1 [shape = 'u32[144,128]{1,0:T(1,128)}', space=vmem, size = 0x12000, scoped, tag = 'internal scratch']
  %s0 = inlined_call_operand.vmem [shape: f32[2,64], index: 0, kind: input, shape index: {}]
  %s1 = inlined_call_operand.vmem [shape: f32[128,64], index: 1, kind: input, shape index: {}]
  %s2 = inlined_call_operand.vmem [shape: bf16[64,512], index: 2, kind: input, shape index: {}]
  %s3 = inlined_call_operand.vmem [shape: f32[128,512], index: 3, kind: output, shape index: {}]
  %s4 = sld [smem:[#allocation0]]
  $region22: #{generator_forward.14} parent=0
    _
  %s6 = ssub.s32 1, %s4
  %s7 = scalar_select 0, %s6, %s4
  // Predicated region
  $region2: #{generator_forward.14} parent=0 // pred_check
    _
  $region3: #{generator_forward.14} parent=0 // pred_check_branch
    %9 = sbr.rel (0) target = $region5
  $region4: #{generator_forward.14} parent=0 // pred_region
    _
  $region5: #{generator_forward.14} parent=0 // pred_fallthru
    _
  // Predicated region
  $region6: #{generator_forward.14} parent=0 // pred_check
    _
  $region7: #{generator_forward.14} parent=0 // pred_check_branch
    %11 = sbr.rel (0) target = $region9
  $region8: #{generator_forward.14} parent=0 // pred_region
    _
  $region9: #{generator_forward.14} parent=0 // pred_fallthru
    _
  // Predicated region
  $region10: #{generator_forward.14} parent=0 // pred_check
    _
  $region11: #{generator_forward.14} parent=0 // pred_check_branch
    %13 = sbr.rel (0) target = $region13
  $region12: #{generator_forward.14} parent=0 // pred_region
    _
  $region13: #{generator_forward.14} parent=0 // pred_fallthru
    _
  %v15 = vld [vmem:[%s0] sm:$0x3]
  %v16 = vld [vmem:[%s1] sm:$0xff]
  %v17 = vld [vmem:[%s1 + $0x8] sm:$0xff]
  %v18 = vld [vmem:[%s1 + $0x10] sm:$0xff]
  %v19 = vld [vmem:[%s1 + $0x18] sm:$0xff]
  %v20 = vld [vmem:[%s1 + $0x20] sm:$0xff]
  %v21 = vld [vmem:[%s1 + $0x28] sm:$0xff]
  %v22 = vld [vmem:[%s1 + $0x30] sm:$0xff]
  %v23 = vld [vmem:[%s1 + $0x38] sm:$0xff]
  %v24 = vld [vmem:[%s1 + $0x40] sm:$0xff]
  %v25 = vld [vmem:[%s1 + $0x48] sm:$0xff]
  %v26 = vld [vmem:[%s1 + $0x50] sm:$0xff]
  %v27 = vld [vmem:[%s1 + $0x58] sm:$0xff]
  %v28 = vld [vmem:[%s1 + $0x60] sm:$0xff]
  %v29 = vld [vmem:[%s1 + $0x68] sm:$0xff]
  %v30 = vld [vmem:[%s1 + $0x70] sm:$0xff]
  %v31 = vld [vmem:[%s1 + $0x78] sm:$0xff]
  %v32 = vlaneseq
  %v33 = vshrl.u32 %v32, 7
  %v34 = vsub.s32 0, %v33
  %v35 = vrot.slane %v15, %v34
  %v36 = vmul.f32 %v16, %v35
  %v37 = vmul.f32 %v17, %v35
  %v38 = vmul.f32 %v18, %v35
  %v39 = vmul.f32 %v19, %v35
  %v40 = vmul.f32 %v20, %v35
  %v41 = vmul.f32 %v21, %v35
  %v42 = vmul.f32 %v22, %v35
  %v43 = vmul.f32 %v23, %v35
  %v44 = vmul.f32 %v24, %v35
  %v45 = vmul.f32 %v25, %v35
  %v46 = vmul.f32 %v26, %v35
  %v47 = vmul.f32 %v27, %v35
  %v48 = vmul.f32 %v28, %v35
  %v49 = vmul.f32 %v29, %v35
  %v50 = vmul.f32 %v30, %v35
  %v51 = vmul.f32 %v31, %v35
  %v52 = vlaneseq
  %v53 = vshrl.u32 %v52, 7
  %v54 = vsub.s32 1, %v53
  %v55 = vrot.slane %v15, %v54
  %v56 = vadd.f32 %v36, %v55
  %v57 = vadd.f32 %v37, %v55
  %v58 = vadd.f32 %v38, %v55
  %v59 = vadd.f32 %v39, %v55
  %v60 = vadd.f32 %v40, %v55
  %v61 = vadd.f32 %v41, %v55
  %v62 = vadd.f32 %v42, %v55
  %v63 = vadd.f32 %v43, %v55
  %v64 = vadd.f32 %v44, %v55
  %v65 = vadd.f32 %v45, %v55
  %v66 = vadd.f32 %v46, %v55
  %v67 = vadd.f32 %v47, %v55
  %v68 = vadd.f32 %v48, %v55
  %v69 = vadd.f32 %v49, %v55
  %v70 = vadd.f32 %v50, %v55
  %v71 = vadd.f32 %v51, %v55
  %v72 = vmax.f32 %v56, 0.0
  %v73 = vmax.f32 %v57, 0.0
  %v74 = vmax.f32 %v58, 0.0
  %v75 = vmax.f32 %v59, 0.0
  %v76 = vmax.f32 %v60, 0.0
  %v77 = vmax.f32 %v61, 0.0
  %v78 = vmax.f32 %v62, 0.0
  %v79 = vmax.f32 %v63, 0.0
  %v80 = vmax.f32 %v64, 0.0
  %v81 = vmax.f32 %v65, 0.0
  %v82 = vmax.f32 %v66, 0.0
  %v83 = vmax.f32 %v67, 0.0
  %v84 = vmax.f32 %v68, 0.0
  %v85 = vmax.f32 %v69, 0.0
  %v86 = vmax.f32 %v70, 0.0
  %v87 = vmax.f32 %v71, 0.0
  %v88 = vpack.c.bf16 %v73, %v72
  %v89 = vpack.c.bf16 %v75, %v74
  %v90 = vpack.c.bf16 %v77, %v76
  %v91 = vpack.c.bf16 %v79, %v78
  %v92 = vpack.c.bf16 %v81, %v80
  %v93 = vpack.c.bf16 %v83, %v82
  %v94 = vpack.c.bf16 %v85, %v84
  %v95 = vpack.c.bf16 %v87, %v86
  %v96 = vld [vmem:[%s2] sm:$0xff]
  %v97 = vld [vmem:[%s2 + $0x8] sm:$0xff]
  %v98 = vld [vmem:[%s2 + $0x10] sm:$0xff]
  %v99 = vld [vmem:[%s2 + $0x18] sm:$0xff]
  %v100 = vld [vmem:[%s2 + $0x20] sm:$0xff]
  %v101 = vld [vmem:[%s2 + $0x28] sm:$0xff]
  %v102 = vld [vmem:[%s2 + $0x30] sm:$0xff]
  %v103 = vld [vmem:[%s2 + $0x38] sm:$0xff]
  %v104 = vld [vmem:[%s2 + $0x40] sm:$0xff]
  %v105 = vld [vmem:[%s2 + $0x48] sm:$0xff]
  %v106 = vld [vmem:[%s2 + $0x50] sm:$0xff]
  %v107 = vld [vmem:[%s2 + $0x58] sm:$0xff]
  %v108 = vld [vmem:[%s2 + $0x60] sm:$0xff]
  %v109 = vld [vmem:[%s2 + $0x68] sm:$0xff]
  %v110 = vld [vmem:[%s2 + $0x70] sm:$0xff]
  %v111 = vld [vmem:[%s2 + $0x78] sm:$0xff]
  %v128 = vunpack.c.l.b16 %v96
  %v129 = vunpack.c.h.b16 %v96
  %v130 = vunpack.c.l.b16 %v97
  %v131 = vunpack.c.h.b16 %v97
  %v132 = vunpack.c.l.b16 %v98
  %v133 = vunpack.c.h.b16 %v98
  %v134 = vunpack.c.l.b16 %v99
  %v135 = vunpack.c.h.b16 %v99
  %v136 = vunpack.c.l.b16 %v100
  %v137 = vunpack.c.h.b16 %v100
  %v138 = vunpack.c.l.b16 %v101
  %v139 = vunpack.c.h.b16 %v101
  %v140 = vunpack.c.l.b16 %v102
  %v141 = vunpack.c.h.b16 %v102
  %v142 = vunpack.c.l.b16 %v103
  %v143 = vunpack.c.h.b16 %v103
  %v144 = vunpack.c.l.b16 %v104
  %v145 = vunpack.c.h.b16 %v104
  %v146 = vunpack.c.l.b16 %v105
  %v147 = vunpack.c.h.b16 %v105
  %v148 = vunpack.c.l.b16 %v106
  %v149 = vunpack.c.h.b16 %v106
  %v150 = vunpack.c.l.b16 %v107
  %v151 = vunpack.c.h.b16 %v107
  %v152 = vunpack.c.l.b16 %v108
  %v153 = vunpack.c.h.b16 %v108
  %v154 = vunpack.c.l.b16 %v109
  %v155 = vunpack.c.h.b16 %v109
  %v156 = vunpack.c.l.b16 %v110
  %v157 = vunpack.c.h.b16 %v110
  %v158 = vunpack.c.l.b16 %v111
  %v159 = vunpack.c.h.b16 %v111
  %v160 = vpack.c.b16 %v132, %v128
  %v161 = vpack.c.b16 %v133, %v129
  %v162 = vpack.c.b16 %v134, %v130
  %v163 = vpack.c.b16 %v135, %v131
  %v164 = vpack.c.b16 %v140, %v136
  %v165 = vpack.c.b16 %v141, %v137
  %v166 = vpack.c.b16 %v142, %v138
  %v167 = vpack.c.b16 %v143, %v139
  %v168 = vpack.c.b16 %v148, %v144
  %v169 = vpack.c.b16 %v149, %v145
  %v170 = vpack.c.b16 %v150, %v146
  %v171 = vpack.c.b16 %v151, %v147
  %v172 = vpack.c.b16 %v156, %v152
  %v173 = vpack.c.b16 %v157, %v153
  %v174 = vpack.c.b16 %v158, %v154
  %v175 = vpack.c.b16 %v159, %v155
  %vm192 = vcmask 523264
  %v194 = vsel %vm192, %v88, 0
  %v197 = vsel %vm192, %v89, 0
  %v200 = vsel %vm192, %v90, 0
  %v203 = vsel %vm192, %v91, 0
  %v206 = vsel %vm192, %v92, 0
  %v209 = vsel %vm192, %v93, 0
  %v212 = vsel %vm192, %v94, 0
  %v215 = vsel %vm192, %v95, 0
  %217 = vmatprep.subr.bf16.mxu0 %v161
  %218 = vmatpush1.bf16.msra.mxu0 %v160
  %219 = vmatprep.subr.bf16.mxu0 %v165
  %220 = vmatpush1.bf16.msra.mxu0 %v164
  %221 = vmatprep.subr.bf16.mxu0 %v169
  %222 = vmatpush1.bf16.msra.mxu0 %v168
  %223 = vmatprep.subr.bf16.mxu0 %v173
  %224 = vmatpush1.bf16.msra.mxu0 %v172
  %225 = vmatprep.subr.bf16.mxu0 0
  %226 = vmatpush1.bf16.msra.mxu0 0
  %227 = vmatprep.subr.bf16.mxu0 0
  %228 = vmatpush1.bf16.msra.mxu0 0
  %229 = vmatprep.subr.bf16.mxu0 0
  %230 = vmatpush1.bf16.msra.mxu0 0
  %231 = vmatprep.subr.bf16.mxu0 0
  %232 = vmatpush1.bf16.msra.mxu0 0
  %233 = vmatprep.subr.bf16.mxu0 0
  %234 = vmatpush1.bf16.msra.mxu0 0
  %235 = vmatprep.subr.bf16.mxu0 0
  %236 = vmatpush1.bf16.msra.mxu0 0
  %237 = vmatprep.subr.bf16.mxu0 0
  %238 = vmatpush1.bf16.msra.mxu0 0
  %239 = vmatprep.subr.bf16.mxu0 0
  %240 = vmatpush1.bf16.msra.mxu0 0
  %241 = vmatprep.subr.bf16.mxu0 0
  %242 = vmatpush1.bf16.msra.mxu0 0
  %243 = vmatprep.subr.bf16.mxu0 0
  %244 = vmatpush1.bf16.msra.mxu0 0
  %245 = vmatprep.subr.bf16.mxu0 0
  %246 = vmatpush1.bf16.msra.mxu0 0
  %247 = vmatprep.subr.bf16.mxu0 0
  %248 = vmatpush1.bf16.msra.mxu0 0
  %249 = vmatprep.mubr.bf16.mxu0 0
  %250 = vmatmul.mubr.bf16.gmra.mrb[0].mxu0 %v194
  %v251 = vpop.f32.mrb[0].mxu0
  %v252 = vadd.f32 0.0, %v251
  %v253 = vpop.f32.mrb[0].mxu0
  %v254 = vadd.f32 0.0, %v253
  %v255 = vpop.f32.mrb[0].mxu0
  %v256 = vadd.f32 0.0, %v255
  %v257 = vpop.f32.mrb[0].mxu0
  %v258 = vadd.f32 0.0, %v257
  %259 = vmatprep.mubr.bf16.mxu0 0
  %260 = vmatmul.mubr.bf16.gmra.mrb[0].mxu0 %v197
  %v261 = vpop.f32.mrb[0].mxu0
  %v262 = vadd.f32 0.0, %v261
  %v263 = vpop.f32.mrb[0].mxu0
  %v264 = vadd.f32 0.0, %v263
  %v265 = vpop.f32.mrb[0].mxu0
  %v266 = vadd.f32 0.0, %v265
  %v267 = vpop.f32.mrb[0].mxu0
  %v268 = vadd.f32 0.0, %v267
  %269 = vmatprep.mubr.bf16.mxu0 0
  %270 = vmatmul.mubr.bf16.gmra.mrb[0].mxu0 %v200
  %v271 = vpop.f32.mrb[0].mxu0
  %v272 = vadd.f32 0.0, %v271
  %v273 = vpop.f32.mrb[0].mxu0
  %v274 = vadd.f32 0.0, %v273
  %v275 = vpop.f32.mrb[0].mxu0
  %v276 = vadd.f32 0.0, %v275
  %v277 = vpop.f32.mrb[0].mxu0
  %v278 = vadd.f32 0.0, %v277
  %279 = vmatprep.mubr.bf16.mxu0 0
  %280 = vmatmul.mubr.bf16.gmra.mrb[0].mxu0 %v203
  %v281 = vpop.f32.mrb[0].mxu0
  %v282 = vadd.f32 0.0, %v281
  %v283 = vpop.f32.mrb[0].mxu0
  %v284 = vadd.f32 0.0, %v283
  %v285 = vpop.f32.mrb[0].mxu0
  %v286 = vadd.f32 0.0, %v285
  %v287 = vpop.f32.mrb[0].mxu0
  %v288 = vadd.f32 0.0, %v287
  %289 = vmatprep.mubr.bf16.mxu0 0
  %290 = vmatmul.mubr.bf16.gmra.mrb[0].mxu0 %v206
  %v291 = vpop.f32.mrb[0].mxu0
  %v292 = vadd.f32 0.0, %v291
  %v293 = vpop.f32.mrb[0].mxu0
  %v294 = vadd.f32 0.0, %v293
  %v295 = vpop.f32.mrb[0].mxu0
  %v296 = vadd.f32 0.0, %v295
  %v297 = vpop.f32.mrb[0].mxu0
  %v298 = vadd.f32 0.0, %v297
  %299 = vmatprep.mubr.bf16.mxu0 0
  %300 = vmatmul.mubr.bf16.gmra.mrb[0].mxu0 %v209
  %v301 = vpop.f32.mrb[0].mxu0
  %v302 = vadd.f32 0.0, %v301
  %v303 = vpop.f32.mrb[0].mxu0
  %v304 = vadd.f32 0.0, %v303
  %v305 = vpop.f32.mrb[0].mxu0
  %v306 = vadd.f32 0.0, %v305
  %v307 = vpop.f32.mrb[0].mxu0
  %v308 = vadd.f32 0.0, %v307
  %309 = vmatprep.mubr.bf16.mxu0 0
  %310 = vmatmul.mubr.bf16.gmra.mrb[0].mxu0 %v212
  %v311 = vpop.f32.mrb[0].mxu0
  %v312 = vadd.f32 0.0, %v311
  %v313 = vpop.f32.mrb[0].mxu0
  %v314 = vadd.f32 0.0, %v313
  %v315 = vpop.f32.mrb[0].mxu0
  %v316 = vadd.f32 0.0, %v315
  %v317 = vpop.f32.mrb[0].mxu0
  %v318 = vadd.f32 0.0, %v317
  %319 = vmatprep.mubr.bf16.mxu0 0
  %320 = vmatmul.mubr.bf16.gmra.mrb[0].mxu0 %v215
  %v321 = vpop.f32.mrb[0].mxu0
  %v322 = vadd.f32 0.0, %v321
  %v323 = vpop.f32.mrb[0].mxu0
  %v324 = vadd.f32 0.0, %v323
  %v325 = vpop.f32.mrb[0].mxu0
  %v326 = vadd.f32 0.0, %v325
  %v327 = vpop.f32.mrb[0].mxu0
  %v328 = vadd.f32 0.0, %v327
  %329 = vdwg.mxu0
  %330 = vmatprep.subr.bf16.mxu0 %v163
  %331 = vmatpush1.bf16.msra.mxu0 %v162
  %332 = vmatprep.subr.bf16.mxu0 %v167
  %333 = vmatpush1.bf16.msra.mxu0 %v166
  %334 = vmatprep.subr.bf16.mxu0 %v171
  %335 = vmatpush1.bf16.msra.mxu0 %v170
  %336 = vmatprep.subr.bf16.mxu0 %v175
  %337 = vmatpush1.bf16.msra.mxu0 %v174
  %338 = vmatprep.subr.bf16.mxu0 0
  %339 = vmatpush1.bf16.msra.mxu0 0
  %340 = vmatprep.subr.bf16.mxu0 0
  %341 = vmatpush1.bf16.msra.mxu0 0
  %342 = vmatprep.subr.bf16.mxu0 0
  %343 = vmatpush1.bf16.msra.mxu0 0
  %344 = vmatprep.subr.bf16.mxu0 0
  %345 = vmatpush1.bf16.msra.mxu0 0
  %346 = vmatprep.subr.bf16.mxu0 0
  %347 = vmatpush1.bf16.msra.mxu0 0
  %348 = vmatprep.subr.bf16.mxu0 0
  %349 = vmatpush1.bf16.msra.mxu0 0
  %350 = vmatprep.subr.bf16.mxu0 0
  %351 = vmatpush1.bf16.msra.mxu0 0
  %352 = vmatprep.subr.bf16.mxu0 0
  %353 = vmatpush1.bf16.msra.mxu0 0
  %354 = vmatprep.subr.bf16.mxu0 0
  %355 = vmatpush1.bf16.msra.mxu0 0
  %356 = vmatprep.subr.bf16.mxu0 0
  %357 = vmatpush1.bf16.msra.mxu0 0
  %358 = vmatprep.subr.bf16.mxu0 0
  %359 = vmatpush1.bf16.msra.mxu0 0
  %360 = vmatprep.subr.bf16.mxu0 0
  %361 = vmatpush1.bf16.msra.mxu0 0
  %362 = vmatprep.mubr.bf16.mxu0 0
  %363 = vmatmul.mubr.bf16.gmra.mrb[0].mxu0 %v194
  %v364 = vpop.f32.mrb[0].mxu0
  %v365 = vadd.f32 0.0, %v364
  %v366 = vpop.f32.mrb[0].mxu0
  %v367 = vadd.f32 0.0, %v366
  %v368 = vpop.f32.mrb[0].mxu0
  %v369 = vadd.f32 0.0, %v368
  %v370 = vpop.f32.mrb[0].mxu0
  %v371 = vadd.f32 0.0, %v370
  %372 = vmatprep.mubr.bf16.mxu0 0
  %373 = vmatmul.mubr.bf16.gmra.mrb[0].mxu0 %v197
  %v374 = vpop.f32.mrb[0].mxu0
  %v375 = vadd.f32 0.0, %v374
  %v376 = vpop.f32.mrb[0].mxu0
  %v377 = vadd.f32 0.0, %v376
  %v378 = vpop.f32.mrb[0].mxu0
  %v379 = vadd.f32 0.0, %v378
  %v380 = vpop.f32.mrb[0].mxu0
  %v381 = vadd.f32 0.0, %v380
  %382 = vmatprep.mubr.bf16.mxu0 0
  %383 = vmatmul.mubr.bf16.gmra.mrb[0].mxu0 %v200
  %v384 = vpop.f32.mrb[0].mxu0
  %v385 = vadd.f32 0.0, %v384
  %v386 = vpop.f32.mrb[0].mxu0
  %v387 = vadd.f32 0.0, %v386
  %v388 = vpop.f32.mrb[0].mxu0
  %v389 = vadd.f32 0.0, %v388
  %v390 = vpop.f32.mrb[0].mxu0
  %v391 = vadd.f32 0.0, %v390
  %392 = vmatprep.mubr.bf16.mxu0 0
  %393 = vmatmul.mubr.bf16.gmra.mrb[0].mxu0 %v203
  %v394 = vpop.f32.mrb[0].mxu0
  %v395 = vadd.f32 0.0, %v394
  %v396 = vpop.f32.mrb[0].mxu0
  %v397 = vadd.f32 0.0, %v396
  %v398 = vpop.f32.mrb[0].mxu0
  %v399 = vadd.f32 0.0, %v398
  %v400 = vpop.f32.mrb[0].mxu0
  %v401 = vadd.f32 0.0, %v400
  %402 = vmatprep.mubr.bf16.mxu0 0
  %403 = vmatmul.mubr.bf16.gmra.mrb[0].mxu0 %v206
  %v404 = vpop.f32.mrb[0].mxu0
  %v405 = vadd.f32 0.0, %v404
  %v406 = vpop.f32.mrb[0].mxu0
  %v407 = vadd.f32 0.0, %v406
  %v408 = vpop.f32.mrb[0].mxu0
  %v409 = vadd.f32 0.0, %v408
  %v410 = vpop.f32.mrb[0].mxu0
  %v411 = vadd.f32 0.0, %v410
  %412 = vmatprep.mubr.bf16.mxu0 0
  %413 = vmatmul.mubr.bf16.gmra.mrb[0].mxu0 %v209
  %v414 = vpop.f32.mrb[0].mxu0
  %v415 = vadd.f32 0.0, %v414
  %v416 = vpop.f32.mrb[0].mxu0
  %v417 = vadd.f32 0.0, %v416
  %v418 = vpop.f32.mrb[0].mxu0
  %v419 = vadd.f32 0.0, %v418
  %v420 = vpop.f32.mrb[0].mxu0
  %v421 = vadd.f32 0.0, %v420
  %422 = vmatprep.mubr.bf16.mxu0 0
  %423 = vmatmul.mubr.bf16.gmra.mrb[0].mxu0 %v212
  %v424 = vpop.f32.mrb[0].mxu0
  %v425 = vadd.f32 0.0, %v424
  %v426 = vpop.f32.mrb[0].mxu0
  %v427 = vadd.f32 0.0, %v426
  %v428 = vpop.f32.mrb[0].mxu0
  %v429 = vadd.f32 0.0, %v428
  %v430 = vpop.f32.mrb[0].mxu0
  %v431 = vadd.f32 0.0, %v430
  %432 = vmatprep.mubr.bf16.mxu0 0
  %433 = vmatmul.mubr.bf16.gmra.mrb[0].mxu0 %v215
  %v434 = vpop.f32.mrb[0].mxu0
  %v435 = vadd.f32 0.0, %v434
  %v436 = vpop.f32.mrb[0].mxu0
  %v437 = vadd.f32 0.0, %v436
  %v438 = vpop.f32.mrb[0].mxu0
  %v439 = vadd.f32 0.0, %v438
  %v440 = vpop.f32.mrb[0].mxu0
  %v441 = vadd.f32 0.0, %v440
  %442 = vdwg.mxu0
  %443 = vst [vmem:[%s3] sm:$0xff] %v252
  %444 = vst [vmem:[%s3 + $0x8] sm:$0xff] %v254
  %445 = vst [vmem:[%s3 + $0x10] sm:$0xff] %v365
  %446 = vst [vmem:[%s3 + $0x18] sm:$0xff] %v367
  %447 = vst [vmem:[%s3 + $0x20] sm:$0xff] %v256
  %448 = vst [vmem:[%s3 + $0x28] sm:$0xff] %v258
  %449 = vst [vmem:[%s3 + $0x30] sm:$0xff] %v369
  %450 = vst [vmem:[%s3 + $0x38] sm:$0xff] %v371
  %451 = vst [vmem:[%s3 + $0x40] sm:$0xff] %v262
  %452 = vst [vmem:[%s3 + $0x48] sm:$0xff] %v264
  %453 = vst [vmem:[%s3 + $0x50] sm:$0xff] %v375
  %454 = vst [vmem:[%s3 + $0x58] sm:$0xff] %v377
  %455 = vst [vmem:[%s3 + $0x60] sm:$0xff] %v266
  %456 = vst [vmem:[%s3 + $0x68] sm:$0xff] %v268
  %457 = vst [vmem:[%s3 + $0x70] sm:$0xff] %v379
  %458 = vst [vmem:[%s3 + $0x78] sm:$0xff] %v381
  %459 = vst [vmem:[%s3 + $0x80] sm:$0xff] %v272
  %460 = vst [vmem:[%s3 + $0x88] sm:$0xff] %v274
  %461 = vst [vmem:[%s3 + $0x90] sm:$0xff] %v385
  %462 = vst [vmem:[%s3 + $0x98] sm:$0xff] %v387
  %463 = vst [vmem:[%s3 + $0xa0] sm:$0xff] %v276
  %464 = vst [vmem:[%s3 + $0xa8] sm:$0xff] %v278
  %465 = vst [vmem:[%s3 + $0xb0] sm:$0xff] %v389
  %466 = vst [vmem:[%s3 + $0xb8] sm:$0xff] %v391
  %467 = vst [vmem:[%s3 + $0xc0] sm:$0xff] %v282
  %468 = vst [vmem:[%s3 + $0xc8] sm:$0xff] %v284
  %469 = vst [vmem:[%s3 + $0xd0] sm:$0xff] %v395
  %470 = vst [vmem:[%s3 + $0xd8] sm:$0xff] %v397
  %471 = vst [vmem:[%s3 + $0xe0] sm:$0xff] %v286
  %472 = vst [vmem:[%s3 + $0xe8] sm:$0xff] %v288
  %473 = vst [vmem:[%s3 + $0xf0] sm:$0xff] %v399
  %474 = vst [vmem:[%s3 + $0xf8] sm:$0xff] %v401
  %475 = vst [vmem:[%s3 + $0x100] sm:$0xff] %v292
  %476 = vst [vmem:[%s3 + $0x108] sm:$0xff] %v294
  %477 = vst [vmem:[%s3 + $0x110] sm:$0xff] %v405
  %478 = vst [vmem:[%s3 + $0x118] sm:$0xff] %v407
  %479 = vst [vmem:[%s3 + $0x120] sm:$0xff] %v296
  %480 = vst [vmem:[%s3 + $0x128] sm:$0xff] %v298
  %481 = vst [vmem:[%s3 + $0x130] sm:$0xff] %v409
  %482 = vst [vmem:[%s3 + $0x138] sm:$0xff] %v411
  %483 = vst [vmem:[%s3 + $0x140] sm:$0xff] %v302
  %484 = vst [vmem:[%s3 + $0x148] sm:$0xff] %v304
  %485 = vst [vmem:[%s3 + $0x150] sm:$0xff] %v415
  %486 = vst [vmem:[%s3 + $0x158] sm:$0xff] %v417
  %487 = vst [vmem:[%s3 + $0x160] sm:$0xff] %v306
  %488 = vst [vmem:[%s3 + $0x168] sm:$0xff] %v308
  %489 = vst [vmem:[%s3 + $0x170] sm:$0xff] %v419
  %490 = vst [vmem:[%s3 + $0x178] sm:$0xff] %v421
  %491 = vst [vmem:[%s3 + $0x180] sm:$0xff] %v312
  %492 = vst [vmem:[%s3 + $0x188] sm:$0xff] %v314
  %493 = vst [vmem:[%s3 + $0x190] sm:$0xff] %v425
  %494 = vst [vmem:[%s3 + $0x198] sm:$0xff] %v427
  %495 = vst [vmem:[%s3 + $0x1a0] sm:$0xff] %v316
  %496 = vst [vmem:[%s3 + $0x1a8] sm:$0xff] %v318
  %497 = vst [vmem:[%s3 + $0x1b0] sm:$0xff] %v429
  %498 = vst [vmem:[%s3 + $0x1b8] sm:$0xff] %v431
  %499 = vst [vmem:[%s3 + $0x1c0] sm:$0xff] %v322
  %500 = vst [vmem:[%s3 + $0x1c8] sm:$0xff] %v324
  %501 = vst [vmem:[%s3 + $0x1d0] sm:$0xff] %v435
  %502 = vst [vmem:[%s3 + $0x1d8] sm:$0xff] %v437
  %503 = vst [vmem:[%s3 + $0x1e0] sm:$0xff] %v326
  %504 = vst [vmem:[%s3 + $0x1e8] sm:$0xff] %v328
  %505 = vst [vmem:[%s3 + $0x1f0] sm:$0xff] %v439
  %506 = vst [vmem:[%s3 + $0x1f8] sm:$0xff] %v441
  // Predicated region
  $region14: #{generator_forward.14} parent=0 // pred_check
    _
  $region15: #{generator_forward.14} parent=0 // pred_check_branch
    %508 = sbr.rel (0) target = $region17
  $region16: #{generator_forward.14} parent=0 // pred_region
    _
  $region17: #{generator_forward.14} parent=0 // pred_fallthru
    _
  // Predicated region
  $region18: #{generator_forward.14} parent=0 // pred_check
    _
  $region19: #{generator_forward.14} parent=0 // pred_check_branch
    %510 = sbr.rel (0) target = $region21
  $region20: #{generator_forward.14} parent=0 // pred_region
    _
  $region21: #{generator_forward.14} parent=0 // pred_fallthru
    _

// kernel: generator_forward.15
$region0: #{generator_forward.15}
  #allocation0 [shape = 'u32[]', space=smem, size = 0x4, offset = 0x4, fixed_abs, tag = 'smem constant byte address 0x4 - core index']
  #allocation1 [shape = 'u32[144,128]{1,0:T(1,128)}', space=vmem, size = 0x12000, scoped, tag = 'internal scratch']
  %s0 = inlined_call_operand.vmem [shape: f32[32,512], index: 0, kind: input, shape index: {}]
  %s1 = inlined_call_operand.vmem [shape: f32[2,512], index: 1, kind: output, shape index: {}]
  %s2 = sld [smem:[#allocation0]]
  $region22: #{generator_forward.15} parent=0
    _
  %s4 = ssub.s32 1, %s2
  %s5 = scalar_select 0, %s4, %s2
  // Predicated region
  $region2: #{generator_forward.15} parent=0 // pred_check
    _
  $region3: #{generator_forward.15} parent=0 // pred_check_branch
    %7 = sbr.rel (0) target = $region5
  $region4: #{generator_forward.15} parent=0 // pred_region
    _
  $region5: #{generator_forward.15} parent=0 // pred_fallthru
    _
  %v8 = vld [vmem:[%s0] sm:$0xff]
  %v9 = vld [vmem:[%s0 + $0x8] sm:$0xff]
  %v10 = vld [vmem:[%s0 + $0x10] sm:$0xff]
  %v11 = vld [vmem:[%s0 + $0x18] sm:$0xff]
  %v12 = vld [vmem:[%s0 + $0x20] sm:$0xff]
  %v13 = vld [vmem:[%s0 + $0x28] sm:$0xff]
  %v14 = vld [vmem:[%s0 + $0x30] sm:$0xff]
  %v15 = vld [vmem:[%s0 + $0x38] sm:$0xff]
  %v16 = vld [vmem:[%s0 + $0x40] sm:$0xff]
  %v17 = vld [vmem:[%s0 + $0x48] sm:$0xff]
  %v18 = vld [vmem:[%s0 + $0x50] sm:$0xff]
  %v19 = vld [vmem:[%s0 + $0x58] sm:$0xff]
  %v20 = vld [vmem:[%s0 + $0x60] sm:$0xff]
  %v21 = vld [vmem:[%s0 + $0x68] sm:$0xff]
  %v22 = vld [vmem:[%s0 + $0x70] sm:$0xff]
  %v23 = vld [vmem:[%s0 + $0x78] sm:$0xff]
  %v24 = vadd.f32 %v8, %v12
  %v25 = vadd.f32 %v24, %v16
  %v26 = vadd.f32 %v25, %v20
  %v27 = vrot.slane %v26, 4
  %v28 = vadd.f32 %v26, %v27
  %v29 = vrot.slane %v28, 2
  %v30 = vadd.f32 %v28, %v29
  %v31 = vrot.slane %v30, 1
  %v32 = vadd.f32 %v30, %v31
  %v33 = vadd.f32 %v9, %v13
  %v34 = vadd.f32 %v33, %v17
  %v35 = vadd.f32 %v34, %v21
  %v36 = vrot.slane %v35, 4
  %v37 = vadd.f32 %v35, %v36
  %v38 = vrot.slane %v37, 2
  %v39 = vadd.f32 %v37, %v38
  %v40 = vrot.slane %v39, 1
  %v41 = vadd.f32 %v39, %v40
  %v42 = vadd.f32 %v10, %v14
  %v43 = vadd.f32 %v42, %v18
  %v44 = vadd.f32 %v43, %v22
  %v45 = vrot.slane %v44, 4
  %v46 = vadd.f32 %v44, %v45
  %v47 = vrot.slane %v46, 2
  %v48 = vadd.f32 %v46, %v47
  %v49 = vrot.slane %v48, 1
  %v50 = vadd.f32 %v48, %v49
  %v51 = vadd.f32 %v11, %v15
  %v52 = vadd.f32 %v51, %v19
  %v53 = vadd.f32 %v52, %v23
  %v54 = vrot.slane %v53, 4
  %v55 = vadd.f32 %v53, %v54
  %v56 = vrot.slane %v55, 2
  %v57 = vadd.f32 %v55, %v56
  %v58 = vrot.slane %v57, 1
  %v59 = vadd.f32 %v57, %v58
  %v60 = vmul.f32 %v8, %v8
  %v61 = vmul.f32 %v9, %v9
  %v62 = vmul.f32 %v10, %v10
  %v63 = vmul.f32 %v11, %v11
  %v64 = vmul.f32 %v12, %v12
  %v65 = vmul.f32 %v13, %v13
  %v66 = vmul.f32 %v14, %v14
  %v67 = vmul.f32 %v15, %v15
  %v68 = vmul.f32 %v16, %v16
  %v69 = vmul.f32 %v17, %v17
  %v70 = vmul.f32 %v18, %v18
  %v71 = vmul.f32 %v19, %v19
  %v72 = vmul.f32 %v20, %v20
  %v73 = vmul.f32 %v21, %v21
  %v74 = vmul.f32 %v22, %v22
  %v75 = vmul.f32 %v23, %v23
  %v76 = vadd.f32 %v60, %v64
  %v77 = vadd.f32 %v76, %v68
  %v78 = vadd.f32 %v77, %v72
  %v79 = vrot.slane %v78, 4
  %v80 = vadd.f32 %v78, %v79
  %v81 = vrot.slane %v80, 2
  %v82 = vadd.f32 %v80, %v81
  %v83 = vrot.slane %v82, 1
  %v84 = vadd.f32 %v82, %v83
  %v85 = vadd.f32 %v61, %v65
  %v86 = vadd.f32 %v85, %v69
  %v87 = vadd.f32 %v86, %v73
  %v88 = vrot.slane %v87, 4
  %v89 = vadd.f32 %v87, %v88
  %v90 = vrot.slane %v89, 2
  %v91 = vadd.f32 %v89, %v90
  %v92 = vrot.slane %v91, 1
  %v93 = vadd.f32 %v91, %v92
  %v94 = vadd.f32 %v62, %v66
  %v95 = vadd.f32 %v94, %v70
  %v96 = vadd.f32 %v95, %v74
  %v97 = vrot.slane %v96, 4
  %v98 = vadd.f32 %v96, %v97
  %v99 = vrot.slane %v98, 2
  %v100 = vadd.f32 %v98, %v99
  %v101 = vrot.slane %v100, 1
  %v102 = vadd.f32 %v100, %v101
  %v103 = vadd.f32 %v63, %v67
  %v104 = vadd.f32 %v103, %v71
  %v105 = vadd.f32 %v104, %v75
  %v106 = vrot.slane %v105, 4
  %v107 = vadd.f32 %v105, %v106
  %v108 = vrot.slane %v107, 2
  %v109 = vadd.f32 %v107, %v108
  %v110 = vrot.slane %v109, 1
  %v111 = vadd.f32 %v109, %v110
  %vm112 = vcmask 1040384
  %v113 = vsel %vm112, %v32, %v84
  %v114 = vsel %vm112, %v41, %v93
  %v115 = vsel %vm112, %v50, %v102
  %v116 = vsel %vm112, %v59, %v111
  %p117 = scmp.eq.s32.totalorder 0, 0
  // Predicated region
  $region6: #{generator_forward.15} parent=0 // pred_check
    %p118 = pneg %p117
  $region7: #{generator_forward.15} parent=0 // pred_check_branch
    %120 = sbr.rel (%p118) target = $region9
  $region8: #{generator_forward.15} parent=0 // pred_region
    %v125 = vcombine.low %v113, %v114
    %v126 = vcombine.low %v115, %v116
    %v128 = vunpack.c.l.s4 1983009808
    %v129 = vunpack.c.0.s8 %v128
    %v130 = vlaneseq
    %v131 = vshrl.u32 %v130, 7
    %v132 = vsub.s32 %v129, %v131
    %v133 = vrot.slane %v125, %v132
    %v135 = vunpack.c.l.s4 1983009808
    %v136 = vunpack.c.0.s8 %v135
    %v137 = vlaneseq
    %v138 = vshrl.u32 %v137, 7
    %v139 = vsub.s32 %v136, %v138
    %v140 = vrot.slane %v126, %v139
    %v141 = vcombine.low %v133, %v140
    %143 = vst [vmem:[%s1] sm:$0xff] %v141
  $region9: #{generator_forward.15} parent=0 // pred_fallthru
    _
  %p144 = scmp.gt.s32.totalorder 0, 0
  // Predicated region
  $region10: #{generator_forward.15} parent=0 // pred_check
    %p145 = pneg %p144
  $region11: #{generator_forward.15} parent=0 // pred_check_branch
    %147 = sbr.rel (%p145) target = $region13
  $region12: #{generator_forward.15} parent=0 // pred_region
    %v148 = vld [vmem:[%s1] sm:$0xff]
    %v153 = vcombine.low %v113, %v114
    %v154 = vcombine.low %v115, %v116
    %v156 = vunpack.c.l.s4 1983009808
    %v157 = vunpack.c.0.s8 %v156
    %v158 = vlaneseq
    %v159 = vshrl.u32 %v158, 7
    %v160 = vsub.s32 %v157, %v159
    %v161 = vrot.slane %v153, %v160
    %v163 = vunpack.c.l.s4 1983009808
    %v164 = vunpack.c.0.s8 %v163
    %v165 = vlaneseq
    %v166 = vshrl.u32 %v165, 7
    %v167 = vsub.s32 %v164, %v166
    %v168 = vrot.slane %v154, %v167
    %v169 = vcombine.low %v161, %v168
    %v171 = vadd.f32 %v148, %v169
    %172 = vst [vmem:[%s1] sm:$0xff] %v171
  $region13: #{generator_forward.15} parent=0 // pred_fallthru
    _
  // Predicated region
  $region14: #{generator_forward.15} parent=0 // pred_check
    _
  $region15: #{generator_forward.15} parent=0 // pred_check_branch
    %174 = sbr.rel (0) target = $region17
  $region16: #{generator_forward.15} parent=0 // pred_region
    _
  $region17: #{generator_forward.15} parent=0 // pred_fallthru
    _
  // Predicated region
  $region18: #{generator_forward.15} parent=0 // pred_check
    _
  $region19: #{generator_forward.15} parent=0 // pred_check_branch
    %176 = sbr.rel (0) target = $region21
  $region20: #{generator_forward.15} parent=0 // pred_region
    _
  $region21: #{generator_forward.15} parent=0 // pred_fallthru
    _

// kernel: generator_forward.16
$region0: #{generator_forward.16}
  #allocation0 [shape = 'u32[]', space=smem, size = 0x4, offset = 0x4, fixed_abs, tag = 'smem constant byte address 0x4 - core index']
  #allocation1 [shape = 'u32[144,128]{1,0:T(1,128)}', space=vmem, size = 0x12000, scoped, tag = 'internal scratch']
  %s0 = inlined_call_operand.vmem [shape: f32[2,32], index: 0, kind: input, shape index: {}]
  %s1 = inlined_call_operand.vmem [shape: f32[512,32], index: 1, kind: input, shape index: {}]
  %s2 = inlined_call_operand.vmem [shape: bf16[32,256], index: 2, kind: input, shape index: {}]
  %s3 = inlined_call_operand.vmem [shape: f32[512,256], index: 3, kind: output, shape index: {}]
  %s4 = sld [smem:[#allocation0]]
  $region22: #{generator_forward.16} parent=0
    _
  %s6 = ssub.s32 1, %s4
  %s7 = scalar_select 0, %s6, %s4
  // Predicated region
  $region2: #{generator_forward.16} parent=0 // pred_check
    _
  $region3: #{generator_forward.16} parent=0 // pred_check_branch
    %9 = sbr.rel (0) target = $region5
  $region4: #{generator_forward.16} parent=0 // pred_region
    _
  $region5: #{generator_forward.16} parent=0 // pred_fallthru
    _
  // Predicated region
  $region6: #{generator_forward.16} parent=0 // pred_check
    _
  $region7: #{generator_forward.16} parent=0 // pred_check_branch
    %11 = sbr.rel (0) target = $region9
  $region8: #{generator_forward.16} parent=0 // pred_region
    _
  $region9: #{generator_forward.16} parent=0 // pred_fallthru
    _
  // Predicated region
  $region10: #{generator_forward.16} parent=0 // pred_check
    _
  $region11: #{generator_forward.16} parent=0 // pred_check_branch
    %13 = sbr.rel (0) target = $region13
  $region12: #{generator_forward.16} parent=0 // pred_region
    _
  $region13: #{generator_forward.16} parent=0 // pred_fallthru
    _
  %v15 = vld [vmem:[%s0] sm:$0x3]
  %v16 = vld [vmem:[%s1] sm:$0xff]
  %v17 = vld [vmem:[%s1 + $0x8] sm:$0xff]
  %v18 = vld [vmem:[%s1 + $0x10] sm:$0xff]
  %v19 = vld [vmem:[%s1 + $0x18] sm:$0xff]
  %v20 = vld [vmem:[%s1 + $0x20] sm:$0xff]
  %v21 = vld [vmem:[%s1 + $0x28] sm:$0xff]
  %v22 = vld [vmem:[%s1 + $0x30] sm:$0xff]
  %v23 = vld [vmem:[%s1 + $0x38] sm:$0xff]
  %v24 = vld [vmem:[%s1 + $0x40] sm:$0xff]
  %v25 = vld [vmem:[%s1 + $0x48] sm:$0xff]
  %v26 = vld [vmem:[%s1 + $0x50] sm:$0xff]
  %v27 = vld [vmem:[%s1 + $0x58] sm:$0xff]
  %v28 = vld [vmem:[%s1 + $0x60] sm:$0xff]
  %v29 = vld [vmem:[%s1 + $0x68] sm:$0xff]
  %v30 = vld [vmem:[%s1 + $0x70] sm:$0xff]
  %v31 = vld [vmem:[%s1 + $0x78] sm:$0xff]
  %v32 = vld [vmem:[%s1 + $0x80] sm:$0xff]
  %v33 = vld [vmem:[%s1 + $0x88] sm:$0xff]
  %v34 = vld [vmem:[%s1 + $0x90] sm:$0xff]
  %v35 = vld [vmem:[%s1 + $0x98] sm:$0xff]
  %v36 = vld [vmem:[%s1 + $0xa0] sm:$0xff]
  %v37 = vld [vmem:[%s1 + $0xa8] sm:$0xff]
  %v38 = vld [vmem:[%s1 + $0xb0] sm:$0xff]
  %v39 = vld [vmem:[%s1 + $0xb8] sm:$0xff]
  %v40 = vld [vmem:[%s1 + $0xc0] sm:$0xff]
  %v41 = vld [vmem:[%s1 + $0xc8] sm:$0xff]
  %v42 = vld [vmem:[%s1 + $0xd0] sm:$0xff]
  %v43 = vld [vmem:[%s1 + $0xd8] sm:$0xff]
  %v44 = vld [vmem:[%s1 + $0xe0] sm:$0xff]
  %v45 = vld [vmem:[%s1 + $0xe8] sm:$0xff]
  %v46 = vld [vmem:[%s1 + $0xf0] sm:$0xff]
  %v47 = vld [vmem:[%s1 + $0xf8] sm:$0xff]
  %v48 = vld [vmem:[%s1 + $0x100] sm:$0xff]
  %v49 = vld [vmem:[%s1 + $0x108] sm:$0xff]
  %v50 = vld [vmem:[%s1 + $0x110] sm:$0xff]
  %v51 = vld [vmem:[%s1 + $0x118] sm:$0xff]
  %v52 = vld [vmem:[%s1 + $0x120] sm:$0xff]
  %v53 = vld [vmem:[%s1 + $0x128] sm:$0xff]
  %v54 = vld [vmem:[%s1 + $0x130] sm:$0xff]
  %v55 = vld [vmem:[%s1 + $0x138] sm:$0xff]
  %v56 = vld [vmem:[%s1 + $0x140] sm:$0xff]
  %v57 = vld [vmem:[%s1 + $0x148] sm:$0xff]
  %v58 = vld [vmem:[%s1 + $0x150] sm:$0xff]
  %v59 = vld [vmem:[%s1 + $0x158] sm:$0xff]
  %v60 = vld [vmem:[%s1 + $0x160] sm:$0xff]
  %v61 = vld [vmem:[%s1 + $0x168] sm:$0xff]
  %v62 = vld [vmem:[%s1 + $0x170] sm:$0xff]
  %v63 = vld [vmem:[%s1 + $0x178] sm:$0xff]
  %v64 = vld [vmem:[%s1 + $0x180] sm:$0xff]
  %v65 = vld [vmem:[%s1 + $0x188] sm:$0xff]
  %v66 = vld [vmem:[%s1 + $0x190] sm:$0xff]
  %v67 = vld [vmem:[%s1 + $0x198] sm:$0xff]
  %v68 = vld [vmem:[%s1 + $0x1a0] sm:$0xff]
  %v69 = vld [vmem:[%s1 + $0x1a8] sm:$0xff]
  %v70 = vld [vmem:[%s1 + $0x1b0] sm:$0xff]
  %v71 = vld [vmem:[%s1 + $0x1b8] sm:$0xff]
  %v72 = vld [vmem:[%s1 + $0x1c0] sm:$0xff]
  %v73 = vld [vmem:[%s1 + $0x1c8] sm:$0xff]
  %v74 = vld [vmem:[%s1 + $0x1d0] sm:$0xff]
  %v75 = vld [vmem:[%s1 + $0x1d8] sm:$0xff]
  %v76 = vld [vmem:[%s1 + $0x1e0] sm:$0xff]
  %v77 = vld [vmem:[%s1 + $0x1e8] sm:$0xff]
  %v78 = vld [vmem:[%s1 + $0x1f0] sm:$0xff]
  %v79 = vld [vmem:[%s1 + $0x1f8] sm:$0xff]
  %v80 = vlaneseq
  %v81 = vshrl.u32 %v80, 7
  %v82 = vsub.s32 0, %v81
  %v83 = vrot.slane %v15, %v82
  %v84 = vmul.f32 %v16, %v83
  %v85 = vmul.f32 %v17, %v83
  %v86 = vmul.f32 %v18, %v83
  %v87 = vmul.f32 %v19, %v83
  %v88 = vmul.f32 %v20, %v83
  %v89 = vmul.f32 %v21, %v83
  %v90 = vmul.f32 %v22, %v83
  %v91 = vmul.f32 %v23, %v83
  %v92 = vmul.f32 %v24, %v83
  %v93 = vmul.f32 %v25, %v83
  %v94 = vmul.f32 %v26, %v83
  %v95 = vmul.f32 %v27, %v83
  %v96 = vmul.f32 %v28, %v83
  %v97 = vmul.f32 %v29, %v83
  %v98 = vmul.f32 %v30, %v83
  %v99 = vmul.f32 %v31, %v83
  %v100 = vmul.f32 %v32, %v83
  %v101 = vmul.f32 %v33, %v83
  %v102 = vmul.f32 %v34, %v83
  %v103 = vmul.f32 %v35, %v83
  %v104 = vmul.f32 %v36, %v83
  %v105 = vmul.f32 %v37, %v83
  %v106 = vmul.f32 %v38, %v83
  %v107 = vmul.f32 %v39, %v83
  %v108 = vmul.f32 %v40, %v83
  %v109 = vmul.f32 %v41, %v83
  %v110 = vmul.f32 %v42, %v83
  %v111 = vmul.f32 %v43, %v83
  %v112 = vmul.f32 %v44, %v83
  %v113 = vmul.f32 %v45, %v83
  %v114 = vmul.f32 %v46, %v83
  %v115 = vmul.f32 %v47, %v83
  %v116 = vmul.f32 %v48, %v83
  %v117 = vmul.f32 %v49, %v83
  %v118 = vmul.f32 %v50, %v83
  %v119 = vmul.f32 %v51, %v83
  %v120 = vmul.f32 %v52, %v83
  %v121 = vmul.f32 %v53, %v83
  %v122 = vmul.f32 %v54, %v83
  %v123 = vmul.f32 %v55, %v83
  %v124 = vmul.f32 %v56, %v83
  %v125 = vmul.f32 %v57, %v83
  %v126 = vmul.f32 %v58, %v83
  %v127 = vmul.f32 %v59, %v83
  %v128 = vmul.f32 %v60, %v83
  %v129 = vmul.f32 %v61, %v83
  %v130 = vmul.f32 %v62, %v83
  %v131 = vmul.f32 %v63, %v83
  %v132 = vmul.f32 %v64, %v83
  %v133 = vmul.f32 %v65, %v83
  %v134 = vmul.f32 %v66, %v83
  %v135 = vmul.f32 %v67, %v83
  %v136 = vmul.f32 %v68, %v83
  %v137 = vmul.f32 %v69, %v83
  %v138 = vmul.f32 %v70, %v83
  %v139 = vmul.f32 %v71, %v83
  %v140 = vmul.f32 %v72, %v83
  %v141 = vmul.f32 %v73, %v83
  %v142 = vmul.f32 %v74, %v83
  %v143 = vmul.f32 %v75, %v83
  %v144 = vmul.f32 %v76, %v83
  %v145 = vmul.f32 %v77, %v83
  %v146 = vmul.f32 %v78, %v83
  %v147 = vmul.f32 %v79, %v83
  %v148 = vlaneseq
  %v149 = vshrl.u32 %v148, 7
  %v150 = vsub.s32 1, %v149
  %v151 = vrot.slane %v15, %v150
  %v152 = vadd.f32 %v84, %v151
  %v153 = vadd.f32 %v85, %v151
  %v154 = vadd.f32 %v86, %v151
  %v155 = vadd.f32 %v87, %v151
  %v156 = vadd.f32 %v88, %v151
  %v157 = vadd.f32 %v89, %v151
  %v158 = vadd.f32 %v90, %v151
  %v159 = vadd.f32 %v91, %v151
  %v160 = vadd.f32 %v92, %v151
  %v161 = vadd.f32 %v93, %v151
  %v162 = vadd.f32 %v94, %v151
  %v163 = vadd.f32 %v95, %v151
  %v164 = vadd.f32 %v96, %v151
  %v165 = vadd.f32 %v97, %v151
  %v166 = vadd.f32 %v98, %v151
  %v167 = vadd.f32 %v99, %v151
  %v168 = vadd.f32 %v100, %v151
  %v169 = vadd.f32 %v101, %v151
  %v170 = vadd.f32 %v102, %v151
  %v171 = vadd.f32 %v103, %v151
  %v172 = vadd.f32 %v104, %v151
  %v173 = vadd.f32 %v105, %v151
  %v174 = vadd.f32 %v106, %v151
  %v175 = vadd.f32 %v107, %v151
  %v176 = vadd.f32 %v108, %v151
  %v177 = vadd.f32 %v109, %v151
  %v178 = vadd.f32 %v110, %v151
  %v179 = vadd.f32 %v111, %v151
  %v180 = vadd.f32 %v112, %v151
  %v181 = vadd.f32 %v113, %v151
  %v182 = vadd.f32 %v114, %v151
  %v183 = vadd.f32 %v115, %v151
  %v184 = vadd.f32 %v116, %v151
  %v185 = vadd.f32 %v117, %v151
  %v186 = vadd.f32 %v118, %v151
  %v187 = vadd.f32 %v119, %v151
  %v188 = vadd.f32 %v120, %v151
  %v189 = vadd.f32 %v121, %v151
  %v190 = vadd.f32 %v122, %v151
  %v191 = vadd.f32 %v123, %v151
  %v192 = vadd.f32 %v124, %v151
  %v193 = vadd.f32 %v125, %v151
  %v194 = vadd.f32 %v126, %v151
  %v195 = vadd.f32 %v127, %v151
  %v196 = vadd.f32 %v128, %v151
  %v197 = vadd.f32 %v129, %v151
  %v198 = vadd.f32 %v130, %v151
  %v199 = vadd.f32 %v131, %v151
  %v200 = vadd.f32 %v132, %v151
  %v201 = vadd.f32 %v133, %v151
  %v202 = vadd.f32 %v134, %v151
  %v203 = vadd.f32 %v135, %v151
  %v204 = vadd.f32 %v136, %v151
  %v205 = vadd.f32 %v137, %v151
  %v206 = vadd.f32 %v138, %v151
  %v207 = vadd.f32 %v139, %v151
  %v208 = vadd.f32 %v140, %v151
  %v209 = vadd.f32 %v141, %v151
  %v210 = vadd.f32 %v142, %v151
  %v211 = vadd.f32 %v143, %v151
  %v212 = vadd.f32 %v144, %v151
  %v213 = vadd.f32 %v145, %v151
  %v214 = vadd.f32 %v146, %v151
  %v215 = vadd.f32 %v147, %v151
  %v216 = vmax.f32 %v152, 0.0
  %v217 = vmax.f32 %v153, 0.0
  %v218 = vmax.f32 %v154, 0.0
  %v219 = vmax.f32 %v155, 0.0
  %v220 = vmax.f32 %v156, 0.0
  %v221 = vmax.f32 %v157, 0.0
  %v222 = vmax.f32 %v158, 0.0
  %v223 = vmax.f32 %v159, 0.0
  %v224 = vmax.f32 %v160, 0.0
  %v225 = vmax.f32 %v161, 0.0
  %v226 = vmax.f32 %v162, 0.0
  %v227 = vmax.f32 %v163, 0.0
  %v228 = vmax.f32 %v164, 0.0
  %v229 = vmax.f32 %v165, 0.0
  %v230 = vmax.f32 %v166, 0.0
  %v231 = vmax.f32 %v167, 0.0
  %v232 = vmax.f32 %v168, 0.0
  %v233 = vmax.f32 %v169, 0.0
  %v234 = vmax.f32 %v170, 0.0
  %v235 = vmax.f32 %v171, 0.0
  %v236 = vmax.f32 %v172, 0.0
  %v237 = vmax.f32 %v173, 0.0
  %v238 = vmax.f32 %v174, 0.0
  %v239 = vmax.f32 %v175, 0.0
  %v240 = vmax.f32 %v176, 0.0
  %v241 = vmax.f32 %v177, 0.0
  %v242 = vmax.f32 %v178, 0.0
  %v243 = vmax.f32 %v179, 0.0
  %v244 = vmax.f32 %v180, 0.0
  %v245 = vmax.f32 %v181, 0.0
  %v246 = vmax.f32 %v182, 0.0
  %v247 = vmax.f32 %v183, 0.0
  %v248 = vmax.f32 %v184, 0.0
  %v249 = vmax.f32 %v185, 0.0
  %v250 = vmax.f32 %v186, 0.0
  %v251 = vmax.f32 %v187, 0.0
  %v252 = vmax.f32 %v188, 0.0
  %v253 = vmax.f32 %v189, 0.0
  %v254 = vmax.f32 %v190, 0.0
  %v255 = vmax.f32 %v191, 0.0
  %v256 = vmax.f32 %v192, 0.0
  %v257 = vmax.f32 %v193, 0.0
  %v258 = vmax.f32 %v194, 0.0
  %v259 = vmax.f32 %v195, 0.0
  %v260 = vmax.f32 %v196, 0.0
  %v261 = vmax.f32 %v197, 0.0
  %v262 = vmax.f32 %v198, 0.0
  %v263 = vmax.f32 %v199, 0.0
  %v264 = vmax.f32 %v200, 0.0
  %v265 = vmax.f32 %v201, 0.0
  %v266 = vmax.f32 %v202, 0.0
  %v267 = vmax.f32 %v203, 0.0
  %v268 = vmax.f32 %v204, 0.0
  %v269 = vmax.f32 %v205, 0.0
  %v270 = vmax.f32 %v206, 0.0
  %v271 = vmax.f32 %v207, 0.0
  %v272 = vmax.f32 %v208, 0.0
  %v273 = vmax.f32 %v209, 0.0
  %v274 = vmax.f32 %v210, 0.0
  %v275 = vmax.f32 %v211, 0.0
  %v276 = vmax.f32 %v212, 0.0
  %v277 = vmax.f32 %v213, 0.0
  %v278 = vmax.f32 %v214, 0.0
  %v279 = vmax.f32 %v215, 0.0
  %v280 = vpack.c.bf16 %v217, %v216
  %v281 = vpack.c.bf16 %v219, %v218
  %v282 = vpack.c.bf16 %v221, %v220
  %v283 = vpack.c.bf16 %v223, %v222
  %v284 = vpack.c.bf16 %v225, %v224
  %v285 = vpack.c.bf16 %v227, %v226
  %v286 = vpack.c.bf16 %v229, %v228
  %v287 = vpack.c.bf16 %v231, %v230
  %v288 = vpack.c.bf16 %v233, %v232
  %v289 = vpack.c.bf16 %v235, %v234
  %v290 = vpack.c.bf16 %v237, %v236
  %v291 = vpack.c.bf16 %v239, %v238
  %v292 = vpack.c.bf16 %v241, %v240
  %v293 = vpack.c.bf16 %v243, %v242
  %v294 = vpack.c.bf16 %v245, %v244
  %v295 = vpack.c.bf16 %v247, %v246
  %v296 = vpack.c.bf16 %v249, %v248
  %v297 = vpack.c.bf16 %v251, %v250
  %v298 = vpack.c.bf16 %v253, %v252
  %v299 = vpack.c.bf16 %v255, %v254
  %v300 = vpack.c.bf16 %v257, %v256
  %v301 = vpack.c.bf16 %v259, %v258
  %v302 = vpack.c.bf16 %v261, %v260
  %v303 = vpack.c.bf16 %v263, %v262
  %v304 = vpack.c.bf16 %v265, %v264
  %v305 = vpack.c.bf16 %v267, %v266
  %v306 = vpack.c.bf16 %v269, %v268
  %v307 = vpack.c.bf16 %v271, %v270
  %v308 = vpack.c.bf16 %v273, %v272
  %v309 = vpack.c.bf16 %v275, %v274
  %v310 = vpack.c.bf16 %v277, %v276
  %v311 = vpack.c.bf16 %v279, %v278
  %v312 = vld [vmem:[%s2] sm:$0xff]
  %v313 = vld [vmem:[%s2 + $0x8] sm:$0xff]
  %v314 = vld [vmem:[%s2 + $0x10] sm:$0xff]
  %v315 = vld [vmem:[%s2 + $0x18] sm:$0xff]
  %v320 = vunpack.c.l.b16 %v312
  %v321 = vunpack.c.h.b16 %v312
  %v322 = vunpack.c.l.b16 %v313
  %v323 = vunpack.c.h.b16 %v313
  %v324 = vunpack.c.l.b16 %v314
  %v325 = vunpack.c.h.b16 %v314
  %v326 = vunpack.c.l.b16 %v315
  %v327 = vunpack.c.h.b16 %v315
  %v328 = vpack.c.b16 %v322, %v320
  %v329 = vpack.c.b16 %v323, %v321
  %v330 = vpack.c.b16 %v326, %v324
  %v331 = vpack.c.b16 %v327, %v325
  %vm336 = vcmask 261120
  %v338 = vsel %vm336, %v280, 0
  %v341 = vsel %vm336, %v281, 0
  %v344 = vsel %vm336, %v282, 0
  %v347 = vsel %vm336, %v283, 0
  %v350 = vsel %vm336, %v284, 0
  %v353 = vsel %vm336, %v285, 0
  %v356 = vsel %vm336, %v286, 0
  %v359 = vsel %vm336, %v287, 0
  %v362 = vsel %vm336, %v288, 0
  %v365 = vsel %vm336, %v289, 0
  %v368 = vsel %vm336, %v290, 0
  %v371 = vsel %vm336, %v291, 0
  %v374 = vsel %vm336, %v292, 0
  %v377 = vsel %vm336, %v293, 0
  %v380 = vsel %vm336, %v294, 0
  %v383 = vsel %vm336, %v295, 0
  %v386 = vsel %vm336, %v296, 0
  %v389 = vsel %vm336, %v297, 0
  %v392 = vsel %vm336, %v298, 0
  %v395 = vsel %vm336, %v299, 0
  %v398 = vsel %vm336, %v300, 0
  %v401 = vsel %vm336, %v301, 0
  %v404 = vsel %vm336, %v302, 0
  %v407 = vsel %vm336, %v303, 0
  %v410 = vsel %vm336, %v304, 0
  %v413 = vsel %vm336, %v305, 0
  %v416 = vsel %vm336, %v306, 0
  %v419 = vsel %vm336, %v307, 0
  %v422 = vsel %vm336, %v308, 0
  %v425 = vsel %vm336, %v309, 0
  %v428 = vsel %vm336, %v310, 0
  %v431 = vsel %vm336, %v311, 0
  %433 = vmatprep.subr.bf16.mxu0 %v329
  %434 = vmatpush1.bf16.msra.mxu0 %v328
  %435 = vmatprep.subr.bf16.mxu0 %v331
  %436 = vmatpush1.bf16.msra.mxu0 %v330
  %437 = vmatprep.subr.bf16.mxu0 0
  %438 = vmatpush1.bf16.msra.mxu0 0
  %439 = vmatprep.subr.bf16.mxu0 0
  %440 = vmatpush1.bf16.msra.mxu0 0
  %441 = vmatprep.subr.bf16.mxu0 0
  %442 = vmatpush1.bf16.msra.mxu0 0
  %443 = vmatprep.subr.bf16.mxu0 0
  %444 = vmatpush1.bf16.msra.mxu0 0
  %445 = vmatprep.subr.bf16.mxu0 0
  %446 = vmatpush1.bf16.msra.mxu0 0
  %447 = vmatprep.subr.bf16.mxu0 0
  %448 = vmatpush1.bf16.msra.mxu0 0
  %449 = vmatprep.subr.bf16.mxu0 0
  %450 = vmatpush1.bf16.msra.mxu0 0
  %451 = vmatprep.subr.bf16.mxu0 0
  %452 = vmatpush1.bf16.msra.mxu0 0
  %453 = vmatprep.subr.bf16.mxu0 0
  %454 = vmatpush1.bf16.msra.mxu0 0
  %455 = vmatprep.subr.bf16.mxu0 0
  %456 = vmatpush1.bf16.msra.mxu0 0
  %457 = vmatprep.subr.bf16.mxu0 0
  %458 = vmatpush1.bf16.msra.mxu0 0
  %459 = vmatprep.subr.bf16.mxu0 0
  %460 = vmatpush1.bf16.msra.mxu0 0
  %461 = vmatprep.subr.bf16.mxu0 0
  %462 = vmatpush1.bf16.msra.mxu0 0
  %463 = vmatprep.subr.bf16.mxu0 0
  %464 = vmatpush1.bf16.msra.mxu0 0
  %465 = vmatprep.mubr.bf16.mxu0 0
  %466 = vmatmul.mubr.bf16.gmra.mrb[0].mxu0 %v338
  %v467 = vpop.f32.mrb[0].mxu0
  %v468 = vadd.f32 0.0, %v467
  %v469 = vpop.f32.mrb[0].mxu0
  %v470 = vadd.f32 0.0, %v469
  %v471 = vpop.f32.mrb[0].mxu0
  %v472 = vadd.f32 0.0, %v471
  %v473 = vpop.f32.mrb[0].mxu0
  %v474 = vadd.f32 0.0, %v473
  %475 = vmatprep.mubr.bf16.mxu0 0
  %476 = vmatmul.mubr.bf16.gmra.mrb[0].mxu0 %v341
  %v477 = vpop.f32.mrb[0].mxu0
  %v478 = vadd.f32 0.0, %v477
  %v479 = vpop.f32.mrb[0].mxu0
  %v480 = vadd.f32 0.0, %v479
  %v481 = vpop.f32.mrb[0].mxu0
  %v482 = vadd.f32 0.0, %v481
  %v483 = vpop.f32.mrb[0].mxu0
  %v484 = vadd.f32 0.0, %v483
  %485 = vmatprep.mubr.bf16.mxu0 0
  %486 = vmatmul.mubr.bf16.gmra.mrb[0].mxu0 %v344
  %v487 = vpop.f32.mrb[0].mxu0
  %v488 = vadd.f32 0.0, %v487
  %v489 = vpop.f32.mrb[0].mxu0
  %v490 = vadd.f32 0.0, %v489
  %v491 = vpop.f32.mrb[0].mxu0
  %v492 = vadd.f32 0.0, %v491
  %v493 = vpop.f32.mrb[0].mxu0
  %v494 = vadd.f32 0.0, %v493
  %495 = vmatprep.mubr.bf16.mxu0 0
  %496 = vmatmul.mubr.bf16.gmra.mrb[0].mxu0 %v347
  %v497 = vpop.f32.mrb[0].mxu0
  %v498 = vadd.f32 0.0, %v497
  %v499 = vpop.f32.mrb[0].mxu0
  %v500 = vadd.f32 0.0, %v499
  %v501 = vpop.f32.mrb[0].mxu0
  %v502 = vadd.f32 0.0, %v501
  %v503 = vpop.f32.mrb[0].mxu0
  %v504 = vadd.f32 0.0, %v503
  %505 = vmatprep.mubr.bf16.mxu0 0
  %506 = vmatmul.mubr.bf16.gmra.mrb[0].mxu0 %v350
  %v507 = vpop.f32.mrb[0].mxu0
  %v508 = vadd.f32 0.0, %v507
  %v509 = vpop.f32.mrb[0].mxu0
  %v510 = vadd.f32 0.0, %v509
  %v511 = vpop.f32.mrb[0].mxu0
  %v512 = vadd.f32 0.0, %v511
  %v513 = vpop.f32.mrb[0].mxu0
  %v514 = vadd.f32 0.0, %v513
  %515 = vmatprep.mubr.bf16.mxu0 0
  %516 = vmatmul.mubr.bf16.gmra.mrb[0].mxu0 %v353
  %v517 = vpop.f32.mrb[0].mxu0
  %v518 = vadd.f32 0.0, %v517
  %v519 = vpop.f32.mrb[0].mxu0
  %v520 = vadd.f32 0.0, %v519
  %v521 = vpop.f32.mrb[0].mxu0
  %v522 = vadd.f32 0.0, %v521
  %v523 = vpop.f32.mrb[0].mxu0
  %v524 = vadd.f32 0.0, %v523
  %525 = vmatprep.mubr.bf16.mxu0 0
  %526 = vmatmul.mubr.bf16.gmra.mrb[0].mxu0 %v356
  %v527 = vpop.f32.mrb[0].mxu0
  %v528 = vadd.f32 0.0, %v527
  %v529 = vpop.f32.mrb[0].mxu0
  %v530 = vadd.f32 0.0, %v529
  %v531 = vpop.f32.mrb[0].mxu0
  %v532 = vadd.f32 0.0, %v531
  %v533 = vpop.f32.mrb[0].mxu0
  %v534 = vadd.f32 0.0, %v533
  %535 = vmatprep.mubr.bf16.mxu0 0
  %536 = vmatmul.mubr.bf16.gmra.mrb[0].mxu0 %v359
  %v537 = vpop.f32.mrb[0].mxu0
  %v538 = vadd.f32 0.0, %v537
  %v539 = vpop.f32.mrb[0].mxu0
  %v540 = vadd.f32 0.0, %v539
  %v541 = vpop.f32.mrb[0].mxu0
  %v542 = vadd.f32 0.0, %v541
  %v543 = vpop.f32.mrb[0].mxu0
  %v544 = vadd.f32 0.0, %v543
  %545 = vmatprep.mubr.bf16.mxu0 0
  %546 = vmatmul.mubr.bf16.gmra.mrb[0].mxu0 %v362
  %v547 = vpop.f32.mrb[0].mxu0
  %v548 = vadd.f32 0.0, %v547
  %v549 = vpop.f32.mrb[0].mxu0
  %v550 = vadd.f32 0.0, %v549
  %v551 = vpop.f32.mrb[0].mxu0
  %v552 = vadd.f32 0.0, %v551
  %v553 = vpop.f32.mrb[0].mxu0
  %v554 = vadd.f32 0.0, %v553
  %555 = vmatprep.mubr.bf16.mxu0 0
  %556 = vmatmul.mubr.bf16.gmra.mrb[0].mxu0 %v365
  %v557 = vpop.f32.mrb[0].mxu0
  %v558 = vadd.f32 0.0, %v557
  %v559 = vpop.f32.mrb[0].mxu0
  %v560 = vadd.f32 0.0, %v559
  %v561 = vpop.f32.mrb[0].mxu0
  %v562 = vadd.f32 0.0, %v561
  %v563 = vpop.f32.mrb[0].mxu0
  %v564 = vadd.f32 0.0, %v563
  %565 = vmatprep.mubr.bf16.mxu0 0
  %566 = vmatmul.mubr.bf16.gmra.mrb[0].mxu0 %v368
  %v567 = vpop.f32.mrb[0].mxu0
  %v568 = vadd.f32 0.0, %v567
  %v569 = vpop.f32.mrb[0].mxu0
  %v570 = vadd.f32 0.0, %v569
  %v571 = vpop.f32.mrb[0].mxu0
  %v572 = vadd.f32 0.0, %v571
  %v573 = vpop.f32.mrb[0].mxu0
  %v574 = vadd.f32 0.0, %v573
  %575 = vmatprep.mubr.bf16.mxu0 0
  %576 = vmatmul.mubr.bf16.gmra.mrb[0].mxu0 %v371
  %v577 = vpop.f32.mrb[0].mxu0
  %v578 = vadd.f32 0.0, %v577
  %v579 = vpop.f32.mrb[0].mxu0
  %v580 = vadd.f32 0.0, %v579
  %v581 = vpop.f32.mrb[0].mxu0
  %v582 = vadd.f32 0.0, %v581
  %v583 = vpop.f32.mrb[0].mxu0
  %v584 = vadd.f32 0.0, %v583
  %585 = vmatprep.mubr.bf16.mxu0 0
  %586 = vmatmul.mubr.bf16.gmra.mrb[0].mxu0 %v374
  %v587 = vpop.f32.mrb[0].mxu0
  %v588 = vadd.f32 0.0, %v587
  %v589 = vpop.f32.mrb[0].mxu0
  %v590 = vadd.f32 0.0, %v589
  %v591 = vpop.f32.mrb[0].mxu0
  %v592 = vadd.f32 0.0, %v591
  %v593 = vpop.f32.mrb[0].mxu0
  %v594 = vadd.f32 0.0, %v593
  %595 = vmatprep.mubr.bf16.mxu0 0
  %596 = vmatmul.mubr.bf16.gmra.mrb[0].mxu0 %v377
  %v597 = vpop.f32.mrb[0].mxu0
  %v598 = vadd.f32 0.0, %v597
  %v599 = vpop.f32.mrb[0].mxu0
  %v600 = vadd.f32 0.0, %v599
  %v601 = vpop.f32.mrb[0].mxu0
  %v602 = vadd.f32 0.0, %v601
  %v603 = vpop.f32.mrb[0].mxu0
  %v604 = vadd.f32 0.0, %v603
  %605 = vmatprep.mubr.bf16.mxu0 0
  %606 = vmatmul.mubr.bf16.gmra.mrb[0].mxu0 %v380
  %v607 = vpop.f32.mrb[0].mxu0
  %v608 = vadd.f32 0.0, %v607
  %v609 = vpop.f32.mrb[0].mxu0
  %v610 = vadd.f32 0.0, %v609
  %v611 = vpop.f32.mrb[0].mxu0
  %v612 = vadd.f32 0.0, %v611
  %v613 = vpop.f32.mrb[0].mxu0
  %v614 = vadd.f32 0.0, %v613
  %615 = vmatprep.mubr.bf16.mxu0 0
  %616 = vmatmul.mubr.bf16.gmra.mrb[0].mxu0 %v383
  %v617 = vpop.f32.mrb[0].mxu0
  %v618 = vadd.f32 0.0, %v617
  %v619 = vpop.f32.mrb[0].mxu0
  %v620 = vadd.f32 0.0, %v619
  %v621 = vpop.f32.mrb[0].mxu0
  %v622 = vadd.f32 0.0, %v621
  %v623 = vpop.f32.mrb[0].mxu0
  %v624 = vadd.f32 0.0, %v623
  %625 = vmatprep.mubr.bf16.mxu0 0
  %626 = vmatmul.mubr.bf16.gmra.mrb[0].mxu0 %v386
  %v627 = vpop.f32.mrb[0].mxu0
  %v628 = vadd.f32 0.0, %v627
  %v629 = vpop.f32.mrb[0].mxu0
  %v630 = vadd.f32 0.0, %v629
  %v631 = vpop.f32.mrb[0].mxu0
  %v632 = vadd.f32 0.0, %v631
  %v633 = vpop.f32.mrb[0].mxu0
  %v634 = vadd.f32 0.0, %v633
  %635 = vmatprep.mubr.bf16.mxu0 0
  %636 = vmatmul.mubr.bf16.gmra.mrb[0].mxu0 %v389
  %v637 = vpop.f32.mrb[0].mxu0
  %v638 = vadd.f32 0.0, %v637
  %v639 = vpop.f32.mrb[0].mxu0
  %v640 = vadd.f32 0.0, %v639
  %v641 = vpop.f32.mrb[0].mxu0
  %v642 = vadd.f32 0.0, %v641
  %v643 = vpop.f32.mrb[0].mxu0
  %v644 = vadd.f32 0.0, %v643
  %645 = vmatprep.mubr.bf16.mxu0 0
  %646 = vmatmul.mubr.bf16.gmra.mrb[0].mxu0 %v392
  %v647 = vpop.f32.mrb[0].mxu0
  %v648 = vadd.f32 0.0, %v647
  %v649 = vpop.f32.mrb[0].mxu0
  %v650 = vadd.f32 0.0, %v649
  %v651 = vpop.f32.mrb[0].mxu0
  %v652 = vadd.f32 0.0, %v651
  %v653 = vpop.f32.mrb[0].mxu0
  %v654 = vadd.f32 0.0, %v653
  %655 = vmatprep.mubr.bf16.mxu0 0
  %656 = vmatmul.mubr.bf16.gmra.mrb[0].mxu0 %v395
  %v657 = vpop.f32.mrb[0].mxu0
  %v658 = vadd.f32 0.0, %v657
  %v659 = vpop.f32.mrb[0].mxu0
  %v660 = vadd.f32 0.0, %v659
  %v661 = vpop.f32.mrb[0].mxu0
  %v662 = vadd.f32 0.0, %v661
  %v663 = vpop.f32.mrb[0].mxu0
  %v664 = vadd.f32 0.0, %v663
  %665 = vmatprep.mubr.bf16.mxu0 0
  %666 = vmatmul.mubr.bf16.gmra.mrb[0].mxu0 %v398
  %v667 = vpop.f32.mrb[0].mxu0
  %v668 = vadd.f32 0.0, %v667
  %v669 = vpop.f32.mrb[0].mxu0
  %v670 = vadd.f32 0.0, %v669
  %v671 = vpop.f32.mrb[0].mxu0
  %v672 = vadd.f32 0.0, %v671
  %v673 = vpop.f32.mrb[0].mxu0
  %v674 = vadd.f32 0.0, %v673
  %675 = vmatprep.mubr.bf16.mxu0 0
  %676 = vmatmul.mubr.bf16.gmra.mrb[0].mxu0 %v401
  %v677 = vpop.f32.mrb[0].mxu0
  %v678 = vadd.f32 0.0, %v677
  %v679 = vpop.f32.mrb[0].mxu0
  %v680 = vadd.f32 0.0, %v679
  %v681 = vpop.f32.mrb[0].mxu0
  %v682 = vadd.f32 0.0, %v681
  %v683 = vpop.f32.mrb[0].mxu0
  %v684 = vadd.f32 0.0, %v683
  %685 = vmatprep.mubr.bf16.mxu0 0
  %686 = vmatmul.mubr.bf16.gmra.mrb[0].mxu0 %v404
  %v687 = vpop.f32.mrb[0].mxu0
  %v688 = vadd.f32 0.0, %v687
  %v689 = vpop.f32.mrb[0].mxu0
  %v690 = vadd.f32 0.0, %v689
  %v691 = vpop.f32.mrb[0].mxu0
  %v692 = vadd.f32 0.0, %v691
  %v693 = vpop.f32.mrb[0].mxu0
  %v694 = vadd.f32 0.0, %v693
  %695 = vmatprep.mubr.bf16.mxu0 0
  %696 = vmatmul.mubr.bf16.gmra.mrb[0].mxu0 %v407
  %v697 = vpop.f32.mrb[0].mxu0
  %v698 = vadd.f32 0.0, %v697
  %v699 = vpop.f32.mrb[0].mxu0
  %v700 = vadd.f32 0.0, %v699
  %v701 = vpop.f32.mrb[0].mxu0
  %v702 = vadd.f32 0.0, %v701
  %v703 = vpop.f32.mrb[0].mxu0
  %v704 = vadd.f32 0.0, %v703
  %705 = vmatprep.mubr.bf16.mxu0 0
  %706 = vmatmul.mubr.bf16.gmra.mrb[0].mxu0 %v410
  %v707 = vpop.f32.mrb[0].mxu0
  %v708 = vadd.f32 0.0, %v707
  %v709 = vpop.f32.mrb[0].mxu0
  %v710 = vadd.f32 0.0, %v709
  %v711 = vpop.f32.mrb[0].mxu0
  %v712 = vadd.f32 0.0, %v711
  %v713 = vpop.f32.mrb[0].mxu0
  %v714 = vadd.f32 0.0, %v713
  %715 = vmatprep.mubr.bf16.mxu0 0
  %716 = vmatmul.mubr.bf16.gmra.mrb[0].mxu0 %v413
  %v717 = vpop.f32.mrb[0].mxu0
  %v718 = vadd.f32 0.0, %v717
  %v719 = vpop.f32.mrb[0].mxu0
  %v720 = vadd.f32 0.0, %v719
  %v721 = vpop.f32.mrb[0].mxu0
  %v722 = vadd.f32 0.0, %v721
  %v723 = vpop.f32.mrb[0].mxu0
  %v724 = vadd.f32 0.0, %v723
  %725 = vmatprep.mubr.bf16.mxu0 0
  %726 = vmatmul.mubr.bf16.gmra.mrb[0].mxu0 %v416
  %v727 = vpop.f32.mrb[0].mxu0
  %v728 = vadd.f32 0.0, %v727
  %v729 = vpop.f32.mrb[0].mxu0
  %v730 = vadd.f32 0.0, %v729
  %v731 = vpop.f32.mrb[0].mxu0
  %v732 = vadd.f32 0.0, %v731
  %v733 = vpop.f32.mrb[0].mxu0
  %v734 = vadd.f32 0.0, %v733
  %735 = vmatprep.mubr.bf16.mxu0 0
  %736 = vmatmul.mubr.bf16.gmra.mrb[0].mxu0 %v419
  %v737 = vpop.f32.mrb[0].mxu0
  %v738 = vadd.f32 0.0, %v737
  %v739 = vpop.f32.mrb[0].mxu0
  %v740 = vadd.f32 0.0, %v739
  %v741 = vpop.f32.mrb[0].mxu0
  %v742 = vadd.f32 0.0, %v741
  %v743 = vpop.f32.mrb[0].mxu0
  %v744 = vadd.f32 0.0, %v743
  %745 = vmatprep.mubr.bf16.mxu0 0
  %746 = vmatmul.mubr.bf16.gmra.mrb[0].mxu0 %v422
  %v747 = vpop.f32.mrb[0].mxu0
  %v748 = vadd.f32 0.0, %v747
  %v749 = vpop.f32.mrb[0].mxu0
  %v750 = vadd.f32 0.0, %v749
  %v751 = vpop.f32.mrb[0].mxu0
  %v752 = vadd.f32 0.0, %v751
  %v753 = vpop.f32.mrb[0].mxu0
  %v754 = vadd.f32 0.0, %v753
  %755 = vmatprep.mubr.bf16.mxu0 0
  %756 = vmatmul.mubr.bf16.gmra.mrb[0].mxu0 %v425
  %v757 = vpop.f32.mrb[0].mxu0
  %v758 = vadd.f32 0.0, %v757
  %v759 = vpop.f32.mrb[0].mxu0
  %v760 = vadd.f32 0.0, %v759
  %v761 = vpop.f32.mrb[0].mxu0
  %v762 = vadd.f32 0.0, %v761
  %v763 = vpop.f32.mrb[0].mxu0
  %v764 = vadd.f32 0.0, %v763
  %765 = vmatprep.mubr.bf16.mxu0 0
  %766 = vmatmul.mubr.bf16.gmra.mrb[0].mxu0 %v428
  %v767 = vpop.f32.mrb[0].mxu0
  %v768 = vadd.f32 0.0, %v767
  %v769 = vpop.f32.mrb[0].mxu0
  %v770 = vadd.f32 0.0, %v769
  %v771 = vpop.f32.mrb[0].mxu0
  %v772 = vadd.f32 0.0, %v771
  %v773 = vpop.f32.mrb[0].mxu0
  %v774 = vadd.f32 0.0, %v773
  %775 = vmatprep.mubr.bf16.mxu0 0
  %776 = vmatmul.mubr.bf16.gmra.mrb[0].mxu0 %v431
  %v777 = vpop.f32.mrb[0].mxu0
  %v778 = vadd.f32 0.0, %v777
  %v779 = vpop.f32.mrb[0].mxu0
  %v780 = vadd.f32 0.0, %v779
  %v781 = vpop.f32.mrb[0].mxu0
  %v782 = vadd.f32 0.0, %v781
  %v783 = vpop.f32.mrb[0].mxu0
  %v784 = vadd.f32 0.0, %v783
  %785 = vdwg.mxu0
  %786 = vst [vmem:[%s3] sm:$0xff] %v468
  %787 = vst [vmem:[%s3 + $0x8] sm:$0xff] %v470
  %788 = vst [vmem:[%s3 + $0x10] sm:$0xff] %v472
  %789 = vst [vmem:[%s3 + $0x18] sm:$0xff] %v474
  %790 = vst [vmem:[%s3 + $0x20] sm:$0xff] %v478
  %791 = vst [vmem:[%s3 + $0x28] sm:$0xff] %v480
  %792 = vst [vmem:[%s3 + $0x30] sm:$0xff] %v482
  %793 = vst [vmem:[%s3 + $0x38] sm:$0xff] %v484
  %794 = vst [vmem:[%s3 + $0x40] sm:$0xff] %v488
  %795 = vst [vmem:[%s3 + $0x48] sm:$0xff] %v490
  %796 = vst [vmem:[%s3 + $0x50] sm:$0xff] %v492
  %797 = vst [vmem:[%s3 + $0x58] sm:$0xff] %v494
  %798 = vst [vmem:[%s3 + $0x60] sm:$0xff] %v498
  %799 = vst [vmem:[%s3 + $0x68] sm:$0xff] %v500
  %800 = vst [vmem:[%s3 + $0x70] sm:$0xff] %v502
  %801 = vst [vmem:[%s3 + $0x78] sm:$0xff] %v504
  %802 = vst [vmem:[%s3 + $0x80] sm:$0xff] %v508
  %803 = vst [vmem:[%s3 + $0x88] sm:$0xff] %v510
  %804 = vst [vmem:[%s3 + $0x90] sm:$0xff] %v512
  %805 = vst [vmem:[%s3 + $0x98] sm:$0xff] %v514
  %806 = vst [vmem:[%s3 + $0xa0] sm:$0xff] %v518
  %807 = vst [vmem:[%s3 + $0xa8] sm:$0xff] %v520
  %808 = vst [vmem:[%s3 + $0xb0] sm:$0xff] %v522
  %809 = vst [vmem:[%s3 + $0xb8] sm:$0xff] %v524
  %810 = vst [vmem:[%s3 + $0xc0] sm:$0xff] %v528
  %811 = vst [vmem:[%s3 + $0xc8] sm:$0xff] %v530
  %812 = vst [vmem:[%s3 + $0xd0] sm:$0xff] %v532
  %813 = vst [vmem:[%s3 + $0xd8] sm:$0xff] %v534
  %814 = vst [vmem:[%s3 + $0xe0] sm:$0xff] %v538
  %815 = vst [vmem:[%s3 + $0xe8] sm:$0xff] %v540
  %816 = vst [vmem:[%s3 + $0xf0] sm:$0xff] %v542
  %817 = vst [vmem:[%s3 + $0xf8] sm:$0xff] %v544
  %818 = vst [vmem:[%s3 + $0x100] sm:$0xff] %v548
  %819 = vst [vmem:[%s3 + $0x108] sm:$0xff] %v550
  %820 = vst [vmem:[%s3 + $0x110] sm:$0xff] %v552
  %821 = vst [vmem:[%s3 + $0x118] sm:$0xff] %v554
  %822 = vst [vmem:[%s3 + $0x120] sm:$0xff] %v558
  %823 = vst [vmem:[%s3 + $0x128] sm:$0xff] %v560
  %824 = vst [vmem:[%s3 + $0x130] sm:$0xff] %v562
  %825 = vst [vmem:[%s3 + $0x138] sm:$0xff] %v564
  %826 = vst [vmem:[%s3 + $0x140] sm:$0xff] %v568
  %827 = vst [vmem:[%s3 + $0x148] sm:$0xff] %v570
  %828 = vst [vmem:[%s3 + $0x150] sm:$0xff] %v572
  %829 = vst [vmem:[%s3 + $0x158] sm:$0xff] %v574
  %830 = vst [vmem:[%s3 + $0x160] sm:$0xff] %v578
  %831 = vst [vmem:[%s3 + $0x168] sm:$0xff] %v580
  %832 = vst [vmem:[%s3 + $0x170] sm:$0xff] %v582
  %833 = vst [vmem:[%s3 + $0x178] sm:$0xff] %v584
  %834 = vst [vmem:[%s3 + $0x180] sm:$0xff] %v588
  %835 = vst [vmem:[%s3 + $0x188] sm:$0xff] %v590
  %836 = vst [vmem:[%s3 + $0x190] sm:$0xff] %v592
  %837 = vst [vmem:[%s3 + $0x198] sm:$0xff] %v594
  %838 = vst [vmem:[%s3 + $0x1a0] sm:$0xff] %v598
  %839 = vst [vmem:[%s3 + $0x1a8] sm:$0xff] %v600
  %840 = vst [vmem:[%s3 + $0x1b0] sm:$0xff] %v602
  %841 = vst [vmem:[%s3 + $0x1b8] sm:$0xff] %v604
  %842 = vst [vmem:[%s3 + $0x1c0] sm:$0xff] %v608
  %843 = vst [vmem:[%s3 + $0x1c8] sm:$0xff] %v610
  %844 = vst [vmem:[%s3 + $0x1d0] sm:$0xff] %v612
  %845 = vst [vmem:[%s3 + $0x1d8] sm:$0xff] %v614
  %846 = vst [vmem:[%s3 + $0x1e0] sm:$0xff] %v618
  %847 = vst [vmem:[%s3 + $0x1e8] sm:$0xff] %v620
  %848 = vst [vmem:[%s3 + $0x1f0] sm:$0xff] %v622
  %849 = vst [vmem:[%s3 + $0x1f8] sm:$0xff] %v624
  %850 = vst [vmem:[%s3 + $0x200] sm:$0xff] %v628
  %851 = vst [vmem:[%s3 + $0x208] sm:$0xff] %v630
  %852 = vst [vmem:[%s3 + $0x210] sm:$0xff] %v632
  %853 = vst [vmem:[%s3 + $0x218] sm:$0xff] %v634
  %854 = vst [vmem:[%s3 + $0x220] sm:$0xff] %v638
  %855 = vst [vmem:[%s3 + $0x228] sm:$0xff] %v640
  %856 = vst [vmem:[%s3 + $0x230] sm:$0xff] %v642
  %857 = vst [vmem:[%s3 + $0x238] sm:$0xff] %v644
  %858 = vst [vmem:[%s3 + $0x240] sm:$0xff] %v648
  %859 = vst [vmem:[%s3 + $0x248] sm:$0xff] %v650
  %860 = vst [vmem:[%s3 + $0x250] sm:$0xff] %v652
  %861 = vst [vmem:[%s3 + $0x258] sm:$0xff] %v654
  %862 = vst [vmem:[%s3 + $0x260] sm:$0xff] %v658
  %863 = vst [vmem:[%s3 + $0x268] sm:$0xff] %v660
  %864 = vst [vmem:[%s3 + $0x270] sm:$0xff] %v662
  %865 = vst [vmem:[%s3 + $0x278] sm:$0xff] %v664
  %866 = vst [vmem:[%s3 + $0x280] sm:$0xff] %v668
  %867 = vst [vmem:[%s3 + $0x288] sm:$0xff] %v670
  %868 = vst [vmem:[%s3 + $0x290] sm:$0xff] %v672
  %869 = vst [vmem:[%s3 + $0x298] sm:$0xff] %v674
  %870 = vst [vmem:[%s3 + $0x2a0] sm:$0xff] %v678
  %871 = vst [vmem:[%s3 + $0x2a8] sm:$0xff] %v680
  %872 = vst [vmem:[%s3 + $0x2b0] sm:$0xff] %v682
  %873 = vst [vmem:[%s3 + $0x2b8] sm:$0xff] %v684
  %874 = vst [vmem:[%s3 + $0x2c0] sm:$0xff] %v688
  %875 = vst [vmem:[%s3 + $0x2c8] sm:$0xff] %v690
  %876 = vst [vmem:[%s3 + $0x2d0] sm:$0xff] %v692
  %877 = vst [vmem:[%s3 + $0x2d8] sm:$0xff] %v694
  %878 = vst [vmem:[%s3 + $0x2e0] sm:$0xff] %v698
  %879 = vst [vmem:[%s3 + $0x2e8] sm:$0xff] %v700
  %880 = vst [vmem:[%s3 + $0x2f0] sm:$0xff] %v702
  %881 = vst [vmem:[%s3 + $0x2f8] sm:$0xff] %v704
  %882 = vst [vmem:[%s3 + $0x300] sm:$0xff] %v708
  %883 = vst [vmem:[%s3 + $0x308] sm:$0xff] %v710
  %884 = vst [vmem:[%s3 + $0x310] sm:$0xff] %v712
  %885 = vst [vmem:[%s3 + $0x318] sm:$0xff] %v714
  %886 = vst [vmem:[%s3 + $0x320] sm:$0xff] %v718
  %887 = vst [vmem:[%s3 + $0x328] sm:$0xff] %v720
  %888 = vst [vmem:[%s3 + $0x330] sm:$0xff] %v722
  %889 = vst [vmem:[%s3 + $0x338] sm:$0xff] %v724
  %890 = vst [vmem:[%s3 + $0x340] sm:$0xff] %v728
  %891 = vst [vmem:[%s3 + $0x348] sm:$0xff] %v730
  %892 = vst [vmem:[%s3 + $0x350] sm:$0xff] %v732
  %893 = vst [vmem:[%s3 + $0x358] sm:$0xff] %v734
  %894 = vst [vmem:[%s3 + $0x360] sm:$0xff] %v738
  %895 = vst [vmem:[%s3 + $0x368] sm:$0xff] %v740
  %896 = vst [vmem:[%s3 + $0x370] sm:$0xff] %v742
  %897 = vst [vmem:[%s3 + $0x378] sm:$0xff] %v744
  %898 = vst [vmem:[%s3 + $0x380] sm:$0xff] %v748
  %899 = vst [vmem:[%s3 + $0x388] sm:$0xff] %v750
  %900 = vst [vmem:[%s3 + $0x390] sm:$0xff] %v752
  %901 = vst [vmem:[%s3 + $0x398] sm:$0xff] %v754
  %902 = vst [vmem:[%s3 + $0x3a0] sm:$0xff] %v758
  %903 = vst [vmem:[%s3 + $0x3a8] sm:$0xff] %v760
  %904 = vst [vmem:[%s3 + $0x3b0] sm:$0xff] %v762
  %905 = vst [vmem:[%s3 + $0x3b8] sm:$0xff] %v764
  %906 = vst [vmem:[%s3 + $0x3c0] sm:$0xff] %v768
  %907 = vst [vmem:[%s3 + $0x3c8] sm:$0xff] %v770
  %908 = vst [vmem:[%s3 + $0x3d0] sm:$0xff] %v772
  %909 = vst [vmem:[%s3 + $0x3d8] sm:$0xff] %v774
  %910 = vst [vmem:[%s3 + $0x3e0] sm:$0xff] %v778
  %911 = vst [vmem:[%s3 + $0x3e8] sm:$0xff] %v780
  %912 = vst [vmem:[%s3 + $0x3f0] sm:$0xff] %v782
  %913 = vst [vmem:[%s3 + $0x3f8] sm:$0xff] %v784
  // Predicated region
  $region14: #{generator_forward.16} parent=0 // pred_check
    _
  $region15: #{generator_forward.16} parent=0 // pred_check_branch
    %915 = sbr.rel (0) target = $region17
  $region16: #{generator_forward.16} parent=0 // pred_region
    _
  $region17: #{generator_forward.16} parent=0 // pred_fallthru
    _
  // Predicated region
  $region18: #{generator_forward.16} parent=0 // pred_check
    _
  $region19: #{generator_forward.16} parent=0 // pred_check_branch
    %917 = sbr.rel (0) target = $region21
  $region20: #{generator_forward.16} parent=0 // pred_region
    _
  $region21: #{generator_forward.16} parent=0 // pred_fallthru
    _

// kernel: generator_forward.17
$region0: #{generator_forward.17}
  #allocation0 [shape = 'u32[]', space=smem, size = 0x4, offset = 0x4, fixed_abs, tag = 'smem constant byte address 0x4 - core index']
  #allocation1 [shape = 'u32[144,128]{1,0:T(1,128)}', space=vmem, size = 0x12000, scoped, tag = 'internal scratch']
  %s0 = inlined_call_operand.vmem [shape: f32[64,512], index: 0, kind: input, shape index: {}]
  %s1 = inlined_call_operand.vmem [shape: f32[2,512], index: 1, kind: output, shape index: {}]
  %s2 = sld [smem:[#allocation0]]
  $region22: #{generator_forward.17} parent=0
    _
  %s4 = ssub.s32 1, %s2
  %s5 = scalar_select 0, %s4, %s2
  // Predicated region
  $region2: #{generator_forward.17} parent=0 // pred_check
    _
  $region3: #{generator_forward.17} parent=0 // pred_check_branch
    %7 = sbr.rel (0) target = $region5
  $region4: #{generator_forward.17} parent=0 // pred_region
    _
  $region5: #{generator_forward.17} parent=0 // pred_fallthru
    _
  %v8 = vld [vmem:[%s0] sm:$0xff]
  %v9 = vld [vmem:[%s0 + $0x8] sm:$0xff]
  %v10 = vld [vmem:[%s0 + $0x10] sm:$0xff]
  %v11 = vld [vmem:[%s0 + $0x18] sm:$0xff]
  %v12 = vld [vmem:[%s0 + $0x20] sm:$0xff]
  %v13 = vld [vmem:[%s0 + $0x28] sm:$0xff]
  %v14 = vld [vmem:[%s0 + $0x30] sm:$0xff]
  %v15 = vld [vmem:[%s0 + $0x38] sm:$0xff]
  %v16 = vld [vmem:[%s0 + $0x40] sm:$0xff]
  %v17 = vld [vmem:[%s0 + $0x48] sm:$0xff]
  %v18 = vld [vmem:[%s0 + $0x50] sm:$0xff]
  %v19 = vld [vmem:[%s0 + $0x58] sm:$0xff]
  %v20 = vld [vmem:[%s0 + $0x60] sm:$0xff]
  %v21 = vld [vmem:[%s0 + $0x68] sm:$0xff]
  %v22 = vld [vmem:[%s0 + $0x70] sm:$0xff]
  %v23 = vld [vmem:[%s0 + $0x78] sm:$0xff]
  %v24 = vld [vmem:[%s0 + $0x80] sm:$0xff]
  %v25 = vld [vmem:[%s0 + $0x88] sm:$0xff]
  %v26 = vld [vmem:[%s0 + $0x90] sm:$0xff]
  %v27 = vld [vmem:[%s0 + $0x98] sm:$0xff]
  %v28 = vld [vmem:[%s0 + $0xa0] sm:$0xff]
  %v29 = vld [vmem:[%s0 + $0xa8] sm:$0xff]
  %v30 = vld [vmem:[%s0 + $0xb0] sm:$0xff]
  %v31 = vld [vmem:[%s0 + $0xb8] sm:$0xff]
  %v32 = vld [vmem:[%s0 + $0xc0] sm:$0xff]
  %v33 = vld [vmem:[%s0 + $0xc8] sm:$0xff]
  %v34 = vld [vmem:[%s0 + $0xd0] sm:$0xff]
  %v35 = vld [vmem:[%s0 + $0xd8] sm:$0xff]
  %v36 = vld [vmem:[%s0 + $0xe0] sm:$0xff]
  %v37 = vld [vmem:[%s0 + $0xe8] sm:$0xff]
  %v38 = vld [vmem:[%s0 + $0xf0] sm:$0xff]
  %v39 = vld [vmem:[%s0 + $0xf8] sm:$0xff]
  %v40 = vadd.f32 %v8, %v12
  %v41 = vadd.f32 %v40, %v16
  %v42 = vadd.f32 %v41, %v20
  %v43 = vadd.f32 %v42, %v24
  %v44 = vadd.f32 %v43, %v28
  %v45 = vadd.f32 %v44, %v32
  %v46 = vadd.f32 %v45, %v36
  %v47 = vrot.slane %v46, 4
  %v48 = vadd.f32 %v46, %v47
  %v49 = vrot.slane %v48, 2
  %v50 = vadd.f32 %v48, %v49
  %v51 = vrot.slane %v50, 1
  %v52 = vadd.f32 %v50, %v51
  %v53 = vadd.f32 %v9, %v13
  %v54 = vadd.f32 %v53, %v17
  %v55 = vadd.f32 %v54, %v21
  %v56 = vadd.f32 %v55, %v25
  %v57 = vadd.f32 %v56, %v29
  %v58 = vadd.f32 %v57, %v33
  %v59 = vadd.f32 %v58, %v37
  %v60 = vrot.slane %v59, 4
  %v61 = vadd.f32 %v59, %v60
  %v62 = vrot.slane %v61, 2
  %v63 = vadd.f32 %v61, %v62
  %v64 = vrot.slane %v63, 1
  %v65 = vadd.f32 %v63, %v64
  %v66 = vadd.f32 %v10, %v14
  %v67 = vadd.f32 %v66, %v18
  %v68 = vadd.f32 %v67, %v22
  %v69 = vadd.f32 %v68, %v26
  %v70 = vadd.f32 %v69, %v30
  %v71 = vadd.f32 %v70, %v34
  %v72 = vadd.f32 %v71, %v38
  %v73 = vrot.slane %v72, 4
  %v74 = vadd.f32 %v72, %v73
  %v75 = vrot.slane %v74, 2
  %v76 = vadd.f32 %v74, %v75
  %v77 = vrot.slane %v76, 1
  %v78 = vadd.f32 %v76, %v77
  %v79 = vadd.f32 %v11, %v15
  %v80 = vadd.f32 %v79, %v19
  %v81 = vadd.f32 %v80, %v23
  %v82 = vadd.f32 %v81, %v27
  %v83 = vadd.f32 %v82, %v31
  %v84 = vadd.f32 %v83, %v35
  %v85 = vadd.f32 %v84, %v39
  %v86 = vrot.slane %v85, 4
  %v87 = vadd.f32 %v85, %v86
  %v88 = vrot.slane %v87, 2
  %v89 = vadd.f32 %v87, %v88
  %v90 = vrot.slane %v89, 1
  %v91 = vadd.f32 %v89, %v90
  %v92 = vmul.f32 %v8, %v8
  %v93 = vmul.f32 %v9, %v9
  %v94 = vmul.f32 %v10, %v10
  %v95 = vmul.f32 %v11, %v11
  %v96 = vmul.f32 %v12, %v12
  %v97 = vmul.f32 %v13, %v13
  %v98 = vmul.f32 %v14, %v14
  %v99 = vmul.f32 %v15, %v15
  %v100 = vmul.f32 %v16, %v16
  %v101 = vmul.f32 %v17, %v17
  %v102 = vmul.f32 %v18, %v18
  %v103 = vmul.f32 %v19, %v19
  %v104 = vmul.f32 %v20, %v20
  %v105 = vmul.f32 %v21, %v21
  %v106 = vmul.f32 %v22, %v22
  %v107 = vmul.f32 %v23, %v23
  %v108 = vmul.f32 %v24, %v24
  %v109 = vmul.f32 %v25, %v25
  %v110 = vmul.f32 %v26, %v26
  %v111 = vmul.f32 %v27, %v27
  %v112 = vmul.f32 %v28, %v28
  %v113 = vmul.f32 %v29, %v29
  %v114 = vmul.f32 %v30, %v30
  %v115 = vmul.f32 %v31, %v31
  %v116 = vmul.f32 %v32, %v32
  %v117 = vmul.f32 %v33, %v33
  %v118 = vmul.f32 %v34, %v34
  %v119 = vmul.f32 %v35, %v35
  %v120 = vmul.f32 %v36, %v36
  %v121 = vmul.f32 %v37, %v37
  %v122 = vmul.f32 %v38, %v38
  %v123 = vmul.f32 %v39, %v39
  %v124 = vadd.f32 %v92, %v96
  %v125 = vadd.f32 %v124, %v100
  %v126 = vadd.f32 %v125, %v104
  %v127 = vadd.f32 %v126, %v108
  %v128 = vadd.f32 %v127, %v112
  %v129 = vadd.f32 %v128, %v116
  %v130 = vadd.f32 %v129, %v120
  %v131 = vrot.slane %v130, 4
  %v132 = vadd.f32 %v130, %v131
  %v133 = vrot.slane %v132, 2
  %v134 = vadd.f32 %v132, %v133
  %v135 = vrot.slane %v134, 1
  %v136 = vadd.f32 %v134, %v135
  %v137 = vadd.f32 %v93, %v97
  %v138 = vadd.f32 %v137, %v101
  %v139 = vadd.f32 %v138, %v105
  %v140 = vadd.f32 %v139, %v109
  %v141 = vadd.f32 %v140, %v113
  %v142 = vadd.f32 %v141, %v117
  %v143 = vadd.f32 %v142, %v121
  %v144 = vrot.slane %v143, 4
  %v145 = vadd.f32 %v143, %v144
  %v146 = vrot.slane %v145, 2
  %v147 = vadd.f32 %v145, %v146
  %v148 = vrot.slane %v147, 1
  %v149 = vadd.f32 %v147, %v148
  %v150 = vadd.f32 %v94, %v98
  %v151 = vadd.f32 %v150, %v102
  %v152 = vadd.f32 %v151, %v106
  %v153 = vadd.f32 %v152, %v110
  %v154 = vadd.f32 %v153, %v114
  %v155 = vadd.f32 %v154, %v118
  %v156 = vadd.f32 %v155, %v122
  %v157 = vrot.slane %v156, 4
  %v158 = vadd.f32 %v156, %v157
  %v159 = vrot.slane %v158, 2
  %v160 = vadd.f32 %v158, %v159
  %v161 = vrot.slane %v160, 1
  %v162 = vadd.f32 %v160, %v161
  %v163 = vadd.f32 %v95, %v99
  %v164 = vadd.f32 %v163, %v103
  %v165 = vadd.f32 %v164, %v107
  %v166 = vadd.f32 %v165, %v111
  %v167 = vadd.f32 %v166, %v115
  %v168 = vadd.f32 %v167, %v119
  %v169 = vadd.f32 %v168, %v123
  %v170 = vrot.slane %v169, 4
  %v171 = vadd.f32 %v169, %v170
  %v172 = vrot.slane %v171, 2
  %v173 = vadd.f32 %v171, %v172
  %v174 = vrot.slane %v173, 1
  %v175 = vadd.f32 %v173, %v174
  %vm176 = vcmask 1040384
  %v177 = vsel %vm176, %v52, %v136
  %v178 = vsel %vm176, %v65, %v149
  %v179 = vsel %vm176, %v78, %v162
  %v180 = vsel %vm176, %v91, %v175
  %p181 = scmp.eq.s32.totalorder 0, 0
  // Predicated region
  $region6: #{generator_forward.17} parent=0 // pred_check
    %p182 = pneg %p181
  $region7: #{generator_forward.17} parent=0 // pred_check_branch
    %184 = sbr.rel (%p182) target = $region9
  $region8: #{generator_forward.17} parent=0 // pred_region
    %v189 = vcombine.low %v177, %v178
    %v190 = vcombine.low %v179, %v180
    %v192 = vunpack.c.l.s4 1983009808
    %v193 = vunpack.c.0.s8 %v192
    %v194 = vlaneseq
    %v195 = vshrl.u32 %v194, 7
    %v196 = vsub.s32 %v193, %v195
    %v197 = vrot.slane %v189, %v196
    %v199 = vunpack.c.l.s4 1983009808
    %v200 = vunpack.c.0.s8 %v199
    %v201 = vlaneseq
    %v202 = vshrl.u32 %v201, 7
    %v203 = vsub.s32 %v200, %v202
    %v204 = vrot.slane %v190, %v203
    %v205 = vcombine.low %v197, %v204
    %207 = vst [vmem:[%s1] sm:$0xff] %v205
  $region9: #{generator_forward.17} parent=0 // pred_fallthru
    _
  %p208 = scmp.gt.s32.totalorder 0, 0
  // Predicated region
  $region10: #{generator_forward.17} parent=0 // pred_check
    %p209 = pneg %p208
  $region11: #{generator_forward.17} parent=0 // pred_check_branch
    %211 = sbr.rel (%p209) target = $region13
  $region12: #{generator_forward.17} parent=0 // pred_region
    %v212 = vld [vmem:[%s1] sm:$0xff]
    %v217 = vcombine.low %v177, %v178
    %v218 = vcombine.low %v179, %v180
    %v220 = vunpack.c.l.s4 1983009808
    %v221 = vunpack.c.0.s8 %v220
    %v222 = vlaneseq
    %v223 = vshrl.u32 %v222, 7
    %v224 = vsub.s32 %v221, %v223
    %v225 = vrot.slane %v217, %v224
    %v227 = vunpack.c.l.s4 1983009808
    %v228 = vunpack.c.0.s8 %v227
    %v229 = vlaneseq
    %v230 = vshrl.u32 %v229, 7
    %v231 = vsub.s32 %v228, %v230
    %v232 = vrot.slane %v218, %v231
    %v233 = vcombine.low %v225, %v232
    %v235 = vadd.f32 %v212, %v233
    %236 = vst [vmem:[%s1] sm:$0xff] %v235
  $region13: #{generator_forward.17} parent=0 // pred_fallthru
    _
  // Predicated region
  $region14: #{generator_forward.17} parent=0 // pred_check
    _
  $region15: #{generator_forward.17} parent=0 // pred_check_branch
    %238 = sbr.rel (0) target = $region17
  $region16: #{generator_forward.17} parent=0 // pred_region
    _
  $region17: #{generator_forward.17} parent=0 // pred_fallthru
    _
  // Predicated region
  $region18: #{generator_forward.17} parent=0 // pred_check
    _
  $region19: #{generator_forward.17} parent=0 // pred_check_branch
    %240 = sbr.rel (0) target = $region21
  $region20: #{generator_forward.17} parent=0 // pred_region
    _
  $region21: #{generator_forward.17} parent=0 // pred_fallthru
    _

// kernel: generator_forward.18
$region0: #{generator_forward.18}
  #allocation0 [shape = 'u32[]', space=smem, size = 0x4, offset = 0x4, fixed_abs, tag = 'smem constant byte address 0x4 - core index']
  #allocation1 [shape = 'u32[144,128]{1,0:T(1,128)}', space=vmem, size = 0x12000, scoped, tag = 'internal scratch']
  %s0 = inlined_call_operand.vmem [shape: f32[2,16], index: 0, kind: input, shape index: {}]
  %s1 = inlined_call_operand.vmem [shape: f32[2048,16], index: 1, kind: input, shape index: {}]
  %s2 = inlined_call_operand.vmem [shape: bf16[16,128], index: 2, kind: input, shape index: {}]
  %s3 = inlined_call_operand.vmem [shape: f32[2048,128], index: 3, kind: output, shape index: {}]
  %s4 = sld [smem:[#allocation0]]
  $region22: #{generator_forward.18} parent=0
    _
  %s6 = ssub.s32 1, %s4
  %s7 = scalar_select 0, %s6, %s4
  // Predicated region
  $region2: #{generator_forward.18} parent=0 // pred_check
    _
  $region3: #{generator_forward.18} parent=0 // pred_check_branch
    %9 = sbr.rel (0) target = $region5
  $region4: #{generator_forward.18} parent=0 // pred_region
    _
  $region5: #{generator_forward.18} parent=0 // pred_fallthru
    _
  // Predicated region
  $region6: #{generator_forward.18} parent=0 // pred_check
    _
  $region7: #{generator_forward.18} parent=0 // pred_check_branch
    %11 = sbr.rel (0) target = $region9
  $region8: #{generator_forward.18} parent=0 // pred_region
    _
  $region9: #{generator_forward.18} parent=0 // pred_fallthru
    _
  // Predicated region
  $region10: #{generator_forward.18} parent=0 // pred_check
    _
  $region11: #{generator_forward.18} parent=0 // pred_check_branch
    %13 = sbr.rel (0) target = $region13
  $region12: #{generator_forward.18} parent=0 // pred_region
    _
  $region13: #{generator_forward.18} parent=0 // pred_fallthru
    _
  %v15 = vld [vmem:[%s0] sm:$0x3]
  %v16 = vld [vmem:[%s1] sm:$0xff]
  %v17 = vld [vmem:[%s1 + $0x8] sm:$0xff]
  %v18 = vld [vmem:[%s1 + $0x10] sm:$0xff]
  %v19 = vld [vmem:[%s1 + $0x18] sm:$0xff]
  %v20 = vld [vmem:[%s1 + $0x20] sm:$0xff]
  %v21 = vld [vmem:[%s1 + $0x28] sm:$0xff]
  %v22 = vld [vmem:[%s1 + $0x30] sm:$0xff]
  %v23 = vld [vmem:[%s1 + $0x38] sm:$0xff]
  %v24 = vld [vmem:[%s1 + $0x40] sm:$0xff]
  %v25 = vld [vmem:[%s1 + $0x48] sm:$0xff]
  %v26 = vld [vmem:[%s1 + $0x50] sm:$0xff]
  %v27 = vld [vmem:[%s1 + $0x58] sm:$0xff]
  %v28 = vld [vmem:[%s1 + $0x60] sm:$0xff]
  %v29 = vld [vmem:[%s1 + $0x68] sm:$0xff]
  %v30 = vld [vmem:[%s1 + $0x70] sm:$0xff]
  %v31 = vld [vmem:[%s1 + $0x78] sm:$0xff]
  %v32 = vld [vmem:[%s1 + $0x80] sm:$0xff]
  %v33 = vld [vmem:[%s1 + $0x88] sm:$0xff]
  %v34 = vld [vmem:[%s1 + $0x90] sm:$0xff]
  %v35 = vld [vmem:[%s1 + $0x98] sm:$0xff]
  %v36 = vld [vmem:[%s1 + $0xa0] sm:$0xff]
  %v37 = vld [vmem:[%s1 + $0xa8] sm:$0xff]
  %v38 = vld [vmem:[%s1 + $0xb0] sm:$0xff]
  %v39 = vld [vmem:[%s1 + $0xb8] sm:$0xff]
  %v40 = vld [vmem:[%s1 + $0xc0] sm:$0xff]
  %v41 = vld [vmem:[%s1 + $0xc8] sm:$0xff]
  %v42 = vld [vmem:[%s1 + $0xd0] sm:$0xff]
  %v43 = vld [vmem:[%s1 + $0xd8] sm:$0xff]
  %v44 = vld [vmem:[%s1 + $0xe0] sm:$0xff]
  %v45 = vld [vmem:[%s1 + $0xe8] sm:$0xff]
  %v46 = vld [vmem:[%s1 + $0xf0] sm:$0xff]
  %v47 = vld [vmem:[%s1 + $0xf8] sm:$0xff]
  %v48 = vld [vmem:[%s1 + $0x100] sm:$0xff]
  %v49 = vld [vmem:[%s1 + $0x108] sm:$0xff]
  %v50 = vld [vmem:[%s1 + $0x110] sm:$0xff]
  %v51 = vld [vmem:[%s1 + $0x118] sm:$0xff]
  %v52 = vld [vmem:[%s1 + $0x120] sm:$0xff]
  %v53 = vld [vmem:[%s1 + $0x128] sm:$0xff]
  %v54 = vld [vmem:[%s1 + $0x130] sm:$0xff]
  %v55 = vld [vmem:[%s1 + $0x138] sm:$0xff]
  %v56 = vld [vmem:[%s1 + $0x140] sm:$0xff]
  %v57 = vld [vmem:[%s1 + $0x148] sm:$0xff]
  %v58 = vld [vmem:[%s1 + $0x150] sm:$0xff]
  %v59 = vld [vmem:[%s1 + $0x158] sm:$0xff]
  %v60 = vld [vmem:[%s1 + $0x160] sm:$0xff]
  %v61 = vld [vmem:[%s1 + $0x168] sm:$0xff]
  %v62 = vld [vmem:[%s1 + $0x170] sm:$0xff]
  %v63 = vld [vmem:[%s1 + $0x178] sm:$0xff]
  %v64 = vld [vmem:[%s1 + $0x180] sm:$0xff]
  %v65 = vld [vmem:[%s1 + $0x188] sm:$0xff]
  %v66 = vld [vmem:[%s1 + $0x190] sm:$0xff]
  %v67 = vld [vmem:[%s1 + $0x198] sm:$0xff]
  %v68 = vld [vmem:[%s1 + $0x1a0] sm:$0xff]
  %v69 = vld [vmem:[%s1 + $0x1a8] sm:$0xff]
  %v70 = vld [vmem:[%s1 + $0x1b0] sm:$0xff]
  %v71 = vld [vmem:[%s1 + $0x1b8] sm:$0xff]
  %v72 = vld [vmem:[%s1 + $0x1c0] sm:$0xff]
  %v73 = vld [vmem:[%s1 + $0x1c8] sm:$0xff]
  %v74 = vld [vmem:[%s1 + $0x1d0] sm:$0xff]
  %v75 = vld [vmem:[%s1 + $0x1d8] sm:$0xff]
  %v76 = vld [vmem:[%s1 + $0x1e0] sm:$0xff]
  %v77 = vld [vmem:[%s1 + $0x1e8] sm:$0xff]
  %v78 = vld [vmem:[%s1 + $0x1f0] sm:$0xff]
  %v79 = vld [vmem:[%s1 + $0x1f8] sm:$0xff]
  %v80 = vld [vmem:[%s1 + $0x200] sm:$0xff]
  %v81 = vld [vmem:[%s1 + $0x208] sm:$0xff]
  %v82 = vld [vmem:[%s1 + $0x210] sm:$0xff]
  %v83 = vld [vmem:[%s1 + $0x218] sm:$0xff]
  %v84 = vld [vmem:[%s1 + $0x220] sm:$0xff]
  %v85 = vld [vmem:[%s1 + $0x228] sm:$0xff]
  %v86 = vld [vmem:[%s1 + $0x230] sm:$0xff]
  %v87 = vld [vmem:[%s1 + $0x238] sm:$0xff]
  %v88 = vld [vmem:[%s1 + $0x240] sm:$0xff]
  %v89 = vld [vmem:[%s1 + $0x248] sm:$0xff]
  %v90 = vld [vmem:[%s1 + $0x250] sm:$0xff]
  %v91 = vld [vmem:[%s1 + $0x258] sm:$0xff]
  %v92 = vld [vmem:[%s1 + $0x260] sm:$0xff]
  %v93 = vld [vmem:[%s1 + $0x268] sm:$0xff]
  %v94 = vld [vmem:[%s1 + $0x270] sm:$0xff]
  %v95 = vld [vmem:[%s1 + $0x278] sm:$0xff]
  %v96 = vld [vmem:[%s1 + $0x280] sm:$0xff]
  %v97 = vld [vmem:[%s1 + $0x288] sm:$0xff]
  %v98 = vld [vmem:[%s1 + $0x290] sm:$0xff]
  %v99 = vld [vmem:[%s1 + $0x298] sm:$0xff]
  %v100 = vld [vmem:[%s1 + $0x2a0] sm:$0xff]
  %v101 = vld [vmem:[%s1 + $0x2a8] sm:$0xff]
  %v102 = vld [vmem:[%s1 + $0x2b0] sm:$0xff]
  %v103 = vld [vmem:[%s1 + $0x2b8] sm:$0xff]
  %v104 = vld [vmem:[%s1 + $0x2c0] sm:$0xff]
  %v105 = vld [vmem:[%s1 + $0x2c8] sm:$0xff]
  %v106 = vld [vmem:[%s1 + $0x2d0] sm:$0xff]
  %v107 = vld [vmem:[%s1 + $0x2d8] sm:$0xff]
  %v108 = vld [vmem:[%s1 + $0x2e0] sm:$0xff]
  %v109 = vld [vmem:[%s1 + $0x2e8] sm:$0xff]
  %v110 = vld [vmem:[%s1 + $0x2f0] sm:$0xff]
  %v111 = vld [vmem:[%s1 + $0x2f8] sm:$0xff]
  %v112 = vld [vmem:[%s1 + $0x300] sm:$0xff]
  %v113 = vld [vmem:[%s1 + $0x308] sm:$0xff]
  %v114 = vld [vmem:[%s1 + $0x310] sm:$0xff]
  %v115 = vld [vmem:[%s1 + $0x318] sm:$0xff]
  %v116 = vld [vmem:[%s1 + $0x320] sm:$0xff]
  %v117 = vld [vmem:[%s1 + $0x328] sm:$0xff]
  %v118 = vld [vmem:[%s1 + $0x330] sm:$0xff]
  %v119 = vld [vmem:[%s1 + $0x338] sm:$0xff]
  %v120 = vld [vmem:[%s1 + $0x340] sm:$0xff]
  %v121 = vld [vmem:[%s1 + $0x348] sm:$0xff]
  %v122 = vld [vmem:[%s1 + $0x350] sm:$0xff]
  %v123 = vld [vmem:[%s1 + $0x358] sm:$0xff]
  %v124 = vld [vmem:[%s1 + $0x360] sm:$0xff]
  %v125 = vld [vmem:[%s1 + $0x368] sm:$0xff]
  %v126 = vld [vmem:[%s1 + $0x370] sm:$0xff]
  %v127 = vld [vmem:[%s1 + $0x378] sm:$0xff]
  %v128 = vld [vmem:[%s1 + $0x380] sm:$0xff]
  %v129 = vld [vmem:[%s1 + $0x388] sm:$0xff]
  %v130 = vld [vmem:[%s1 + $0x390] sm:$0xff]
  %v131 = vld [vmem:[%s1 + $0x398] sm:$0xff]
  %v132 = vld [vmem:[%s1 + $0x3a0] sm:$0xff]
  %v133 = vld [vmem:[%s1 + $0x3a8] sm:$0xff]
  %v134 = vld [vmem:[%s1 + $0x3b0] sm:$0xff]
  %v135 = vld [vmem:[%s1 + $0x3b8] sm:$0xff]
  %v136 = vld [vmem:[%s1 + $0x3c0] sm:$0xff]
  %v137 = vld [vmem:[%s1 + $0x3c8] sm:$0xff]
  %v138 = vld [vmem:[%s1 + $0x3d0] sm:$0xff]
  %v139 = vld [vmem:[%s1 + $0x3d8] sm:$0xff]
  %v140 = vld [vmem:[%s1 + $0x3e0] sm:$0xff]
  %v141 = vld [vmem:[%s1 + $0x3e8] sm:$0xff]
  %v142 = vld [vmem:[%s1 + $0x3f0] sm:$0xff]
  %v143 = vld [vmem:[%s1 + $0x3f8] sm:$0xff]
  %v144 = vld [vmem:[%s1 + $0x400] sm:$0xff]
  %v145 = vld [vmem:[%s1 + $0x408] sm:$0xff]
  %v146 = vld [vmem:[%s1 + $0x410] sm:$0xff]
  %v147 = vld [vmem:[%s1 + $0x418] sm:$0xff]
  %v148 = vld [vmem:[%s1 + $0x420] sm:$0xff]
  %v149 = vld [vmem:[%s1 + $0x428] sm:$0xff]
  %v150 = vld [vmem:[%s1 + $0x430] sm:$0xff]
  %v151 = vld [vmem:[%s1 + $0x438] sm:$0xff]
  %v152 = vld [vmem:[%s1 + $0x440] sm:$0xff]
  %v153 = vld [vmem:[%s1 + $0x448] sm:$0xff]
  %v154 = vld [vmem:[%s1 + $0x450] sm:$0xff]
  %v155 = vld [vmem:[%s1 + $0x458] sm:$0xff]
  %v156 = vld [vmem:[%s1 + $0x460] sm:$0xff]
  %v157 = vld [vmem:[%s1 + $0x468] sm:$0xff]
  %v158 = vld [vmem:[%s1 + $0x470] sm:$0xff]
  %v159 = vld [vmem:[%s1 + $0x478] sm:$0xff]
  %v160 = vld [vmem:[%s1 + $0x480] sm:$0xff]
  %v161 = vld [vmem:[%s1 + $0x488] sm:$0xff]
  %v162 = vld [vmem:[%s1 + $0x490] sm:$0xff]
  %v163 = vld [vmem:[%s1 + $0x498] sm:$0xff]
  %v164 = vld [vmem:[%s1 + $0x4a0] sm:$0xff]
  %v165 = vld [vmem:[%s1 + $0x4a8] sm:$0xff]
  %v166 = vld [vmem:[%s1 + $0x4b0] sm:$0xff]
  %v167 = vld [vmem:[%s1 + $0x4b8] sm:$0xff]
  %v168 = vld [vmem:[%s1 + $0x4c0] sm:$0xff]
  %v169 = vld [vmem:[%s1 + $0x4c8] sm:$0xff]
  %v170 = vld [vmem:[%s1 + $0x4d0] sm:$0xff]
  %v171 = vld [vmem:[%s1 + $0x4d8] sm:$0xff]
  %v172 = vld [vmem:[%s1 + $0x4e0] sm:$0xff]
  %v173 = vld [vmem:[%s1 + $0x4e8] sm:$0xff]
  %v174 = vld [vmem:[%s1 + $0x4f0] sm:$0xff]
  %v175 = vld [vmem:[%s1 + $0x4f8] sm:$0xff]
  %v176 = vld [vmem:[%s1 + $0x500] sm:$0xff]
  %v177 = vld [vmem:[%s1 + $0x508] sm:$0xff]
  %v178 = vld [vmem:[%s1 + $0x510] sm:$0xff]
  %v179 = vld [vmem:[%s1 + $0x518] sm:$0xff]
  %v180 = vld [vmem:[%s1 + $0x520] sm:$0xff]
  %v181 = vld [vmem:[%s1 + $0x528] sm:$0xff]
  %v182 = vld [vmem:[%s1 + $0x530] sm:$0xff]
  %v183 = vld [vmem:[%s1 + $0x538] sm:$0xff]
  %v184 = vld [vmem:[%s1 + $0x540] sm:$0xff]
  %v185 = vld [vmem:[%s1 + $0x548] sm:$0xff]
  %v186 = vld [vmem:[%s1 + $0x550] sm:$0xff]
  %v187 = vld [vmem:[%s1 + $0x558] sm:$0xff]
  %v188 = vld [vmem:[%s1 + $0x560] sm:$0xff]
  %v189 = vld [vmem:[%s1 + $0x568] sm:$0xff]
  %v190 = vld [vmem:[%s1 + $0x570] sm:$0xff]
  %v191 = vld [vmem:[%s1 + $0x578] sm:$0xff]
  %v192 = vld [vmem:[%s1 + $0x580] sm:$0xff]
  %v193 = vld [vmem:[%s1 + $0x588] sm:$0xff]
  %v194 = vld [vmem:[%s1 + $0x590] sm:$0xff]
  %v195 = vld [vmem:[%s1 + $0x598] sm:$0xff]
  %v196 = vld [vmem:[%s1 + $0x5a0] sm:$0xff]
  %v197 = vld [vmem:[%s1 + $0x5a8] sm:$0xff]
  %v198 = vld [vmem:[%s1 + $0x5b0] sm:$0xff]
  %v199 = vld [vmem:[%s1 + $0x5b8] sm:$0xff]
  %v200 = vld [vmem:[%s1 + $0x5c0] sm:$0xff]
  %v201 = vld [vmem:[%s1 + $0x5c8] sm:$0xff]
  %v202 = vld [vmem:[%s1 + $0x5d0] sm:$0xff]
  %v203 = vld [vmem:[%s1 + $0x5d8] sm:$0xff]
  %v204 = vld [vmem:[%s1 + $0x5e0] sm:$0xff]
  %v205 = vld [vmem:[%s1 + $0x5e8] sm:$0xff]
  %v206 = vld [vmem:[%s1 + $0x5f0] sm:$0xff]
  %v207 = vld [vmem:[%s1 + $0x5f8] sm:$0xff]
  %v208 = vld [vmem:[%s1 + $0x600] sm:$0xff]
  %v209 = vld [vmem:[%s1 + $0x608] sm:$0xff]
  %v210 = vld [vmem:[%s1 + $0x610] sm:$0xff]
  %v211 = vld [vmem:[%s1 + $0x618] sm:$0xff]
  %v212 = vld [vmem:[%s1 + $0x620] sm:$0xff]
  %v213 = vld [vmem:[%s1 + $0x628] sm:$0xff]
  %v214 = vld [vmem:[%s1 + $0x630] sm:$0xff]
  %v215 = vld [vmem:[%s1 + $0x638] sm:$0xff]
  %v216 = vld [vmem:[%s1 + $0x640] sm:$0xff]
  %v217 = vld [vmem:[%s1 + $0x648] sm:$0xff]
  %v218 = vld [vmem:[%s1 + $0x650] sm:$0xff]
  %v219 = vld [vmem:[%s1 + $0x658] sm:$0xff]
  %v220 = vld [vmem:[%s1 + $0x660] sm:$0xff]
  %v221 = vld [vmem:[%s1 + $0x668] sm:$0xff]
  %v222 = vld [vmem:[%s1 + $0x670] sm:$0xff]
  %v223 = vld [vmem:[%s1 + $0x678] sm:$0xff]
  %v224 = vld [vmem:[%s1 + $0x680] sm:$0xff]
  %v225 = vld [vmem:[%s1 + $0x688] sm:$0xff]
  %v226 = vld [vmem:[%s1 + $0x690] sm:$0xff]
  %v227 = vld [vmem:[%s1 + $0x698] sm:$0xff]
  %v228 = vld [vmem:[%s1 + $0x6a0] sm:$0xff]
  %v229 = vld [vmem:[%s1 + $0x6a8] sm:$0xff]
  %v230 = vld [vmem:[%s1 + $0x6b0] sm:$0xff]
  %v231 = vld [vmem:[%s1 + $0x6b8] sm:$0xff]
  %v232 = vld [vmem:[%s1 + $0x6c0] sm:$0xff]
  %v233 = vld [vmem:[%s1 + $0x6c8] sm:$0xff]
  %v234 = vld [vmem:[%s1 + $0x6d0] sm:$0xff]
  %v235 = vld [vmem:[%s1 + $0x6d8] sm:$0xff]
  %v236 = vld [vmem:[%s1 + $0x6e0] sm:$0xff]
  %v237 = vld [vmem:[%s1 + $0x6e8] sm:$0xff]
  %v238 = vld [vmem:[%s1 + $0x6f0] sm:$0xff]
  %v239 = vld [vmem:[%s1 + $0x6f8] sm:$0xff]
  %v240 = vld [vmem:[%s1 + $0x700] sm:$0xff]
  %v241 = vld [vmem:[%s1 + $0x708] sm:$0xff]
  %v242 = vld [vmem:[%s1 + $0x710] sm:$0xff]
  %v243 = vld [vmem:[%s1 + $0x718] sm:$0xff]
  %v244 = vld [vmem:[%s1 + $0x720] sm:$0xff]
  %v245 = vld [vmem:[%s1 + $0x728] sm:$0xff]
  %v246 = vld [vmem:[%s1 + $0x730] sm:$0xff]
  %v247 = vld [vmem:[%s1 + $0x738] sm:$0xff]
  %v248 = vld [vmem:[%s1 + $0x740] sm:$0xff]
  %v249 = vld [vmem:[%s1 + $0x748] sm:$0xff]
  %v250 = vld [vmem:[%s1 + $0x750] sm:$0xff]
  %v251 = vld [vmem:[%s1 + $0x758] sm:$0xff]
  %v252 = vld [vmem:[%s1 + $0x760] sm:$0xff]
  %v253 = vld [vmem:[%s1 + $0x768] sm:$0xff]
  %v254 = vld [vmem:[%s1 + $0x770] sm:$0xff]
  %v255 = vld [vmem:[%s1 + $0x778] sm:$0xff]
  %v256 = vld [vmem:[%s1 + $0x780] sm:$0xff]
  %v257 = vld [vmem:[%s1 + $0x788] sm:$0xff]
  %v258 = vld [vmem:[%s1 + $0x790] sm:$0xff]
  %v259 = vld [vmem:[%s1 + $0x798] sm:$0xff]
  %v260 = vld [vmem:[%s1 + $0x7a0] sm:$0xff]
  %v261 = vld [vmem:[%s1 + $0x7a8] sm:$0xff]
  %v262 = vld [vmem:[%s1 + $0x7b0] sm:$0xff]
  %v263 = vld [vmem:[%s1 + $0x7b8] sm:$0xff]
  %v264 = vld [vmem:[%s1 + $0x7c0] sm:$0xff]
  %v265 = vld [vmem:[%s1 + $0x7c8] sm:$0xff]
  %v266 = vld [vmem:[%s1 + $0x7d0] sm:$0xff]
  %v267 = vld [vmem:[%s1 + $0x7d8] sm:$0xff]
  %v268 = vld [vmem:[%s1 + $0x7e0] sm:$0xff]
  %v269 = vld [vmem:[%s1 + $0x7e8] sm:$0xff]
  %v270 = vld [vmem:[%s1 + $0x7f0] sm:$0xff]
  %v271 = vld [vmem:[%s1 + $0x7f8] sm:$0xff]
  %v272 = vlaneseq
  %v273 = vshrl.u32 %v272, 7
  %v274 = vsub.s32 0, %v273
  %v275 = vrot.slane %v15, %v274
  %v276 = vmul.f32 %v16, %v275
  %v277 = vmul.f32 %v17, %v275
  %v278 = vmul.f32 %v18, %v275
  %v279 = vmul.f32 %v19, %v275
  %v280 = vmul.f32 %v20, %v275
  %v281 = vmul.f32 %v21, %v275
  %v282 = vmul.f32 %v22, %v275
  %v283 = vmul.f32 %v23, %v275
  %v284 = vmul.f32 %v24, %v275
  %v285 = vmul.f32 %v25, %v275
  %v286 = vmul.f32 %v26, %v275
  %v287 = vmul.f32 %v27, %v275
  %v288 = vmul.f32 %v28, %v275
  %v289 = vmul.f32 %v29, %v275
  %v290 = vmul.f32 %v30, %v275
  %v291 = vmul.f32 %v31, %v275
  %v292 = vmul.f32 %v32, %v275
  %v293 = vmul.f32 %v33, %v275
  %v294 = vmul.f32 %v34, %v275
  %v295 = vmul.f32 %v35, %v275
  %v296 = vmul.f32 %v36, %v275
  %v297 = vmul.f32 %v37, %v275
  %v298 = vmul.f32 %v38, %v275
  %v299 = vmul.f32 %v39, %v275
  %v300 = vmul.f32 %v40, %v275
  %v301 = vmul.f32 %v41, %v275
  %v302 = vmul.f32 %v42, %v275
  %v303 = vmul.f32 %v43, %v275
  %v304 = vmul.f32 %v44, %v275
  %v305 = vmul.f32 %v45, %v275
  %v306 = vmul.f32 %v46, %v275
  %v307 = vmul.f32 %v47, %v275
  %v308 = vmul.f32 %v48, %v275
  %v309 = vmul.f32 %v49, %v275
  %v310 = vmul.f32 %v50, %v275
  %v311 = vmul.f32 %v51, %v275
  %v312 = vmul.f32 %v52, %v275
  %v313 = vmul.f32 %v53, %v275
  %v314 = vmul.f32 %v54, %v275
  %v315 = vmul.f32 %v55, %v275
  %v316 = vmul.f32 %v56, %v275
  %v317 = vmul.f32 %v57, %v275
  %v318 = vmul.f32 %v58, %v275
  %v319 = vmul.f32 %v59, %v275
  %v320 = vmul.f32 %v60, %v275
  %v321 = vmul.f32 %v61, %v275
  %v322 = vmul.f32 %v62, %v275
  %v323 = vmul.f32 %v63, %v275
  %v324 = vmul.f32 %v64, %v275
  %v325 = vmul.f32 %v65, %v275
  %v326 = vmul.f32 %v66, %v275
  %v327 = vmul.f32 %v67, %v275
  %v328 = vmul.f32 %v68, %v275
  %v329 = vmul.f32 %v69, %v275
  %v330 = vmul.f32 %v70, %v275
  %v331 = vmul.f32 %v71, %v275
  %v332 = vmul.f32 %v72, %v275
  %v333 = vmul.f32 %v73, %v275
  %v334 = vmul.f32 %v74, %v275
  %v335 = vmul.f32 %v75, %v275
  %v336 = vmul.f32 %v76, %v275
  %v337 = vmul.f32 %v77, %v275
  %v338 = vmul.f32 %v78, %v275
  %v339 = vmul.f32 %v79, %v275
  %v340 = vmul.f32 %v80, %v275
  %v341 = vmul.f32 %v81, %v275
  %v342 = vmul.f32 %v82, %v275
  %v343 = vmul.f32 %v83, %v275
  %v344 = vmul.f32 %v84, %v275
  %v345 = vmul.f32 %v85, %v275
  %v346 = vmul.f32 %v86, %v275
  %v347 = vmul.f32 %v87, %v275
  %v348 = vmul.f32 %v88, %v275
  %v349 = vmul.f32 %v89, %v275
  %v350 = vmul.f32 %v90, %v275
  %v351 = vmul.f32 %v91, %v275
  %v352 = vmul.f32 %v92, %v275
  %v353 = vmul.f32 %v93, %v275
  %v354 = vmul.f32 %v94, %v275
  %v355 = vmul.f32 %v95, %v275
  %v356 = vmul.f32 %v96, %v275
  %v357 = vmul.f32 %v97, %v275
  %v358 = vmul.f32 %v98, %v275
  %v359 = vmul.f32 %v99, %v275
  %v360 = vmul.f32 %v100, %v275
  %v361 = vmul.f32 %v101, %v275
  %v362 = vmul.f32 %v102, %v275
  %v363 = vmul.f32 %v103, %v275
  %v364 = vmul.f32 %v104, %v275
  %v365 = vmul.f32 %v105, %v275
  %v366 = vmul.f32 %v106, %v275
  %v367 = vmul.f32 %v107, %v275
  %v368 = vmul.f32 %v108, %v275
  %v369 = vmul.f32 %v109, %v275
  %v370 = vmul.f32 %v110, %v275
  %v371 = vmul.f32 %v111, %v275
  %v372 = vmul.f32 %v112, %v275
  %v373 = vmul.f32 %v113, %v275
  %v374 = vmul.f32 %v114, %v275
  %v375 = vmul.f32 %v115, %v275
  %v376 = vmul.f32 %v116, %v275
  %v377 = vmul.f32 %v117, %v275
  %v378 = vmul.f32 %v118, %v275
  %v379 = vmul.f32 %v119, %v275
  %v380 = vmul.f32 %v120, %v275
  %v381 = vmul.f32 %v121, %v275
  %v382 = vmul.f32 %v122, %v275
  %v383 = vmul.f32 %v123, %v275
  %v384 = vmul.f32 %v124, %v275
  %v385 = vmul.f32 %v125, %v275
  %v386 = vmul.f32 %v126, %v275
  %v387 = vmul.f32 %v127, %v275
  %v388 = vmul.f32 %v128, %v275
  %v389 = vmul.f32 %v129, %v275
  %v390 = vmul.f32 %v130, %v275
  %v391 = vmul.f32 %v131, %v275
  %v392 = vmul.f32 %v132, %v275
  %v393 = vmul.f32 %v133, %v275
  %v394 = vmul.f32 %v134, %v275
  %v395 = vmul.f32 %v135, %v275
  %v396 = vmul.f32 %v136, %v275
  %v397 = vmul.f32 %v137, %v275
  %v398 = vmul.f32 %v138, %v275
  %v399 = vmul.f32 %v139, %v275
  %v400 = vmul.f32 %v140, %v275
  %v401 = vmul.f32 %v141, %v275
  %v402 = vmul.f32 %v142, %v275
  %v403 = vmul.f32 %v143, %v275
  %v404 = vmul.f32 %v144, %v275
  %v405 = vmul.f32 %v145, %v275
  %v406 = vmul.f32 %v146, %v275
  %v407 = vmul.f32 %v147, %v275
  %v408 = vmul.f32 %v148, %v275
  %v409 = vmul.f32 %v149, %v275
  %v410 = vmul.f32 %v150, %v275
  %v411 = vmul.f32 %v151, %v275
  %v412 = vmul.f32 %v152, %v275
  %v413 = vmul.f32 %v153, %v275
  %v414 = vmul.f32 %v154, %v275
  %v415 = vmul.f32 %v155, %v275
  %v416 = vmul.f32 %v156, %v275
  %v417 = vmul.f32 %v157, %v275
  %v418 = vmul.f32 %v158, %v275
  %v419 = vmul.f32 %v159, %v275
  %v420 = vmul.f32 %v160, %v275
  %v421 = vmul.f32 %v161, %v275
  %v422 = vmul.f32 %v162, %v275
  %v423 = vmul.f32 %v163, %v275
  %v424 = vmul.f32 %v164, %v275
  %v425 = vmul.f32 %v165, %v275
  %v426 = vmul.f32 %v166, %v275
  %v427 = vmul.f32 %v167, %v275
  %v428 = vmul.f32 %v168, %v275
  %v429 = vmul.f32 %v169, %v275
  %v430 = vmul.f32 %v170, %v275
  %v431 = vmul.f32 %v171, %v275
  %v432 = vmul.f32 %v172, %v275
  %v433 = vmul.f32 %v173, %v275
  %v434 = vmul.f32 %v174, %v275
  %v435 = vmul.f32 %v175, %v275
  %v436 = vmul.f32 %v176, %v275
  %v437 = vmul.f32 %v177, %v275
  %v438 = vmul.f32 %v178, %v275
  %v439 = vmul.f32 %v179, %v275
  %v440 = vmul.f32 %v180, %v275
  %v441 = vmul.f32 %v181, %v275
  %v442 = vmul.f32 %v182, %v275
  %v443 = vmul.f32 %v183, %v275
  %v444 = vmul.f32 %v184, %v275
  %v445 = vmul.f32 %v185, %v275
  %v446 = vmul.f32 %v186, %v275
  %v447 = vmul.f32 %v187, %v275
  %v448 = vmul.f32 %v188, %v275
  %v449 = vmul.f32 %v189, %v275
  %v450 = vmul.f32 %v190, %v275
  %v451 = vmul.f32 %v191, %v275
  %v452 = vmul.f32 %v192, %v275
  %v453 = vmul.f32 %v193, %v275
  %v454 = vmul.f32 %v194, %v275
  %v455 = vmul.f32 %v195, %v275
  %v456 = vmul.f32 %v196, %v275
  %v457 = vmul.f32 %v197, %v275
  %v458 = vmul.f32 %v198, %v275
  %v459 = vmul.f32 %v199, %v275
  %v460 = vmul.f32 %v200, %v275
  %v461 = vmul.f32 %v201, %v275
  %v462 = vmul.f32 %v202, %v275
  %v463 = vmul.f32 %v203, %v275
  %v464 = vmul.f32 %v204, %v275
  %v465 = vmul.f32 %v205, %v275
  %v466 = vmul.f32 %v206, %v275
  %v467 = vmul.f32 %v207, %v275
  %v468 = vmul.f32 %v208, %v275
  %v469 = vmul.f32 %v209, %v275
  %v470 = vmul.f32 %v210, %v275
  %v471 = vmul.f32 %v211, %v275
  %v472 = vmul.f32 %v212, %v275
  %v473 = vmul.f32 %v213, %v275
  %v474 = vmul.f32 %v214, %v275
  %v475 = vmul.f32 %v215, %v275
  %v476 = vmul.f32 %v216, %v275
  %v477 = vmul.f32 %v217, %v275
  %v478 = vmul.f32 %v218, %v275
  %v479 = vmul.f32 %v219, %v275
  %v480 = vmul.f32 %v220, %v275
  %v481 = vmul.f32 %v221, %v275
  %v482 = vmul.f32 %v222, %v275
  %v483 = vmul.f32 %v223, %v275
  %v484 = vmul.f32 %v224, %v275
  %v485 = vmul.f32 %v225, %v275
  %v486 = vmul.f32 %v226, %v275
  %v487 = vmul.f32 %v227, %v275
  %v488 = vmul.f32 %v228, %v275
  %v489 = vmul.f32 %v229, %v275
  %v490 = vmul.f32 %v230, %v275
  %v491 = vmul.f32 %v231, %v275
  %v492 = vmul.f32 %v232, %v275
  %v493 = vmul.f32 %v233, %v275
  %v494 = vmul.f32 %v234, %v275
  %v495 = vmul.f32 %v235, %v275
  %v496 = vmul.f32 %v236, %v275
  %v497 = vmul.f32 %v237, %v275
  %v498 = vmul.f32 %v238, %v275
  %v499 = vmul.f32 %v239, %v275
  %v500 = vmul.f32 %v240, %v275
  %v501 = vmul.f32 %v241, %v275
  %v502 = vmul.f32 %v242, %v275
  %v503 = vmul.f32 %v243, %v275
  %v504 = vmul.f32 %v244, %v275
  %v505 = vmul.f32 %v245, %v275
  %v506 = vmul.f32 %v246, %v275
  %v507 = vmul.f32 %v247, %v275
  %v508 = vmul.f32 %v248, %v275
  %v509 = vmul.f32 %v249, %v275
  %v510 = vmul.f32 %v250, %v275
  %v511 = vmul.f32 %v251, %v275
  %v512 = vmul.f32 %v252, %v275
  %v513 = vmul.f32 %v253, %v275
  %v514 = vmul.f32 %v254, %v275
  %v515 = vmul.f32 %v255, %v275
  %v516 = vmul.f32 %v256, %v275
  %v517 = vmul.f32 %v257, %v275
  %v518 = vmul.f32 %v258, %v275
  %v519 = vmul.f32 %v259, %v275
  %v520 = vmul.f32 %v260, %v275
  %v521 = vmul.f32 %v261, %v275
  %v522 = vmul.f32 %v262, %v275
  %v523 = vmul.f32 %v263, %v275
  %v524 = vmul.f32 %v264, %v275
  %v525 = vmul.f32 %v265, %v275
  %v526 = vmul.f32 %v266, %v275
  %v527 = vmul.f32 %v267, %v275
  %v528 = vmul.f32 %v268, %v275
  %v529 = vmul.f32 %v269, %v275
  %v530 = vmul.f32 %v270, %v275
  %v531 = vmul.f32 %v271, %v275
  %v532 = vlaneseq
  %v533 = vshrl.u32 %v532, 7
  %v534 = vsub.s32 1, %v533
  %v535 = vrot.slane %v15, %v534
  %v536 = vadd.f32 %v276, %v535
  %v537 = vadd.f32 %v277, %v535
  %v538 = vadd.f32 %v278, %v535
  %v539 = vadd.f32 %v279, %v535
  %v540 = vadd.f32 %v280, %v535
  %v541 = vadd.f32 %v281, %v535
  %v542 = vadd.f32 %v282, %v535
  %v543 = vadd.f32 %v283, %v535
  %v544 = vadd.f32 %v284, %v535
  %v545 = vadd.f32 %v285, %v535
  %v546 = vadd.f32 %v286, %v535
  %v547 = vadd.f32 %v287, %v535
  %v548 = vadd.f32 %v288, %v535
  %v549 = vadd.f32 %v289, %v535
  %v550 = vadd.f32 %v290, %v535
  %v551 = vadd.f32 %v291, %v535
  %v552 = vadd.f32 %v292, %v535
  %v553 = vadd.f32 %v293, %v535
  %v554 = vadd.f32 %v294, %v535
  %v555 = vadd.f32 %v295, %v535
  %v556 = vadd.f32 %v296, %v535
  %v557 = vadd.f32 %v297, %v535
  %v558 = vadd.f32 %v298, %v535
  %v559 = vadd.f32 %v299, %v535
  %v560 = vadd.f32 %v300, %v535
  %v561 = vadd.f32 %v301, %v535
  %v562 = vadd.f32 %v302, %v535
  %v563 = vadd.f32 %v303, %v535
  %v564 = vadd.f32 %v304, %v535
  %v565 = vadd.f32 %v305, %v535
  %v566 = vadd.f32 %v306, %v535
  %v567 = vadd.f32 %v307, %v535
  %v568 = vadd.f32 %v308, %v535
  %v569 = vadd.f32 %v309, %v535
  %v570 = vadd.f32 %v310, %v535
  %v571 = vadd.f32 %v311, %v535
  %v572 = vadd.f32 %v312, %v535
  %v573 = vadd.f32 %v313, %v535
  %v574 = vadd.f32 %v314, %v535
  %v575 = vadd.f32 %v315, %v535
  %v576 = vadd.f32 %v316, %v535
  %v577 = vadd.f32 %v317, %v535
  %v578 = vadd.f32 %v318, %v535
  %v579 = vadd.f32 %v319, %v535
  %v580 = vadd.f32 %v320, %v535
  %v581 = vadd.f32 %v321, %v535
  %v582 = vadd.f32 %v322, %v535
  %v583 = vadd.f32 %v323, %v535
  %v584 = vadd.f32 %v324, %v535
  %v585 = vadd.f32 %v325, %v535
  %v586 = vadd.f32 %v326, %v535
  %v587 = vadd.f32 %v327, %v535
  %v588 = vadd.f32 %v328, %v535
  %v589 = vadd.f32 %v329, %v535
  %v590 = vadd.f32 %v330, %v535
  %v591 = vadd.f32 %v331, %v535
  %v592 = vadd.f32 %v332, %v535
  %v593 = vadd.f32 %v333, %v535
  %v594 = vadd.f32 %v334, %v535
  %v595 = vadd.f32 %v335, %v535
  %v596 = vadd.f32 %v336, %v535
  %v597 = vadd.f32 %v337, %v535
  %v598 = vadd.f32 %v338, %v535
  %v599 = vadd.f32 %v339, %v535
  %v600 = vadd.f32 %v340, %v535
  %v601 = vadd.f32 %v341, %v535
  %v602 = vadd.f32 %v342, %v535
  %v603 = vadd.f32 %v343, %v535
  %v604 = vadd.f32 %v344, %v535
  %v605 = vadd.f32 %v345, %v535
  %v606 = vadd.f32 %v346, %v535
  %v607 = vadd.f32 %v347, %v535
  %v608 = vadd.f32 %v348, %v535
  %v609 = vadd.f32 %v349, %v535
  %v610 = vadd.f32 %v350, %v535
  %v611 = vadd.f32 %v351, %v535
  %v612 = vadd.f32 %v352, %v535
  %v613 = vadd.f32 %v353, %v535
  %v614 = vadd.f32 %v354, %v535
  %v615 = vadd.f32 %v355, %v535
  %v616 = vadd.f32 %v356, %v535
  %v617 = vadd.f32 %v357, %v535
  %v618 = vadd.f32 %v358, %v535
  %v619 = vadd.f32 %v359, %v535
  %v620 = vadd.f32 %v360, %v535
  %v621 = vadd.f32 %v361, %v535
  %v622 = vadd.f32 %v362, %v535
  %v623 = vadd.f32 %v363, %v535
  %v624 = vadd.f32 %v364, %v535
  %v625 = vadd.f32 %v365, %v535
  %v626 = vadd.f32 %v366, %v535
  %v627 = vadd.f32 %v367, %v535
  %v628 = vadd.f32 %v368, %v535
  %v629 = vadd.f32 %v369, %v535
  %v630 = vadd.f32 %v370, %v535
  %v631 = vadd.f32 %v371, %v535
  %v632 = vadd.f32 %v372, %v535
  %v633 = vadd.f32 %v373, %v535
  %v634 = vadd.f32 %v374, %v535
  %v635 = vadd.f32 %v375, %v535
  %v636 = vadd.f32 %v376, %v535
  %v637 = vadd.f32 %v377, %v535
  %v638 = vadd.f32 %v378, %v535
  %v639 = vadd.f32 %v379, %v535
  %v640 = vadd.f32 %v380, %v535
  %v641 = vadd.f32 %v381, %v535
  %v642 = vadd.f32 %v382, %v535
  %v643 = vadd.f32 %v383, %v535
  %v644 = vadd.f32 %v384, %v535
  %v645 = vadd.f32 %v385, %v535
  %v646 = vadd.f32 %v386, %v535
  %v647 = vadd.f32 %v387, %v535
  %v648 = vadd.f32 %v388, %v535
  %v649 = vadd.f32 %v389, %v535
  %v650 = vadd.f32 %v390, %v535
  %v651 = vadd.f32 %v391, %v535
  %v652 = vadd.f32 %v392, %v535
  %v653 = vadd.f32 %v393, %v535
  %v654 = vadd.f32 %v394, %v535
  %v655 = vadd.f32 %v395, %v535
  %v656 = vadd.f32 %v396, %v535
  %v657 = vadd.f32 %v397, %v535
  %v658 = vadd.f32 %v398, %v535
  %v659 = vadd.f32 %v399, %v535
  %v660 = vadd.f32 %v400, %v535
  %v661 = vadd.f32 %v401, %v535
  %v662 = vadd.f32 %v402, %v535
  %v663 = vadd.f32 %v403, %v535
  %v664 = vadd.f32 %v404, %v535
  %v665 = vadd.f32 %v405, %v535
  %v666 = vadd.f32 %v406, %v535
  %v667 = vadd.f32 %v407, %v535
  %v668 = vadd.f32 %v408, %v535
  %v669 = vadd.f32 %v409, %v535
  %v670 = vadd.f32 %v410, %v535
  %v671 = vadd.f32 %v411, %v535
  %v672 = vadd.f32 %v412, %v535
  %v673 = vadd.f32 %v413, %v535
  %v674 = vadd.f32 %v414, %v535
  %v675 = vadd.f32 %v415, %v535
  %v676 = vadd.f32 %v416, %v535
  %v677 = vadd.f32 %v417, %v535
  %v678 = vadd.f32 %v418, %v535
  %v679 = vadd.f32 %v419, %v535
  %v680 = vadd.f32 %v420, %v535
  %v681 = vadd.f32 %v421, %v535
  %v682 = vadd.f32 %v422, %v535
  %v683 = vadd.f32 %v423, %v535
  %v684 = vadd.f32 %v424, %v535
  %v685 = vadd.f32 %v425, %v535
  %v686 = vadd.f32 %v426, %v535
  %v687 = vadd.f32 %v427, %v535
  %v688 = vadd.f32 %v428, %v535
  %v689 = vadd.f32 %v429, %v535
  %v690 = vadd.f32 %v430, %v535
  %v691 = vadd.f32 %v431, %v535
  %v692 = vadd.f32 %v432, %v535
  %v693 = vadd.f32 %v433, %v535
  %v694 = vadd.f32 %v434, %v535
  %v695 = vadd.f32 %v435, %v535
  %v696 = vadd.f32 %v436, %v535
  %v697 = vadd.f32 %v437, %v535
  %v698 = vadd.f32 %v438, %v535
  %v699 = vadd.f32 %v439, %v535
  %v700 = vadd.f32 %v440, %v535
  %v701 = vadd.f32 %v441, %v535
  %v702 = vadd.f32 %v442, %v535
  %v703 = vadd.f32 %v443, %v535
  %v704 = vadd.f32 %v444, %v535
  %v705 = vadd.f32 %v445, %v535
  %v706 = vadd.f32 %v446, %v535
  %v707 = vadd.f32 %v447, %v535
  %v708 = vadd.f32 %v448, %v535
  %v709 = vadd.f32 %v449, %v535
  %v710 = vadd.f32 %v450, %v535
  %v711 = vadd.f32 %v451, %v535
  %v712 = vadd.f32 %v452, %v535
  %v713 = vadd.f32 %v453, %v535
  %v714 = vadd.f32 %v454, %v535
  %v715 = vadd.f32 %v455, %v535
  %v716 = vadd.f32 %v456, %v535
  %v717 = vadd.f32 %v457, %v535
  %v718 = vadd.f32 %v458, %v535
  %v719 = vadd.f32 %v459, %v535
  %v720 = vadd.f32 %v460, %v535
  %v721 = vadd.f32 %v461, %v535
  %v722 = vadd.f32 %v462, %v535
  %v723 = vadd.f32 %v463, %v535
  %v724 = vadd.f32 %v464, %v535
  %v725 = vadd.f32 %v465, %v535
  %v726 = vadd.f32 %v466, %v535
  %v727 = vadd.f32 %v467, %v535
  %v728 = vadd.f32 %v468, %v535
  %v729 = vadd.f32 %v469, %v535
  %v730 = vadd.f32 %v470, %v535
  %v731 = vadd.f32 %v471, %v535
  %v732 = vadd.f32 %v472, %v535
  %v733 = vadd.f32 %v473, %v535
  %v734 = vadd.f32 %v474, %v535
  %v735 = vadd.f32 %v475, %v535
  %v736 = vadd.f32 %v476, %v535
  %v737 = vadd.f32 %v477, %v535
  %v738 = vadd.f32 %v478, %v535
  %v739 = vadd.f32 %v479, %v535
  %v740 = vadd.f32 %v480, %v535
  %v741 = vadd.f32 %v481, %v535
  %v742 = vadd.f32 %v482, %v535
  %v743 = vadd.f32 %v483, %v535
  %v744 = vadd.f32 %v484, %v535
  %v745 = vadd.f32 %v485, %v535
  %v746 = vadd.f32 %v486, %v535
  %v747 = vadd.f32 %v487, %v535
  %v748 = vadd.f32 %v488, %v535
  %v749 = vadd.f32 %v489, %v535
  %v750 = vadd.f32 %v490, %v535
  %v751 = vadd.f32 %v491, %v535
  %v752 = vadd.f32 %v492, %v535
  %v753 = vadd.f32 %v493, %v535
  %v754 = vadd.f32 %v494, %v535
  %v755 = vadd.f32 %v495, %v535
  %v756 = vadd.f32 %v496, %v535
  %v757 = vadd.f32 %v497, %v535
  %v758 = vadd.f32 %v498, %v535
  %v759 = vadd.f32 %v499, %v535
  %v760 = vadd.f32 %v500, %v535
  %v761 = vadd.f32 %v501, %v535
  %v762 = vadd.f32 %v502, %v535
  %v763 = vadd.f32 %v503, %v535
  %v764 = vadd.f32 %v504, %v535
  %v765 = vadd.f32 %v505, %v535
  %v766 = vadd.f32 %v506, %v535
  %v767 = vadd.f32 %v507, %v535
  %v768 = vadd.f32 %v508, %v535
  %v769 = vadd.f32 %v509, %v535
  %v770 = vadd.f32 %v510, %v535
  %v771 = vadd.f32 %v511, %v535
  %v772 = vadd.f32 %v512, %v535
  %v773 = vadd.f32 %v513, %v535
  %v774 = vadd.f32 %v514, %v535
  %v775 = vadd.f32 %v515, %v535
  %v776 = vadd.f32 %v516, %v535
  %v777 = vadd.f32 %v517, %v535
  %v778 = vadd.f32 %v518, %v535
  %v779 = vadd.f32 %v519, %v535
  %v780 = vadd.f32 %v520, %v535
  %v781 = vadd.f32 %v521, %v535
  %v782 = vadd.f32 %v522, %v535
  %v783 = vadd.f32 %v523, %v535
  %v784 = vadd.f32 %v524, %v535
  %v785 = vadd.f32 %v525, %v535
  %v786 = vadd.f32 %v526, %v535
  %v787 = vadd.f32 %v527, %v535
  %v788 = vadd.f32 %v528, %v535
  %v789 = vadd.f32 %v529, %v535
  %v790 = vadd.f32 %v530, %v535
  %v791 = vadd.f32 %v531, %v535
  %v792 = vmax.f32 %v536, 0.0
  %v793 = vmax.f32 %v537, 0.0
  %v794 = vmax.f32 %v538, 0.0
  %v795 = vmax.f32 %v539, 0.0
  %v796 = vmax.f32 %v540, 0.0
  %v797 = vmax.f32 %v541, 0.0
  %v798 = vmax.f32 %v542, 0.0
  %v799 = vmax.f32 %v543, 0.0
  %v800 = vmax.f32 %v544, 0.0
  %v801 = vmax.f32 %v545, 0.0
  %v802 = vmax.f32 %v546, 0.0
  %v803 = vmax.f32 %v547, 0.0
  %v804 = vmax.f32 %v548, 0.0
  %v805 = vmax.f32 %v549, 0.0
  %v806 = vmax.f32 %v550, 0.0
  %v807 = vmax.f32 %v551, 0.0
  %v808 = vmax.f32 %v552, 0.0
  %v809 = vmax.f32 %v553, 0.0
  %v810 = vmax.f32 %v554, 0.0
  %v811 = vmax.f32 %v555, 0.0
  %v812 = vmax.f32 %v556, 0.0
  %v813 = vmax.f32 %v557, 0.0
  %v814 = vmax.f32 %v558, 0.0
  %v815 = vmax.f32 %v559, 0.0
  %v816 = vmax.f32 %v560, 0.0
  %v817 = vmax.f32 %v561, 0.0
  %v818 = vmax.f32 %v562, 0.0
  %v819 = vmax.f32 %v563, 0.0
  %v820 = vmax.f32 %v564, 0.0
  %v821 = vmax.f32 %v565, 0.0
  %v822 = vmax.f32 %v566, 0.0
  %v823 = vmax.f32 %v567, 0.0
  %v824 = vmax.f32 %v568, 0.0
  %v825 = vmax.f32 %v569, 0.0
  %v826 = vmax.f32 %v570, 0.0
  %v827 = vmax.f32 %v571, 0.0
  %v828 = vmax.f32 %v572, 0.0
  %v829 = vmax.f32 %v573, 0.0
  %v830 = vmax.f32 %v574, 0.0
  %v831 = vmax.f32 %v575, 0.0
  %v832 = vmax.f32 %v576, 0.0
  %v833 = vmax.f32 %v577, 0.0
  %v834 = vmax.f32 %v578, 0.0
  %v835 = vmax.f32 %v579, 0.0
  %v836 = vmax.f32 %v580, 0.0
  %v837 = vmax.f32 %v581, 0.0
  %v838 = vmax.f32 %v582, 0.0
  %v839 = vmax.f32 %v583, 0.0
  %v840 = vmax.f32 %v584, 0.0
  %v841 = vmax.f32 %v585, 0.0
  %v842 = vmax.f32 %v586, 0.0
  %v843 = vmax.f32 %v587, 0.0
  %v844 = vmax.f32 %v588, 0.0
  %v845 = vmax.f32 %v589, 0.0
  %v846 = vmax.f32 %v590, 0.0
  %v847 = vmax.f32 %v591, 0.0
  %v848 = vmax.f32 %v592, 0.0
  %v849 = vmax.f32 %v593, 0.0
  %v850 = vmax.f32 %v594, 0.0
  %v851 = vmax.f32 %v595, 0.0
  %v852 = vmax.f32 %v596, 0.0
  %v853 = vmax.f32 %v597, 0.0
  %v854 = vmax.f32 %v598, 0.0
  %v855 = vmax.f32 %v599, 0.0
  %v856 = vmax.f32 %v600, 0.0
  %v857 = vmax.f32 %v601, 0.0
  %v858 = vmax.f32 %v602, 0.0
  %v859 = vmax.f32 %v603, 0.0
  %v860 = vmax.f32 %v604, 0.0
  %v861 = vmax.f32 %v605, 0.0
  %v862 = vmax.f32 %v606, 0.0
  %v863 = vmax.f32 %v607, 0.0
  %v864 = vmax.f32 %v608, 0.0
  %v865 = vmax.f32 %v609, 0.0
  %v866 = vmax.f32 %v610, 0.0
  %v867 = vmax.f32 %v611, 0.0
  %v868 = vmax.f32 %v612, 0.0
  %v869 = vmax.f32 %v613, 0.0
  %v870 = vmax.f32 %v614, 0.0
  %v871 = vmax.f32 %v615, 0.0
  %v872 = vmax.f32 %v616, 0.0
  %v873 = vmax.f32 %v617, 0.0
  %v874 = vmax.f32 %v618, 0.0
  %v875 = vmax.f32 %v619, 0.0
  %v876 = vmax.f32 %v620, 0.0
  %v877 = vmax.f32 %v621, 0.0
  %v878 = vmax.f32 %v622, 0.0
  %v879 = vmax.f32 %v623, 0.0
  %v880 = vmax.f32 %v624, 0.0
  %v881 = vmax.f32 %v625, 0.0
  %v882 = vmax.f32 %v626, 0.0
  %v883 = vmax.f32 %v627, 0.0
  %v884 = vmax.f32 %v628, 0.0
  %v885 = vmax.f32 %v629, 0.0
  %v886 = vmax.f32 %v630, 0.0
  %v887 = vmax.f32 %v631, 0.0
  %v888 = vmax.f32 %v632, 0.0
  %v889 = vmax.f32 %v633, 0.0
  %v890 = vmax.f32 %v634, 0.0
  %v891 = vmax.f32 %v635, 0.0
  %v892 = vmax.f32 %v636, 0.0
  %v893 = vmax.f32 %v637, 0.0
  %v894 = vmax.f32 %v638, 0.0
  %v895 = vmax.f32 %v639, 0.0
  %v896 = vmax.f32 %v640, 0.0
  %v897 = vmax.f32 %v641, 0.0
  %v898 = vmax.f32 %v642, 0.0
  %v899 = vmax.f32 %v643, 0.0
  %v900 = vmax.f32 %v644, 0.0
  %v901 = vmax.f32 %v645, 0.0
  %v902 = vmax.f32 %v646, 0.0
  %v903 = vmax.f32 %v647, 0.0
  %v904 = vmax.f32 %v648, 0.0
  %v905 = vmax.f32 %v649, 0.0
  %v906 = vmax.f32 %v650, 0.0
  %v907 = vmax.f32 %v651, 0.0
  %v908 = vmax.f32 %v652, 0.0
  %v909 = vmax.f32 %v653, 0.0
  %v910 = vmax.f32 %v654, 0.0
  %v911 = vmax.f32 %v655, 0.0
  %v912 = vmax.f32 %v656, 0.0
  %v913 = vmax.f32 %v657, 0.0
  %v914 = vmax.f32 %v658, 0.0
  %v915 = vmax.f32 %v659, 0.0
  %v916 = vmax.f32 %v660, 0.0
  %v917 = vmax.f32 %v661, 0.0
  %v918 = vmax.f32 %v662, 0.0
  %v919 = vmax.f32 %v663, 0.0
  %v920 = vmax.f32 %v664, 0.0
  %v921 = vmax.f32 %v665, 0.0
  %v922 = vmax.f32 %v666, 0.0
  %v923 = vmax.f32 %v667, 0.0
  %v924 = vmax.f32 %v668, 0.0
  %v925 = vmax.f32 %v669, 0.0
  %v926 = vmax.f32 %v670, 0.0
  %v927 = vmax.f32 %v671, 0.0
  %v928 = vmax.f32 %v672, 0.0
  %v929 = vmax.f32 %v673, 0.0
  %v930 = vmax.f32 %v674, 0.0
  %v931 = vmax.f32 %v675, 0.0
  %v932 = vmax.f32 %v676, 0.0
  %v933 = vmax.f32 %v677, 0.0
  %v934 = vmax.f32 %v678, 0.0
  %v935 = vmax.f32 %v679, 0.0
  %v936 = vmax.f32 %v680, 0.0
  %v937 = vmax.f32 %v681, 0.0
  %v938 = vmax.f32 %v682, 0.0
  %v939 = vmax.f32 %v683, 0.0
  %v940 = vmax.f32 %v684, 0.0
  %v941 = vmax.f32 %v685, 0.0
  %v942 = vmax.f32 %v686, 0.0
  %v943 = vmax.f32 %v687, 0.0
  %v944 = vmax.f32 %v688, 0.0
  %v945 = vmax.f32 %v689, 0.0
  %v946 = vmax.f32 %v690, 0.0
  %v947 = vmax.f32 %v691, 0.0
  %v948 = vmax.f32 %v692, 0.0
  %v949 = vmax.f32 %v693, 0.0
  %v950 = vmax.f32 %v694, 0.0
  %v951 = vmax.f32 %v695, 0.0
  %v952 = vmax.f32 %v696, 0.0
  %v953 = vmax.f32 %v697, 0.0
  %v954 = vmax.f32 %v698, 0.0
  %v955 = vmax.f32 %v699, 0.0
  %v956 = vmax.f32 %v700, 0.0
  %v957 = vmax.f32 %v701, 0.0
  %v958 = vmax.f32 %v702, 0.0
  %v959 = vmax.f32 %v703, 0.0
  %v960 = vmax.f32 %v704, 0.0
  %v961 = vmax.f32 %v705, 0.0
  %v962 = vmax.f32 %v706, 0.0
  %v963 = vmax.f32 %v707, 0.0
  %v964 = vmax.f32 %v708, 0.0
  %v965 = vmax.f32 %v709, 0.0
  %v966 = vmax.f32 %v710, 0.0
  %v967 = vmax.f32 %v711, 0.0
  %v968 = vmax.f32 %v712, 0.0
  %v969 = vmax.f32 %v713, 0.0
  %v970 = vmax.f32 %v714, 0.0
  %v971 = vmax.f32 %v715, 0.0
  %v972 = vmax.f32 %v716, 0.0
  %v973 = vmax.f32 %v717, 0.0
  %v974 = vmax.f32 %v718, 0.0
  %v975 = vmax.f32 %v719, 0.0
  %v976 = vmax.f32 %v720, 0.0
  %v977 = vmax.f32 %v721, 0.0
  %v978 = vmax.f32 %v722, 0.0
  %v979 = vmax.f32 %v723, 0.0
  %v980 = vmax.f32 %v724, 0.0
  %v981 = vmax.f32 %v725, 0.0
  %v982 = vmax.f32 %v726, 0.0
  %v983 = vmax.f32 %v727, 0.0
  %v984 = vmax.f32 %v728, 0.0
  %v985 = vmax.f32 %v729, 0.0
  %v986 = vmax.f32 %v730, 0.0
  %v987 = vmax.f32 %v731, 0.0
  %v988 = vmax.f32 %v732, 0.0
  %v989 = vmax.f32 %v733, 0.0
  %v990 = vmax.f32 %v734, 0.0
  %v991 = vmax.f32 %v735, 0.0
  %v992 = vmax.f32 %v736, 0.0
  %v993 = vmax.f32 %v737, 0.0
  %v994 = vmax.f32 %v738, 0.0
  %v995 = vmax.f32 %v739, 0.0
  %v996 = vmax.f32 %v740, 0.0
  %v997 = vmax.f32 %v741, 0.0
  %v998 = vmax.f32 %v742, 0.0
  %v999 = vmax.f32 %v743, 0.0
  %v1000 = vmax.f32 %v744, 0.0
  %v1001 = vmax.f32 %v745, 0.0
  %v1002 = vmax.f32 %v746, 0.0
  %v1003 = vmax.f32 %v747, 0.0
  %v1004 = vmax.f32 %v748, 0.0
  %v1005 = vmax.f32 %v749, 0.0
  %v1006 = vmax.f32 %v750, 0.0
  %v1007 = vmax.f32 %v751, 0.0
  %v1008 = vmax.f32 %v752, 0.0
  %v1009 = vmax.f32 %v753, 0.0
  %v1010 = vmax.f32 %v754, 0.0
  %v1011 = vmax.f32 %v755, 0.0
  %v1012 = vmax.f32 %v756, 0.0
  %v1013 = vmax.f32 %v757, 0.0
  %v1014 = vmax.f32 %v758, 0.0
  %v1015 = vmax.f32 %v759, 0.0
  %v1016 = vmax.f32 %v760, 0.0
  %v1017 = vmax.f32 %v761, 0.0
  %v1018 = vmax.f32 %v762, 0.0
  %v1019 = vmax.f32 %v763, 0.0
  %v1020 = vmax.f32 %v764, 0.0
  %v1021 = vmax.f32 %v765, 0.0
  %v1022 = vmax.f32 %v766, 0.0
  %v1023 = vmax.f32 %v767, 0.0
  %v1024 = vmax.f32 %v768, 0.0
  %v1025 = vmax.f32 %v769, 0.0
  %v1026 = vmax.f32 %v770, 0.0
  %v1027 = vmax.f32 %v771, 0.0
  %v1028 = vmax.f32 %v772, 0.0
  %v1029 = vmax.f32 %v773, 0.0
  %v1030 = vmax.f32 %v774, 0.0
  %v1031 = vmax.f32 %v775, 0.0
  %v1032 = vmax.f32 %v776, 0.0
  %v1033 = vmax.f32 %v777, 0.0
  %v1034 = vmax.f32 %v778, 0.0
  %v1035 = vmax.f32 %v779, 0.0
  %v1036 = vmax.f32 %v780, 0.0
  %v1037 = vmax.f32 %v781, 0.0
  %v1038 = vmax.f32 %v782, 0.0
  %v1039 = vmax.f32 %v783, 0.0
  %v1040 = vmax.f32 %v784, 0.0
  %v1041 = vmax.f32 %v785, 0.0
  %v1042 = vmax.f32 %v786, 0.0
  %v1043 = vmax.f32 %v787, 0.0
  %v1044 = vmax.f32 %v788, 0.0
  %v1045 = vmax.f32 %v789, 0.0
  %v1046 = vmax.f32 %v790, 0.0
  %v1047 = vmax.f32 %v791, 0.0
  %v1048 = vpack.c.bf16 %v793, %v792
  %v1049 = vpack.c.bf16 %v795, %v794
  %v1050 = vpack.c.bf16 %v797, %v796
  %v1051 = vpack.c.bf16 %v799, %v798
  %v1052 = vpack.c.bf16 %v801, %v800
  %v1053 = vpack.c.bf16 %v803, %v802
  %v1054 = vpack.c.bf16 %v805, %v804
  %v1055 = vpack.c.bf16 %v807, %v806
  %v1056 = vpack.c.bf16 %v809, %v808
  %v1057 = vpack.c.bf16 %v811, %v810
  %v1058 = vpack.c.bf16 %v813, %v812
  %v1059 = vpack.c.bf16 %v815, %v814
  %v1060 = vpack.c.bf16 %v817, %v816
  %v1061 = vpack.c.bf16 %v819, %v818
  %v1062 = vpack.c.bf16 %v821, %v820
  %v1063 = vpack.c.bf16 %v823, %v822
  %v1064 = vpack.c.bf16 %v825, %v824
  %v1065 = vpack.c.bf16 %v827, %v826
  %v1066 = vpack.c.bf16 %v829, %v828
  %v1067 = vpack.c.bf16 %v831, %v830
  %v1068 = vpack.c.bf16 %v833, %v832
  %v1069 = vpack.c.bf16 %v835, %v834
  %v1070 = vpack.c.bf16 %v837, %v836
  %v1071 = vpack.c.bf16 %v839, %v838
  %v1072 = vpack.c.bf16 %v841, %v840
  %v1073 = vpack.c.bf16 %v843, %v842
  %v1074 = vpack.c.bf16 %v845, %v844
  %v1075 = vpack.c.bf16 %v847, %v846
  %v1076 = vpack.c.bf16 %v849, %v848
  %v1077 = vpack.c.bf16 %v851, %v850
  %v1078 = vpack.c.bf16 %v853, %v852
  %v1079 = vpack.c.bf16 %v855, %v854
  %v1080 = vpack.c.bf16 %v857, %v856
  %v1081 = vpack.c.bf16 %v859, %v858
  %v1082 = vpack.c.bf16 %v861, %v860
  %v1083 = vpack.c.bf16 %v863, %v862
  %v1084 = vpack.c.bf16 %v865, %v864
  %v1085 = vpack.c.bf16 %v867, %v866
  %v1086 = vpack.c.bf16 %v869, %v868
  %v1087 = vpack.c.bf16 %v871, %v870
  %v1088 = vpack.c.bf16 %v873, %v872
  %v1089 = vpack.c.bf16 %v875, %v874
  %v1090 = vpack.c.bf16 %v877, %v876
  %v1091 = vpack.c.bf16 %v879, %v878
  %v1092 = vpack.c.bf16 %v881, %v880
  %v1093 = vpack.c.bf16 %v883, %v882
  %v1094 = vpack.c.bf16 %v885, %v884
  %v1095 = vpack.c.bf16 %v887, %v886
  %v1096 = vpack.c.bf16 %v889, %v888
  %v1097 = vpack.c.bf16 %v891, %v890
  %v1098 = vpack.c.bf16 %v893, %v892
  %v1099 = vpack.c.bf16 %v895, %v894
  %v1100 = vpack.c.bf16 %v897, %v896
  %v1101 = vpack.c.bf16 %v899, %v898
  %v1102 = vpack.c.bf16 %v901, %v900
  %v1103 = vpack.c.bf16 %v903, %v902
  %v1104 = vpack.c.bf16 %v905, %v904
  %v1105 = vpack.c.bf16 %v907, %v906
  %v1106 = vpack.c.bf16 %v909, %v908
  %v1107 = vpack.c.bf16 %v911, %v910
  %v1108 = vpack.c.bf16 %v913, %v912
  %v1109 = vpack.c.bf16 %v915, %v914
  %v1110 = vpack.c.bf16 %v917, %v916
  %v1111 = vpack.c.bf16 %v919, %v918
  %v1112 = vpack.c.bf16 %v921, %v920
  %v1113 = vpack.c.bf16 %v923, %v922
  %v1114 = vpack.c.bf16 %v925, %v924
  %v1115 = vpack.c.bf16 %v927, %v926
  %v1116 = vpack.c.bf16 %v929, %v928
  %v1117 = vpack.c.bf16 %v931, %v930
  %v1118 = vpack.c.bf16 %v933, %v932
  %v1119 = vpack.c.bf16 %v935, %v934
  %v1120 = vpack.c.bf16 %v937, %v936
  %v1121 = vpack.c.bf16 %v939, %v938
  %v1122 = vpack.c.bf16 %v941, %v940
  %v1123 = vpack.c.bf16 %v943, %v942
  %v1124 = vpack.c.bf16 %v945, %v944
  %v1125 = vpack.c.bf16 %v947, %v946
  %v1126 = vpack.c.bf16 %v949, %v948
  %v1127 = vpack.c.bf16 %v951, %v950
  %v1128 = vpack.c.bf16 %v953, %v952
  %v1129 = vpack.c.bf16 %v955, %v954
  %v1130 = vpack.c.bf16 %v957, %v956
  %v1131 = vpack.c.bf16 %v959, %v958
  %v1132 = vpack.c.bf16 %v961, %v960
  %v1133 = vpack.c.bf16 %v963, %v962
  %v1134 = vpack.c.bf16 %v965, %v964
  %v1135 = vpack.c.bf16 %v967, %v966
  %v1136 = vpack.c.bf16 %v969, %v968
  %v1137 = vpack.c.bf16 %v971, %v970
  %v1138 = vpack.c.bf16 %v973, %v972
  %v1139 = vpack.c.bf16 %v975, %v974
  %v1140 = vpack.c.bf16 %v977, %v976
  %v1141 = vpack.c.bf16 %v979, %v978
  %v1142 = vpack.c.bf16 %v981, %v980
  %v1143 = vpack.c.bf16 %v983, %v982
  %v1144 = vpack.c.bf16 %v985, %v984
  %v1145 = vpack.c.bf16 %v987, %v986
  %v1146 = vpack.c.bf16 %v989, %v988
  %v1147 = vpack.c.bf16 %v991, %v990
  %v1148 = vpack.c.bf16 %v993, %v992
  %v1149 = vpack.c.bf16 %v995, %v994
  %v1150 = vpack.c.bf16 %v997, %v996
  %v1151 = vpack.c.bf16 %v999, %v998
  %v1152 = vpack.c.bf16 %v1001, %v1000
  %v1153 = vpack.c.bf16 %v1003, %v1002
  %v1154 = vpack.c.bf16 %v1005, %v1004
  %v1155 = vpack.c.bf16 %v1007, %v1006
  %v1156 = vpack.c.bf16 %v1009, %v1008
  %v1157 = vpack.c.bf16 %v1011, %v1010
  %v1158 = vpack.c.bf16 %v1013, %v1012
  %v1159 = vpack.c.bf16 %v1015, %v1014
  %v1160 = vpack.c.bf16 %v1017, %v1016
  %v1161 = vpack.c.bf16 %v1019, %v1018
  %v1162 = vpack.c.bf16 %v1021, %v1020
  %v1163 = vpack.c.bf16 %v1023, %v1022
  %v1164 = vpack.c.bf16 %v1025, %v1024
  %v1165 = vpack.c.bf16 %v1027, %v1026
  %v1166 = vpack.c.bf16 %v1029, %v1028
  %v1167 = vpack.c.bf16 %v1031, %v1030
  %v1168 = vpack.c.bf16 %v1033, %v1032
  %v1169 = vpack.c.bf16 %v1035, %v1034
  %v1170 = vpack.c.bf16 %v1037, %v1036
  %v1171 = vpack.c.bf16 %v1039, %v1038
  %v1172 = vpack.c.bf16 %v1041, %v1040
  %v1173 = vpack.c.bf16 %v1043, %v1042
  %v1174 = vpack.c.bf16 %v1045, %v1044
  %v1175 = vpack.c.bf16 %v1047, %v1046
  %v1176 = vld [vmem:[%s2] sm:$0xf]
  %v1177 = vld [vmem:[%s2 + $0x4] sm:$0xf]
  %v1180 = vunpack.c.l.b16 %v1176
  %v1181 = vunpack.c.l.b16 %v1177
  %v1182 = vpack.c.b16 %v1181, %v1180
  %vm1184 = vcmask 130048
  %v1186 = vsel %vm1184, %v1048, 0
  %v1189 = vsel %vm1184, %v1049, 0
  %v1192 = vsel %vm1184, %v1050, 0
  %v1195 = vsel %vm1184, %v1051, 0
  %v1198 = vsel %vm1184, %v1052, 0
  %v1201 = vsel %vm1184, %v1053, 0
  %v1204 = vsel %vm1184, %v1054, 0
  %v1207 = vsel %vm1184, %v1055, 0
  %v1210 = vsel %vm1184, %v1056, 0
  %v1213 = vsel %vm1184, %v1057, 0
  %v1216 = vsel %vm1184, %v1058, 0
  %v1219 = vsel %vm1184, %v1059, 0
  %v1222 = vsel %vm1184, %v1060, 0
  %v1225 = vsel %vm1184, %v1061, 0
  %v1228 = vsel %vm1184, %v1062, 0
  %v1231 = vsel %vm1184, %v1063, 0
  %v1234 = vsel %vm1184, %v1064, 0
  %v1237 = vsel %vm1184, %v1065, 0
  %v1240 = vsel %vm1184, %v1066, 0
  %v1243 = vsel %vm1184, %v1067, 0
  %v1246 = vsel %vm1184, %v1068, 0
  %v1249 = vsel %vm1184, %v1069, 0
  %v1252 = vsel %vm1184, %v1070, 0
  %v1255 = vsel %vm1184, %v1071, 0
  %v1258 = vsel %vm1184, %v1072, 0
  %v1261 = vsel %vm1184, %v1073, 0
  %v1264 = vsel %vm1184, %v1074, 0
  %v1267 = vsel %vm1184, %v1075, 0
  %v1270 = vsel %vm1184, %v1076, 0
  %v1273 = vsel %vm1184, %v1077, 0
  %v1276 = vsel %vm1184, %v1078, 0
  %v1279 = vsel %vm1184, %v1079, 0
  %v1282 = vsel %vm1184, %v1080, 0
  %v1285 = vsel %vm1184, %v1081, 0
  %v1288 = vsel %vm1184, %v1082, 0
  %v1291 = vsel %vm1184, %v1083, 0
  %v1294 = vsel %vm1184, %v1084, 0
  %v1297 = vsel %vm1184, %v1085, 0
  %v1300 = vsel %vm1184, %v1086, 0
  %v1303 = vsel %vm1184, %v1087, 0
  %v1306 = vsel %vm1184, %v1088, 0
  %v1309 = vsel %vm1184, %v1089, 0
  %v1312 = vsel %vm1184, %v1090, 0
  %v1315 = vsel %vm1184, %v1091, 0
  %v1318 = vsel %vm1184, %v1092, 0
  %v1321 = vsel %vm1184, %v1093, 0
  %v1324 = vsel %vm1184, %v1094, 0
  %v1327 = vsel %vm1184, %v1095, 0
  %v1330 = vsel %vm1184, %v1096, 0
  %v1333 = vsel %vm1184, %v1097, 0
  %v1336 = vsel %vm1184, %v1098, 0
  %v1339 = vsel %vm1184, %v1099, 0
  %v1342 = vsel %vm1184, %v1100, 0
  %v1345 = vsel %vm1184, %v1101, 0
  %v1348 = vsel %vm1184, %v1102, 0
  %v1351 = vsel %vm1184, %v1103, 0
  %v1354 = vsel %vm1184, %v1104, 0
  %v1357 = vsel %vm1184, %v1105, 0
  %v1360 = vsel %vm1184, %v1106, 0
  %v1363 = vsel %vm1184, %v1107, 0
  %v1366 = vsel %vm1184, %v1108, 0
  %v1369 = vsel %vm1184, %v1109, 0
  %v1372 = vsel %vm1184, %v1110, 0
  %v1375 = vsel %vm1184, %v1111, 0
  %v1378 = vsel %vm1184, %v1112, 0
  %v1381 = vsel %vm1184, %v1113, 0
  %v1384 = vsel %vm1184, %v1114, 0
  %v1387 = vsel %vm1184, %v1115, 0
  %v1390 = vsel %vm1184, %v1116, 0
  %v1393 = vsel %vm1184, %v1117, 0
  %v1396 = vsel %vm1184, %v1118, 0
  %v1399 = vsel %vm1184, %v1119, 0
  %v1402 = vsel %vm1184, %v1120, 0
  %v1405 = vsel %vm1184, %v1121, 0
  %v1408 = vsel %vm1184, %v1122, 0
  %v1411 = vsel %vm1184, %v1123, 0
  %v1414 = vsel %vm1184, %v1124, 0
  %v1417 = vsel %vm1184, %v1125, 0
  %v1420 = vsel %vm1184, %v1126, 0
  %v1423 = vsel %vm1184, %v1127, 0
  %v1426 = vsel %vm1184, %v1128, 0
  %v1429 = vsel %vm1184, %v1129, 0
  %v1432 = vsel %vm1184, %v1130, 0
  %v1435 = vsel %vm1184, %v1131, 0
  %v1438 = vsel %vm1184, %v1132, 0
  %v1441 = vsel %vm1184, %v1133, 0
  %v1444 = vsel %vm1184, %v1134, 0
  %v1447 = vsel %vm1184, %v1135, 0
  %v1450 = vsel %vm1184, %v1136, 0
  %v1453 = vsel %vm1184, %v1137, 0
  %v1456 = vsel %vm1184, %v1138, 0
  %v1459 = vsel %vm1184, %v1139, 0
  %v1462 = vsel %vm1184, %v1140, 0
  %v1465 = vsel %vm1184, %v1141, 0
  %v1468 = vsel %vm1184, %v1142, 0
  %v1471 = vsel %vm1184, %v1143, 0
  %v1474 = vsel %vm1184, %v1144, 0
  %v1477 = vsel %vm1184, %v1145, 0
  %v1480 = vsel %vm1184, %v1146, 0
  %v1483 = vsel %vm1184, %v1147, 0
  %v1486 = vsel %vm1184, %v1148, 0
  %v1489 = vsel %vm1184, %v1149, 0
  %v1492 = vsel %vm1184, %v1150, 0
  %v1495 = vsel %vm1184, %v1151, 0
  %v1498 = vsel %vm1184, %v1152, 0
  %v1501 = vsel %vm1184, %v1153, 0
  %v1504 = vsel %vm1184, %v1154, 0
  %v1507 = vsel %vm1184, %v1155, 0
  %v1510 = vsel %vm1184, %v1156, 0
  %v1513 = vsel %vm1184, %v1157, 0
  %v1516 = vsel %vm1184, %v1158, 0
  %v1519 = vsel %vm1184, %v1159, 0
  %v1522 = vsel %vm1184, %v1160, 0
  %v1525 = vsel %vm1184, %v1161, 0
  %v1528 = vsel %vm1184, %v1162, 0
  %v1531 = vsel %vm1184, %v1163, 0
  %v1534 = vsel %vm1184, %v1164, 0
  %v1537 = vsel %vm1184, %v1165, 0
  %v1540 = vsel %vm1184, %v1166, 0
  %v1543 = vsel %vm1184, %v1167, 0
  %v1546 = vsel %vm1184, %v1168, 0
  %v1549 = vsel %vm1184, %v1169, 0
  %v1552 = vsel %vm1184, %v1170, 0
  %v1555 = vsel %vm1184, %v1171, 0
  %v1558 = vsel %vm1184, %v1172, 0
  %v1561 = vsel %vm1184, %v1173, 0
  %v1564 = vsel %vm1184, %v1174, 0
  %v1567 = vsel %vm1184, %v1175, 0
  %1569 = vmatprep.subr.bf16.mxu0 0
  %1570 = vmatpush1.bf16.msra.mxu0 %v1182
  %1571 = vmatprep.subr.bf16.mxu0 0
  %1572 = vmatpush1.bf16.msra.mxu0 0
  %1573 = vmatprep.subr.bf16.mxu0 0
  %1574 = vmatpush1.bf16.msra.mxu0 0
  %1575 = vmatprep.subr.bf16.mxu0 0
  %1576 = vmatpush1.bf16.msra.mxu0 0
  %1577 = vmatprep.subr.bf16.mxu0 0
  %1578 = vmatpush1.bf16.msra.mxu0 0
  %1579 = vmatprep.subr.bf16.mxu0 0
  %1580 = vmatpush1.bf16.msra.mxu0 0
  %1581 = vmatprep.subr.bf16.mxu0 0
  %1582 = vmatpush1.bf16.msra.mxu0 0
  %1583 = vmatprep.subr.bf16.mxu0 0
  %1584 = vmatpush1.bf16.msra.mxu0 0
  %1585 = vmatprep.subr.bf16.mxu0 0
  %1586 = vmatpush1.bf16.msra.mxu0 0
  %1587 = vmatprep.subr.bf16.mxu0 0
  %1588 = vmatpush1.bf16.msra.mxu0 0
  %1589 = vmatprep.subr.bf16.mxu0 0
  %1590 = vmatpush1.bf16.msra.mxu0 0
  %1591 = vmatprep.subr.bf16.mxu0 0
  %1592 = vmatpush1.bf16.msra.mxu0 0
  %1593 = vmatprep.subr.bf16.mxu0 0
  %1594 = vmatpush1.bf16.msra.mxu0 0
  %1595 = vmatprep.subr.bf16.mxu0 0
  %1596 = vmatpush1.bf16.msra.mxu0 0
  %1597 = vmatprep.subr.bf16.mxu0 0
  %1598 = vmatpush1.bf16.msra.mxu0 0
  %1599 = vmatprep.subr.bf16.mxu0 0
  %1600 = vmatpush1.bf16.msra.mxu0 0
  %1601 = vmatprep.mubr.bf16.mxu0 0
  %1602 = vmatmul.mubr.bf16.gmra.mrb[0].mxu0 %v1186
  %v1603 = vpop.f32.mrb[0].mxu0
  %v1604 = vadd.f32 0.0, %v1603
  %v1605 = vpop.f32.mrb[0].mxu0
  %v1606 = vpop.f32.mrb[0].mxu0
  %v1607 = vadd.f32 0.0, %v1606
  %v1608 = vpop.f32.mrb[0].mxu0
  %1609 = vmatprep.mubr.bf16.mxu0 0
  %1610 = vmatmul.mubr.bf16.gmra.mrb[0].mxu0 %v1189
  %v1611 = vpop.f32.mrb[0].mxu0
  %v1612 = vadd.f32 0.0, %v1611
  %v1613 = vpop.f32.mrb[0].mxu0
  %v1614 = vpop.f32.mrb[0].mxu0
  %v1615 = vadd.f32 0.0, %v1614
  %v1616 = vpop.f32.mrb[0].mxu0
  %1617 = vmatprep.mubr.bf16.mxu0 0
  %1618 = vmatmul.mubr.bf16.gmra.mrb[0].mxu0 %v1192
  %v1619 = vpop.f32.mrb[0].mxu0
  %v1620 = vadd.f32 0.0, %v1619
  %v1621 = vpop.f32.mrb[0].mxu0
  %v1622 = vpop.f32.mrb[0].mxu0
  %v1623 = vadd.f32 0.0, %v1622
  %v1624 = vpop.f32.mrb[0].mxu0
  %1625 = vmatprep.mubr.bf16.mxu0 0
  %1626 = vmatmul.mubr.bf16.gmra.mrb[0].mxu0 %v1195
  %v1627 = vpop.f32.mrb[0].mxu0
  %v1628 = vadd.f32 0.0, %v1627
  %v1629 = vpop.f32.mrb[0].mxu0
  %v1630 = vpop.f32.mrb[0].mxu0
  %v1631 = vadd.f32 0.0, %v1630
  %v1632 = vpop.f32.mrb[0].mxu0
  %1633 = vmatprep.mubr.bf16.mxu0 0
  %1634 = vmatmul.mubr.bf16.gmra.mrb[0].mxu0 %v1198
  %v1635 = vpop.f32.mrb[0].mxu0
  %v1636 = vadd.f32 0.0, %v1635
  %v1637 = vpop.f32.mrb[0].mxu0
  %v1638 = vpop.f32.mrb[0].mxu0
  %v1639 = vadd.f32 0.0, %v1638
  %v1640 = vpop.f32.mrb[0].mxu0
  %1641 = vmatprep.mubr.bf16.mxu0 0
  %1642 = vmatmul.mubr.bf16.gmra.mrb[0].mxu0 %v1201
  %v1643 = vpop.f32.mrb[0].mxu0
  %v1644 = vadd.f32 0.0, %v1643
  %v1645 = vpop.f32.mrb[0].mxu0
  %v1646 = vpop.f32.mrb[0].mxu0
  %v1647 = vadd.f32 0.0, %v1646
  %v1648 = vpop.f32.mrb[0].mxu0
  %1649 = vmatprep.mubr.bf16.mxu0 0
  %1650 = vmatmul.mubr.bf16.gmra.mrb[0].mxu0 %v1204
  %v1651 = vpop.f32.mrb[0].mxu0
  %v1652 = vadd.f32 0.0, %v1651
  %v1653 = vpop.f32.mrb[0].mxu0
  %v1654 = vpop.f32.mrb[0].mxu0
  %v1655 = vadd.f32 0.0, %v1654
  %v1656 = vpop.f32.mrb[0].mxu0
  %1657 = vmatprep.mubr.bf16.mxu0 0
  %1658 = vmatmul.mubr.bf16.gmra.mrb[0].mxu0 %v1207
  %v1659 = vpop.f32.mrb[0].mxu0
  %v1660 = vadd.f32 0.0, %v1659
  %v1661 = vpop.f32.mrb[0].mxu0
  %v1662 = vpop.f32.mrb[0].mxu0
  %v1663 = vadd.f32 0.0, %v1662
  %v1664 = vpop.f32.mrb[0].mxu0
  %1665 = vmatprep.mubr.bf16.mxu0 0
  %1666 = vmatmul.mubr.bf16.gmra.mrb[0].mxu0 %v1210
  %v1667 = vpop.f32.mrb[0].mxu0
  %v1668 = vadd.f32 0.0, %v1667
  %v1669 = vpop.f32.mrb[0].mxu0
  %v1670 = vpop.f32.mrb[0].mxu0
  %v1671 = vadd.f32 0.0, %v1670
  %v1672 = vpop.f32.mrb[0].mxu0
  %1673 = vmatprep.mubr.bf16.mxu0 0
  %1674 = vmatmul.mubr.bf16.gmra.mrb[0].mxu0 %v1213
  %v1675 = vpop.f32.mrb[0].mxu0
  %v1676 = vadd.f32 0.0, %v1675
  %v1677 = vpop.f32.mrb[0].mxu0
  %v1678 = vpop.f32.mrb[0].mxu0
  %v1679 = vadd.f32 0.0, %v1678
  %v1680 = vpop.f32.mrb[0].mxu0
  %1681 = vmatprep.mubr.bf16.mxu0 0
  %1682 = vmatmul.mubr.bf16.gmra.mrb[0].mxu0 %v1216
  %v1683 = vpop.f32.mrb[0].mxu0
  %v1684 = vadd.f32 0.0, %v1683
  %v1685 = vpop.f32.mrb[0].mxu0
  %v1686 = vpop.f32.mrb[0].mxu0
  %v1687 = vadd.f32 0.0, %v1686
  %v1688 = vpop.f32.mrb[0].mxu0
  %1689 = vmatprep.mubr.bf16.mxu0 0
  %1690 = vmatmul.mubr.bf16.gmra.mrb[0].mxu0 %v1219
  %v1691 = vpop.f32.mrb[0].mxu0
  %v1692 = vadd.f32 0.0, %v1691
  %v1693 = vpop.f32.mrb[0].mxu0
  %v1694 = vpop.f32.mrb[0].mxu0
  %v1695 = vadd.f32 0.0, %v1694
  %v1696 = vpop.f32.mrb[0].mxu0
  %1697 = vmatprep.mubr.bf16.mxu0 0
  %1698 = vmatmul.mubr.bf16.gmra.mrb[0].mxu0 %v1222
  %v1699 = vpop.f32.mrb[0].mxu0
  %v1700 = vadd.f32 0.0, %v1699
  %v1701 = vpop.f32.mrb[0].mxu0
  %v1702 = vpop.f32.mrb[0].mxu0
  %v1703 = vadd.f32 0.0, %v1702
  %v1704 = vpop.f32.mrb[0].mxu0
  %1705 = vmatprep.mubr.bf16.mxu0 0
  %1706 = vmatmul.mubr.bf16.gmra.mrb[0].mxu0 %v1225
  %v1707 = vpop.f32.mrb[0].mxu0
  %v1708 = vadd.f32 0.0, %v1707
  %v1709 = vpop.f32.mrb[0].mxu0
  %v1710 = vpop.f32.mrb[0].mxu0
  %v1711 = vadd.f32 0.0, %v1710
  %v1712 = vpop.f32.mrb[0].mxu0
  %1713 = vmatprep.mubr.bf16.mxu0 0
  %1714 = vmatmul.mubr.bf16.gmra.mrb[0].mxu0 %v1228
  %v1715 = vpop.f32.mrb[0].mxu0
  %v1716 = vadd.f32 0.0, %v1715
  %v1717 = vpop.f32.mrb[0].mxu0
  %v1718 = vpop.f32.mrb[0].mxu0
  %v1719 = vadd.f32 0.0, %v1718
  %v1720 = vpop.f32.mrb[0].mxu0
  %1721 = vmatprep.mubr.bf16.mxu0 0
  %1722 = vmatmul.mubr.bf16.gmra.mrb[0].mxu0 %v1231
  %v1723 = vpop.f32.mrb[0].mxu0
  %v1724 = vadd.f32 0.0, %v1723
  %v1725 = vpop.f32.mrb[0].mxu0
  %v1726 = vpop.f32.mrb[0].mxu0
  %v1727 = vadd.f32 0.0, %v1726
  %v1728 = vpop.f32.mrb[0].mxu0
  %1729 = vmatprep.mubr.bf16.mxu0 0
  %1730 = vmatmul.mubr.bf16.gmra.mrb[0].mxu0 %v1234
  %v1731 = vpop.f32.mrb[0].mxu0
  %v1732 = vadd.f32 0.0, %v1731
  %v1733 = vpop.f32.mrb[0].mxu0
  %v1734 = vpop.f32.mrb[0].mxu0
  %v1735 = vadd.f32 0.0, %v1734
  %v1736 = vpop.f32.mrb[0].mxu0
  %1737 = vmatprep.mubr.bf16.mxu0 0
  %1738 = vmatmul.mubr.bf16.gmra.mrb[0].mxu0 %v1237
  %v1739 = vpop.f32.mrb[0].mxu0
  %v1740 = vadd.f32 0.0, %v1739
  %v1741 = vpop.f32.mrb[0].mxu0
  %v1742 = vpop.f32.mrb[0].mxu0
  %v1743 = vadd.f32 0.0, %v1742
  %v1744 = vpop.f32.mrb[0].mxu0
  %1745 = vmatprep.mubr.bf16.mxu0 0
  %1746 = vmatmul.mubr.bf16.gmra.mrb[0].mxu0 %v1240
  %v1747 = vpop.f32.mrb[0].mxu0
  %v1748 = vadd.f32 0.0, %v1747
  %v1749 = vpop.f32.mrb[0].mxu0
  %v1750 = vpop.f32.mrb[0].mxu0
  %v1751 = vadd.f32 0.0, %v1750
  %v1752 = vpop.f32.mrb[0].mxu0
  %1753 = vmatprep.mubr.bf16.mxu0 0
  %1754 = vmatmul.mubr.bf16.gmra.mrb[0].mxu0 %v1243
  %v1755 = vpop.f32.mrb[0].mxu0
  %v1756 = vadd.f32 0.0, %v1755
  %v1757 = vpop.f32.mrb[0].mxu0
  %v1758 = vpop.f32.mrb[0].mxu0
  %v1759 = vadd.f32 0.0, %v1758
  %v1760 = vpop.f32.mrb[0].mxu0
  %1761 = vmatprep.mubr.bf16.mxu0 0
  %1762 = vmatmul.mubr.bf16.gmra.mrb[0].mxu0 %v1246
  %v1763 = vpop.f32.mrb[0].mxu0
  %v1764 = vadd.f32 0.0, %v1763
  %v1765 = vpop.f32.mrb[0].mxu0
  %v1766 = vpop.f32.mrb[0].mxu0
  %v1767 = vadd.f32 0.0, %v1766
  %v1768 = vpop.f32.mrb[0].mxu0
  %1769 = vmatprep.mubr.bf16.mxu0 0
  %1770 = vmatmul.mubr.bf16.gmra.mrb[0].mxu0 %v1249
  %v1771 = vpop.f32.mrb[0].mxu0
  %v1772 = vadd.f32 0.0, %v1771
  %v1773 = vpop.f32.mrb[0].mxu0
  %v1774 = vpop.f32.mrb[0].mxu0
  %v1775 = vadd.f32 0.0, %v1774
  %v1776 = vpop.f32.mrb[0].mxu0
  %1777 = vmatprep.mubr.bf16.mxu0 0
  %1778 = vmatmul.mubr.bf16.gmra.mrb[0].mxu0 %v1252
  %v1779 = vpop.f32.mrb[0].mxu0
  %v1780 = vadd.f32 0.0, %v1779
  %v1781 = vpop.f32.mrb[0].mxu0
  %v1782 = vpop.f32.mrb[0].mxu0
  %v1783 = vadd.f32 0.0, %v1782
  %v1784 = vpop.f32.mrb[0].mxu0
  %1785 = vmatprep.mubr.bf16.mxu0 0
  %1786 = vmatmul.mubr.bf16.gmra.mrb[0].mxu0 %v1255
  %v1787 = vpop.f32.mrb[0].mxu0
  %v1788 = vadd.f32 0.0, %v1787
  %v1789 = vpop.f32.mrb[0].mxu0
  %v1790 = vpop.f32.mrb[0].mxu0
  %v1791 = vadd.f32 0.0, %v1790
  %v1792 = vpop.f32.mrb[0].mxu0
  %1793 = vmatprep.mubr.bf16.mxu0 0
  %1794 = vmatmul.mubr.bf16.gmra.mrb[0].mxu0 %v1258
  %v1795 = vpop.f32.mrb[0].mxu0
  %v1796 = vadd.f32 0.0, %v1795
  %v1797 = vpop.f32.mrb[0].mxu0
  %v1798 = vpop.f32.mrb[0].mxu0
  %v1799 = vadd.f32 0.0, %v1798
  %v1800 = vpop.f32.mrb[0].mxu0
  %1801 = vmatprep.mubr.bf16.mxu0 0
  %1802 = vmatmul.mubr.bf16.gmra.mrb[0].mxu0 %v1261
  %v1803 = vpop.f32.mrb[0].mxu0
  %v1804 = vadd.f32 0.0, %v1803
  %v1805 = vpop.f32.mrb[0].mxu0
  %v1806 = vpop.f32.mrb[0].mxu0
  %v1807 = vadd.f32 0.0, %v1806
  %v1808 = vpop.f32.mrb[0].mxu0
  %1809 = vmatprep.mubr.bf16.mxu0 0
  %1810 = vmatmul.mubr.bf16.gmra.mrb[0].mxu0 %v1264
  %v1811 = vpop.f32.mrb[0].mxu0
  %v1812 = vadd.f32 0.0, %v1811
  %v1813 = vpop.f32.mrb[0].mxu0
  %v1814 = vpop.f32.mrb[0].mxu0
  %v1815 = vadd.f32 0.0, %v1814
  %v1816 = vpop.f32.mrb[0].mxu0
  %1817 = vmatprep.mubr.bf16.mxu0 0
  %1818 = vmatmul.mubr.bf16.gmra.mrb[0].mxu0 %v1267
  %v1819 = vpop.f32.mrb[0].mxu0
  %v1820 = vadd.f32 0.0, %v1819
  %v1821 = vpop.f32.mrb[0].mxu0
  %v1822 = vpop.f32.mrb[0].mxu0
  %v1823 = vadd.f32 0.0, %v1822
  %v1824 = vpop.f32.mrb[0].mxu0
  %1825 = vmatprep.mubr.bf16.mxu0 0
  %1826 = vmatmul.mubr.bf16.gmra.mrb[0].mxu0 %v1270
  %v1827 = vpop.f32.mrb[0].mxu0
  %v1828 = vadd.f32 0.0, %v1827
  %v1829 = vpop.f32.mrb[0].mxu0
  %v1830 = vpop.f32.mrb[0].mxu0
  %v1831 = vadd.f32 0.0, %v1830
  %v1832 = vpop.f32.mrb[0].mxu0
  %1833 = vmatprep.mubr.bf16.mxu0 0
  %1834 = vmatmul.mubr.bf16.gmra.mrb[0].mxu0 %v1273
  %v1835 = vpop.f32.mrb[0].mxu0
  %v1836 = vadd.f32 0.0, %v1835
  %v1837 = vpop.f32.mrb[0].mxu0
  %v1838 = vpop.f32.mrb[0].mxu0
  %v1839 = vadd.f32 0.0, %v1838
  %v1840 = vpop.f32.mrb[0].mxu0
  %1841 = vmatprep.mubr.bf16.mxu0 0
  %1842 = vmatmul.mubr.bf16.gmra.mrb[0].mxu0 %v1276
  %v1843 = vpop.f32.mrb[0].mxu0
  %v1844 = vadd.f32 0.0, %v1843
  %v1845 = vpop.f32.mrb[0].mxu0
  %v1846 = vpop.f32.mrb[0].mxu0
  %v1847 = vadd.f32 0.0, %v1846
  %v1848 = vpop.f32.mrb[0].mxu0
  %1849 = vmatprep.mubr.bf16.mxu0 0
  %1850 = vmatmul.mubr.bf16.gmra.mrb[0].mxu0 %v1279
  %v1851 = vpop.f32.mrb[0].mxu0
  %v1852 = vadd.f32 0.0, %v1851
  %v1853 = vpop.f32.mrb[0].mxu0
  %v1854 = vpop.f32.mrb[0].mxu0
  %v1855 = vadd.f32 0.0, %v1854
  %v1856 = vpop.f32.mrb[0].mxu0
  %1857 = vmatprep.mubr.bf16.mxu0 0
  %1858 = vmatmul.mubr.bf16.gmra.mrb[0].mxu0 %v1282
  %v1859 = vpop.f32.mrb[0].mxu0
  %v1860 = vadd.f32 0.0, %v1859
  %v1861 = vpop.f32.mrb[0].mxu0
  %v1862 = vpop.f32.mrb[0].mxu0
  %v1863 = vadd.f32 0.0, %v1862
  %v1864 = vpop.f32.mrb[0].mxu0
  %1865 = vmatprep.mubr.bf16.mxu0 0
  %1866 = vmatmul.mubr.bf16.gmra.mrb[0].mxu0 %v1285
  %v1867 = vpop.f32.mrb[0].mxu0
  %v1868 = vadd.f32 0.0, %v1867
  %v1869 = vpop.f32.mrb[0].mxu0
  %v1870 = vpop.f32.mrb[0].mxu0
  %v1871 = vadd.f32 0.0, %v1870
  %v1872 = vpop.f32.mrb[0].mxu0
  %1873 = vmatprep.mubr.bf16.mxu0 0
  %1874 = vmatmul.mubr.bf16.gmra.mrb[0].mxu0 %v1288
  %v1875 = vpop.f32.mrb[0].mxu0
  %v1876 = vadd.f32 0.0, %v1875
  %v1877 = vpop.f32.mrb[0].mxu0
  %v1878 = vpop.f32.mrb[0].mxu0
  %v1879 = vadd.f32 0.0, %v1878
  %v1880 = vpop.f32.mrb[0].mxu0
  %1881 = vmatprep.mubr.bf16.mxu0 0
  %1882 = vmatmul.mubr.bf16.gmra.mrb[0].mxu0 %v1291
  %v1883 = vpop.f32.mrb[0].mxu0
  %v1884 = vadd.f32 0.0, %v1883
  %v1885 = vpop.f32.mrb[0].mxu0
  %v1886 = vpop.f32.mrb[0].mxu0
  %v1887 = vadd.f32 0.0, %v1886
  %v1888 = vpop.f32.mrb[0].mxu0
  %1889 = vmatprep.mubr.bf16.mxu0 0
  %1890 = vmatmul.mubr.bf16.gmra.mrb[0].mxu0 %v1294
  %v1891 = vpop.f32.mrb[0].mxu0
  %v1892 = vadd.f32 0.0, %v1891
  %v1893 = vpop.f32.mrb[0].mxu0
  %v1894 = vpop.f32.mrb[0].mxu0
  %v1895 = vadd.f32 0.0, %v1894
  %v1896 = vpop.f32.mrb[0].mxu0
  %1897 = vmatprep.mubr.bf16.mxu0 0
  %1898 = vmatmul.mubr.bf16.gmra.mrb[0].mxu0 %v1297
  %v1899 = vpop.f32.mrb[0].mxu0
  %v1900 = vadd.f32 0.0, %v1899
  %v1901 = vpop.f32.mrb[0].mxu0
  %v1902 = vpop.f32.mrb[0].mxu0
  %v1903 = vadd.f32 0.0, %v1902
  %v1904 = vpop.f32.mrb[0].mxu0
  %1905 = vmatprep.mubr.bf16.mxu0 0
  %1906 = vmatmul.mubr.bf16.gmra.mrb[0].mxu0 %v1300
  %v1907 = vpop.f32.mrb[0].mxu0
  %v1908 = vadd.f32 0.0, %v1907
  %v1909 = vpop.f32.mrb[0].mxu0
  %v1910 = vpop.f32.mrb[0].mxu0
  %v1911 = vadd.f32 0.0, %v1910
  %v1912 = vpop.f32.mrb[0].mxu0
  %1913 = vmatprep.mubr.bf16.mxu0 0
  %1914 = vmatmul.mubr.bf16.gmra.mrb[0].mxu0 %v1303
  %v1915 = vpop.f32.mrb[0].mxu0
  %v1916 = vadd.f32 0.0, %v1915
  %v1917 = vpop.f32.mrb[0].mxu0
  %v1918 = vpop.f32.mrb[0].mxu0
  %v1919 = vadd.f32 0.0, %v1918
  %v1920 = vpop.f32.mrb[0].mxu0
  %1921 = vmatprep.mubr.bf16.mxu0 0
  %1922 = vmatmul.mubr.bf16.gmra.mrb[0].mxu0 %v1306
  %v1923 = vpop.f32.mrb[0].mxu0
  %v1924 = vadd.f32 0.0, %v1923
  %v1925 = vpop.f32.mrb[0].mxu0
  %v1926 = vpop.f32.mrb[0].mxu0
  %v1927 = vadd.f32 0.0, %v1926
  %v1928 = vpop.f32.mrb[0].mxu0
  %1929 = vmatprep.mubr.bf16.mxu0 0
  %1930 = vmatmul.mubr.bf16.gmra.mrb[0].mxu0 %v1309
  %v1931 = vpop.f32.mrb[0].mxu0
  %v1932 = vadd.f32 0.0, %v1931
  %v1933 = vpop.f32.mrb[0].mxu0
  %v1934 = vpop.f32.mrb[0].mxu0
  %v1935 = vadd.f32 0.0, %v1934
  %v1936 = vpop.f32.mrb[0].mxu0
  %1937 = vmatprep.mubr.bf16.mxu0 0
  %1938 = vmatmul.mubr.bf16.gmra.mrb[0].mxu0 %v1312
  %v1939 = vpop.f32.mrb[0].mxu0
  %v1940 = vadd.f32 0.0, %v1939
  %v1941 = vpop.f32.mrb[0].mxu0
  %v1942 = vpop.f32.mrb[0].mxu0
  %v1943 = vadd.f32 0.0, %v1942
  %v1944 = vpop.f32.mrb[0].mxu0
  %1945 = vmatprep.mubr.bf16.mxu0 0
  %1946 = vmatmul.mubr.bf16.gmra.mrb[0].mxu0 %v1315
  %v1947 = vpop.f32.mrb[0].mxu0
  %v1948 = vadd.f32 0.0, %v1947
  %v1949 = vpop.f32.mrb[0].mxu0
  %v1950 = vpop.f32.mrb[0].mxu0
  %v1951 = vadd.f32 0.0, %v1950
  %v1952 = vpop.f32.mrb[0].mxu0
  %1953 = vmatprep.mubr.bf16.mxu0 0
  %1954 = vmatmul.mubr.bf16.gmra.mrb[0].mxu0 %v1318
  %v1955 = vpop.f32.mrb[0].mxu0
  %v1956 = vadd.f32 0.0, %v1955
  %v1957 = vpop.f32.mrb[0].mxu0
  %v1958 = vpop.f32.mrb[0].mxu0
  %v1959 = vadd.f32 0.0, %v1958
  %v1960 = vpop.f32.mrb[0].mxu0
  %1961 = vmatprep.mubr.bf16.mxu0 0
  %1962 = vmatmul.mubr.bf16.gmra.mrb[0].mxu0 %v1321
  %v1963 = vpop.f32.mrb[0].mxu0
  %v1964 = vadd.f32 0.0, %v1963
  %v1965 = vpop.f32.mrb[0].mxu0
  %v1966 = vpop.f32.mrb[0].mxu0
  %v1967 = vadd.f32 0.0, %v1966
  %v1968 = vpop.f32.mrb[0].mxu0
  %1969 = vmatprep.mubr.bf16.mxu0 0
  %1970 = vmatmul.mubr.bf16.gmra.mrb[0].mxu0 %v1324
  %v1971 = vpop.f32.mrb[0].mxu0
  %v1972 = vadd.f32 0.0, %v1971
  %v1973 = vpop.f32.mrb[0].mxu0
  %v1974 = vpop.f32.mrb[0].mxu0
  %v1975 = vadd.f32 0.0, %v1974
  %v1976 = vpop.f32.mrb[0].mxu0
  %1977 = vmatprep.mubr.bf16.mxu0 0
  %1978 = vmatmul.mubr.bf16.gmra.mrb[0].mxu0 %v1327
  %v1979 = vpop.f32.mrb[0].mxu0
  %v1980 = vadd.f32 0.0, %v1979
  %v1981 = vpop.f32.mrb[0].mxu0
  %v1982 = vpop.f32.mrb[0].mxu0
  %v1983 = vadd.f32 0.0, %v1982
  %v1984 = vpop.f32.mrb[0].mxu0
  %1985 = vmatprep.mubr.bf16.mxu0 0
  %1986 = vmatmul.mubr.bf16.gmra.mrb[0].mxu0 %v1330
  %v1987 = vpop.f32.mrb[0].mxu0
  %v1988 = vadd.f32 0.0, %v1987
  %v1989 = vpop.f32.mrb[0].mxu0
  %v1990 = vpop.f32.mrb[0].mxu0
  %v1991 = vadd.f32 0.0, %v1990
  %v1992 = vpop.f32.mrb[0].mxu0
  %1993 = vmatprep.mubr.bf16.mxu0 0
  %1994 = vmatmul.mubr.bf16.gmra.mrb[0].mxu0 %v1333
  %v1995 = vpop.f32.mrb[0].mxu0
  %v1996 = vadd.f32 0.0, %v1995
  %v1997 = vpop.f32.mrb[0].mxu0
  %v1998 = vpop.f32.mrb[0].mxu0
  %v1999 = vadd.f32 0.0, %v1998
  %v2000 = vpop.f32.mrb[0].mxu0
  %2001 = vmatprep.mubr.bf16.mxu0 0
  %2002 = vmatmul.mubr.bf16.gmra.mrb[0].mxu0 %v1336
  %v2003 = vpop.f32.mrb[0].mxu0
  %v2004 = vadd.f32 0.0, %v2003
  %v2005 = vpop.f32.mrb[0].mxu0
  %v2006 = vpop.f32.mrb[0].mxu0
  %v2007 = vadd.f32 0.0, %v2006
  %v2008 = vpop.f32.mrb[0].mxu0
  %2009 = vmatprep.mubr.bf16.mxu0 0
  %2010 = vmatmul.mubr.bf16.gmra.mrb[0].mxu0 %v1339
  %v2011 = vpop.f32.mrb[0].mxu0
  %v2012 = vadd.f32 0.0, %v2011
  %v2013 = vpop.f32.mrb[0].mxu0
  %v2014 = vpop.f32.mrb[0].mxu0
  %v2015 = vadd.f32 0.0, %v2014
  %v2016 = vpop.f32.mrb[0].mxu0
  %2017 = vmatprep.mubr.bf16.mxu0 0
  %2018 = vmatmul.mubr.bf16.gmra.mrb[0].mxu0 %v1342
  %v2019 = vpop.f32.mrb[0].mxu0
  %v2020 = vadd.f32 0.0, %v2019
  %v2021 = vpop.f32.mrb[0].mxu0
  %v2022 = vpop.f32.mrb[0].mxu0
  %v2023 = vadd.f32 0.0, %v2022
  %v2024 = vpop.f32.mrb[0].mxu0
  %2025 = vmatprep.mubr.bf16.mxu0 0
  %2026 = vmatmul.mubr.bf16.gmra.mrb[0].mxu0 %v1345
  %v2027 = vpop.f32.mrb[0].mxu0
  %v2028 = vadd.f32 0.0, %v2027
  %v2029 = vpop.f32.mrb[0].mxu0
  %v2030 = vpop.f32.mrb[0].mxu0
  %v2031 = vadd.f32 0.0, %v2030
  %v2032 = vpop.f32.mrb[0].mxu0
  %2033 = vmatprep.mubr.bf16.mxu0 0
  %2034 = vmatmul.mubr.bf16.gmra.mrb[0].mxu0 %v1348
  %v2035 = vpop.f32.mrb[0].mxu0
  %v2036 = vadd.f32 0.0, %v2035
  %v2037 = vpop.f32.mrb[0].mxu0
  %v2038 = vpop.f32.mrb[0].mxu0
  %v2039 = vadd.f32 0.0, %v2038
  %v2040 = vpop.f32.mrb[0].mxu0
  %2041 = vmatprep.mubr.bf16.mxu0 0
  %2042 = vmatmul.mubr.bf16.gmra.mrb[0].mxu0 %v1351
  %v2043 = vpop.f32.mrb[0].mxu0
  %v2044 = vadd.f32 0.0, %v2043
  %v2045 = vpop.f32.mrb[0].mxu0
  %v2046 = vpop.f32.mrb[0].mxu0
  %v2047 = vadd.f32 0.0, %v2046
  %v2048 = vpop.f32.mrb[0].mxu0
  %2049 = vmatprep.mubr.bf16.mxu0 0
  %2050 = vmatmul.mubr.bf16.gmra.mrb[0].mxu0 %v1354
  %v2051 = vpop.f32.mrb[0].mxu0
  %v2052 = vadd.f32 0.0, %v2051
  %v2053 = vpop.f32.mrb[0].mxu0
  %v2054 = vpop.f32.mrb[0].mxu0
  %v2055 = vadd.f32 0.0, %v2054
  %v2056 = vpop.f32.mrb[0].mxu0
  %2057 = vmatprep.mubr.bf16.mxu0 0
  %2058 = vmatmul.mubr.bf16.gmra.mrb[0].mxu0 %v1357
  %v2059 = vpop.f32.mrb[0].mxu0
  %v2060 = vadd.f32 0.0, %v2059
  %v2061 = vpop.f32.mrb[0].mxu0
  %v2062 = vpop.f32.mrb[0].mxu0
  %v2063 = vadd.f32 0.0, %v2062
  %v2064 = vpop.f32.mrb[0].mxu0
  %2065 = vmatprep.mubr.bf16.mxu0 0
  %2066 = vmatmul.mubr.bf16.gmra.mrb[0].mxu0 %v1360
  %v2067 = vpop.f32.mrb[0].mxu0
  %v2068 = vadd.f32 0.0, %v2067
  %v2069 = vpop.f32.mrb[0].mxu0
  %v2070 = vpop.f32.mrb[0].mxu0
  %v2071 = vadd.f32 0.0, %v2070
  %v2072 = vpop.f32.mrb[0].mxu0
  %2073 = vmatprep.mubr.bf16.mxu0 0
  %2074 = vmatmul.mubr.bf16.gmra.mrb[0].mxu0 %v1363
  %v2075 = vpop.f32.mrb[0].mxu0
  %v2076 = vadd.f32 0.0, %v2075
  %v2077 = vpop.f32.mrb[0].mxu0
  %v2078 = vpop.f32.mrb[0].mxu0
  %v2079 = vadd.f32 0.0, %v2078
  %v2080 = vpop.f32.mrb[0].mxu0
  %2081 = vmatprep.mubr.bf16.mxu0 0
  %2082 = vmatmul.mubr.bf16.gmra.mrb[0].mxu0 %v1366
  %v2083 = vpop.f32.mrb[0].mxu0
  %v2084 = vadd.f32 0.0, %v2083
  %v2085 = vpop.f32.mrb[0].mxu0
  %v2086 = vpop.f32.mrb[0].mxu0
  %v2087 = vadd.f32 0.0, %v2086
  %v2088 = vpop.f32.mrb[0].mxu0
  %2089 = vmatprep.mubr.bf16.mxu0 0
  %2090 = vmatmul.mubr.bf16.gmra.mrb[0].mxu0 %v1369
  %v2091 = vpop.f32.mrb[0].mxu0
  %v2092 = vadd.f32 0.0, %v2091
  %v2093 = vpop.f32.mrb[0].mxu0
  %v2094 = vpop.f32.mrb[0].mxu0
  %v2095 = vadd.f32 0.0, %v2094
  %v2096 = vpop.f32.mrb[0].mxu0
  %2097 = vmatprep.mubr.bf16.mxu0 0
  %2098 = vmatmul.mubr.bf16.gmra.mrb[0].mxu0 %v1372
  %v2099 = vpop.f32.mrb[0].mxu0
  %v2100 = vadd.f32 0.0, %v2099
  %v2101 = vpop.f32.mrb[0].mxu0
  %v2102 = vpop.f32.mrb[0].mxu0
  %v2103 = vadd.f32 0.0, %v2102
  %v2104 = vpop.f32.mrb[0].mxu0
  %2105 = vmatprep.mubr.bf16.mxu0 0
  %2106 = vmatmul.mubr.bf16.gmra.mrb[0].mxu0 %v1375
  %v2107 = vpop.f32.mrb[0].mxu0
  %v2108 = vadd.f32 0.0, %v2107
  %v2109 = vpop.f32.mrb[0].mxu0
  %v2110 = vpop.f32.mrb[0].mxu0
  %v2111 = vadd.f32 0.0, %v2110
  %v2112 = vpop.f32.mrb[0].mxu0
  %2113 = vmatprep.mubr.bf16.mxu0 0
  %2114 = vmatmul.mubr.bf16.gmra.mrb[0].mxu0 %v1378
  %v2115 = vpop.f32.mrb[0].mxu0
  %v2116 = vadd.f32 0.0, %v2115
  %v2117 = vpop.f32.mrb[0].mxu0
  %v2118 = vpop.f32.mrb[0].mxu0
  %v2119 = vadd.f32 0.0, %v2118
  %v2120 = vpop.f32.mrb[0].mxu0
  %2121 = vmatprep.mubr.bf16.mxu0 0
  %2122 = vmatmul.mubr.bf16.gmra.mrb[0].mxu0 %v1381
  %v2123 = vpop.f32.mrb[0].mxu0
  %v2124 = vadd.f32 0.0, %v2123
  %v2125 = vpop.f32.mrb[0].mxu0
  %v2126 = vpop.f32.mrb[0].mxu0
  %v2127 = vadd.f32 0.0, %v2126
  %v2128 = vpop.f32.mrb[0].mxu0
  %2129 = vmatprep.mubr.bf16.mxu0 0
  %2130 = vmatmul.mubr.bf16.gmra.mrb[0].mxu0 %v1384
  %v2131 = vpop.f32.mrb[0].mxu0
  %v2132 = vadd.f32 0.0, %v2131
  %v2133 = vpop.f32.mrb[0].mxu0
  %v2134 = vpop.f32.mrb[0].mxu0
  %v2135 = vadd.f32 0.0, %v2134
  %v2136 = vpop.f32.mrb[0].mxu0
  %2137 = vmatprep.mubr.bf16.mxu0 0
  %2138 = vmatmul.mubr.bf16.gmra.mrb[0].mxu0 %v1387
  %v2139 = vpop.f32.mrb[0].mxu0
  %v2140 = vadd.f32 0.0, %v2139
  %v2141 = vpop.f32.mrb[0].mxu0
  %v2142 = vpop.f32.mrb[0].mxu0
  %v2143 = vadd.f32 0.0, %v2142
  %v2144 = vpop.f32.mrb[0].mxu0
  %2145 = vmatprep.mubr.bf16.mxu0 0
  %2146 = vmatmul.mubr.bf16.gmra.mrb[0].mxu0 %v1390
  %v2147 = vpop.f32.mrb[0].mxu0
  %v2148 = vadd.f32 0.0, %v2147
  %v2149 = vpop.f32.mrb[0].mxu0
  %v2150 = vpop.f32.mrb[0].mxu0
  %v2151 = vadd.f32 0.0, %v2150
  %v2152 = vpop.f32.mrb[0].mxu0
  %2153 = vmatprep.mubr.bf16.mxu0 0
  %2154 = vmatmul.mubr.bf16.gmra.mrb[0].mxu0 %v1393
  %v2155 = vpop.f32.mrb[0].mxu0
  %v2156 = vadd.f32 0.0, %v2155
  %v2157 = vpop.f32.mrb[0].mxu0
  %v2158 = vpop.f32.mrb[0].mxu0
  %v2159 = vadd.f32 0.0, %v2158
  %v2160 = vpop.f32.mrb[0].mxu0
  %2161 = vmatprep.mubr.bf16.mxu0 0
  %2162 = vmatmul.mubr.bf16.gmra.mrb[0].mxu0 %v1396
  %v2163 = vpop.f32.mrb[0].mxu0
  %v2164 = vadd.f32 0.0, %v2163
  %v2165 = vpop.f32.mrb[0].mxu0
  %v2166 = vpop.f32.mrb[0].mxu0
  %v2167 = vadd.f32 0.0, %v2166
  %v2168 = vpop.f32.mrb[0].mxu0
  %2169 = vmatprep.mubr.bf16.mxu0 0
  %2170 = vmatmul.mubr.bf16.gmra.mrb[0].mxu0 %v1399
  %v2171 = vpop.f32.mrb[0].mxu0
  %v2172 = vadd.f32 0.0, %v2171
  %v2173 = vpop.f32.mrb[0].mxu0
  %v2174 = vpop.f32.mrb[0].mxu0
  %v2175 = vadd.f32 0.0, %v2174
  %v2176 = vpop.f32.mrb[0].mxu0
  %2177 = vmatprep.mubr.bf16.mxu0 0
  %2178 = vmatmul.mubr.bf16.gmra.mrb[0].mxu0 %v1402
  %v2179 = vpop.f32.mrb[0].mxu0
  %v2180 = vadd.f32 0.0, %v2179
  %v2181 = vpop.f32.mrb[0].mxu0
  %v2182 = vpop.f32.mrb[0].mxu0
  %v2183 = vadd.f32 0.0, %v2182
  %v2184 = vpop.f32.mrb[0].mxu0
  %2185 = vmatprep.mubr.bf16.mxu0 0
  %2186 = vmatmul.mubr.bf16.gmra.mrb[0].mxu0 %v1405
  %v2187 = vpop.f32.mrb[0].mxu0
  %v2188 = vadd.f32 0.0, %v2187
  %v2189 = vpop.f32.mrb[0].mxu0
  %v2190 = vpop.f32.mrb[0].mxu0
  %v2191 = vadd.f32 0.0, %v2190
  %v2192 = vpop.f32.mrb[0].mxu0
  %2193 = vmatprep.mubr.bf16.mxu0 0
  %2194 = vmatmul.mubr.bf16.gmra.mrb[0].mxu0 %v1408
  %v2195 = vpop.f32.mrb[0].mxu0
  %v2196 = vadd.f32 0.0, %v2195
  %v2197 = vpop.f32.mrb[0].mxu0
  %v2198 = vpop.f32.mrb[0].mxu0
  %v2199 = vadd.f32 0.0, %v2198
  %v2200 = vpop.f32.mrb[0].mxu0
  %2201 = vmatprep.mubr.bf16.mxu0 0
  %2202 = vmatmul.mubr.bf16.gmra.mrb[0].mxu0 %v1411
  %v2203 = vpop.f32.mrb[0].mxu0
  %v2204 = vadd.f32 0.0, %v2203
  %v2205 = vpop.f32.mrb[0].mxu0
  %v2206 = vpop.f32.mrb[0].mxu0
  %v2207 = vadd.f32 0.0, %v2206
  %v2208 = vpop.f32.mrb[0].mxu0
  %2209 = vmatprep.mubr.bf16.mxu0 0
  %2210 = vmatmul.mubr.bf16.gmra.mrb[0].mxu0 %v1414
  %v2211 = vpop.f32.mrb[0].mxu0
  %v2212 = vadd.f32 0.0, %v2211
  %v2213 = vpop.f32.mrb[0].mxu0
  %v2214 = vpop.f32.mrb[0].mxu0
  %v2215 = vadd.f32 0.0, %v2214
  %v2216 = vpop.f32.mrb[0].mxu0
  %2217 = vmatprep.mubr.bf16.mxu0 0
  %2218 = vmatmul.mubr.bf16.gmra.mrb[0].mxu0 %v1417
  %v2219 = vpop.f32.mrb[0].mxu0
  %v2220 = vadd.f32 0.0, %v2219
  %v2221 = vpop.f32.mrb[0].mxu0
  %v2222 = vpop.f32.mrb[0].mxu0
  %v2223 = vadd.f32 0.0, %v2222
  %v2224 = vpop.f32.mrb[0].mxu0
  %2225 = vmatprep.mubr.bf16.mxu0 0
  %2226 = vmatmul.mubr.bf16.gmra.mrb[0].mxu0 %v1420
  %v2227 = vpop.f32.mrb[0].mxu0
  %v2228 = vadd.f32 0.0, %v2227
  %v2229 = vpop.f32.mrb[0].mxu0
  %v2230 = vpop.f32.mrb[0].mxu0
  %v2231 = vadd.f32 0.0, %v2230
  %v2232 = vpop.f32.mrb[0].mxu0
  %2233 = vmatprep.mubr.bf16.mxu0 0
  %2234 = vmatmul.mubr.bf16.gmra.mrb[0].mxu0 %v1423
  %v2235 = vpop.f32.mrb[0].mxu0
  %v2236 = vadd.f32 0.0, %v2235
  %v2237 = vpop.f32.mrb[0].mxu0
  %v2238 = vpop.f32.mrb[0].mxu0
  %v2239 = vadd.f32 0.0, %v2238
  %v2240 = vpop.f32.mrb[0].mxu0
  %2241 = vmatprep.mubr.bf16.mxu0 0
  %2242 = vmatmul.mubr.bf16.gmra.mrb[0].mxu0 %v1426
  %v2243 = vpop.f32.mrb[0].mxu0
  %v2244 = vadd.f32 0.0, %v2243
  %v2245 = vpop.f32.mrb[0].mxu0
  %v2246 = vpop.f32.mrb[0].mxu0
  %v2247 = vadd.f32 0.0, %v2246
  %v2248 = vpop.f32.mrb[0].mxu0
  %2249 = vmatprep.mubr.bf16.mxu0 0
  %2250 = vmatmul.mubr.bf16.gmra.mrb[0].mxu0 %v1429
  %v2251 = vpop.f32.mrb[0].mxu0
  %v2252 = vadd.f32 0.0, %v2251
  %v2253 = vpop.f32.mrb[0].mxu0
  %v2254 = vpop.f32.mrb[0].mxu0
  %v2255 = vadd.f32 0.0, %v2254
  %v2256 = vpop.f32.mrb[0].mxu0
  %2257 = vmatprep.mubr.bf16.mxu0 0
  %2258 = vmatmul.mubr.bf16.gmra.mrb[0].mxu0 %v1432
  %v2259 = vpop.f32.mrb[0].mxu0
  %v2260 = vadd.f32 0.0, %v2259
  %v2261 = vpop.f32.mrb[0].mxu0
  %v2262 = vpop.f32.mrb[0].mxu0
  %v2263 = vadd.f32 0.0, %v2262
  %v2264 = vpop.f32.mrb[0].mxu0
  %2265 = vmatprep.mubr.bf16.mxu0 0
  %2266 = vmatmul.mubr.bf16.gmra.mrb[0].mxu0 %v1435
  %v2267 = vpop.f32.mrb[0].mxu0
  %v2268 = vadd.f32 0.0, %v2267
  %v2269 = vpop.f32.mrb[0].mxu0
  %v2270 = vpop.f32.mrb[0].mxu0
  %v2271 = vadd.f32 0.0, %v2270
  %v2272 = vpop.f32.mrb[0].mxu0
  %2273 = vmatprep.mubr.bf16.mxu0 0
  %2274 = vmatmul.mubr.bf16.gmra.mrb[0].mxu0 %v1438
  %v2275 = vpop.f32.mrb[0].mxu0
  %v2276 = vadd.f32 0.0, %v2275
  %v2277 = vpop.f32.mrb[0].mxu0
  %v2278 = vpop.f32.mrb[0].mxu0
  %v2279 = vadd.f32 0.0, %v2278
  %v2280 = vpop.f32.mrb[0].mxu0
  %2281 = vmatprep.mubr.bf16.mxu0 0
  %2282 = vmatmul.mubr.bf16.gmra.mrb[0].mxu0 %v1441
  %v2283 = vpop.f32.mrb[0].mxu0
  %v2284 = vadd.f32 0.0, %v2283
  %v2285 = vpop.f32.mrb[0].mxu0
  %v2286 = vpop.f32.mrb[0].mxu0
  %v2287 = vadd.f32 0.0, %v2286
  %v2288 = vpop.f32.mrb[0].mxu0
  %2289 = vmatprep.mubr.bf16.mxu0 0
  %2290 = vmatmul.mubr.bf16.gmra.mrb[0].mxu0 %v1444
  %v2291 = vpop.f32.mrb[0].mxu0
  %v2292 = vadd.f32 0.0, %v2291
  %v2293 = vpop.f32.mrb[0].mxu0
  %v2294 = vpop.f32.mrb[0].mxu0
  %v2295 = vadd.f32 0.0, %v2294
  %v2296 = vpop.f32.mrb[0].mxu0
  %2297 = vmatprep.mubr.bf16.mxu0 0
  %2298 = vmatmul.mubr.bf16.gmra.mrb[0].mxu0 %v1447
  %v2299 = vpop.f32.mrb[0].mxu0
  %v2300 = vadd.f32 0.0, %v2299
  %v2301 = vpop.f32.mrb[0].mxu0
  %v2302 = vpop.f32.mrb[0].mxu0
  %v2303 = vadd.f32 0.0, %v2302
  %v2304 = vpop.f32.mrb[0].mxu0
  %2305 = vmatprep.mubr.bf16.mxu0 0
  %2306 = vmatmul.mubr.bf16.gmra.mrb[0].mxu0 %v1450
  %v2307 = vpop.f32.mrb[0].mxu0
  %v2308 = vadd.f32 0.0, %v2307
  %v2309 = vpop.f32.mrb[0].mxu0
  %v2310 = vpop.f32.mrb[0].mxu0
  %v2311 = vadd.f32 0.0, %v2310
  %v2312 = vpop.f32.mrb[0].mxu0
  %2313 = vmatprep.mubr.bf16.mxu0 0
  %2314 = vmatmul.mubr.bf16.gmra.mrb[0].mxu0 %v1453
  %v2315 = vpop.f32.mrb[0].mxu0
  %v2316 = vadd.f32 0.0, %v2315
  %v2317 = vpop.f32.mrb[0].mxu0
  %v2318 = vpop.f32.mrb[0].mxu0
  %v2319 = vadd.f32 0.0, %v2318
  %v2320 = vpop.f32.mrb[0].mxu0
  %2321 = vmatprep.mubr.bf16.mxu0 0
  %2322 = vmatmul.mubr.bf16.gmra.mrb[0].mxu0 %v1456
  %v2323 = vpop.f32.mrb[0].mxu0
  %v2324 = vadd.f32 0.0, %v2323
  %v2325 = vpop.f32.mrb[0].mxu0
  %v2326 = vpop.f32.mrb[0].mxu0
  %v2327 = vadd.f32 0.0, %v2326
  %v2328 = vpop.f32.mrb[0].mxu0
  %2329 = vmatprep.mubr.bf16.mxu0 0
  %2330 = vmatmul.mubr.bf16.gmra.mrb[0].mxu0 %v1459
  %v2331 = vpop.f32.mrb[0].mxu0
  %v2332 = vadd.f32 0.0, %v2331
  %v2333 = vpop.f32.mrb[0].mxu0
  %v2334 = vpop.f32.mrb[0].mxu0
  %v2335 = vadd.f32 0.0, %v2334
  %v2336 = vpop.f32.mrb[0].mxu0
  %2337 = vmatprep.mubr.bf16.mxu0 0
  %2338 = vmatmul.mubr.bf16.gmra.mrb[0].mxu0 %v1462
  %v2339 = vpop.f32.mrb[0].mxu0
  %v2340 = vadd.f32 0.0, %v2339
  %v2341 = vpop.f32.mrb[0].mxu0
  %v2342 = vpop.f32.mrb[0].mxu0
  %v2343 = vadd.f32 0.0, %v2342
  %v2344 = vpop.f32.mrb[0].mxu0
  %2345 = vmatprep.mubr.bf16.mxu0 0
  %2346 = vmatmul.mubr.bf16.gmra.mrb[0].mxu0 %v1465
  %v2347 = vpop.f32.mrb[0].mxu0
  %v2348 = vadd.f32 0.0, %v2347
  %v2349 = vpop.f32.mrb[0].mxu0
  %v2350 = vpop.f32.mrb[0].mxu0
  %v2351 = vadd.f32 0.0, %v2350
  %v2352 = vpop.f32.mrb[0].mxu0
  %2353 = vmatprep.mubr.bf16.mxu0 0
  %2354 = vmatmul.mubr.bf16.gmra.mrb[0].mxu0 %v1468
  %v2355 = vpop.f32.mrb[0].mxu0
  %v2356 = vadd.f32 0.0, %v2355
  %v2357 = vpop.f32.mrb[0].mxu0
  %v2358 = vpop.f32.mrb[0].mxu0
  %v2359 = vadd.f32 0.0, %v2358
  %v2360 = vpop.f32.mrb[0].mxu0
  %2361 = vmatprep.mubr.bf16.mxu0 0
  %2362 = vmatmul.mubr.bf16.gmra.mrb[0].mxu0 %v1471
  %v2363 = vpop.f32.mrb[0].mxu0
  %v2364 = vadd.f32 0.0, %v2363
  %v2365 = vpop.f32.mrb[0].mxu0
  %v2366 = vpop.f32.mrb[0].mxu0
  %v2367 = vadd.f32 0.0, %v2366
  %v2368 = vpop.f32.mrb[0].mxu0
  %2369 = vmatprep.mubr.bf16.mxu0 0
  %2370 = vmatmul.mubr.bf16.gmra.mrb[0].mxu0 %v1474
  %v2371 = vpop.f32.mrb[0].mxu0
  %v2372 = vadd.f32 0.0, %v2371
  %v2373 = vpop.f32.mrb[0].mxu0
  %v2374 = vpop.f32.mrb[0].mxu0
  %v2375 = vadd.f32 0.0, %v2374
  %v2376 = vpop.f32.mrb[0].mxu0
  %2377 = vmatprep.mubr.bf16.mxu0 0
  %2378 = vmatmul.mubr.bf16.gmra.mrb[0].mxu0 %v1477
  %v2379 = vpop.f32.mrb[0].mxu0
  %v2380 = vadd.f32 0.0, %v2379
  %v2381 = vpop.f32.mrb[0].mxu0
  %v2382 = vpop.f32.mrb[0].mxu0
  %v2383 = vadd.f32 0.0, %v2382
  %v2384 = vpop.f32.mrb[0].mxu0
  %2385 = vmatprep.mubr.bf16.mxu0 0
  %2386 = vmatmul.mubr.bf16.gmra.mrb[0].mxu0 %v1480
  %v2387 = vpop.f32.mrb[0].mxu0
  %v2388 = vadd.f32 0.0, %v2387
  %v2389 = vpop.f32.mrb[0].mxu0
  %v2390 = vpop.f32.mrb[0].mxu0
  %v2391 = vadd.f32 0.0, %v2390
  %v2392 = vpop.f32.mrb[0].mxu0
  %2393 = vmatprep.mubr.bf16.mxu0 0
  %2394 = vmatmul.mubr.bf16.gmra.mrb[0].mxu0 %v1483
  %v2395 = vpop.f32.mrb[0].mxu0
  %v2396 = vadd.f32 0.0, %v2395
  %v2397 = vpop.f32.mrb[0].mxu0
  %v2398 = vpop.f32.mrb[0].mxu0
  %v2399 = vadd.f32 0.0, %v2398
  %v2400 = vpop.f32.mrb[0].mxu0
  %2401 = vmatprep.mubr.bf16.mxu0 0
  %2402 = vmatmul.mubr.bf16.gmra.mrb[0].mxu0 %v1486
  %v2403 = vpop.f32.mrb[0].mxu0
  %v2404 = vadd.f32 0.0, %v2403
  %v2405 = vpop.f32.mrb[0].mxu0
  %v2406 = vpop.f32.mrb[0].mxu0
  %v2407 = vadd.f32 0.0, %v2406
  %v2408 = vpop.f32.mrb[0].mxu0
  %2409 = vmatprep.mubr.bf16.mxu0 0
  %2410 = vmatmul.mubr.bf16.gmra.mrb[0].mxu0 %v1489
  %v2411 = vpop.f32.mrb[0].mxu0
  %v2412 = vadd.f32 0.0, %v2411
  %v2413 = vpop.f32.mrb[0].mxu0
  %v2414 = vpop.f32.mrb[0].mxu0
  %v2415 = vadd.f32 0.0, %v2414
  %v2416 = vpop.f32.mrb[0].mxu0
  %2417 = vmatprep.mubr.bf16.mxu0 0
  %2418 = vmatmul.mubr.bf16.gmra.mrb[0].mxu0 %v1492
  %v2419 = vpop.f32.mrb[0].mxu0
  %v2420 = vadd.f32 0.0, %v2419
  %v2421 = vpop.f32.mrb[0].mxu0
  %v2422 = vpop.f32.mrb[0].mxu0
  %v2423 = vadd.f32 0.0, %v2422
  %v2424 = vpop.f32.mrb[0].mxu0
  %2425 = vmatprep.mubr.bf16.mxu0 0
  %2426 = vmatmul.mubr.bf16.gmra.mrb[0].mxu0 %v1495
  %v2427 = vpop.f32.mrb[0].mxu0
  %v2428 = vadd.f32 0.0, %v2427
  %v2429 = vpop.f32.mrb[0].mxu0
  %v2430 = vpop.f32.mrb[0].mxu0
  %v2431 = vadd.f32 0.0, %v2430
  %v2432 = vpop.f32.mrb[0].mxu0
  %2433 = vmatprep.mubr.bf16.mxu0 0
  %2434 = vmatmul.mubr.bf16.gmra.mrb[0].mxu0 %v1498
  %v2435 = vpop.f32.mrb[0].mxu0
  %v2436 = vadd.f32 0.0, %v2435
  %v2437 = vpop.f32.mrb[0].mxu0
  %v2438 = vpop.f32.mrb[0].mxu0
  %v2439 = vadd.f32 0.0, %v2438
  %v2440 = vpop.f32.mrb[0].mxu0
  %2441 = vmatprep.mubr.bf16.mxu0 0
  %2442 = vmatmul.mubr.bf16.gmra.mrb[0].mxu0 %v1501
  %v2443 = vpop.f32.mrb[0].mxu0
  %v2444 = vadd.f32 0.0, %v2443
  %v2445 = vpop.f32.mrb[0].mxu0
  %v2446 = vpop.f32.mrb[0].mxu0
  %v2447 = vadd.f32 0.0, %v2446
  %v2448 = vpop.f32.mrb[0].mxu0
  %2449 = vmatprep.mubr.bf16.mxu0 0
  %2450 = vmatmul.mubr.bf16.gmra.mrb[0].mxu0 %v1504
  %v2451 = vpop.f32.mrb[0].mxu0
  %v2452 = vadd.f32 0.0, %v2451
  %v2453 = vpop.f32.mrb[0].mxu0
  %v2454 = vpop.f32.mrb[0].mxu0
  %v2455 = vadd.f32 0.0, %v2454
  %v2456 = vpop.f32.mrb[0].mxu0
  %2457 = vmatprep.mubr.bf16.mxu0 0
  %2458 = vmatmul.mubr.bf16.gmra.mrb[0].mxu0 %v1507
  %v2459 = vpop.f32.mrb[0].mxu0
  %v2460 = vadd.f32 0.0, %v2459
  %v2461 = vpop.f32.mrb[0].mxu0
  %v2462 = vpop.f32.mrb[0].mxu0
  %v2463 = vadd.f32 0.0, %v2462
  %v2464 = vpop.f32.mrb[0].mxu0
  %2465 = vmatprep.mubr.bf16.mxu0 0
  %2466 = vmatmul.mubr.bf16.gmra.mrb[0].mxu0 %v1510
  %v2467 = vpop.f32.mrb[0].mxu0
  %v2468 = vadd.f32 0.0, %v2467
  %v2469 = vpop.f32.mrb[0].mxu0
  %v2470 = vpop.f32.mrb[0].mxu0
  %v2471 = vadd.f32 0.0, %v2470
  %v2472 = vpop.f32.mrb[0].mxu0
  %2473 = vmatprep.mubr.bf16.mxu0 0
  %2474 = vmatmul.mubr.bf16.gmra.mrb[0].mxu0 %v1513
  %v2475 = vpop.f32.mrb[0].mxu0
  %v2476 = vadd.f32 0.0, %v2475
  %v2477 = vpop.f32.mrb[0].mxu0
  %v2478 = vpop.f32.mrb[0].mxu0
  %v2479 = vadd.f32 0.0, %v2478
  %v2480 = vpop.f32.mrb[0].mxu0
  %2481 = vmatprep.mubr.bf16.mxu0 0
  %2482 = vmatmul.mubr.bf16.gmra.mrb[0].mxu0 %v1516
  %v2483 = vpop.f32.mrb[0].mxu0
  %v2484 = vadd.f32 0.0, %v2483
  %v2485 = vpop.f32.mrb[0].mxu0
  %v2486 = vpop.f32.mrb[0].mxu0
  %v2487 = vadd.f32 0.0, %v2486
  %v2488 = vpop.f32.mrb[0].mxu0
  %2489 = vmatprep.mubr.bf16.mxu0 0
  %2490 = vmatmul.mubr.bf16.gmra.mrb[0].mxu0 %v1519
  %v2491 = vpop.f32.mrb[0].mxu0
  %v2492 = vadd.f32 0.0, %v2491
  %v2493 = vpop.f32.mrb[0].mxu0
  %v2494 = vpop.f32.mrb[0].mxu0
  %v2495 = vadd.f32 0.0, %v2494
  %v2496 = vpop.f32.mrb[0].mxu0
  %2497 = vmatprep.mubr.bf16.mxu0 0
  %2498 = vmatmul.mubr.bf16.gmra.mrb[0].mxu0 %v1522
  %v2499 = vpop.f32.mrb[0].mxu0
  %v2500 = vadd.f32 0.0, %v2499
  %v2501 = vpop.f32.mrb[0].mxu0
  %v2502 = vpop.f32.mrb[0].mxu0
  %v2503 = vadd.f32 0.0, %v2502
  %v2504 = vpop.f32.mrb[0].mxu0
  %2505 = vmatprep.mubr.bf16.mxu0 0
  %2506 = vmatmul.mubr.bf16.gmra.mrb[0].mxu0 %v1525
  %v2507 = vpop.f32.mrb[0].mxu0
  %v2508 = vadd.f32 0.0, %v2507
  %v2509 = vpop.f32.mrb[0].mxu0
  %v2510 = vpop.f32.mrb[0].mxu0
  %v2511 = vadd.f32 0.0, %v2510
  %v2512 = vpop.f32.mrb[0].mxu0
  %2513 = vmatprep.mubr.bf16.mxu0 0
  %2514 = vmatmul.mubr.bf16.gmra.mrb[0].mxu0 %v1528
  %v2515 = vpop.f32.mrb[0].mxu0
  %v2516 = vadd.f32 0.0, %v2515
  %v2517 = vpop.f32.mrb[0].mxu0
  %v2518 = vpop.f32.mrb[0].mxu0
  %v2519 = vadd.f32 0.0, %v2518
  %v2520 = vpop.f32.mrb[0].mxu0
  %2521 = vmatprep.mubr.bf16.mxu0 0
  %2522 = vmatmul.mubr.bf16.gmra.mrb[0].mxu0 %v1531
  %v2523 = vpop.f32.mrb[0].mxu0
  %v2524 = vadd.f32 0.0, %v2523
  %v2525 = vpop.f32.mrb[0].mxu0
  %v2526 = vpop.f32.mrb[0].mxu0
  %v2527 = vadd.f32 0.0, %v2526
  %v2528 = vpop.f32.mrb[0].mxu0
  %2529 = vmatprep.mubr.bf16.mxu0 0
  %2530 = vmatmul.mubr.bf16.gmra.mrb[0].mxu0 %v1534
  %v2531 = vpop.f32.mrb[0].mxu0
  %v2532 = vadd.f32 0.0, %v2531
  %v2533 = vpop.f32.mrb[0].mxu0
  %v2534 = vpop.f32.mrb[0].mxu0
  %v2535 = vadd.f32 0.0, %v2534
  %v2536 = vpop.f32.mrb[0].mxu0
  %2537 = vmatprep.mubr.bf16.mxu0 0
  %2538 = vmatmul.mubr.bf16.gmra.mrb[0].mxu0 %v1537
  %v2539 = vpop.f32.mrb[0].mxu0
  %v2540 = vadd.f32 0.0, %v2539
  %v2541 = vpop.f32.mrb[0].mxu0
  %v2542 = vpop.f32.mrb[0].mxu0
  %v2543 = vadd.f32 0.0, %v2542
  %v2544 = vpop.f32.mrb[0].mxu0
  %2545 = vmatprep.mubr.bf16.mxu0 0
  %2546 = vmatmul.mubr.bf16.gmra.mrb[0].mxu0 %v1540
  %v2547 = vpop.f32.mrb[0].mxu0
  %v2548 = vadd.f32 0.0, %v2547
  %v2549 = vpop.f32.mrb[0].mxu0
  %v2550 = vpop.f32.mrb[0].mxu0
  %v2551 = vadd.f32 0.0, %v2550
  %v2552 = vpop.f32.mrb[0].mxu0
  %2553 = vmatprep.mubr.bf16.mxu0 0
  %2554 = vmatmul.mubr.bf16.gmra.mrb[0].mxu0 %v1543
  %v2555 = vpop.f32.mrb[0].mxu0
  %v2556 = vadd.f32 0.0, %v2555
  %v2557 = vpop.f32.mrb[0].mxu0
  %v2558 = vpop.f32.mrb[0].mxu0
  %v2559 = vadd.f32 0.0, %v2558
  %v2560 = vpop.f32.mrb[0].mxu0
  %2561 = vmatprep.mubr.bf16.mxu0 0
  %2562 = vmatmul.mubr.bf16.gmra.mrb[0].mxu0 %v1546
  %v2563 = vpop.f32.mrb[0].mxu0
  %v2564 = vadd.f32 0.0, %v2563
  %v2565 = vpop.f32.mrb[0].mxu0
  %v2566 = vpop.f32.mrb[0].mxu0
  %v2567 = vadd.f32 0.0, %v2566
  %v2568 = vpop.f32.mrb[0].mxu0
  %2569 = vmatprep.mubr.bf16.mxu0 0
  %2570 = vmatmul.mubr.bf16.gmra.mrb[0].mxu0 %v1549
  %v2571 = vpop.f32.mrb[0].mxu0
  %v2572 = vadd.f32 0.0, %v2571
  %v2573 = vpop.f32.mrb[0].mxu0
  %v2574 = vpop.f32.mrb[0].mxu0
  %v2575 = vadd.f32 0.0, %v2574
  %v2576 = vpop.f32.mrb[0].mxu0
  %2577 = vmatprep.mubr.bf16.mxu0 0
  %2578 = vmatmul.mubr.bf16.gmra.mrb[0].mxu0 %v1552
  %v2579 = vpop.f32.mrb[0].mxu0
  %v2580 = vadd.f32 0.0, %v2579
  %v2581 = vpop.f32.mrb[0].mxu0
  %v2582 = vpop.f32.mrb[0].mxu0
  %v2583 = vadd.f32 0.0, %v2582
  %v2584 = vpop.f32.mrb[0].mxu0
  %2585 = vmatprep.mubr.bf16.mxu0 0
  %2586 = vmatmul.mubr.bf16.gmra.mrb[0].mxu0 %v1555
  %v2587 = vpop.f32.mrb[0].mxu0
  %v2588 = vadd.f32 0.0, %v2587
  %v2589 = vpop.f32.mrb[0].mxu0
  %v2590 = vpop.f32.mrb[0].mxu0
  %v2591 = vadd.f32 0.0, %v2590
  %v2592 = vpop.f32.mrb[0].mxu0
  %2593 = vmatprep.mubr.bf16.mxu0 0
  %2594 = vmatmul.mubr.bf16.gmra.mrb[0].mxu0 %v1558
  %v2595 = vpop.f32.mrb[0].mxu0
  %v2596 = vadd.f32 0.0, %v2595
  %v2597 = vpop.f32.mrb[0].mxu0
  %v2598 = vpop.f32.mrb[0].mxu0
  %v2599 = vadd.f32 0.0, %v2598
  %v2600 = vpop.f32.mrb[0].mxu0
  %2601 = vmatprep.mubr.bf16.mxu0 0
  %2602 = vmatmul.mubr.bf16.gmra.mrb[0].mxu0 %v1561
  %v2603 = vpop.f32.mrb[0].mxu0
  %v2604 = vadd.f32 0.0, %v2603
  %v2605 = vpop.f32.mrb[0].mxu0
  %v2606 = vpop.f32.mrb[0].mxu0
  %v2607 = vadd.f32 0.0, %v2606
  %v2608 = vpop.f32.mrb[0].mxu0
  %2609 = vmatprep.mubr.bf16.mxu0 0
  %2610 = vmatmul.mubr.bf16.gmra.mrb[0].mxu0 %v1564
  %v2611 = vpop.f32.mrb[0].mxu0
  %v2612 = vadd.f32 0.0, %v2611
  %v2613 = vpop.f32.mrb[0].mxu0
  %v2614 = vpop.f32.mrb[0].mxu0
  %v2615 = vadd.f32 0.0, %v2614
  %v2616 = vpop.f32.mrb[0].mxu0
  %2617 = vmatprep.mubr.bf16.mxu0 0
  %2618 = vmatmul.mubr.bf16.gmra.mrb[0].mxu0 %v1567
  %v2619 = vpop.f32.mrb[0].mxu0
  %v2620 = vadd.f32 0.0, %v2619
  %v2621 = vpop.f32.mrb[0].mxu0
  %v2622 = vpop.f32.mrb[0].mxu0
  %v2623 = vadd.f32 0.0, %v2622
  %v2624 = vpop.f32.mrb[0].mxu0
  %2625 = vdwg.mxu0
  %2626 = vst [vmem:[%s3] sm:$0xff] %v1604
  %2627 = vst [vmem:[%s3 + $0x8] sm:$0xff] %v1607
  %2628 = vst [vmem:[%s3 + $0x10] sm:$0xff] %v1612
  %2629 = vst [vmem:[%s3 + $0x18] sm:$0xff] %v1615
  %2630 = vst [vmem:[%s3 + $0x20] sm:$0xff] %v1620
  %2631 = vst [vmem:[%s3 + $0x28] sm:$0xff] %v1623
  %2632 = vst [vmem:[%s3 + $0x30] sm:$0xff] %v1628
  %2633 = vst [vmem:[%s3 + $0x38] sm:$0xff] %v1631
  %2634 = vst [vmem:[%s3 + $0x40] sm:$0xff] %v1636
  %2635 = vst [vmem:[%s3 + $0x48] sm:$0xff] %v1639
  %2636 = vst [vmem:[%s3 + $0x50] sm:$0xff] %v1644
  %2637 = vst [vmem:[%s3 + $0x58] sm:$0xff] %v1647
  %2638 = vst [vmem:[%s3 + $0x60] sm:$0xff] %v1652
  %2639 = vst [vmem:[%s3 + $0x68] sm:$0xff] %v1655
  %2640 = vst [vmem:[%s3 + $0x70] sm:$0xff] %v1660
  %2641 = vst [vmem:[%s3 + $0x78] sm:$0xff] %v1663
  %2642 = vst [vmem:[%s3 + $0x80] sm:$0xff] %v1668
  %2643 = vst [vmem:[%s3 + $0x88] sm:$0xff] %v1671
  %2644 = vst [vmem:[%s3 + $0x90] sm:$0xff] %v1676
  %2645 = vst [vmem:[%s3 + $0x98] sm:$0xff] %v1679
  %2646 = vst [vmem:[%s3 + $0xa0] sm:$0xff] %v1684
  %2647 = vst [vmem:[%s3 + $0xa8] sm:$0xff] %v1687
  %2648 = vst [vmem:[%s3 + $0xb0] sm:$0xff] %v1692
  %2649 = vst [vmem:[%s3 + $0xb8] sm:$0xff] %v1695
  %2650 = vst [vmem:[%s3 + $0xc0] sm:$0xff] %v1700
  %2651 = vst [vmem:[%s3 + $0xc8] sm:$0xff] %v1703
  %2652 = vst [vmem:[%s3 + $0xd0] sm:$0xff] %v1708
  %2653 = vst [vmem:[%s3 + $0xd8] sm:$0xff] %v1711
  %2654 = vst [vmem:[%s3 + $0xe0] sm:$0xff] %v1716
  %2655 = vst [vmem:[%s3 + $0xe8] sm:$0xff] %v1719
  %2656 = vst [vmem:[%s3 + $0xf0] sm:$0xff] %v1724
  %2657 = vst [vmem:[%s3 + $0xf8] sm:$0xff] %v1727
  %2658 = vst [vmem:[%s3 + $0x100] sm:$0xff] %v1732
  %2659 = vst [vmem:[%s3 + $0x108] sm:$0xff] %v1735
  %2660 = vst [vmem:[%s3 + $0x110] sm:$0xff] %v1740
  %2661 = vst [vmem:[%s3 + $0x118] sm:$0xff] %v1743
  %2662 = vst [vmem:[%s3 + $0x120] sm:$0xff] %v1748
  %2663 = vst [vmem:[%s3 + $0x128] sm:$0xff] %v1751
  %2664 = vst [vmem:[%s3 + $0x130] sm:$0xff] %v1756
  %2665 = vst [vmem:[%s3 + $0x138] sm:$0xff] %v1759
  %2666 = vst [vmem:[%s3 + $0x140] sm:$0xff] %v1764
  %2667 = vst [vmem:[%s3 + $0x148] sm:$0xff] %v1767
  %2668 = vst [vmem:[%s3 + $0x150] sm:$0xff] %v1772
  %2669 = vst [vmem:[%s3 + $0x158] sm:$0xff] %v1775
  %2670 = vst [vmem:[%s3 + $0x160] sm:$0xff] %v1780
  %2671 = vst [vmem:[%s3 + $0x168] sm:$0xff] %v1783
  %2672 = vst [vmem:[%s3 + $0x170] sm:$0xff] %v1788
  %2673 = vst [vmem:[%s3 + $0x178] sm:$0xff] %v1791
  %2674 = vst [vmem:[%s3 + $0x180] sm:$0xff] %v1796
  %2675 = vst [vmem:[%s3 + $0x188] sm:$0xff] %v1799
  %2676 = vst [vmem:[%s3 + $0x190] sm:$0xff] %v1804
  %2677 = vst [vmem:[%s3 + $0x198] sm:$0xff] %v1807
  %2678 = vst [vmem:[%s3 + $0x1a0] sm:$0xff] %v1812
  %2679 = vst [vmem:[%s3 + $0x1a8] sm:$0xff] %v1815
  %2680 = vst [vmem:[%s3 + $0x1b0] sm:$0xff] %v1820
  %2681 = vst [vmem:[%s3 + $0x1b8] sm:$0xff] %v1823
  %2682 = vst [vmem:[%s3 + $0x1c0] sm:$0xff] %v1828
  %2683 = vst [vmem:[%s3 + $0x1c8] sm:$0xff] %v1831
  %2684 = vst [vmem:[%s3 + $0x1d0] sm:$0xff] %v1836
  %2685 = vst [vmem:[%s3 + $0x1d8] sm:$0xff] %v1839
  %2686 = vst [vmem:[%s3 + $0x1e0] sm:$0xff] %v1844
  %2687 = vst [vmem:[%s3 + $0x1e8] sm:$0xff] %v1847
  %2688 = vst [vmem:[%s3 + $0x1f0] sm:$0xff] %v1852
  %2689 = vst [vmem:[%s3 + $0x1f8] sm:$0xff] %v1855
  %2690 = vst [vmem:[%s3 + $0x200] sm:$0xff] %v1860
  %2691 = vst [vmem:[%s3 + $0x208] sm:$0xff] %v1863
  %2692 = vst [vmem:[%s3 + $0x210] sm:$0xff] %v1868
  %2693 = vst [vmem:[%s3 + $0x218] sm:$0xff] %v1871
  %2694 = vst [vmem:[%s3 + $0x220] sm:$0xff] %v1876
  %2695 = vst [vmem:[%s3 + $0x228] sm:$0xff] %v1879
  %2696 = vst [vmem:[%s3 + $0x230] sm:$0xff] %v1884
  %2697 = vst [vmem:[%s3 + $0x238] sm:$0xff] %v1887
  %2698 = vst [vmem:[%s3 + $0x240] sm:$0xff] %v1892
  %2699 = vst [vmem:[%s3 + $0x248] sm:$0xff] %v1895
  %2700 = vst [vmem:[%s3 + $0x250] sm:$0xff] %v1900
  %2701 = vst [vmem:[%s3 + $0x258] sm:$0xff] %v1903
  %2702 = vst [vmem:[%s3 + $0x260] sm:$0xff] %v1908
  %2703 = vst [vmem:[%s3 + $0x268] sm:$0xff] %v1911
  %2704 = vst [vmem:[%s3 + $0x270] sm:$0xff] %v1916
  %2705 = vst [vmem:[%s3 + $0x278] sm:$0xff] %v1919
  %2706 = vst [vmem:[%s3 + $0x280] sm:$0xff] %v1924
  %2707 = vst [vmem:[%s3 + $0x288] sm:$0xff] %v1927
  %2708 = vst [vmem:[%s3 + $0x290] sm:$0xff] %v1932
  %2709 = vst [vmem:[%s3 + $0x298] sm:$0xff] %v1935
  %2710 = vst [vmem:[%s3 + $0x2a0] sm:$0xff] %v1940
  %2711 = vst [vmem:[%s3 + $0x2a8] sm:$0xff] %v1943
  %2712 = vst [vmem:[%s3 + $0x2b0] sm:$0xff] %v1948
  %2713 = vst [vmem:[%s3 + $0x2b8] sm:$0xff] %v1951
  %2714 = vst [vmem:[%s3 + $0x2c0] sm:$0xff] %v1956
  %2715 = vst [vmem:[%s3 + $0x2c8] sm:$0xff] %v1959
  %2716 = vst [vmem:[%s3 + $0x2d0] sm:$0xff] %v1964
  %2717 = vst [vmem:[%s3 + $0x2d8] sm:$0xff] %v1967
  %2718 = vst [vmem:[%s3 + $0x2e0] sm:$0xff] %v1972
  %2719 = vst [vmem:[%s3 + $0x2e8] sm:$0xff] %v1975
  %2720 = vst [vmem:[%s3 + $0x2f0] sm:$0xff] %v1980
  %2721 = vst [vmem:[%s3 + $0x2f8] sm:$0xff] %v1983
  %2722 = vst [vmem:[%s3 + $0x300] sm:$0xff] %v1988
  %2723 = vst [vmem:[%s3 + $0x308] sm:$0xff] %v1991
  %2724 = vst [vmem:[%s3 + $0x310] sm:$0xff] %v1996
  %2725 = vst [vmem:[%s3 + $0x318] sm:$0xff] %v1999
  %2726 = vst [vmem:[%s3 + $0x320] sm:$0xff] %v2004
  %2727 = vst [vmem:[%s3 + $0x328] sm:$0xff] %v2007
  %2728 = vst [vmem:[%s3 + $0x330] sm:$0xff] %v2012
  %2729 = vst [vmem:[%s3 + $0x338] sm:$0xff] %v2015
  %2730 = vst [vmem:[%s3 + $0x340] sm:$0xff] %v2020
  %2731 = vst [vmem:[%s3 + $0x348] sm:$0xff] %v2023
  %2732 = vst [vmem:[%s3 + $0x350] sm:$0xff] %v2028
  %2733 = vst [vmem:[%s3 + $0x358] sm:$0xff] %v2031
  %2734 = vst [vmem:[%s3 + $0x360] sm:$0xff] %v2036
  %2735 = vst [vmem:[%s3 + $0x368] sm:$0xff] %v2039
  %2736 = vst [vmem:[%s3 + $0x370] sm:$0xff] %v2044
  %2737 = vst [vmem:[%s3 + $0x378] sm:$0xff] %v2047
  %2738 = vst [vmem:[%s3 + $0x380] sm:$0xff] %v2052
  %2739 = vst [vmem:[%s3 + $0x388] sm:$0xff] %v2055
  %2740 = vst [vmem:[%s3 + $0x390] sm:$0xff] %v2060
  %2741 = vst [vmem:[%s3 + $0x398] sm:$0xff] %v2063
  %2742 = vst [vmem:[%s3 + $0x3a0] sm:$0xff] %v2068
  %2743 = vst [vmem:[%s3 + $0x3a8] sm:$0xff] %v2071
  %2744 = vst [vmem:[%s3 + $0x3b0] sm:$0xff] %v2076
  %2745 = vst [vmem:[%s3 + $0x3b8] sm:$0xff] %v2079
  %2746 = vst [vmem:[%s3 + $0x3c0] sm:$0xff] %v2084
  %2747 = vst [vmem:[%s3 + $0x3c8] sm:$0xff] %v2087
  %2748 = vst [vmem:[%s3 + $0x3d0] sm:$0xff] %v2092
  %2749 = vst [vmem:[%s3 + $0x3d8] sm:$0xff] %v2095
  %2750 = vst [vmem:[%s3 + $0x3e0] sm:$0xff] %v2100
  %2751 = vst [vmem:[%s3 + $0x3e8] sm:$0xff] %v2103
  %2752 = vst [vmem:[%s3 + $0x3f0] sm:$0xff] %v2108
  %2753 = vst [vmem:[%s3 + $0x3f8] sm:$0xff] %v2111
  %2754 = vst [vmem:[%s3 + $0x400] sm:$0xff] %v2116
  %2755 = vst [vmem:[%s3 + $0x408] sm:$0xff] %v2119
  %2756 = vst [vmem:[%s3 + $0x410] sm:$0xff] %v2124
  %2757 = vst [vmem:[%s3 + $0x418] sm:$0xff] %v2127
  %2758 = vst [vmem:[%s3 + $0x420] sm:$0xff] %v2132
  %2759 = vst [vmem:[%s3 + $0x428] sm:$0xff] %v2135
  %2760 = vst [vmem:[%s3 + $0x430] sm:$0xff] %v2140
  %2761 = vst [vmem:[%s3 + $0x438] sm:$0xff] %v2143
  %2762 = vst [vmem:[%s3 + $0x440] sm:$0xff] %v2148
  %2763 = vst [vmem:[%s3 + $0x448] sm:$0xff] %v2151
  %2764 = vst [vmem:[%s3 + $0x450] sm:$0xff] %v2156
  %2765 = vst [vmem:[%s3 + $0x458] sm:$0xff] %v2159
  %2766 = vst [vmem:[%s3 + $0x460] sm:$0xff] %v2164
  %2767 = vst [vmem:[%s3 + $0x468] sm:$0xff] %v2167
  %2768 = vst [vmem:[%s3 + $0x470] sm:$0xff] %v2172
  %2769 = vst [vmem:[%s3 + $0x478] sm:$0xff] %v2175
  %2770 = vst [vmem:[%s3 + $0x480] sm:$0xff] %v2180
  %2771 = vst [vmem:[%s3 + $0x488] sm:$0xff] %v2183
  %2772 = vst [vmem:[%s3 + $0x490] sm:$0xff] %v2188
  %2773 = vst [vmem:[%s3 + $0x498] sm:$0xff] %v2191
  %2774 = vst [vmem:[%s3 + $0x4a0] sm:$0xff] %v2196
  %2775 = vst [vmem:[%s3 + $0x4a8] sm:$0xff] %v2199
  %2776 = vst [vmem:[%s3 + $0x4b0] sm:$0xff] %v2204
  %2777 = vst [vmem:[%s3 + $0x4b8] sm:$0xff] %v2207
  %2778 = vst [vmem:[%s3 + $0x4c0] sm:$0xff] %v2212
  %2779 = vst [vmem:[%s3 + $0x4c8] sm:$0xff] %v2215
  %2780 = vst [vmem:[%s3 + $0x4d0] sm:$0xff] %v2220
  %2781 = vst [vmem:[%s3 + $0x4d8] sm:$0xff] %v2223
  %2782 = vst [vmem:[%s3 + $0x4e0] sm:$0xff] %v2228
  %2783 = vst [vmem:[%s3 + $0x4e8] sm:$0xff] %v2231
  %2784 = vst [vmem:[%s3 + $0x4f0] sm:$0xff] %v2236
  %2785 = vst [vmem:[%s3 + $0x4f8] sm:$0xff] %v2239
  %2786 = vst [vmem:[%s3 + $0x500] sm:$0xff] %v2244
  %2787 = vst [vmem:[%s3 + $0x508] sm:$0xff] %v2247
  %2788 = vst [vmem:[%s3 + $0x510] sm:$0xff] %v2252
  %2789 = vst [vmem:[%s3 + $0x518] sm:$0xff] %v2255
  %2790 = vst [vmem:[%s3 + $0x520] sm:$0xff] %v2260
  %2791 = vst [vmem:[%s3 + $0x528] sm:$0xff] %v2263
  %2792 = vst [vmem:[%s3 + $0x530] sm:$0xff] %v2268
  %2793 = vst [vmem:[%s3 + $0x538] sm:$0xff] %v2271
  %2794 = vst [vmem:[%s3 + $0x540] sm:$0xff] %v2276
  %2795 = vst [vmem:[%s3 + $0x548] sm:$0xff] %v2279
  %2796 = vst [vmem:[%s3 + $0x550] sm:$0xff] %v2284
  %2797 = vst [vmem:[%s3 + $0x558] sm:$0xff] %v2287
  %2798 = vst [vmem:[%s3 + $0x560] sm:$0xff] %v2292
  %2799 = vst [vmem:[%s3 + $0x568] sm:$0xff] %v2295
  %2800 = vst [vmem:[%s3 + $0x570] sm:$0xff] %v2300
  %2801 = vst [vmem:[%s3 + $0x578] sm:$0xff] %v2303
  %2802 = vst [vmem:[%s3 + $0x580] sm:$0xff] %v2308
  %2803 = vst [vmem:[%s3 + $0x588] sm:$0xff] %v2311
  %2804 = vst [vmem:[%s3 + $0x590] sm:$0xff] %v2316
  %2805 = vst [vmem:[%s3 + $0x598] sm:$0xff] %v2319
  %2806 = vst [vmem:[%s3 + $0x5a0] sm:$0xff] %v2324
  %2807 = vst [vmem:[%s3 + $0x5a8] sm:$0xff] %v2327
  %2808 = vst [vmem:[%s3 + $0x5b0] sm:$0xff] %v2332
  %2809 = vst [vmem:[%s3 + $0x5b8] sm:$0xff] %v2335
  %2810 = vst [vmem:[%s3 + $0x5c0] sm:$0xff] %v2340
  %2811 = vst [vmem:[%s3 + $0x5c8] sm:$0xff] %v2343
  %2812 = vst [vmem:[%s3 + $0x5d0] sm:$0xff] %v2348
  %2813 = vst [vmem:[%s3 + $0x5d8] sm:$0xff] %v2351
  %2814 = vst [vmem:[%s3 + $0x5e0] sm:$0xff] %v2356
  %2815 = vst [vmem:[%s3 + $0x5e8] sm:$0xff] %v2359
  %2816 = vst [vmem:[%s3 + $0x5f0] sm:$0xff] %v2364
  %2817 = vst [vmem:[%s3 + $0x5f8] sm:$0xff] %v2367
  %2818 = vst [vmem:[%s3 + $0x600] sm:$0xff] %v2372
  %2819 = vst [vmem:[%s3 + $0x608] sm:$0xff] %v2375
  %2820 = vst [vmem:[%s3 + $0x610] sm:$0xff] %v2380
  %2821 = vst [vmem:[%s3 + $0x618] sm:$0xff] %v2383
  %2822 = vst [vmem:[%s3 + $0x620] sm:$0xff] %v2388
  %2823 = vst [vmem:[%s3 + $0x628] sm:$0xff] %v2391
  %2824 = vst [vmem:[%s3 + $0x630] sm:$0xff] %v2396
  %2825 = vst [vmem:[%s3 + $0x638] sm:$0xff] %v2399
  %2826 = vst [vmem:[%s3 + $0x640] sm:$0xff] %v2404
  %2827 = vst [vmem:[%s3 + $0x648] sm:$0xff] %v2407
  %2828 = vst [vmem:[%s3 + $0x650] sm:$0xff] %v2412
  %2829 = vst [vmem:[%s3 + $0x658] sm:$0xff] %v2415
  %2830 = vst [vmem:[%s3 + $0x660] sm:$0xff] %v2420
  %2831 = vst [vmem:[%s3 + $0x668] sm:$0xff] %v2423
  %2832 = vst [vmem:[%s3 + $0x670] sm:$0xff] %v2428
  %2833 = vst [vmem:[%s3 + $0x678] sm:$0xff] %v2431
  %2834 = vst [vmem:[%s3 + $0x680] sm:$0xff] %v2436
  %2835 = vst [vmem:[%s3 + $0x688] sm:$0xff] %v2439
  %2836 = vst [vmem:[%s3 + $0x690] sm:$0xff] %v2444
  %2837 = vst [vmem:[%s3 + $0x698] sm:$0xff] %v2447
  %2838 = vst [vmem:[%s3 + $0x6a0] sm:$0xff] %v2452
  %2839 = vst [vmem:[%s3 + $0x6a8] sm:$0xff] %v2455
  %2840 = vst [vmem:[%s3 + $0x6b0] sm:$0xff] %v2460
  %2841 = vst [vmem:[%s3 + $0x6b8] sm:$0xff] %v2463
  %2842 = vst [vmem:[%s3 + $0x6c0] sm:$0xff] %v2468
  %2843 = vst [vmem:[%s3 + $0x6c8] sm:$0xff] %v2471
  %2844 = vst [vmem:[%s3 + $0x6d0] sm:$0xff] %v2476
  %2845 = vst [vmem:[%s3 + $0x6d8] sm:$0xff] %v2479
  %2846 = vst [vmem:[%s3 + $0x6e0] sm:$0xff] %v2484
  %2847 = vst [vmem:[%s3 + $0x6e8] sm:$0xff] %v2487
  %2848 = vst [vmem:[%s3 + $0x6f0] sm:$0xff] %v2492
  %2849 = vst [vmem:[%s3 + $0x6f8] sm:$0xff] %v2495
  %2850 = vst [vmem:[%s3 + $0x700] sm:$0xff] %v2500
  %2851 = vst [vmem:[%s3 + $0x708] sm:$0xff] %v2503
  %2852 = vst [vmem:[%s3 + $0x710] sm:$0xff] %v2508
  %2853 = vst [vmem:[%s3 + $0x718] sm:$0xff] %v2511
  %2854 = vst [vmem:[%s3 + $0x720] sm:$0xff] %v2516
  %2855 = vst [vmem:[%s3 + $0x728] sm:$0xff] %v2519
  %2856 = vst [vmem:[%s3 + $0x730] sm:$0xff] %v2524
  %2857 = vst [vmem:[%s3 + $0x738] sm:$0xff] %v2527
  %2858 = vst [vmem:[%s3 + $0x740] sm:$0xff] %v2532
  %2859 = vst [vmem:[%s3 + $0x748] sm:$0xff] %v2535
  %2860 = vst [vmem:[%s3 + $0x750] sm:$0xff] %v2540
  %2861 = vst [vmem:[%s3 + $0x758] sm:$0xff] %v2543
  %2862 = vst [vmem:[%s3 + $0x760] sm:$0xff] %v2548
  %2863 = vst [vmem:[%s3 + $0x768] sm:$0xff] %v2551
  %2864 = vst [vmem:[%s3 + $0x770] sm:$0xff] %v2556
  %2865 = vst [vmem:[%s3 + $0x778] sm:$0xff] %v2559
  %2866 = vst [vmem:[%s3 + $0x780] sm:$0xff] %v2564
  %2867 = vst [vmem:[%s3 + $0x788] sm:$0xff] %v2567
  %2868 = vst [vmem:[%s3 + $0x790] sm:$0xff] %v2572
  %2869 = vst [vmem:[%s3 + $0x798] sm:$0xff] %v2575
  %2870 = vst [vmem:[%s3 + $0x7a0] sm:$0xff] %v2580
  %2871 = vst [vmem:[%s3 + $0x7a8] sm:$0xff] %v2583
  %2872 = vst [vmem:[%s3 + $0x7b0] sm:$0xff] %v2588
  %2873 = vst [vmem:[%s3 + $0x7b8] sm:$0xff] %v2591
  %2874 = vst [vmem:[%s3 + $0x7c0] sm:$0xff] %v2596
  %2875 = vst [vmem:[%s3 + $0x7c8] sm:$0xff] %v2599
  %2876 = vst [vmem:[%s3 + $0x7d0] sm:$0xff] %v2604
  %2877 = vst [vmem:[%s3 + $0x7d8] sm:$0xff] %v2607
  %2878 = vst [vmem:[%s3 + $0x7e0] sm:$0xff] %v2612
  %2879 = vst [vmem:[%s3 + $0x7e8] sm:$0xff] %v2615
  %2880 = vst [vmem:[%s3 + $0x7f0] sm:$0xff] %v2620
  %2881 = vst [vmem:[%s3 + $0x7f8] sm:$0xff] %v2623
  // Predicated region
  $region14: #{generator_forward.18} parent=0 // pred_check
    _
  $region15: #{generator_forward.18} parent=0 // pred_check_branch
    %2883 = sbr.rel (0) target = $region17
  $region16: #{generator_forward.18} parent=0 // pred_region
    _
  $region17: #{generator_forward.18} parent=0 // pred_fallthru
    _
  // Predicated region
  $region18: #{generator_forward.18} parent=0 // pred_check
    _
  $region19: #{generator_forward.18} parent=0 // pred_check_branch
    %2885 = sbr.rel (0) target = $region21
  $region20: #{generator_forward.18} parent=0 // pred_region
    _
  $region21: #{generator_forward.18} parent=0 // pred_fallthru
    _

// kernel: tile.8
$region0: #{tile.8}
  #allocation0 [shape = 's32[1]{0}', space=sflag, size = 0x4, scoped, tag = 'scoped memory for tile.8']
  %s0 = inlined_call_operand.vmem [shape: f32[3], index: 0, kind: input, shape index: {}]
  %s1 = inlined_call_operand.vmem [shape: f32[128,3], index: 1, kind: output, shape index: {}]
  // Predicated region
  $region2: #{tile.8} parent=0 // pred_check
    _
  $region3: #{tile.8} parent=0 // pred_check_branch
    %3 = sbr.rel (0) target = $region5
  $region4: #{tile.8} parent=0 // pred_region
    _
  $region5: #{tile.8} parent=0 // pred_fallthru
    _
  %v4 = vld [vmem:[%s0] ss:$0 sm:$0xff]
  %5 = vst [vmem:[%s1] sm:$0xff] %v4
  %s6 = scalar_lea.vmem %s1, 8
  %7 = vst [vmem:[%s6] sm:$0xff] %v4
  %s8 = scalar_lea.vmem %s1, 16
  %9 = vst [vmem:[%s8] sm:$0xff] %v4
  %s10 = scalar_lea.vmem %s1, 24
  %11 = vst [vmem:[%s10] sm:$0xff] %v4
  %s12 = scalar_lea.vmem %s1, 32
  %13 = vst [vmem:[%s12] sm:$0xff] %v4
  %s14 = scalar_lea.vmem %s1, 40
  %15 = vst [vmem:[%s14] sm:$0xff] %v4
  %s16 = scalar_lea.vmem %s1, 48
  %17 = vst [vmem:[%s16] sm:$0xff] %v4
  %s18 = scalar_lea.vmem %s1, 56
  %19 = vst [vmem:[%s18] sm:$0xff] %v4
  %s20 = scalar_lea.vmem %s1, 64
  %21 = vst [vmem:[%s20] sm:$0xff] %v4
  %s22 = scalar_lea.vmem %s1, 72
  %23 = vst [vmem:[%s22] sm:$0xff] %v4
  %s24 = scalar_lea.vmem %s1, 80
  %25 = vst [vmem:[%s24] sm:$0xff] %v4
  %s26 = scalar_lea.vmem %s1, 88
  %27 = vst [vmem:[%s26] sm:$0xff] %v4
  %s28 = scalar_lea.vmem %s1, 96
  %29 = vst [vmem:[%s28] sm:$0xff] %v4
  %s30 = scalar_lea.vmem %s1, 104
  %31 = vst [vmem:[%s30] sm:$0xff] %v4
  %s32 = scalar_lea.vmem %s1, 112
  %33 = vst [vmem:[%s32] sm:$0xff] %v4
  %s34 = scalar_lea.vmem %s1, 120
  %35 = vst [vmem:[%s34] sm:$0xff] %v4

// kernel: tile.9
$region0: #{tile.9}
  %s0 = inlined_call_operand.vmem [shape: f32[128,3], index: 0, kind: input, shape index: {}]
  %s1 = inlined_call_operand.vmem [shape: f32[1,384], index: 1, kind: output, shape index: {}]
  $region1: #{tile.9} parent=0
    #allocation0 [shape = 'u8[12288]{0}', space=vmem, size = 0x3000, scoped, tag = 'scoped mem for output reshape']
    %v2 = vld [vmem:[%s0] sm:$0x1]
    %vm3 = vcmask 23552
    %4 = vst.msk [vmem:[#allocation0] sm:$0x1] %vm3, %v2
    %s5 = scalar_lea.vmem %s0, 85
    %v6 = vld [vmem:[%s5] sm:$0x1]
    %s7 = scalar_lea.vmem %s0, 85
    %v8 = vld [vmem:[%s7] sm:$0x1]
    %vm9 = vcmask 7168
    %v10 = vsel %vm9, %v8, %v6
    %11 = vrot.lane.b32.xlu0 %v10, 127
    %v12 = vpop.permute.xlu0 %11
    %vm13 = vcmask 15360
    %s14 = scalar_lea.vmem [#allocation0], 16
    %15 = vst.msk [vmem:[%s14] sm:$0x1] %vm13, %v12
    %vm16 = vcmask 1048568
    %s17 = scalar_lea.vmem [#allocation0], 8
    %18 = vst.msk [vmem:[%s17] sm:$0x1] %vm16, %v12
    %s19 = scalar_lea.vmem %s0, 42
    %v20 = vld [vmem:[%s19] sm:$0x1]
    %s21 = scalar_lea.vmem %s0, 42
    %v22 = vld [vmem:[%s21] sm:$0x1]
    %vm23 = vcmask 15360
    %v24 = vsel %vm23, %v22, %v20
    %25 = vrot.lane.b32.xlu0 %v24, 126
    %v26 = vpop.permute.xlu0 %25
    %vm27 = vcmask 7168
    %s28 = scalar_lea.vmem [#allocation0], 8
    %29 = vst.msk [vmem:[%s28] sm:$0x1] %vm27, %v26
    %vm30 = vcmask 1048560
    %31 = vst.msk [vmem:[#allocation0] sm:$0x1] %vm30, %v26
    %s32 = scalar_lea.vmem %s0, 127
    %v33 = vld [vmem:[%s32] sm:$0x1]
    %34 = vrot.lane.b32.xlu0 %v33, 125
    %v35 = vpop.permute.xlu0 %34
    %vm36 = vcmask 1048552
    %s37 = scalar_lea.vmem [#allocation0], 16
    %38 = vst.msk [vmem:[%s37] sm:$0x1] %vm36, %v35
    %s39 = scalar_lea.vmem %s0, 84
    %v40 = vld [vmem:[%s39] sm:$0x1]
    %41 = vrot.lane.b32.xlu0 %v40, 124
    %v42 = vpop.permute.xlu0 %41
    %vm43 = vcmask 1040352
    %s44 = scalar_lea.vmem [#allocation0], 8
    %45 = vst.msk [vmem:[%s44] sm:$0x1] %vm43, %v42
    %s46 = scalar_lea.vmem %s0, 41
    %v47 = vld [vmem:[%s46] sm:$0x1]
    %48 = vrot.lane.b32.xlu0 %v47, 123
    %v49 = vpop.permute.xlu0 %48
    %vm50 = vcmask 1032152
    %51 = vst.msk [vmem:[#allocation0] sm:$0x1] %vm50, %v49
    %s52 = scalar_lea.vmem %s0, 126
    %v53 = vld [vmem:[%s52] sm:$0x1]
    %54 = vrot.lane.b32.xlu0 %v53, 122
    %v55 = vpop.permute.xlu0 %54
    %vm56 = vcmask 1023952
    %s57 = scalar_lea.vmem [#allocation0], 16
    %58 = vst.msk [vmem:[%s57] sm:$0x1] %vm56, %v55
    %s59 = scalar_lea.vmem %s0, 83
    %v60 = vld [vmem:[%s59] sm:$0x1]
    %61 = vrot.lane.b32.xlu0 %v60, 121
    %v62 = vpop.permute.xlu0 %61
    %vm63 = vcmask 1015752
    %s64 = scalar_lea.vmem [#allocation0], 8
    %65 = vst.msk [vmem:[%s64] sm:$0x1] %vm63, %v62
    %s66 = scalar_lea.vmem %s0, 40
    %v67 = vld [vmem:[%s66] sm:$0x1]
    %68 = vrot.lane.b32.xlu0 %v67, 120
    %v69 = vpop.permute.xlu0 %68
    %vm70 = vcmask 1007552
    %71 = vst.msk [vmem:[#allocation0] sm:$0x1] %vm70, %v69
    %s72 = scalar_lea.vmem %s0, 125
    %v73 = vld [vmem:[%s72] sm:$0x1]
    %74 = vrot.lane.b32.xlu0 %v73, 119
    %v75 = vpop.permute.xlu0 %74
    %vm76 = vcmask 999352
    %s77 = scalar_lea.vmem [#allocation0], 16
    %78 = vst.msk [vmem:[%s77] sm:$0x1] %vm76, %v75
    %s79 = scalar_lea.vmem %s0, 82
    %v80 = vld [vmem:[%s79] sm:$0x1]
    %81 = vrot.lane.b32.xlu0 %v80, 118
    %v82 = vpop.permute.xlu0 %81
    %vm83 = vcmask 991152
    %s84 = scalar_lea.vmem [#allocation0], 8
    %85 = vst.msk [vmem:[%s84] sm:$0x1] %vm83, %v82
    %s86 = scalar_lea.vmem %s0, 39
    %v87 = vld [vmem:[%s86] sm:$0x1]
    %88 = vrot.lane.b32.xlu0 %v87, 117
    %v89 = vpop.permute.xlu0 %88
    %vm90 = vcmask 982952
    %91 = vst.msk [vmem:[#allocation0] sm:$0x1] %vm90, %v89
    %s92 = scalar_lea.vmem %s0, 124
    %v93 = vld [vmem:[%s92] sm:$0x1]
    %94 = vrot.lane.b32.xlu0 %v93, 116
    %v95 = vpop.permute.xlu0 %94
    %vm96 = vcmask 974752
    %s97 = scalar_lea.vmem [#allocation0], 16
    %98 = vst.msk [vmem:[%s97] sm:$0x1] %vm96, %v95
    %s99 = scalar_lea.vmem %s0, 81
    %v100 = vld [vmem:[%s99] sm:$0x1]
    %101 = vrot.lane.b32.xlu0 %v100, 115
    %v102 = vpop.permute.xlu0 %101
    %vm103 = vcmask 966552
    %s104 = scalar_lea.vmem [#allocation0], 8
    %105 = vst.msk [vmem:[%s104] sm:$0x1] %vm103, %v102
    %s106 = scalar_lea.vmem %s0, 38
    %v107 = vld [vmem:[%s106] sm:$0x1]
    %108 = vrot.lane.b32.xlu0 %v107, 114
    %v109 = vpop.permute.xlu0 %108
    %vm110 = vcmask 958352
    %111 = vst.msk [vmem:[#allocation0] sm:$0x1] %vm110, %v109
    %s112 = scalar_lea.vmem %s0, 123
    %v113 = vld [vmem:[%s112] sm:$0x1]
    %114 = vrot.lane.b32.xlu0 %v113, 113
    %v115 = vpop.permute.xlu0 %114
    %vm116 = vcmask 950152
    %s117 = scalar_lea.vmem [#allocation0], 16
    %118 = vst.msk [vmem:[%s117] sm:$0x1] %vm116, %v115
    %s119 = scalar_lea.vmem %s0, 80
    %v120 = vld [vmem:[%s119] sm:$0x1]
    %121 = vrot.lane.b32.xlu0 %v120, 112
    %v122 = vpop.permute.xlu0 %121
    %vm123 = vcmask 941952
    %s124 = scalar_lea.vmem [#allocation0], 8
    %125 = vst.msk [vmem:[%s124] sm:$0x1] %vm123, %v122
    %s126 = scalar_lea.vmem %s0, 37
    %v127 = vld [vmem:[%s126] sm:$0x1]
    %128 = vrot.lane.b32.xlu0 %v127, 111
    %v129 = vpop.permute.xlu0 %128
    %vm130 = vcmask 933752
    %131 = vst.msk [vmem:[#allocation0] sm:$0x1] %vm130, %v129
    %s132 = scalar_lea.vmem %s0, 122
    %v133 = vld [vmem:[%s132] sm:$0x1]
    %134 = vrot.lane.b32.xlu0 %v133, 110
    %v135 = vpop.permute.xlu0 %134
    %vm136 = vcmask 925552
    %s137 = scalar_lea.vmem [#allocation0], 16
    %138 = vst.msk [vmem:[%s137] sm:$0x1] %vm136, %v135
    %s139 = scalar_lea.vmem %s0, 79
    %v140 = vld [vmem:[%s139] sm:$0x1]
    %141 = vrot.lane.b32.xlu0 %v140, 109
    %v142 = vpop.permute.xlu0 %141
    %vm143 = vcmask 917352
    %s144 = scalar_lea.vmem [#allocation0], 8
    %145 = vst.msk [vmem:[%s144] sm:$0x1] %vm143, %v142
    %s146 = scalar_lea.vmem %s0, 36
    %v147 = vld [vmem:[%s146] sm:$0x1]
    %148 = vrot.lane.b32.xlu0 %v147, 108
    %v149 = vpop.permute.xlu0 %148
    %vm150 = vcmask 909152
    %151 = vst.msk [vmem:[#allocation0] sm:$0x1] %vm150, %v149
    %s152 = scalar_lea.vmem %s0, 121
    %v153 = vld [vmem:[%s152] sm:$0x1]
    %154 = vrot.lane.b32.xlu0 %v153, 107
    %v155 = vpop.permute.xlu0 %154
    %vm156 = vcmask 900952
    %s157 = scalar_lea.vmem [#allocation0], 16
    %158 = vst.msk [vmem:[%s157] sm:$0x1] %vm156, %v155
    %s159 = scalar_lea.vmem %s0, 78
    %v160 = vld [vmem:[%s159] sm:$0x1]
    %161 = vrot.lane.b32.xlu0 %v160, 106
    %v162 = vpop.permute.xlu0 %161
    %vm163 = vcmask 892752
    %s164 = scalar_lea.vmem [#allocation0], 8
    %165 = vst.msk [vmem:[%s164] sm:$0x1] %vm163, %v162
    %s166 = scalar_lea.vmem %s0, 35
    %v167 = vld [vmem:[%s166] sm:$0x1]
    %168 = vrot.lane.b32.xlu0 %v167, 105
    %v169 = vpop.permute.xlu0 %168
    %vm170 = vcmask 884552
    %171 = vst.msk [vmem:[#allocation0] sm:$0x1] %vm170, %v169
    %s172 = scalar_lea.vmem %s0, 120
    %v173 = vld [vmem:[%s172] sm:$0x1]
    %174 = vrot.lane.b32.xlu0 %v173, 104
    %v175 = vpop.permute.xlu0 %174
    %vm176 = vcmask 876352
    %s177 = scalar_lea.vmem [#allocation0], 16
    %178 = vst.msk [vmem:[%s177] sm:$0x1] %vm176, %v175
    %s179 = scalar_lea.vmem %s0, 77
    %v180 = vld [vmem:[%s179] sm:$0x1]
    %181 = vrot.lane.b32.xlu0 %v180, 103
    %v182 = vpop.permute.xlu0 %181
    %vm183 = vcmask 868152
    %s184 = scalar_lea.vmem [#allocation0], 8
    %185 = vst.msk [vmem:[%s184] sm:$0x1] %vm183, %v182
    %s186 = scalar_lea.vmem %s0, 34
    %v187 = vld [vmem:[%s186] sm:$0x1]
    %188 = vrot.lane.b32.xlu0 %v187, 102
    %v189 = vpop.permute.xlu0 %188
    %vm190 = vcmask 859952
    %191 = vst.msk [vmem:[#allocation0] sm:$0x1] %vm190, %v189
    %s192 = scalar_lea.vmem %s0, 119
    %v193 = vld [vmem:[%s192] sm:$0x1]
    %194 = vrot.lane.b32.xlu0 %v193, 101
    %v195 = vpop.permute.xlu0 %194
    %vm196 = vcmask 851752
    %s197 = scalar_lea.vmem [#allocation0], 16
    %198 = vst.msk [vmem:[%s197] sm:$0x1] %vm196, %v195
    %s199 = scalar_lea.vmem %s0, 76
    %v200 = vld [vmem:[%s199] sm:$0x1]
    %201 = vrot.lane.b32.xlu0 %v200, 100
    %v202 = vpop.permute.xlu0 %201
    %vm203 = vcmask 843552
    %s204 = scalar_lea.vmem [#allocation0], 8
    %205 = vst.msk [vmem:[%s204] sm:$0x1] %vm203, %v202
    %s206 = scalar_lea.vmem %s0, 33
    %v207 = vld [vmem:[%s206] sm:$0x1]
    %208 = vrot.lane.b32.xlu0 %v207, 99
    %v209 = vpop.permute.xlu0 %208
    %vm210 = vcmask 835352
    %211 = vst.msk [vmem:[#allocation0] sm:$0x1] %vm210, %v209
    %s212 = scalar_lea.vmem %s0, 118
    %v213 = vld [vmem:[%s212] sm:$0x1]
    %214 = vrot.lane.b32.xlu0 %v213, 98
    %v215 = vpop.permute.xlu0 %214
    %vm216 = vcmask 827152
    %s217 = scalar_lea.vmem [#allocation0], 16
    %218 = vst.msk [vmem:[%s217] sm:$0x1] %vm216, %v215
    %s219 = scalar_lea.vmem %s0, 75
    %v220 = vld [vmem:[%s219] sm:$0x1]
    %221 = vrot.lane.b32.xlu0 %v220, 97
    %v222 = vpop.permute.xlu0 %221
    %vm223 = vcmask 818952
    %s224 = scalar_lea.vmem [#allocation0], 8
    %225 = vst.msk [vmem:[%s224] sm:$0x1] %vm223, %v222
    %s226 = scalar_lea.vmem %s0, 32
    %v227 = vld [vmem:[%s226] sm:$0x1]
    %228 = vrot.lane.b32.xlu0 %v227, 96
    %v229 = vpop.permute.xlu0 %228
    %vm230 = vcmask 810752
    %231 = vst.msk [vmem:[#allocation0] sm:$0x1] %vm230, %v229
    %s232 = scalar_lea.vmem %s0, 117
    %v233 = vld [vmem:[%s232] sm:$0x1]
    %234 = vrot.lane.b32.xlu0 %v233, 95
    %v235 = vpop.permute.xlu0 %234
    %vm236 = vcmask 802552
    %s237 = scalar_lea.vmem [#allocation0], 16
    %238 = vst.msk [vmem:[%s237] sm:$0x1] %vm236, %v235
    %s239 = scalar_lea.vmem %s0, 74
    %v240 = vld [vmem:[%s239] sm:$0x1]
    %241 = vrot.lane.b32.xlu0 %v240, 94
    %v242 = vpop.permute.xlu0 %241
    %vm243 = vcmask 794352
    %s244 = scalar_lea.vmem [#allocation0], 8
    %245 = vst.msk [vmem:[%s244] sm:$0x1] %vm243, %v242
    %s246 = scalar_lea.vmem %s0, 31
    %v247 = vld [vmem:[%s246] sm:$0x1]
    %248 = vrot.lane.b32.xlu0 %v247, 93
    %v249 = vpop.permute.xlu0 %248
    %vm250 = vcmask 786152
    %251 = vst.msk [vmem:[#allocation0] sm:$0x1] %vm250, %v249
    %s252 = scalar_lea.vmem %s0, 116
    %v253 = vld [vmem:[%s252] sm:$0x1]
    %254 = vrot.lane.b32.xlu0 %v253, 92
    %v255 = vpop.permute.xlu0 %254
    %vm256 = vcmask 777952
    %s257 = scalar_lea.vmem [#allocation0], 16
    %258 = vst.msk [vmem:[%s257] sm:$0x1] %vm256, %v255
    %s259 = scalar_lea.vmem %s0, 73
    %v260 = vld [vmem:[%s259] sm:$0x1]
    %261 = vrot.lane.b32.xlu0 %v260, 91
    %v262 = vpop.permute.xlu0 %261
    %vm263 = vcmask 769752
    %s264 = scalar_lea.vmem [#allocation0], 8
    %265 = vst.msk [vmem:[%s264] sm:$0x1] %vm263, %v262
    %s266 = scalar_lea.vmem %s0, 30
    %v267 = vld [vmem:[%s266] sm:$0x1]
    %268 = vrot.lane.b32.xlu0 %v267, 90
    %v269 = vpop.permute.xlu0 %268
    %vm270 = vcmask 761552
    %271 = vst.msk [vmem:[#allocation0] sm:$0x1] %vm270, %v269
    %s272 = scalar_lea.vmem %s0, 115
    %v273 = vld [vmem:[%s272] sm:$0x1]
    %274 = vrot.lane.b32.xlu0 %v273, 89
    %v275 = vpop.permute.xlu0 %274
    %vm276 = vcmask 753352
    %s277 = scalar_lea.vmem [#allocation0], 16
    %278 = vst.msk [vmem:[%s277] sm:$0x1] %vm276, %v275
    %s279 = scalar_lea.vmem %s0, 72
    %v280 = vld [vmem:[%s279] sm:$0x1]
    %281 = vrot.lane.b32.xlu0 %v280, 88
    %v282 = vpop.permute.xlu0 %281
    %vm283 = vcmask 745152
    %s284 = scalar_lea.vmem [#allocation0], 8
    %285 = vst.msk [vmem:[%s284] sm:$0x1] %vm283, %v282
    %s286 = scalar_lea.vmem %s0, 29
    %v287 = vld [vmem:[%s286] sm:$0x1]
    %288 = vrot.lane.b32.xlu0 %v287, 87
    %v289 = vpop.permute.xlu0 %288
    %vm290 = vcmask 736952
    %291 = vst.msk [vmem:[#allocation0] sm:$0x1] %vm290, %v289
    %s292 = scalar_lea.vmem %s0, 114
    %v293 = vld [vmem:[%s292] sm:$0x1]
    %294 = vrot.lane.b32.xlu0 %v293, 86
    %v295 = vpop.permute.xlu0 %294
    %vm296 = vcmask 728752
    %s297 = scalar_lea.vmem [#allocation0], 16
    %298 = vst.msk [vmem:[%s297] sm:$0x1] %vm296, %v295
    %s299 = scalar_lea.vmem %s0, 71
    %v300 = vld [vmem:[%s299] sm:$0x1]
    %301 = vrot.lane.b32.xlu0 %v300, 85
    %v302 = vpop.permute.xlu0 %301
    %vm303 = vcmask 720552
    %s304 = scalar_lea.vmem [#allocation0], 8
    %305 = vst.msk [vmem:[%s304] sm:$0x1] %vm303, %v302
    %s306 = scalar_lea.vmem %s0, 28
    %v307 = vld [vmem:[%s306] sm:$0x1]
    %308 = vrot.lane.b32.xlu0 %v307, 84
    %v309 = vpop.permute.xlu0 %308
    %vm310 = vcmask 712352
    %311 = vst.msk [vmem:[#allocation0] sm:$0x1] %vm310, %v309
    %s312 = scalar_lea.vmem %s0, 113
    %v313 = vld [vmem:[%s312] sm:$0x1]
    %314 = vrot.lane.b32.xlu0 %v313, 83
    %v315 = vpop.permute.xlu0 %314
    %vm316 = vcmask 704152
    %s317 = scalar_lea.vmem [#allocation0], 16
    %318 = vst.msk [vmem:[%s317] sm:$0x1] %vm316, %v315
    %s319 = scalar_lea.vmem %s0, 70
    %v320 = vld [vmem:[%s319] sm:$0x1]
    %321 = vrot.lane.b32.xlu0 %v320, 82
    %v322 = vpop.permute.xlu0 %321
    %vm323 = vcmask 695952
    %s324 = scalar_lea.vmem [#allocation0], 8
    %325 = vst.msk [vmem:[%s324] sm:$0x1] %vm323, %v322
    %s326 = scalar_lea.vmem %s0, 27
    %v327 = vld [vmem:[%s326] sm:$0x1]
    %328 = vrot.lane.b32.xlu0 %v327, 81
    %v329 = vpop.permute.xlu0 %328
    %vm330 = vcmask 687752
    %331 = vst.msk [vmem:[#allocation0] sm:$0x1] %vm330, %v329
    %s332 = scalar_lea.vmem %s0, 112
    %v333 = vld [vmem:[%s332] sm:$0x1]
    %334 = vrot.lane.b32.xlu0 %v333, 80
    %v335 = vpop.permute.xlu0 %334
    %vm336 = vcmask 679552
    %s337 = scalar_lea.vmem [#allocation0], 16
    %338 = vst.msk [vmem:[%s337] sm:$0x1] %vm336, %v335
    %s339 = scalar_lea.vmem %s0, 69
    %v340 = vld [vmem:[%s339] sm:$0x1]
    %341 = vrot.lane.b32.xlu0 %v340, 79
    %v342 = vpop.permute.xlu0 %341
    %vm343 = vcmask 671352
    %s344 = scalar_lea.vmem [#allocation0], 8
    %345 = vst.msk [vmem:[%s344] sm:$0x1] %vm343, %v342
    %s346 = scalar_lea.vmem %s0, 26
    %v347 = vld [vmem:[%s346] sm:$0x1]
    %348 = vrot.lane.b32.xlu0 %v347, 78
    %v349 = vpop.permute.xlu0 %348
    %vm350 = vcmask 663152
    %351 = vst.msk [vmem:[#allocation0] sm:$0x1] %vm350, %v349
    %s352 = scalar_lea.vmem %s0, 111
    %v353 = vld [vmem:[%s352] sm:$0x1]
    %354 = vrot.lane.b32.xlu0 %v353, 77
    %v355 = vpop.permute.xlu0 %354
    %vm356 = vcmask 654952
    %s357 = scalar_lea.vmem [#allocation0], 16
    %358 = vst.msk [vmem:[%s357] sm:$0x1] %vm356, %v355
    %s359 = scalar_lea.vmem %s0, 68
    %v360 = vld [vmem:[%s359] sm:$0x1]
    %361 = vrot.lane.b32.xlu0 %v360, 76
    %v362 = vpop.permute.xlu0 %361
    %vm363 = vcmask 646752
    %s364 = scalar_lea.vmem [#allocation0], 8
    %365 = vst.msk [vmem:[%s364] sm:$0x1] %vm363, %v362
    %s366 = scalar_lea.vmem %s0, 25
    %v367 = vld [vmem:[%s366] sm:$0x1]
    %368 = vrot.lane.b32.xlu0 %v367, 75
    %v369 = vpop.permute.xlu0 %368
    %vm370 = vcmask 638552
    %371 = vst.msk [vmem:[#allocation0] sm:$0x1] %vm370, %v369
    %s372 = scalar_lea.vmem %s0, 110
    %v373 = vld [vmem:[%s372] sm:$0x1]
    %374 = vrot.lane.b32.xlu0 %v373, 74
    %v375 = vpop.permute.xlu0 %374
    %vm376 = vcmask 630352
    %s377 = scalar_lea.vmem [#allocation0], 16
    %378 = vst.msk [vmem:[%s377] sm:$0x1] %vm376, %v375
    %s379 = scalar_lea.vmem %s0, 67
    %v380 = vld [vmem:[%s379] sm:$0x1]
    %381 = vrot.lane.b32.xlu0 %v380, 73
    %v382 = vpop.permute.xlu0 %381
    %vm383 = vcmask 622152
    %s384 = scalar_lea.vmem [#allocation0], 8
    %385 = vst.msk [vmem:[%s384] sm:$0x1] %vm383, %v382
    %s386 = scalar_lea.vmem %s0, 24
    %v387 = vld [vmem:[%s386] sm:$0x1]
    %388 = vrot.lane.b32.xlu0 %v387, 72
    %v389 = vpop.permute.xlu0 %388
    %vm390 = vcmask 613952
    %391 = vst.msk [vmem:[#allocation0] sm:$0x1] %vm390, %v389
    %s392 = scalar_lea.vmem %s0, 109
    %v393 = vld [vmem:[%s392] sm:$0x1]
    %394 = vrot.lane.b32.xlu0 %v393, 71
    %v395 = vpop.permute.xlu0 %394
    %vm396 = vcmask 605752
    %s397 = scalar_lea.vmem [#allocation0], 16
    %398 = vst.msk [vmem:[%s397] sm:$0x1] %vm396, %v395
    %s399 = scalar_lea.vmem %s0, 66
    %v400 = vld [vmem:[%s399] sm:$0x1]
    %401 = vrot.lane.b32.xlu0 %v400, 70
    %v402 = vpop.permute.xlu0 %401
    %vm403 = vcmask 597552
    %s404 = scalar_lea.vmem [#allocation0], 8
    %405 = vst.msk [vmem:[%s404] sm:$0x1] %vm403, %v402
    %s406 = scalar_lea.vmem %s0, 23
    %v407 = vld [vmem:[%s406] sm:$0x1]
    %408 = vrot.lane.b32.xlu0 %v407, 69
    %v409 = vpop.permute.xlu0 %408
    %vm410 = vcmask 589352
    %411 = vst.msk [vmem:[#allocation0] sm:$0x1] %vm410, %v409
    %s412 = scalar_lea.vmem %s0, 108
    %v413 = vld [vmem:[%s412] sm:$0x1]
    %414 = vrot.lane.b32.xlu0 %v413, 68
    %v415 = vpop.permute.xlu0 %414
    %vm416 = vcmask 581152
    %s417 = scalar_lea.vmem [#allocation0], 16
    %418 = vst.msk [vmem:[%s417] sm:$0x1] %vm416, %v415
    %s419 = scalar_lea.vmem %s0, 65
    %v420 = vld [vmem:[%s419] sm:$0x1]
    %421 = vrot.lane.b32.xlu0 %v420, 67
    %v422 = vpop.permute.xlu0 %421
    %vm423 = vcmask 572952
    %s424 = scalar_lea.vmem [#allocation0], 8
    %425 = vst.msk [vmem:[%s424] sm:$0x1] %vm423, %v422
    %s426 = scalar_lea.vmem %s0, 22
    %v427 = vld [vmem:[%s426] sm:$0x1]
    %428 = vrot.lane.b32.xlu0 %v427, 66
    %v429 = vpop.permute.xlu0 %428
    %vm430 = vcmask 564752
    %431 = vst.msk [vmem:[#allocation0] sm:$0x1] %vm430, %v429
    %s432 = scalar_lea.vmem %s0, 107
    %v433 = vld [vmem:[%s432] sm:$0x1]
    %434 = vrot.lane.b32.xlu0 %v433, 65
    %v435 = vpop.permute.xlu0 %434
    %vm436 = vcmask 556552
    %s437 = scalar_lea.vmem [#allocation0], 16
    %438 = vst.msk [vmem:[%s437] sm:$0x1] %vm436, %v435
    %s439 = scalar_lea.vmem %s0, 64
    %v440 = vld [vmem:[%s439] sm:$0x1]
    %441 = vrot.lane.b32.xlu0 %v440, 64
    %v442 = vpop.permute.xlu0 %441
    %vm443 = vcmask 548352
    %s444 = scalar_lea.vmem [#allocation0], 8
    %445 = vst.msk [vmem:[%s444] sm:$0x1] %vm443, %v442
    %s446 = scalar_lea.vmem %s0, 21
    %v447 = vld [vmem:[%s446] sm:$0x1]
    %448 = vrot.lane.b32.xlu0 %v447, 63
    %v449 = vpop.permute.xlu0 %448
    %vm450 = vcmask 540152
    %451 = vst.msk [vmem:[#allocation0] sm:$0x1] %vm450, %v449
    %s452 = scalar_lea.vmem %s0, 106
    %v453 = vld [vmem:[%s452] sm:$0x1]
    %454 = vrot.lane.b32.xlu0 %v453, 62
    %v455 = vpop.permute.xlu0 %454
    %vm456 = vcmask 531952
    %s457 = scalar_lea.vmem [#allocation0], 16
    %458 = vst.msk [vmem:[%s457] sm:$0x1] %vm456, %v455
    %s459 = scalar_lea.vmem %s0, 63
    %v460 = vld [vmem:[%s459] sm:$0x1]
    %461 = vrot.lane.b32.xlu0 %v460, 61
    %v462 = vpop.permute.xlu0 %461
    %vm463 = vcmask 523752
    %s464 = scalar_lea.vmem [#allocation0], 8
    %465 = vst.msk [vmem:[%s464] sm:$0x1] %vm463, %v462
    %s466 = scalar_lea.vmem %s0, 20
    %v467 = vld [vmem:[%s466] sm:$0x1]
    %468 = vrot.lane.b32.xlu0 %v467, 60
    %v469 = vpop.permute.xlu0 %468
    %vm470 = vcmask 515552
    %471 = vst.msk [vmem:[#allocation0] sm:$0x1] %vm470, %v469
    %s472 = scalar_lea.vmem %s0, 105
    %v473 = vld [vmem:[%s472] sm:$0x1]
    %474 = vrot.lane.b32.xlu0 %v473, 59
    %v475 = vpop.permute.xlu0 %474
    %vm476 = vcmask 507352
    %s477 = scalar_lea.vmem [#allocation0], 16
    %478 = vst.msk [vmem:[%s477] sm:$0x1] %vm476, %v475
    %s479 = scalar_lea.vmem %s0, 62
    %v480 = vld [vmem:[%s479] sm:$0x1]
    %481 = vrot.lane.b32.xlu0 %v480, 58
    %v482 = vpop.permute.xlu0 %481
    %vm483 = vcmask 499152
    %s484 = scalar_lea.vmem [#allocation0], 8
    %485 = vst.msk [vmem:[%s484] sm:$0x1] %vm483, %v482
    %s486 = scalar_lea.vmem %s0, 19
    %v487 = vld [vmem:[%s486] sm:$0x1]
    %488 = vrot.lane.b32.xlu0 %v487, 57
    %v489 = vpop.permute.xlu0 %488
    %vm490 = vcmask 490952
    %491 = vst.msk [vmem:[#allocation0] sm:$0x1] %vm490, %v489
    %s492 = scalar_lea.vmem %s0, 104
    %v493 = vld [vmem:[%s492] sm:$0x1]
    %494 = vrot.lane.b32.xlu0 %v493, 56
    %v495 = vpop.permute.xlu0 %494
    %vm496 = vcmask 482752
    %s497 = scalar_lea.vmem [#allocation0], 16
    %498 = vst.msk [vmem:[%s497] sm:$0x1] %vm496, %v495
    %s499 = scalar_lea.vmem %s0, 61
    %v500 = vld [vmem:[%s499] sm:$0x1]
    %501 = vrot.lane.b32.xlu0 %v500, 55
    %v502 = vpop.permute.xlu0 %501
    %vm503 = vcmask 474552
    %s504 = scalar_lea.vmem [#allocation0], 8
    %505 = vst.msk [vmem:[%s504] sm:$0x1] %vm503, %v502
    %s506 = scalar_lea.vmem %s0, 18
    %v507 = vld [vmem:[%s506] sm:$0x1]
    %508 = vrot.lane.b32.xlu0 %v507, 54
    %v509 = vpop.permute.xlu0 %508
    %vm510 = vcmask 466352
    %511 = vst.msk [vmem:[#allocation0] sm:$0x1] %vm510, %v509
    %s512 = scalar_lea.vmem %s0, 103
    %v513 = vld [vmem:[%s512] sm:$0x1]
    %514 = vrot.lane.b32.xlu0 %v513, 53
    %v515 = vpop.permute.xlu0 %514
    %vm516 = vcmask 458152
    %s517 = scalar_lea.vmem [#allocation0], 16
    %518 = vst.msk [vmem:[%s517] sm:$0x1] %vm516, %v515
    %s519 = scalar_lea.vmem %s0, 60
    %v520 = vld [vmem:[%s519] sm:$0x1]
    %521 = vrot.lane.b32.xlu0 %v520, 52
    %v522 = vpop.permute.xlu0 %521
    %vm523 = vcmask 449952
    %s524 = scalar_lea.vmem [#allocation0], 8
    %525 = vst.msk [vmem:[%s524] sm:$0x1] %vm523, %v522
    %s526 = scalar_lea.vmem %s0, 17
    %v527 = vld [vmem:[%s526] sm:$0x1]
    %528 = vrot.lane.b32.xlu0 %v527, 51
    %v529 = vpop.permute.xlu0 %528
    %vm530 = vcmask 441752
    %531 = vst.msk [vmem:[#allocation0] sm:$0x1] %vm530, %v529
    %s532 = scalar_lea.vmem %s0, 102
    %v533 = vld [vmem:[%s532] sm:$0x1]
    %534 = vrot.lane.b32.xlu0 %v533, 50
    %v535 = vpop.permute.xlu0 %534
    %vm536 = vcmask 433552
    %s537 = scalar_lea.vmem [#allocation0], 16
    %538 = vst.msk [vmem:[%s537] sm:$0x1] %vm536, %v535
    %s539 = scalar_lea.vmem %s0, 59
    %v540 = vld [vmem:[%s539] sm:$0x1]
    %541 = vrot.lane.b32.xlu0 %v540, 49
    %v542 = vpop.permute.xlu0 %541
    %vm543 = vcmask 425352
    %s544 = scalar_lea.vmem [#allocation0], 8
    %545 = vst.msk [vmem:[%s544] sm:$0x1] %vm543, %v542
    %s546 = scalar_lea.vmem %s0, 16
    %v547 = vld [vmem:[%s546] sm:$0x1]
    %548 = vrot.lane.b32.xlu0 %v547, 48
    %v549 = vpop.permute.xlu0 %548
    %vm550 = vcmask 417152
    %551 = vst.msk [vmem:[#allocation0] sm:$0x1] %vm550, %v549
    %s552 = scalar_lea.vmem %s0, 101
    %v553 = vld [vmem:[%s552] sm:$0x1]
    %554 = vrot.lane.b32.xlu0 %v553, 47
    %v555 = vpop.permute.xlu0 %554
    %vm556 = vcmask 408952
    %s557 = scalar_lea.vmem [#allocation0], 16
    %558 = vst.msk [vmem:[%s557] sm:$0x1] %vm556, %v555
    %s559 = scalar_lea.vmem %s0, 58
    %v560 = vld [vmem:[%s559] sm:$0x1]
    %561 = vrot.lane.b32.xlu0 %v560, 46
    %v562 = vpop.permute.xlu0 %561
    %vm563 = vcmask 400752
    %s564 = scalar_lea.vmem [#allocation0], 8
    %565 = vst.msk [vmem:[%s564] sm:$0x1] %vm563, %v562
    %s566 = scalar_lea.vmem %s0, 15
    %v567 = vld [vmem:[%s566] sm:$0x1]
    %568 = vrot.lane.b32.xlu0 %v567, 45
    %v569 = vpop.permute.xlu0 %568
    %vm570 = vcmask 392552
    %571 = vst.msk [vmem:[#allocation0] sm:$0x1] %vm570, %v569
    %s572 = scalar_lea.vmem %s0, 100
    %v573 = vld [vmem:[%s572] sm:$0x1]
    %574 = vrot.lane.b32.xlu0 %v573, 44
    %v575 = vpop.permute.xlu0 %574
    %vm576 = vcmask 384352
    %s577 = scalar_lea.vmem [#allocation0], 16
    %578 = vst.msk [vmem:[%s577] sm:$0x1] %vm576, %v575
    %s579 = scalar_lea.vmem %s0, 57
    %v580 = vld [vmem:[%s579] sm:$0x1]
    %581 = vrot.lane.b32.xlu0 %v580, 43
    %v582 = vpop.permute.xlu0 %581
    %vm583 = vcmask 376152
    %s584 = scalar_lea.vmem [#allocation0], 8
    %585 = vst.msk [vmem:[%s584] sm:$0x1] %vm583, %v582
    %s586 = scalar_lea.vmem %s0, 14
    %v587 = vld [vmem:[%s586] sm:$0x1]
    %588 = vrot.lane.b32.xlu0 %v587, 42
    %v589 = vpop.permute.xlu0 %588
    %vm590 = vcmask 367952
    %591 = vst.msk [vmem:[#allocation0] sm:$0x1] %vm590, %v589
    %s592 = scalar_lea.vmem %s0, 99
    %v593 = vld [vmem:[%s592] sm:$0x1]
    %594 = vrot.lane.b32.xlu0 %v593, 41
    %v595 = vpop.permute.xlu0 %594
    %vm596 = vcmask 359752
    %s597 = scalar_lea.vmem [#allocation0], 16
    %598 = vst.msk [vmem:[%s597] sm:$0x1] %vm596, %v595
    %s599 = scalar_lea.vmem %s0, 56
    %v600 = vld [vmem:[%s599] sm:$0x1]
    %601 = vrot.lane.b32.xlu0 %v600, 40
    %v602 = vpop.permute.xlu0 %601
    %vm603 = vcmask 351552
    %s604 = scalar_lea.vmem [#allocation0], 8
    %605 = vst.msk [vmem:[%s604] sm:$0x1] %vm603, %v602
    %s606 = scalar_lea.vmem %s0, 13
    %v607 = vld [vmem:[%s606] sm:$0x1]
    %608 = vrot.lane.b32.xlu0 %v607, 39
    %v609 = vpop.permute.xlu0 %608
    %vm610 = vcmask 343352
    %611 = vst.msk [vmem:[#allocation0] sm:$0x1] %vm610, %v609
    %s612 = scalar_lea.vmem %s0, 98
    %v613 = vld [vmem:[%s612] sm:$0x1]
    %614 = vrot.lane.b32.xlu0 %v613, 38
    %v615 = vpop.permute.xlu0 %614
    %vm616 = vcmask 335152
    %s617 = scalar_lea.vmem [#allocation0], 16
    %618 = vst.msk [vmem:[%s617] sm:$0x1] %vm616, %v615
    %s619 = scalar_lea.vmem %s0, 55
    %v620 = vld [vmem:[%s619] sm:$0x1]
    %621 = vrot.lane.b32.xlu0 %v620, 37
    %v622 = vpop.permute.xlu0 %621
    %vm623 = vcmask 326952
    %s624 = scalar_lea.vmem [#allocation0], 8
    %625 = vst.msk [vmem:[%s624] sm:$0x1] %vm623, %v622
    %s626 = scalar_lea.vmem %s0, 12
    %v627 = vld [vmem:[%s626] sm:$0x1]
    %628 = vrot.lane.b32.xlu0 %v627, 36
    %v629 = vpop.permute.xlu0 %628
    %vm630 = vcmask 318752
    %631 = vst.msk [vmem:[#allocation0] sm:$0x1] %vm630, %v629
    %s632 = scalar_lea.vmem %s0, 97
    %v633 = vld [vmem:[%s632] sm:$0x1]
    %634 = vrot.lane.b32.xlu0 %v633, 35
    %v635 = vpop.permute.xlu0 %634
    %vm636 = vcmask 310552
    %s637 = scalar_lea.vmem [#allocation0], 16
    %638 = vst.msk [vmem:[%s637] sm:$0x1] %vm636, %v635
    %s639 = scalar_lea.vmem %s0, 54
    %v640 = vld [vmem:[%s639] sm:$0x1]
    %641 = vrot.lane.b32.xlu0 %v640, 34
    %v642 = vpop.permute.xlu0 %641
    %vm643 = vcmask 302352
    %s644 = scalar_lea.vmem [#allocation0], 8
    %645 = vst.msk [vmem:[%s644] sm:$0x1] %vm643, %v642
    %s646 = scalar_lea.vmem %s0, 11
    %v647 = vld [vmem:[%s646] sm:$0x1]
    %648 = vrot.lane.b32.xlu0 %v647, 33
    %v649 = vpop.permute.xlu0 %648
    %vm650 = vcmask 294152
    %651 = vst.msk [vmem:[#allocation0] sm:$0x1] %vm650, %v649
    %s652 = scalar_lea.vmem %s0, 96
    %v653 = vld [vmem:[%s652] sm:$0x1]
    %654 = vrot.lane.b32.xlu0 %v653, 32
    %v655 = vpop.permute.xlu0 %654
    %vm656 = vcmask 285952
    %s657 = scalar_lea.vmem [#allocation0], 16
    %658 = vst.msk [vmem:[%s657] sm:$0x1] %vm656, %v655
    %s659 = scalar_lea.vmem %s0, 53
    %v660 = vld [vmem:[%s659] sm:$0x1]
    %661 = vrot.lane.b32.xlu0 %v660, 31
    %v662 = vpop.permute.xlu0 %661
    %vm663 = vcmask 277752
    %s664 = scalar_lea.vmem [#allocation0], 8
    %665 = vst.msk [vmem:[%s664] sm:$0x1] %vm663, %v662
    %s666 = scalar_lea.vmem %s0, 10
    %v667 = vld [vmem:[%s666] sm:$0x1]
    %668 = vrot.lane.b32.xlu0 %v667, 30
    %v669 = vpop.permute.xlu0 %668
    %vm670 = vcmask 269552
    %671 = vst.msk [vmem:[#allocation0] sm:$0x1] %vm670, %v669
    %s672 = scalar_lea.vmem %s0, 95
    %v673 = vld [vmem:[%s672] sm:$0x1]
    %674 = vrot.lane.b32.xlu0 %v673, 29
    %v675 = vpop.permute.xlu0 %674
    %vm676 = vcmask 261352
    %s677 = scalar_lea.vmem [#allocation0], 16
    %678 = vst.msk [vmem:[%s677] sm:$0x1] %vm676, %v675
    %s679 = scalar_lea.vmem %s0, 52
    %v680 = vld [vmem:[%s679] sm:$0x1]
    %681 = vrot.lane.b32.xlu0 %v680, 28
    %v682 = vpop.permute.xlu0 %681
    %vm683 = vcmask 253152
    %s684 = scalar_lea.vmem [#allocation0], 8
    %685 = vst.msk [vmem:[%s684] sm:$0x1] %vm683, %v682
    %s686 = scalar_lea.vmem %s0, 9
    %v687 = vld [vmem:[%s686] sm:$0x1]
    %688 = vrot.lane.b32.xlu0 %v687, 27
    %v689 = vpop.permute.xlu0 %688
    %vm690 = vcmask 244952
    %691 = vst.msk [vmem:[#allocation0] sm:$0x1] %vm690, %v689
    %s692 = scalar_lea.vmem %s0, 94
    %v693 = vld [vmem:[%s692] sm:$0x1]
    %694 = vrot.lane.b32.xlu0 %v693, 26
    %v695 = vpop.permute.xlu0 %694
    %vm696 = vcmask 236752
    %s697 = scalar_lea.vmem [#allocation0], 16
    %698 = vst.msk [vmem:[%s697] sm:$0x1] %vm696, %v695
    %s699 = scalar_lea.vmem %s0, 51
    %v700 = vld [vmem:[%s699] sm:$0x1]
    %701 = vrot.lane.b32.xlu0 %v700, 25
    %v702 = vpop.permute.xlu0 %701
    %vm703 = vcmask 228552
    %s704 = scalar_lea.vmem [#allocation0], 8
    %705 = vst.msk [vmem:[%s704] sm:$0x1] %vm703, %v702
    %s706 = scalar_lea.vmem %s0, 8
    %v707 = vld [vmem:[%s706] sm:$0x1]
    %708 = vrot.lane.b32.xlu0 %v707, 24
    %v709 = vpop.permute.xlu0 %708
    %vm710 = vcmask 220352
    %711 = vst.msk [vmem:[#allocation0] sm:$0x1] %vm710, %v709
    %s712 = scalar_lea.vmem %s0, 93
    %v713 = vld [vmem:[%s712] sm:$0x1]
    %714 = vrot.lane.b32.xlu0 %v713, 23
    %v715 = vpop.permute.xlu0 %714
    %vm716 = vcmask 212152
    %s717 = scalar_lea.vmem [#allocation0], 16
    %718 = vst.msk [vmem:[%s717] sm:$0x1] %vm716, %v715
    %s719 = scalar_lea.vmem %s0, 50
    %v720 = vld [vmem:[%s719] sm:$0x1]
    %721 = vrot.lane.b32.xlu0 %v720, 22
    %v722 = vpop.permute.xlu0 %721
    %vm723 = vcmask 203952
    %s724 = scalar_lea.vmem [#allocation0], 8
    %725 = vst.msk [vmem:[%s724] sm:$0x1] %vm723, %v722
    %s726 = scalar_lea.vmem %s0, 7
    %v727 = vld [vmem:[%s726] sm:$0x1]
    %728 = vrot.lane.b32.xlu0 %v727, 21
    %v729 = vpop.permute.xlu0 %728
    %vm730 = vcmask 195752
    %731 = vst.msk [vmem:[#allocation0] sm:$0x1] %vm730, %v729
    %s732 = scalar_lea.vmem %s0, 92
    %v733 = vld [vmem:[%s732] sm:$0x1]
    %734 = vrot.lane.b32.xlu0 %v733, 20
    %v735 = vpop.permute.xlu0 %734
    %vm736 = vcmask 187552
    %s737 = scalar_lea.vmem [#allocation0], 16
    %738 = vst.msk [vmem:[%s737] sm:$0x1] %vm736, %v735
    %s739 = scalar_lea.vmem %s0, 49
    %v740 = vld [vmem:[%s739] sm:$0x1]
    %741 = vrot.lane.b32.xlu0 %v740, 19
    %v742 = vpop.permute.xlu0 %741
    %vm743 = vcmask 179352
    %s744 = scalar_lea.vmem [#allocation0], 8
    %745 = vst.msk [vmem:[%s744] sm:$0x1] %vm743, %v742
    %s746 = scalar_lea.vmem %s0, 6
    %v747 = vld [vmem:[%s746] sm:$0x1]
    %748 = vrot.lane.b32.xlu0 %v747, 18
    %v749 = vpop.permute.xlu0 %748
    %vm750 = vcmask 171152
    %751 = vst.msk [vmem:[#allocation0] sm:$0x1] %vm750, %v749
    %s752 = scalar_lea.vmem %s0, 91
    %v753 = vld [vmem:[%s752] sm:$0x1]
    %754 = vrot.lane.b32.xlu0 %v753, 17
    %v755 = vpop.permute.xlu0 %754
    %vm756 = vcmask 162952
    %s757 = scalar_lea.vmem [#allocation0], 16
    %758 = vst.msk [vmem:[%s757] sm:$0x1] %vm756, %v755
    %s759 = scalar_lea.vmem %s0, 48
    %v760 = vld [vmem:[%s759] sm:$0x1]
    %761 = vrot.lane.b32.xlu0 %v760, 16
    %v762 = vpop.permute.xlu0 %761
    %vm763 = vcmask 154752
    %s764 = scalar_lea.vmem [#allocation0], 8
    %765 = vst.msk [vmem:[%s764] sm:$0x1] %vm763, %v762
    %s766 = scalar_lea.vmem %s0, 5
    %v767 = vld [vmem:[%s766] sm:$0x1]
    %768 = vrot.lane.b32.xlu0 %v767, 15
    %v769 = vpop.permute.xlu0 %768
    %vm770 = vcmask 146552
    %771 = vst.msk [vmem:[#allocation0] sm:$0x1] %vm770, %v769
    %s772 = scalar_lea.vmem %s0, 90
    %v773 = vld [vmem:[%s772] sm:$0x1]
    %774 = vrot.lane.b32.xlu0 %v773, 14
    %v775 = vpop.permute.xlu0 %774
    %vm776 = vcmask 138352
    %s777 = scalar_lea.vmem [#allocation0], 16
    %778 = vst.msk [vmem:[%s777] sm:$0x1] %vm776, %v775
    %s779 = scalar_lea.vmem %s0, 47
    %v780 = vld [vmem:[%s779] sm:$0x1]
    %781 = vrot.lane.b32.xlu0 %v780, 13
    %v782 = vpop.permute.xlu0 %781
    %vm783 = vcmask 130152
    %s784 = scalar_lea.vmem [#allocation0], 8
    %785 = vst.msk [vmem:[%s784] sm:$0x1] %vm783, %v782
    %s786 = scalar_lea.vmem %s0, 4
    %v787 = vld [vmem:[%s786] sm:$0x1]
    %788 = vrot.lane.b32.xlu0 %v787, 12
    %v789 = vpop.permute.xlu0 %788
    %vm790 = vcmask 121952
    %791 = vst.msk [vmem:[#allocation0] sm:$0x1] %vm790, %v789
    %s792 = scalar_lea.vmem %s0, 89
    %v793 = vld [vmem:[%s792] sm:$0x1]
    %794 = vrot.lane.b32.xlu0 %v793, 11
    %v795 = vpop.permute.xlu0 %794
    %vm796 = vcmask 113752
    %s797 = scalar_lea.vmem [#allocation0], 16
    %798 = vst.msk [vmem:[%s797] sm:$0x1] %vm796, %v795
    %s799 = scalar_lea.vmem %s0, 46
    %v800 = vld [vmem:[%s799] sm:$0x1]
    %801 = vrot.lane.b32.xlu0 %v800, 10
    %v802 = vpop.permute.xlu0 %801
    %vm803 = vcmask 105552
    %s804 = scalar_lea.vmem [#allocation0], 8
    %805 = vst.msk [vmem:[%s804] sm:$0x1] %vm803, %v802
    %s806 = scalar_lea.vmem %s0, 3
    %v807 = vld [vmem:[%s806] sm:$0x1]
    %808 = vrot.lane.b32.xlu0 %v807, 9
    %v809 = vpop.permute.xlu0 %808
    %vm810 = vcmask 97352
    %811 = vst.msk [vmem:[#allocation0] sm:$0x1] %vm810, %v809
    %s812 = scalar_lea.vmem %s0, 88
    %v813 = vld [vmem:[%s812] sm:$0x1]
    %814 = vrot.lane.b32.xlu0 %v813, 8
    %v815 = vpop.permute.xlu0 %814
    %vm816 = vcmask 89152
    %s817 = scalar_lea.vmem [#allocation0], 16
    %818 = vst.msk [vmem:[%s817] sm:$0x1] %vm816, %v815
    %s819 = scalar_lea.vmem %s0, 45
    %v820 = vld [vmem:[%s819] sm:$0x1]
    %821 = vrot.lane.b32.xlu0 %v820, 7
    %v822 = vpop.permute.xlu0 %821
    %vm823 = vcmask 80952
    %s824 = scalar_lea.vmem [#allocation0], 8
    %825 = vst.msk [vmem:[%s824] sm:$0x1] %vm823, %v822
    %s826 = scalar_lea.vmem %s0, 2
    %v827 = vld [vmem:[%s826] sm:$0x1]
    %828 = vrot.lane.b32.xlu0 %v827, 6
    %v829 = vpop.permute.xlu0 %828
    %vm830 = vcmask 72752
    %831 = vst.msk [vmem:[#allocation0] sm:$0x1] %vm830, %v829
    %s832 = scalar_lea.vmem %s0, 87
    %v833 = vld [vmem:[%s832] sm:$0x1]
    %834 = vrot.lane.b32.xlu0 %v833, 5
    %v835 = vpop.permute.xlu0 %834
    %vm836 = vcmask 64552
    %s837 = scalar_lea.vmem [#allocation0], 16
    %838 = vst.msk [vmem:[%s837] sm:$0x1] %vm836, %v835
    %s839 = scalar_lea.vmem %s0, 44
    %v840 = vld [vmem:[%s839] sm:$0x1]
    %841 = vrot.lane.b32.xlu0 %v840, 4
    %v842 = vpop.permute.xlu0 %841
    %vm843 = vcmask 56352
    %s844 = scalar_lea.vmem [#allocation0], 8
    %845 = vst.msk [vmem:[%s844] sm:$0x1] %vm843, %v842
    %s846 = scalar_lea.vmem %s0, 1
    %v847 = vld [vmem:[%s846] sm:$0x1]
    %848 = vrot.lane.b32.xlu0 %v847, 3
    %v849 = vpop.permute.xlu0 %848
    %vm850 = vcmask 48152
    %851 = vst.msk [vmem:[#allocation0] sm:$0x1] %vm850, %v849
    %s852 = scalar_lea.vmem %s0, 86
    %v853 = vld [vmem:[%s852] sm:$0x1]
    %854 = vrot.lane.b32.xlu0 %v853, 2
    %v855 = vpop.permute.xlu0 %854
    %vm856 = vcmask 39952
    %s857 = scalar_lea.vmem [#allocation0], 16
    %858 = vst.msk [vmem:[%s857] sm:$0x1] %vm856, %v855
    %s859 = scalar_lea.vmem %s0, 43
    %v860 = vld [vmem:[%s859] sm:$0x1]
    %861 = vrot.lane.b32.xlu0 %v860, 1
    %v862 = vpop.permute.xlu0 %861
    %vm863 = vcmask 31752
    %s864 = scalar_lea.vmem [#allocation0], 8
    %865 = vst.msk [vmem:[%s864] sm:$0x1] %vm863, %v862
    %s867 = sshllo.u32 0, 1
    %v869 = vld [vmem:[#allocation0] sm:%s867]
    %s870 = sshllo.u32 0, 1
    %871 = vst [vmem:[%s1] sm:%s870] %v869
    %s872 = scalar_lea.vmem [#allocation0], 8
    %v873 = vld [vmem:[%s872] sm:%s867]
    %s874 = sshllo.u32 0, 1
    %s875 = scalar_lea.vmem %s1, 1
    %876 = vst [vmem:[%s875] sm:%s874] %v873
    %s877 = scalar_lea.vmem [#allocation0], 16
    %v878 = vld [vmem:[%s877] sm:%s867]
    %s879 = sshllo.u32 0, 1
    %s880 = smul.addr 1, 2
    %s881 = scalar_lea.vmem %s1, %s880
    %882 = vst [vmem:[%s881] sm:%s879] %v878

// kernel: generator_forward.19
$region0: #{generator_forward.19}
  #allocation0 [shape = 'u32[]', space=smem, size = 0x4, offset = 0x4, fixed_abs, tag = 'smem constant byte address 0x4 - core index']
  #allocation1 [shape = 'u32[144,128]{1,0:T(1,128)}', space=vmem, size = 0x12000, scoped, tag = 'internal scratch']
  %s0 = inlined_call_operand.vmem [shape: f32[2,384], index: 0, kind: input, shape index: {}]
  %s1 = inlined_call_operand.vmem [shape: f32[64,384], index: 1, kind: input, shape index: {}]
  %s2 = inlined_call_operand.vmem [shape: f32[64,384], index: 2, kind: output, shape index: {}]
  %s3 = sld [smem:[#allocation0]]
  $region18: #{generator_forward.19} parent=0
    _
  %s5 = ssub.s32 1, %s3
  %s6 = scalar_select 0, %s5, %s3
  // Predicated region
  $region2: #{generator_forward.19} parent=0 // pred_check
    _
  $region3: #{generator_forward.19} parent=0 // pred_check_branch
    %8 = sbr.rel (0) target = $region5
  $region4: #{generator_forward.19} parent=0 // pred_region
    _
  $region5: #{generator_forward.19} parent=0 // pred_fallthru
    _
  // Predicated region
  $region6: #{generator_forward.19} parent=0 // pred_check
    _
  $region7: #{generator_forward.19} parent=0 // pred_check_branch
    %10 = sbr.rel (0) target = $region9
  $region8: #{generator_forward.19} parent=0 // pred_region
    _
  $region9: #{generator_forward.19} parent=0 // pred_fallthru
    _
  %v11 = vld [vmem:[%s0] sm:$0x3f]
  %v12 = vld [vmem:[%s1] sm:$0xff]
  %v13 = vld [vmem:[%s1 + $0x8] sm:$0xff]
  %v14 = vld [vmem:[%s1 + $0x10] sm:$0xff]
  %v15 = vld [vmem:[%s1 + $0x18] sm:$0xff]
  %v16 = vld [vmem:[%s1 + $0x20] sm:$0xff]
  %v17 = vld [vmem:[%s1 + $0x28] sm:$0xff]
  %v18 = vld [vmem:[%s1 + $0x30] sm:$0xff]
  %v19 = vld [vmem:[%s1 + $0x38] sm:$0xff]
  %v20 = vld [vmem:[%s1 + $0x40] sm:$0xff]
  %v21 = vld [vmem:[%s1 + $0x48] sm:$0xff]
  %v22 = vld [vmem:[%s1 + $0x50] sm:$0xff]
  %v23 = vld [vmem:[%s1 + $0x58] sm:$0xff]
  %v24 = vld [vmem:[%s1 + $0x60] sm:$0xff]
  %v25 = vld [vmem:[%s1 + $0x68] sm:$0xff]
  %v26 = vld [vmem:[%s1 + $0x70] sm:$0xff]
  %v27 = vld [vmem:[%s1 + $0x78] sm:$0xff]
  %v28 = vld [vmem:[%s1 + $0x80] sm:$0xff]
  %v29 = vld [vmem:[%s1 + $0x88] sm:$0xff]
  %v30 = vld [vmem:[%s1 + $0x90] sm:$0xff]
  %v31 = vld [vmem:[%s1 + $0x98] sm:$0xff]
  %v32 = vld [vmem:[%s1 + $0xa0] sm:$0xff]
  %v33 = vld [vmem:[%s1 + $0xa8] sm:$0xff]
  %v34 = vld [vmem:[%s1 + $0xb0] sm:$0xff]
  %v35 = vld [vmem:[%s1 + $0xb8] sm:$0xff]
  %v37 = vlaneseq
  %v38 = vshrl.u32 %v37, 7
  %v39 = vsub.s32 0, %v38
  %v40 = vrot.slane %v11, %v39
  %v41 = vlaneseq
  %v42 = vshrl.u32 %v41, 7
  %v43 = vsub.s32 2, %v42
  %v44 = vrot.slane %v11, %v43
  %v45 = vlaneseq
  %v46 = vshrl.u32 %v45, 7
  %v47 = vsub.s32 4, %v46
  %v48 = vrot.slane %v11, %v47
  %v52 = vlaneseq
  %v53 = vshrl.u32 %v52, 7
  %v54 = vsub.s32 0, %v53
  %v55 = vrot.slane %v40, %v54
  %v56 = vlaneseq
  %v57 = vshrl.u32 %v56, 7
  %v58 = vsub.s32 0, %v57
  %v59 = vrot.slane %v44, %v58
  %v60 = vlaneseq
  %v61 = vshrl.u32 %v60, 7
  %v62 = vsub.s32 0, %v61
  %v63 = vrot.slane %v48, %v62
  %v64 = vmul.f32 %v12, %v55
  %v65 = vmul.f32 %v13, %v59
  %v66 = vmul.f32 %v14, %v63
  %v67 = vmul.f32 %v15, %v55
  %v68 = vmul.f32 %v16, %v59
  %v69 = vmul.f32 %v17, %v63
  %v70 = vmul.f32 %v18, %v55
  %v71 = vmul.f32 %v19, %v59
  %v72 = vmul.f32 %v20, %v63
  %v73 = vmul.f32 %v21, %v55
  %v74 = vmul.f32 %v22, %v59
  %v75 = vmul.f32 %v23, %v63
  %v76 = vmul.f32 %v24, %v55
  %v77 = vmul.f32 %v25, %v59
  %v78 = vmul.f32 %v26, %v63
  %v79 = vmul.f32 %v27, %v55
  %v80 = vmul.f32 %v28, %v59
  %v81 = vmul.f32 %v29, %v63
  %v82 = vmul.f32 %v30, %v55
  %v83 = vmul.f32 %v31, %v59
  %v84 = vmul.f32 %v32, %v63
  %v85 = vmul.f32 %v33, %v55
  %v86 = vmul.f32 %v34, %v59
  %v87 = vmul.f32 %v35, %v63
  %v88 = vlaneseq
  %v89 = vshrl.u32 %v88, 7
  %v90 = vsub.s32 1, %v89
  %v91 = vrot.slane %v11, %v90
  %v92 = vlaneseq
  %v93 = vshrl.u32 %v92, 7
  %v94 = vsub.s32 3, %v93
  %v95 = vrot.slane %v11, %v94
  %v96 = vlaneseq
  %v97 = vshrl.u32 %v96, 7
  %v98 = vsub.s32 5, %v97
  %v99 = vrot.slane %v11, %v98
  %v103 = vlaneseq
  %v104 = vshrl.u32 %v103, 7
  %v105 = vsub.s32 1, %v104
  %v106 = vrot.slane %v91, %v105
  %v107 = vlaneseq
  %v108 = vshrl.u32 %v107, 7
  %v109 = vsub.s32 1, %v108
  %v110 = vrot.slane %v95, %v109
  %v111 = vlaneseq
  %v112 = vshrl.u32 %v111, 7
  %v113 = vsub.s32 1, %v112
  %v114 = vrot.slane %v99, %v113
  %v115 = vadd.f32 %v64, %v106
  %v116 = vadd.f32 %v65, %v110
  %v117 = vadd.f32 %v66, %v114
  %v118 = vadd.f32 %v67, %v106
  %v119 = vadd.f32 %v68, %v110
  %v120 = vadd.f32 %v69, %v114
  %v121 = vadd.f32 %v70, %v106
  %v122 = vadd.f32 %v71, %v110
  %v123 = vadd.f32 %v72, %v114
  %v124 = vadd.f32 %v73, %v106
  %v125 = vadd.f32 %v74, %v110
  %v126 = vadd.f32 %v75, %v114
  %v127 = vadd.f32 %v76, %v106
  %v128 = vadd.f32 %v77, %v110
  %v129 = vadd.f32 %v78, %v114
  %v130 = vadd.f32 %v79, %v106
  %v131 = vadd.f32 %v80, %v110
  %v132 = vadd.f32 %v81, %v114
  %v133 = vadd.f32 %v82, %v106
  %v134 = vadd.f32 %v83, %v110
  %v135 = vadd.f32 %v84, %v114
  %v136 = vadd.f32 %v85, %v106
  %v137 = vadd.f32 %v86, %v110
  %v138 = vadd.f32 %v87, %v114
  %v139 = vtanh.pop %v115
  %v140 = vtanh.pop %v116
  %v141 = vtanh.pop %v117
  %v142 = vtanh.pop %v118
  %v143 = vtanh.pop %v119
  %v144 = vtanh.pop %v120
  %v145 = vtanh.pop %v121
  %v146 = vtanh.pop %v122
  %v147 = vtanh.pop %v123
  %v148 = vtanh.pop %v124
  %v149 = vtanh.pop %v125
  %v150 = vtanh.pop %v126
  %v151 = vtanh.pop %v127
  %v152 = vtanh.pop %v128
  %v153 = vtanh.pop %v129
  %v154 = vtanh.pop %v130
  %v155 = vtanh.pop %v131
  %v156 = vtanh.pop %v132
  %v157 = vtanh.pop %v133
  %v158 = vtanh.pop %v134
  %v159 = vtanh.pop %v135
  %v160 = vtanh.pop %v136
  %v161 = vtanh.pop %v137
  %v162 = vtanh.pop %v138
  %163 = vst [vmem:[%s2] sm:$0xff] %v139
  %164 = vst [vmem:[%s2 + $0x8] sm:$0xff] %v140
  %165 = vst [vmem:[%s2 + $0x10] sm:$0xff] %v141
  %166 = vst [vmem:[%s2 + $0x18] sm:$0xff] %v142
  %167 = vst [vmem:[%s2 + $0x20] sm:$0xff] %v143
  %168 = vst [vmem:[%s2 + $0x28] sm:$0xff] %v144
  %169 = vst [vmem:[%s2 + $0x30] sm:$0xff] %v145
  %170 = vst [vmem:[%s2 + $0x38] sm:$0xff] %v146
  %171 = vst [vmem:[%s2 + $0x40] sm:$0xff] %v147
  %172 = vst [vmem:[%s2 + $0x48] sm:$0xff] %v148
  %173 = vst [vmem:[%s2 + $0x50] sm:$0xff] %v149
  %174 = vst [vmem:[%s2 + $0x58] sm:$0xff] %v150
  %175 = vst [vmem:[%s2 + $0x60] sm:$0xff] %v151
  %176 = vst [vmem:[%s2 + $0x68] sm:$0xff] %v152
  %177 = vst [vmem:[%s2 + $0x70] sm:$0xff] %v153
  %178 = vst [vmem:[%s2 + $0x78] sm:$0xff] %v154
  %179 = vst [vmem:[%s2 + $0x80] sm:$0xff] %v155
  %180 = vst [vmem:[%s2 + $0x88] sm:$0xff] %v156
  %181 = vst [vmem:[%s2 + $0x90] sm:$0xff] %v157
  %182 = vst [vmem:[%s2 + $0x98] sm:$0xff] %v158
  %183 = vst [vmem:[%s2 + $0xa0] sm:$0xff] %v159
  %184 = vst [vmem:[%s2 + $0xa8] sm:$0xff] %v160
  %185 = vst [vmem:[%s2 + $0xb0] sm:$0xff] %v161
  %186 = vst [vmem:[%s2 + $0xb8] sm:$0xff] %v162
  // Predicated region
  $region10: #{generator_forward.19} parent=0 // pred_check
    _
  $region11: #{generator_forward.19} parent=0 // pred_check_branch
    %188 = sbr.rel (0) target = $region13
  $region12: #{generator_forward.19} parent=0 // pred_region
    _
  $region13: #{generator_forward.19} parent=0 // pred_fallthru
    _
  // Predicated region
  $region14: #{generator_forward.19} parent=0 // pred_check
    _
  $region15: #{generator_forward.19} parent=0 // pred_check_branch
    %190 = sbr.rel (0) target = $region17
  $region16: #{generator_forward.19} parent=0 // pred_region
    _
  $region17: #{generator_forward.19} parent=0 // pred_fallthru
    _

</llo_original>
